<compile_context>
chip_gen: v6e
topology: v6e:2x2x1
jax: 0.10.0
libtpu: 0.0.40
codegen_flags: <defaults>
</compile_context>

<pallas_src>
import functools

import jax
import jax.numpy as jnp
from jax import lax
from jax.experimental import pallas as pl
from jax.experimental.pallas import tpu as pltpu

EPS = 1e-5


def _round_up(x, m):
    return ((x + m - 1) // m) * m


# --------------------------------- kernel ------------------------------------

def _ccr_kernel(xp_ref, mask_ref, w1_ref, wr_ref, w2_ref, b_ref, slopes_ref,
                out_ref, h1_ref, *, Sp, Cpad, Cin_pad, HALO, SEXT, Wp):
    # xp_ref    : (1, SEXT, Cin_pad) bf16  zero-padded input, flattened padded
    #                                      grid, HALO zero rows front/back
    # mask_ref  : (Sp, 1) f32              1.0 on interior rows, else 0.0
    # w1_ref    : (9, Cin_pad, Cpad) bf16  conv1 weights (BN folded), per tap
    # wr_ref    : (Cin_pad, Cpad) bf16     residual 1x1 weights (BN folded)
    # w2_ref    : (9, Cpad, Cpad) bf16     conv2 weights (BN folded), per tap
    # b_ref     : (3, Cpad) f32            [b1 | b_res | b2]
    # slopes_ref: (2,) f32 (SMEM)          PReLU slopes
    # out_ref   : (1, Sp, Cpad) bf16       output on the padded, flattened grid
    # h1_ref    : (SEXT, Cpad) bf16 VMEM   halo-extended scratch for h1
    a1 = slopes_ref[0]
    a2 = slopes_ref[1]
    offs = [(dy - 1) * Wp + (dx - 1) for dy in range(3) for dx in range(3)]

    # Grid-invariant interior mask: broadcast once across lanes, reuse twice.
    maskb = jnp.broadcast_to(mask_ref[...], (Sp, Cpad))

    x0 = xp_ref.at[0]                                   # (SEXT, Cin_pad) view

    # ---- conv1 (3x3 + BN): 9 accumulating matmuls over shifted slices -------
    acc1 = jnp.zeros((Sp, Cpad), jnp.float32)
    for k, s in enumerate(offs):
        tap = x0[HALO + s:HALO + s + Sp, :]             # static slice, bf16
        acc1 = acc1 + jnp.dot(tap, w1_ref[k],
                              preferred_element_type=jnp.float32)
    acc1 = acc1 + b_ref[0:1, :]
    h1 = jnp.where(acc1 > 0, acc1, a1 * acc1) * maskb   # PReLU #1 + mask

    # Halo rows of the scratch must be zero so conv2 sees a correct zero halo;
    # re-zeroing them every step is ~64 rows and keeps the kernel independent
    # of how the batch axis is sharded across TensorCores.
    h1_ref[0:HALO, :] = jnp.zeros((HALO, Cpad), jnp.bfloat16)
    h1_ref[HALO + Sp:SEXT, :] = jnp.zeros((SEXT - HALO - Sp, Cpad), jnp.bfloat16)
    h1_ref[HALO:HALO + Sp, :] = h1.astype(jnp.bfloat16)  # single bf16 cast

    # ---- residual branch: 1x1 conv + BN == centre-tap matmul ----------------
    res = (jnp.dot(x0[HALO:HALO + Sp, :], wr_ref[...],
                   preferred_element_type=jnp.float32)
           + b_ref[1:2, :]).astype(jnp.bfloat16)

    # ---- conv2 (3x3 + BN): 9 accumulating matmuls over scratch slices -------
    acc2 = jnp.zeros((Sp, Cpad), jnp.float32)
    for k, s in enumerate(offs):
        acc2 = acc2 + jnp.dot(h1_ref[HALO + s:HALO + s + Sp, :], w2_ref[k],
                              preferred_element_type=jnp.float32)
    acc2 = acc2 + b_ref[2:3, :]
    h2 = jnp.where(acc2 > 0, acc2, a2 * acc2)            # PReLU #2

    # TODO(synk): training-mode Dropout (random masking) not implemented;
    # at inference Dropout is the identity.
    out_ref[0] = (maskb * (h2 + res)).astype(out_ref.dtype)


# ----------------------------- parameter setup --------------------------------

def init_ccr_params(key, in_c, out_c):
    """Deterministic synthetic parameters matching the PyTorch module's shapes."""
    ks = jax.random.split(key, 6)
    wr = jax.random.normal(ks[0], (out_c, in_c, 1, 1), jnp.float32) * 0.3
    w1 = jax.random.normal(ks[1], (out_c, in_c, 3, 3), jnp.float32) * 0.3
    w2 = jax.random.normal(ks[2], (out_c, out_c, 3, 3), jnp.float32) * 0.3

    def bn(k):
        k1, k2, k3, k4 = jax.random.split(k, 4)
        gamma = jax.random.uniform(k1, (out_c,), minval=0.5, maxval=1.5)
        beta = jax.random.normal(k2, (out_c,)) * 0.1
        mean = jax.random.normal(k3, (out_c,)) * 0.1
        var = jax.random.uniform(k4, (out_c,), minval=0.5, maxval=1.5)
        return gamma, beta, mean, var

    return dict(wr=wr, w1=w1, w2=w2,
                bnr=bn(ks[3]), bn1=bn(ks[4]), bn2=bn(ks[5]),
                a1=jnp.float32(0.25), a2=jnp.float32(0.25))


def _fold_bn(w_oihw, bn):
    gamma, beta, mean, var = bn
    s = gamma / jnp.sqrt(var + EPS)
    return w_oihw * s[:, None, None, None], beta - mean * s


# --------------------------------- wrapper ------------------------------------

def ccr_block(x_nchw, params):
    N, Cin, H, W = x_nchw.shape
    Cout = params["wr"].shape[0]
    Hp, Wp = H + 2, W + 2
    S = Hp * Wp
    Cin_pad = _round_up(Cin, 8)
    # Lane-dense channel padding; fill the full 256-wide MXU on v6e/v7x when
    # the real channel count exceeds one 128-lane group.
    Cpad = 128 if Cout <= 128 else _round_up(Cout, 256)
    Sp = _round_up(S, 16)                    # flattened padded spatial length
    HALO = _round_up(Wp + 1, 16)             # sublane-aligned front halo
    SEXT = _round_up(HALO + Sp + Wp + 1, 16)  # halo-extended length

    # ---- activations: NCHW -> zero-padded, flattened, halo-extended slab ----
    x_nhwc = jnp.transpose(x_nchw, (0, 2, 3, 1))
    xpad = jnp.pad(x_nhwc, ((0, 0), (1, 1), (1, 1), (0, Cin_pad - Cin)))
    xflat = xpad.reshape(N, S, Cin_pad)
    xp = jnp.pad(xflat, ((0, 0), (HALO, SEXT - HALO - S), (0, 0))
                 ).astype(jnp.bfloat16)

    # ---- grid-invariant interior mask (computed once in the wrapper) --------
    rows = jnp.arange(Sp, dtype=jnp.int32)
    py, px = rows // Wp, rows % Wp
    interior = (py >= 1) & (py <= H) & (px >= 1) & (px <= W)
    mask = interior.astype(jnp.float32).reshape(Sp, 1)

    # ---- fold BN into conv weights, pack per-tap for the MXU ----------------
    wr_f, br = _fold_bn(params["wr"], params["bnr"])
    w1_f, b1 = _fold_bn(params["w1"], params["bn1"])
    w2_f, b2 = _fold_bn(params["w2"], params["bn2"])

    def pack(w, in_to):                      # (O,I,kh,kw) -> (kh*kw, in_to, Cpad)
        o, i, kh, kw = w.shape
        w = jnp.pad(w, ((0, Cpad - o), (0, in_to - i), (0, 0), (0, 0)))
        return jnp.transpose(w, (2, 3, 1, 0)).reshape(kh * kw, in_to, Cpad)

    w1_p = pack(w1_f, Cin_pad).astype(jnp.bfloat16)       # (9, Cin_pad, Cpad)
    wr_p = pack(wr_f, Cin_pad)[0].astype(jnp.bfloat16)    # (Cin_pad, Cpad)
    w2_p = pack(w2_f, Cpad).astype(jnp.bfloat16)          # (9, Cpad, Cpad)
    biases = jnp.stack([jnp.pad(b1, (0, Cpad - Cout)),
                        jnp.pad(br, (0, Cpad - Cout)),
                        jnp.pad(b2, (0, Cpad - Cout))]).astype(jnp.float32)
    slopes = jnp.stack([params["a1"], params["a2"]]).astype(jnp.float32)

    kernel = functools.partial(_ccr_kernel, Sp=Sp, Cpad=Cpad, Cin_pad=Cin_pad,
                               HALO=HALO, SEXT=SEXT, Wp=Wp)

    out_flat = pl.pallas_call(
        kernel,
        out_shape=jax.ShapeDtypeStruct((N, Sp, Cpad), jnp.bfloat16),
        grid_spec=pltpu.PrefetchScalarGridSpec(
            num_scalar_prefetch=0,
            grid=(N,),
            in_specs=[
                pl.BlockSpec((1, SEXT, Cin_pad), lambda n: (n, 0, 0)),   # xp
                pl.BlockSpec((Sp, 1), lambda n: (0, 0)),                 # mask
                pl.BlockSpec((9, Cin_pad, Cpad), lambda n: (0, 0, 0)),   # w1
                pl.BlockSpec((Cin_pad, Cpad), lambda n: (0, 0)),         # wr
                pl.BlockSpec((9, Cpad, Cpad), lambda n: (0, 0, 0)),      # w2
                pl.BlockSpec((3, Cpad), lambda n: (0, 0)),               # biases
                pl.BlockSpec(memory_space=pltpu.MemorySpace.SMEM),       # slopes
            ],
            out_specs=pl.BlockSpec((1, Sp, Cpad), lambda n: (n, 0, 0)),
            scratch_shapes=[pltpu.VMEM((SEXT, Cpad), jnp.bfloat16)],
        ),
        compiler_params=pltpu.CompilerParams(
            dimension_semantics=("parallel",),       # batch elems independent
            vmem_limit_bytes=32 * 1024 * 1024),      # explicit (v5e default 16M)
    )(xp, mask, w1_p, wr_p, w2_p, biases, slopes)

    # Strip spatial + channel padding and return NCHW (PyTorch layout).
    out = out_flat[:, :S, :].reshape(N, Hp, Wp, Cpad)[:, 1:H + 1, 1:W + 1, :Cout]
    return jnp.transpose(out, (0, 3, 1, 2)).astype(jnp.float32)


# ----------------------------- pure-JAX reference ------------------------------

def ccr_ref(x_nchw, params):
    def conv(x, w, pad):
        return lax.conv_general_dilated(
            x, w, (1, 1), [(pad, pad), (pad, pad)],
            dimension_numbers=("NCHW", "OIHW", "NCHW"))

    def bn(x, p):
        gamma, beta, mean, var = p
        c = lambda v: v[None, :, None, None]
        return (x - c(mean)) / jnp.sqrt(c(var) + EPS) * c(gamma) + c(beta)

    def prelu(x, a):
        return jnp.where(x > 0, x, a * x)

    block = bn(conv(x_nchw, params["wr"], 0), params["bnr"])
    h = prelu(bn(conv(x_nchw, params["w1"], 1), params["bn1"]), params["a1"])
    h = prelu(bn(conv(h, params["w2"], 1), params["bn2"]), params["a2"])
    return h + block  # Dropout == identity (inference)


if __name__ == "__main__":
    key = jax.random.PRNGKey(0)
    k_x, k_p = jax.random.split(key)

    N, Cin, Cout, H, W = 2, 4, 8, 16, 16
    x = jax.random.normal(k_x, (N, Cin, H, W), jnp.float32)
    params = init_ccr_params(k_p, Cin, Cout)

    out = jax.block_until_ready(ccr_block(x, params))
    ref = jax.block_until_ready(ccr_ref(x, params))

    assert out.shape == (N, Cout, H, W)
    # Matmul operands, the stored h1 and the kernel output are bf16 (MXU /
    # bandwidth native) with f32 accumulation, so tolerances account for bf16
    # quantization.  A layout/indexing bug would produce O(1)-O(10) errors.
    err = jnp.abs(out - ref)
    assert jnp.allclose(out, ref, rtol=5e-2, atol=2.5e-1), \
        f"max abs err = {jnp.max(err)}"
    # Tighter statistical check: catches systematic per-channel scale errors
    # that a loose element-wise atol would miss.
    assert float(jnp.mean(err)) < 5e-2, f"mean abs err = {jnp.mean(err)}"
    print("KERNEL_OK")
</pallas_src>

<mosaic_0001>
module attributes {stable_mosaic.version = 11 : i64} {
  func.func @_ccr_kernel(%arg0: i32, %arg1: memref<1x400x8xbf16, #tpu.memory_space<vmem>>, %arg2: memref<336x1xf32, #tpu.memory_space<vmem>>, %arg3: memref<9x8x128xbf16, #tpu.memory_space<vmem>>, %arg4: memref<8x128xbf16, #tpu.memory_space<vmem>>, %arg5: memref<9x128x128xbf16, #tpu.memory_space<vmem>>, %arg6: memref<3x128xf32, #tpu.memory_space<vmem>>, %arg7: memref<2xf32, #tpu.memory_space<smem>>, %arg8: memref<1x336x128xbf16, #tpu.memory_space<vmem>>, %arg9: memref<400x128xbf16, #tpu.memory_space<vmem>>) attributes {dimension_semantics = [#tpu.dimension_semantics<parallel>], iteration_bounds = array<i64: 2>, scalar_prefetch = 0 : i64, scratch_operands = 1 : i64, tpu.core_type = #tpu.core_type<tc>, window_params = [{transform_indices = @transform_0, window_bounds = array<i64: 1, 400, 8>}, {pipeline_mode = #tpu.pipeline_mode<synchronous>, transform_indices = @transform_1, window_bounds = array<i64: 336, 1>}, {pipeline_mode = #tpu.pipeline_mode<synchronous>, transform_indices = @transform_2, window_bounds = array<i64: 9, 8, 128>}, {pipeline_mode = #tpu.pipeline_mode<synchronous>, transform_indices = @transform_3, window_bounds = array<i64: 8, 128>}, {pipeline_mode = #tpu.pipeline_mode<synchronous>, transform_indices = @transform_4, window_bounds = array<i64: 9, 128, 128>}, {pipeline_mode = #tpu.pipeline_mode<synchronous>, transform_indices = @transform_5, window_bounds = array<i64: 3, 128>}, {transform_indices = @transform_6, window_bounds = array<i64: 2>}, {transform_indices = @transform_7, window_bounds = array<i64: 1, 336, 128>}]} {
    %c0 = arith.constant 0 : index
    %0 = memref.load %arg7[%c0] : memref<2xf32, #tpu.memory_space<smem>>
    %c1 = arith.constant 1 : index
    %1 = memref.load %arg7[%c1] : memref<2xf32, #tpu.memory_space<smem>>
    %c0_0 = arith.constant 0 : index
    %c0_1 = arith.constant 0 : index
    %2 = vector.load %arg2[%c0_0, %c0_1] : memref<336x1xf32, #tpu.memory_space<vmem>>, vector<336x1xf32>
    %3 = vector.shape_cast %2 : vector<336x1xf32> to vector<336x1xf32>
    %4 = vector.broadcast %3 : vector<336x1xf32> to vector<336x128xf32>
    %cst = arith.constant 0.000000e+00 : f32
    %5 = vector.broadcast %cst : f32 to vector<336x128xf32>
    %c0_i32 = arith.constant 0 : i32
    %c0_i32_2 = arith.constant 0 : i32
    %c0_i32_3 = arith.constant 0 : i32
    %6 = tpu.memref_slice %arg1[%c0_i32, %c0_i32_2, %c0_i32_3] : memref<1x400x8xbf16, #tpu.memory_space<vmem>> -> memref<1x400x8xbf16, #tpu.memory_space<vmem>>
    %7 = tpu.memref_squeeze %6 : memref<1x400x8xbf16, #tpu.memory_space<vmem>> -> memref<400x8xbf16, #tpu.memory_space<vmem>>
    %c13 = arith.constant 13 : index
    %c0_4 = arith.constant 0 : index
    %8 = vector.load %7[%c13, %c0_4] : memref<400x8xbf16, #tpu.memory_space<vmem>>, vector<336x8xbf16>
    %c0_5 = arith.constant 0 : index
    %c0_6 = arith.constant 0 : index
    %c0_7 = arith.constant 0 : index
    %9 = vector.load %arg3[%c0_5, %c0_6, %c0_7] : memref<9x8x128xbf16, #tpu.memory_space<vmem>>, vector<1x8x128xbf16>
    %10 = vector.shape_cast %9 : vector<1x8x128xbf16> to vector<8x128xbf16>
    %cst_8 = arith.constant dense<0.000000e+00> : vector<336x128xf32>
    %11 = tpu.matmul %8, %10, %cst_8 {dimension_numbers = #tpu.dot_dimension_numbers<[1], [0], [0], [1], [0, 0, 1, 1], [], []>} : vector<336x8xbf16>, vector<8x128xbf16>, vector<336x128xf32> -> vector<336x128xf32>
    %12 = arith.addf %5, %11 : vector<336x128xf32>
    %c0_i32_9 = arith.constant 0 : i32
    %c0_i32_10 = arith.constant 0 : i32
    %c0_i32_11 = arith.constant 0 : i32
    %13 = tpu.memref_slice %arg1[%c0_i32_9, %c0_i32_10, %c0_i32_11] : memref<1x400x8xbf16, #tpu.memory_space<vmem>> -> memref<1x400x8xbf16, #tpu.memory_space<vmem>>
    %14 = tpu.memref_squeeze %13 : memref<1x400x8xbf16, #tpu.memory_space<vmem>> -> memref<400x8xbf16, #tpu.memory_space<vmem>>
    %c14 = arith.constant 14 : index
    %c0_12 = arith.constant 0 : index
    %15 = vector.load %14[%c14, %c0_12] : memref<400x8xbf16, #tpu.memory_space<vmem>>, vector<336x8xbf16>
    %c1_13 = arith.constant 1 : index
    %c0_14 = arith.constant 0 : index
    %c0_15 = arith.constant 0 : index
    %16 = vector.load %arg3[%c1_13, %c0_14, %c0_15] : memref<9x8x128xbf16, #tpu.memory_space<vmem>>, vector<1x8x128xbf16>
    %17 = vector.shape_cast %16 : vector<1x8x128xbf16> to vector<8x128xbf16>
    %cst_16 = arith.constant dense<0.000000e+00> : vector<336x128xf32>
    %18 = tpu.matmul %15, %17, %cst_16 {dimension_numbers = #tpu.dot_dimension_numbers<[1], [0], [0], [1], [0, 0, 1, 1], [], []>} : vector<336x8xbf16>, vector<8x128xbf16>, vector<336x128xf32> -> vector<336x128xf32>
    %19 = arith.addf %12, %18 : vector<336x128xf32>
    %c0_i32_17 = arith.constant 0 : i32
    %c0_i32_18 = arith.constant 0 : i32
    %c0_i32_19 = arith.constant 0 : i32
    %20 = tpu.memref_slice %arg1[%c0_i32_17, %c0_i32_18, %c0_i32_19] : memref<1x400x8xbf16, #tpu.memory_space<vmem>> -> memref<1x400x8xbf16, #tpu.memory_space<vmem>>
    %21 = tpu.memref_squeeze %20 : memref<1x400x8xbf16, #tpu.memory_space<vmem>> -> memref<400x8xbf16, #tpu.memory_space<vmem>>
    %c15 = arith.constant 15 : index
    %c0_20 = arith.constant 0 : index
    %22 = vector.load %21[%c15, %c0_20] : memref<400x8xbf16, #tpu.memory_space<vmem>>, vector<336x8xbf16>
    %c2 = arith.constant 2 : index
    %c0_21 = arith.constant 0 : index
    %c0_22 = arith.constant 0 : index
    %23 = vector.load %arg3[%c2, %c0_21, %c0_22] : memref<9x8x128xbf16, #tpu.memory_space<vmem>>, vector<1x8x128xbf16>
    %24 = vector.shape_cast %23 : vector<1x8x128xbf16> to vector<8x128xbf16>
    %cst_23 = arith.constant dense<0.000000e+00> : vector<336x128xf32>
    %25 = tpu.matmul %22, %24, %cst_23 {dimension_numbers = #tpu.dot_dimension_numbers<[1], [0], [0], [1], [0, 0, 1, 1], [], []>} : vector<336x8xbf16>, vector<8x128xbf16>, vector<336x128xf32> -> vector<336x128xf32>
    %26 = arith.addf %19, %25 : vector<336x128xf32>
    %c0_i32_24 = arith.constant 0 : i32
    %c0_i32_25 = arith.constant 0 : i32
    %c0_i32_26 = arith.constant 0 : i32
    %27 = tpu.memref_slice %arg1[%c0_i32_24, %c0_i32_25, %c0_i32_26] : memref<1x400x8xbf16, #tpu.memory_space<vmem>> -> memref<1x400x8xbf16, #tpu.memory_space<vmem>>
    %28 = tpu.memref_squeeze %27 : memref<1x400x8xbf16, #tpu.memory_space<vmem>> -> memref<400x8xbf16, #tpu.memory_space<vmem>>
    %c31 = arith.constant 31 : index
    %c0_27 = arith.constant 0 : index
    %29 = vector.load %28[%c31, %c0_27] : memref<400x8xbf16, #tpu.memory_space<vmem>>, vector<336x8xbf16>
    %c3 = arith.constant 3 : index
    %c0_28 = arith.constant 0 : index
    %c0_29 = arith.constant 0 : index
    %30 = vector.load %arg3[%c3, %c0_28, %c0_29] : memref<9x8x128xbf16, #tpu.memory_space<vmem>>, vector<1x8x128xbf16>
    %31 = vector.shape_cast %30 : vector<1x8x128xbf16> to vector<8x128xbf16>
    %cst_30 = arith.constant dense<0.000000e+00> : vector<336x128xf32>
    %32 = tpu.matmul %29, %31, %cst_30 {dimension_numbers = #tpu.dot_dimension_numbers<[1], [0], [0], [1], [0, 0, 1, 1], [], []>} : vector<336x8xbf16>, vector<8x128xbf16>, vector<336x128xf32> -> vector<336x128xf32>
    %33 = arith.addf %26, %32 : vector<336x128xf32>
    %c0_i32_31 = arith.constant 0 : i32
    %c0_i32_32 = arith.constant 0 : i32
    %c0_i32_33 = arith.constant 0 : i32
    %34 = tpu.memref_slice %arg1[%c0_i32_31, %c0_i32_32, %c0_i32_33] : memref<1x400x8xbf16, #tpu.memory_space<vmem>> -> memref<1x400x8xbf16, #tpu.memory_space<vmem>>
    %35 = tpu.memref_squeeze %34 : memref<1x400x8xbf16, #tpu.memory_space<vmem>> -> memref<400x8xbf16, #tpu.memory_space<vmem>>
    %c32 = arith.constant 32 : index
    %c0_34 = arith.constant 0 : index
    %36 = vector.load %35[%c32, %c0_34] : memref<400x8xbf16, #tpu.memory_space<vmem>>, vector<336x8xbf16>
    %c4 = arith.constant 4 : index
    %c0_35 = arith.constant 0 : index
    %c0_36 = arith.constant 0 : index
    %37 = vector.load %arg3[%c4, %c0_35, %c0_36] : memref<9x8x128xbf16, #tpu.memory_space<vmem>>, vector<1x8x128xbf16>
    %38 = vector.shape_cast %37 : vector<1x8x128xbf16> to vector<8x128xbf16>
    %cst_37 = arith.constant dense<0.000000e+00> : vector<336x128xf32>
    %39 = tpu.matmul %36, %38, %cst_37 {dimension_numbers = #tpu.dot_dimension_numbers<[1], [0], [0], [1], [0, 0, 1, 1], [], []>} : vector<336x8xbf16>, vector<8x128xbf16>, vector<336x128xf32> -> vector<336x128xf32>
    %40 = arith.addf %33, %39 : vector<336x128xf32>
    %c0_i32_38 = arith.constant 0 : i32
    %c0_i32_39 = arith.constant 0 : i32
    %c0_i32_40 = arith.constant 0 : i32
    %41 = tpu.memref_slice %arg1[%c0_i32_38, %c0_i32_39, %c0_i32_40] : memref<1x400x8xbf16, #tpu.memory_space<vmem>> -> memref<1x400x8xbf16, #tpu.memory_space<vmem>>
    %42 = tpu.memref_squeeze %41 : memref<1x400x8xbf16, #tpu.memory_space<vmem>> -> memref<400x8xbf16, #tpu.memory_space<vmem>>
    %c33 = arith.constant 33 : index
    %c0_41 = arith.constant 0 : index
    %43 = vector.load %42[%c33, %c0_41] : memref<400x8xbf16, #tpu.memory_space<vmem>>, vector<336x8xbf16>
    %c5 = arith.constant 5 : index
    %c0_42 = arith.constant 0 : index
    %c0_43 = arith.constant 0 : index
    %44 = vector.load %arg3[%c5, %c0_42, %c0_43] : memref<9x8x128xbf16, #tpu.memory_space<vmem>>, vector<1x8x128xbf16>
    %45 = vector.shape_cast %44 : vector<1x8x128xbf16> to vector<8x128xbf16>
    %cst_44 = arith.constant dense<0.000000e+00> : vector<336x128xf32>
    %46 = tpu.matmul %43, %45, %cst_44 {dimension_numbers = #tpu.dot_dimension_numbers<[1], [0], [0], [1], [0, 0, 1, 1], [], []>} : vector<336x8xbf16>, vector<8x128xbf16>, vector<336x128xf32> -> vector<336x128xf32>
    %47 = arith.addf %40, %46 : vector<336x128xf32>
    %c0_i32_45 = arith.constant 0 : i32
    %c0_i32_46 = arith.constant 0 : i32
    %c0_i32_47 = arith.constant 0 : i32
    %48 = tpu.memref_slice %arg1[%c0_i32_45, %c0_i32_46, %c0_i32_47] : memref<1x400x8xbf16, #tpu.memory_space<vmem>> -> memref<1x400x8xbf16, #tpu.memory_space<vmem>>
    %49 = tpu.memref_squeeze %48 : memref<1x400x8xbf16, #tpu.memory_space<vmem>> -> memref<400x8xbf16, #tpu.memory_space<vmem>>
    %c49 = arith.constant 49 : index
    %c0_48 = arith.constant 0 : index
    %50 = vector.load %49[%c49, %c0_48] : memref<400x8xbf16, #tpu.memory_space<vmem>>, vector<336x8xbf16>
    %c6 = arith.constant 6 : index
    %c0_49 = arith.constant 0 : index
    %c0_50 = arith.constant 0 : index
    %51 = vector.load %arg3[%c6, %c0_49, %c0_50] : memref<9x8x128xbf16, #tpu.memory_space<vmem>>, vector<1x8x128xbf16>
    %52 = vector.shape_cast %51 : vector<1x8x128xbf16> to vector<8x128xbf16>
    %cst_51 = arith.constant dense<0.000000e+00> : vector<336x128xf32>
    %53 = tpu.matmul %50, %52, %cst_51 {dimension_numbers = #tpu.dot_dimension_numbers<[1], [0], [0], [1], [0, 0, 1, 1], [], []>} : vector<336x8xbf16>, vector<8x128xbf16>, vector<336x128xf32> -> vector<336x128xf32>
    %54 = arith.addf %47, %53 : vector<336x128xf32>
    %c0_i32_52 = arith.constant 0 : i32
    %c0_i32_53 = arith.constant 0 : i32
    %c0_i32_54 = arith.constant 0 : i32
    %55 = tpu.memref_slice %arg1[%c0_i32_52, %c0_i32_53, %c0_i32_54] : memref<1x400x8xbf16, #tpu.memory_space<vmem>> -> memref<1x400x8xbf16, #tpu.memory_space<vmem>>
    %56 = tpu.memref_squeeze %55 : memref<1x400x8xbf16, #tpu.memory_space<vmem>> -> memref<400x8xbf16, #tpu.memory_space<vmem>>
    %c50 = arith.constant 50 : index
    %c0_55 = arith.constant 0 : index
    %57 = vector.load %56[%c50, %c0_55] : memref<400x8xbf16, #tpu.memory_space<vmem>>, vector<336x8xbf16>
    %c7 = arith.constant 7 : index
    %c0_56 = arith.constant 0 : index
    %c0_57 = arith.constant 0 : index
    %58 = vector.load %arg3[%c7, %c0_56, %c0_57] : memref<9x8x128xbf16, #tpu.memory_space<vmem>>, vector<1x8x128xbf16>
    %59 = vector.shape_cast %58 : vector<1x8x128xbf16> to vector<8x128xbf16>
    %cst_58 = arith.constant dense<0.000000e+00> : vector<336x128xf32>
    %60 = tpu.matmul %57, %59, %cst_58 {dimension_numbers = #tpu.dot_dimension_numbers<[1], [0], [0], [1], [0, 0, 1, 1], [], []>} : vector<336x8xbf16>, vector<8x128xbf16>, vector<336x128xf32> -> vector<336x128xf32>
    %61 = arith.addf %54, %60 : vector<336x128xf32>
    %c0_i32_59 = arith.constant 0 : i32
    %c0_i32_60 = arith.constant 0 : i32
    %c0_i32_61 = arith.constant 0 : i32
    %62 = tpu.memref_slice %arg1[%c0_i32_59, %c0_i32_60, %c0_i32_61] : memref<1x400x8xbf16, #tpu.memory_space<vmem>> -> memref<1x400x8xbf16, #tpu.memory_space<vmem>>
    %63 = tpu.memref_squeeze %62 : memref<1x400x8xbf16, #tpu.memory_space<vmem>> -> memref<400x8xbf16, #tpu.memory_space<vmem>>
    %c51 = arith.constant 51 : index
    %c0_62 = arith.constant 0 : index
    %64 = vector.load %63[%c51, %c0_62] : memref<400x8xbf16, #tpu.memory_space<vmem>>, vector<336x8xbf16>
    %c8 = arith.constant 8 : index
    %c0_63 = arith.constant 0 : index
    %c0_64 = arith.constant 0 : index
    %65 = vector.load %arg3[%c8, %c0_63, %c0_64] : memref<9x8x128xbf16, #tpu.memory_space<vmem>>, vector<1x8x128xbf16>
    %66 = vector.shape_cast %65 : vector<1x8x128xbf16> to vector<8x128xbf16>
    %cst_65 = arith.constant dense<0.000000e+00> : vector<336x128xf32>
    %67 = tpu.matmul %64, %66, %cst_65 {dimension_numbers = #tpu.dot_dimension_numbers<[1], [0], [0], [1], [0, 0, 1, 1], [], []>} : vector<336x8xbf16>, vector<8x128xbf16>, vector<336x128xf32> -> vector<336x128xf32>
    %68 = arith.addf %61, %67 : vector<336x128xf32>
    %c0_66 = arith.constant 0 : index
    %c0_67 = arith.constant 0 : index
    %69 = vector.load %arg6[%c0_66, %c0_67] : memref<3x128xf32, #tpu.memory_space<vmem>>, vector<1x128xf32>
    %70 = vector.broadcast %69 : vector<1x128xf32> to vector<336x128xf32>
    %71 = arith.addf %68, %70 : vector<336x128xf32>
    %cst_68 = arith.constant 0.000000e+00 : f32
    %72 = vector.broadcast %cst_68 : f32 to vector<336x128xf32>
    %73 = arith.cmpf ogt, %71, %72 : vector<336x128xf32>
    %74 = vector.broadcast %0 : f32 to vector<336x128xf32>
    %75 = arith.mulf %74, %71 : vector<336x128xf32>
    %76 = arith.select %73, %71, %75 : vector<336x128xi1>, vector<336x128xf32>
    %77 = arith.mulf %76, %4 : vector<336x128xf32>
    %cst_69 = arith.constant 0.000000e+00 : bf16
    %78 = vector.broadcast %cst_69 : bf16 to vector<32x128xbf16>
    %c0_70 = arith.constant 0 : index
    %c0_71 = arith.constant 0 : index
    %79 = vector.load %arg9[%c0_70, %c0_71] : memref<400x128xbf16, #tpu.memory_space<vmem>>, vector<32x128xbf16>
    tpu.vector_store %arg9[%c0_70, %c0_71], %78 {strides = array<i32>} : memref<400x128xbf16, #tpu.memory_space<vmem>>, vector<32x128xbf16>,
    %cst_72 = arith.constant 0.000000e+00 : bf16
    %80 = vector.broadcast %cst_72 : bf16 to vector<32x128xbf16>
    %c368 = arith.constant 368 : index
    %c0_73 = arith.constant 0 : index
    %81 = vector.load %arg9[%c368, %c0_73] : memref<400x128xbf16, #tpu.memory_space<vmem>>, vector<32x128xbf16>
    tpu.vector_store %arg9[%c368, %c0_73], %80 {strides = array<i32>} : memref<400x128xbf16, #tpu.memory_space<vmem>>, vector<32x128xbf16>,
    %82 = arith.truncf %77 : vector<336x128xf32> to vector<336x128xbf16>
    %c32_74 = arith.constant 32 : index
    %c0_75 = arith.constant 0 : index
    %83 = vector.load %arg9[%c32_74, %c0_75] : memref<400x128xbf16, #tpu.memory_space<vmem>>, vector<336x128xbf16>
    tpu.vector_store %arg9[%c32_74, %c0_75], %82 {strides = array<i32>} : memref<400x128xbf16, #tpu.memory_space<vmem>>, vector<336x128xbf16>,
    %c0_i32_76 = arith.constant 0 : i32
    %c0_i32_77 = arith.constant 0 : i32
    %c0_i32_78 = arith.constant 0 : i32
    %84 = tpu.memref_slice %arg1[%c0_i32_76, %c0_i32_77, %c0_i32_78] : memref<1x400x8xbf16, #tpu.memory_space<vmem>> -> memref<1x400x8xbf16, #tpu.memory_space<vmem>>
    %85 = tpu.memref_squeeze %84 : memref<1x400x8xbf16, #tpu.memory_space<vmem>> -> memref<400x8xbf16, #tpu.memory_space<vmem>>
    %c32_79 = arith.constant 32 : index
    %c0_80 = arith.constant 0 : index
    %86 = vector.load %85[%c32_79, %c0_80] : memref<400x8xbf16, #tpu.memory_space<vmem>>, vector<336x8xbf16>
    %c0_81 = arith.constant 0 : index
    %c0_82 = arith.constant 0 : index
    %87 = vector.load %arg4[%c0_81, %c0_82] : memref<8x128xbf16, #tpu.memory_space<vmem>>, vector<8x128xbf16>
    %cst_83 = arith.constant dense<0.000000e+00> : vector<336x128xf32>
    %88 = tpu.matmul %86, %87, %cst_83 {dimension_numbers = #tpu.dot_dimension_numbers<[1], [0], [0], [1], [0, 0, 1, 1], [], []>} : vector<336x8xbf16>, vector<8x128xbf16>, vector<336x128xf32> -> vector<336x128xf32>
    %c1_84 = arith.constant 1 : index
    %c0_85 = arith.constant 0 : index
    %89 = vector.load %arg6[%c1_84, %c0_85] : memref<3x128xf32, #tpu.memory_space<vmem>>, vector<1x128xf32>
    %90 = vector.broadcast %89 : vector<1x128xf32> to vector<336x128xf32>
    %91 = arith.addf %88, %90 : vector<336x128xf32>
    %92 = arith.truncf %91 : vector<336x128xf32> to vector<336x128xbf16>
    %cst_86 = arith.constant 0.000000e+00 : f32
    %93 = vector.broadcast %cst_86 : f32 to vector<336x128xf32>
    %c13_87 = arith.constant 13 : index
    %c0_88 = arith.constant 0 : index
    %94 = vector.load %arg9[%c13_87, %c0_88] : memref<400x128xbf16, #tpu.memory_space<vmem>>, vector<336x128xbf16>
    %c0_89 = arith.constant 0 : index
    %c0_90 = arith.constant 0 : index
    %c0_91 = arith.constant 0 : index
    %95 = vector.load %arg5[%c0_89, %c0_90, %c0_91] : memref<9x128x128xbf16, #tpu.memory_space<vmem>>, vector<1x128x128xbf16>
    %96 = vector.shape_cast %95 : vector<1x128x128xbf16> to vector<128x128xbf16>
    %cst_92 = arith.constant dense<0.000000e+00> : vector<336x128xf32>
    %97 = tpu.matmul %94, %96, %cst_92 {dimension_numbers = #tpu.dot_dimension_numbers<[1], [0], [0], [1], [0, 0, 1, 1], [], []>} : vector<336x128xbf16>, vector<128x128xbf16>, vector<336x128xf32> -> vector<336x128xf32>
    %98 = arith.addf %93, %97 : vector<336x128xf32>
    %c14_93 = arith.constant 14 : index
    %c0_94 = arith.constant 0 : index
    %99 = vector.load %arg9[%c14_93, %c0_94] : memref<400x128xbf16, #tpu.memory_space<vmem>>, vector<336x128xbf16>
    %c1_95 = arith.constant 1 : index
    %c0_96 = arith.constant 0 : index
    %c0_97 = arith.constant 0 : index
    %100 = vector.load %arg5[%c1_95, %c0_96, %c0_97] : memref<9x128x128xbf16, #tpu.memory_space<vmem>>, vector<1x128x128xbf16>
    %101 = vector.shape_cast %100 : vector<1x128x128xbf16> to vector<128x128xbf16>
    %cst_98 = arith.constant dense<0.000000e+00> : vector<336x128xf32>
    %102 = tpu.matmul %99, %101, %cst_98 {dimension_numbers = #tpu.dot_dimension_numbers<[1], [0], [0], [1], [0, 0, 1, 1], [], []>} : vector<336x128xbf16>, vector<128x128xbf16>, vector<336x128xf32> -> vector<336x128xf32>
    %103 = arith.addf %98, %102 : vector<336x128xf32>
    %c15_99 = arith.constant 15 : index
    %c0_100 = arith.constant 0 : index
    %104 = vector.load %arg9[%c15_99, %c0_100] : memref<400x128xbf16, #tpu.memory_space<vmem>>, vector<336x128xbf16>
    %c2_101 = arith.constant 2 : index
    %c0_102 = arith.constant 0 : index
    %c0_103 = arith.constant 0 : index
    %105 = vector.load %arg5[%c2_101, %c0_102, %c0_103] : memref<9x128x128xbf16, #tpu.memory_space<vmem>>, vector<1x128x128xbf16>
    %106 = vector.shape_cast %105 : vector<1x128x128xbf16> to vector<128x128xbf16>
    %cst_104 = arith.constant dense<0.000000e+00> : vector<336x128xf32>
    %107 = tpu.matmul %104, %106, %cst_104 {dimension_numbers = #tpu.dot_dimension_numbers<[1], [0], [0], [1], [0, 0, 1, 1], [], []>} : vector<336x128xbf16>, vector<128x128xbf16>, vector<336x128xf32> -> vector<336x128xf32>
    %108 = arith.addf %103, %107 : vector<336x128xf32>
    %c31_105 = arith.constant 31 : index
    %c0_106 = arith.constant 0 : index
    %109 = vector.load %arg9[%c31_105, %c0_106] : memref<400x128xbf16, #tpu.memory_space<vmem>>, vector<336x128xbf16>
    %c3_107 = arith.constant 3 : index
    %c0_108 = arith.constant 0 : index
    %c0_109 = arith.constant 0 : index
    %110 = vector.load %arg5[%c3_107, %c0_108, %c0_109] : memref<9x128x128xbf16, #tpu.memory_space<vmem>>, vector<1x128x128xbf16>
    %111 = vector.shape_cast %110 : vector<1x128x128xbf16> to vector<128x128xbf16>
    %cst_110 = arith.constant dense<0.000000e+00> : vector<336x128xf32>
    %112 = tpu.matmul %109, %111, %cst_110 {dimension_numbers = #tpu.dot_dimension_numbers<[1], [0], [0], [1], [0, 0, 1, 1], [], []>} : vector<336x128xbf16>, vector<128x128xbf16>, vector<336x128xf32> -> vector<336x128xf32>
    %113 = arith.addf %108, %112 : vector<336x128xf32>
    %c32_111 = arith.constant 32 : index
    %c0_112 = arith.constant 0 : index
    %114 = vector.load %arg9[%c32_111, %c0_112] : memref<400x128xbf16, #tpu.memory_space<vmem>>, vector<336x128xbf16>
    %c4_113 = arith.constant 4 : index
    %c0_114 = arith.constant 0 : index
    %c0_115 = arith.constant 0 : index
    %115 = vector.load %arg5[%c4_113, %c0_114, %c0_115] : memref<9x128x128xbf16, #tpu.memory_space<vmem>>, vector<1x128x128xbf16>
    %116 = vector.shape_cast %115 : vector<1x128x128xbf16> to vector<128x128xbf16>
    %cst_116 = arith.constant dense<0.000000e+00> : vector<336x128xf32>
    %117 = tpu.matmul %114, %116, %cst_116 {dimension_numbers = #tpu.dot_dimension_numbers<[1], [0], [0], [1], [0, 0, 1, 1], [], []>} : vector<336x128xbf16>, vector<128x128xbf16>, vector<336x128xf32> -> vector<336x128xf32>
    %118 = arith.addf %113, %117 : vector<336x128xf32>
    %c33_117 = arith.constant 33 : index
    %c0_118 = arith.constant 0 : index
    %119 = vector.load %arg9[%c33_117, %c0_118] : memref<400x128xbf16, #tpu.memory_space<vmem>>, vector<336x128xbf16>
    %c5_119 = arith.constant 5 : index
    %c0_120 = arith.constant 0 : index
    %c0_121 = arith.constant 0 : index
    %120 = vector.load %arg5[%c5_119, %c0_120, %c0_121] : memref<9x128x128xbf16, #tpu.memory_space<vmem>>, vector<1x128x128xbf16>
    %121 = vector.shape_cast %120 : vector<1x128x128xbf16> to vector<128x128xbf16>
    %cst_122 = arith.constant dense<0.000000e+00> : vector<336x128xf32>
    %122 = tpu.matmul %119, %121, %cst_122 {dimension_numbers = #tpu.dot_dimension_numbers<[1], [0], [0], [1], [0, 0, 1, 1], [], []>} : vector<336x128xbf16>, vector<128x128xbf16>, vector<336x128xf32> -> vector<336x128xf32>
    %123 = arith.addf %118, %122 : vector<336x128xf32>
    %c49_123 = arith.constant 49 : index
    %c0_124 = arith.constant 0 : index
    %124 = vector.load %arg9[%c49_123, %c0_124] : memref<400x128xbf16, #tpu.memory_space<vmem>>, vector<336x128xbf16>
    %c6_125 = arith.constant 6 : index
    %c0_126 = arith.constant 0 : index
    %c0_127 = arith.constant 0 : index
    %125 = vector.load %arg5[%c6_125, %c0_126, %c0_127] : memref<9x128x128xbf16, #tpu.memory_space<vmem>>, vector<1x128x128xbf16>
    %126 = vector.shape_cast %125 : vector<1x128x128xbf16> to vector<128x128xbf16>
    %cst_128 = arith.constant dense<0.000000e+00> : vector<336x128xf32>
    %127 = tpu.matmul %124, %126, %cst_128 {dimension_numbers = #tpu.dot_dimension_numbers<[1], [0], [0], [1], [0, 0, 1, 1], [], []>} : vector<336x128xbf16>, vector<128x128xbf16>, vector<336x128xf32> -> vector<336x128xf32>
    %128 = arith.addf %123, %127 : vector<336x128xf32>
    %c50_129 = arith.constant 50 : index
    %c0_130 = arith.constant 0 : index
    %129 = vector.load %arg9[%c50_129, %c0_130] : memref<400x128xbf16, #tpu.memory_space<vmem>>, vector<336x128xbf16>
    %c7_131 = arith.constant 7 : index
    %c0_132 = arith.constant 0 : index
    %c0_133 = arith.constant 0 : index
    %130 = vector.load %arg5[%c7_131, %c0_132, %c0_133] : memref<9x128x128xbf16, #tpu.memory_space<vmem>>, vector<1x128x128xbf16>
    %131 = vector.shape_cast %130 : vector<1x128x128xbf16> to vector<128x128xbf16>
    %cst_134 = arith.constant dense<0.000000e+00> : vector<336x128xf32>
    %132 = tpu.matmul %129, %131, %cst_134 {dimension_numbers = #tpu.dot_dimension_numbers<[1], [0], [0], [1], [0, 0, 1, 1], [], []>} : vector<336x128xbf16>, vector<128x128xbf16>, vector<336x128xf32> -> vector<336x128xf32>
    %133 = arith.addf %128, %132 : vector<336x128xf32>
    %c51_135 = arith.constant 51 : index
    %c0_136 = arith.constant 0 : index
    %134 = vector.load %arg9[%c51_135, %c0_136] : memref<400x128xbf16, #tpu.memory_space<vmem>>, vector<336x128xbf16>
    %c8_137 = arith.constant 8 : index
    %c0_138 = arith.constant 0 : index
    %c0_139 = arith.constant 0 : index
    %135 = vector.load %arg5[%c8_137, %c0_138, %c0_139] : memref<9x128x128xbf16, #tpu.memory_space<vmem>>, vector<1x128x128xbf16>
    %136 = vector.shape_cast %135 : vector<1x128x128xbf16> to vector<128x128xbf16>
    %cst_140 = arith.constant dense<0.000000e+00> : vector<336x128xf32>
    %137 = tpu.matmul %134, %136, %cst_140 {dimension_numbers = #tpu.dot_dimension_numbers<[1], [0], [0], [1], [0, 0, 1, 1], [], []>} : vector<336x128xbf16>, vector<128x128xbf16>, vector<336x128xf32> -> vector<336x128xf32>
    %138 = arith.addf %133, %137 : vector<336x128xf32>
    %c2_141 = arith.constant 2 : index
    %c0_142 = arith.constant 0 : index
    %139 = vector.load %arg6[%c2_141, %c0_142] : memref<3x128xf32, #tpu.memory_space<vmem>>, vector<1x128xf32>
    %140 = vector.broadcast %139 : vector<1x128xf32> to vector<336x128xf32>
    %141 = arith.addf %138, %140 : vector<336x128xf32>
    %cst_143 = arith.constant 0.000000e+00 : f32
    %142 = vector.broadcast %cst_143 : f32 to vector<336x128xf32>
    %143 = arith.cmpf ogt, %141, %142 : vector<336x128xf32>
    %144 = vector.broadcast %1 : f32 to vector<336x128xf32>
    %145 = arith.mulf %144, %141 : vector<336x128xf32>
    %146 = arith.select %143, %141, %145 : vector<336x128xi1>, vector<336x128xf32>
    %147 = arith.extf %92 : vector<336x128xbf16> to vector<336x128xf32>
    %148 = arith.addf %146, %147 : vector<336x128xf32>
    %149 = arith.mulf %4, %148 : vector<336x128xf32>
    %150 = arith.truncf %149 : vector<336x128xf32> to vector<336x128xbf16>
    %c0_144 = arith.constant 0 : index
    %c0_145 = arith.constant 0 : index
    %c0_146 = arith.constant 0 : index
    %151 = vector.load %arg8[%c0_144, %c0_145, %c0_146] : memref<1x336x128xbf16, #tpu.memory_space<vmem>>, vector<1x336x128xbf16>
    %152 = vector.shape_cast %151 : vector<1x336x128xbf16> to vector<336x128xbf16>
    %153 = vector.shape_cast %150 : vector<336x128xbf16> to vector<1x336x128xbf16>
    tpu.vector_store %arg8[%c0_144, %c0_145, %c0_146], %153 {strides = array<i32>} : memref<1x336x128xbf16, #tpu.memory_space<vmem>>, vector<1x336x128xbf16>,
    return
  }
  func.func @transform_0(%arg0: i32) -> (i32, i32, i32) {
    %c0_i32 = arith.constant 0 : i32
    %c0_i32_0 = arith.constant 0 : i32
    %c0_i32_1 = arith.constant 0 : i32
    return %arg0, %c0_i32, %c0_i32_0 : i32, i32, i32
  }
  func.func @transform_1(%arg0: i32) -> (i32, i32) {
    %c0_i32 = arith.constant 0 : i32
    %c0_i32_0 = arith.constant 0 : i32
    %c0_i32_1 = arith.constant 0 : i32
    return %c0_i32, %c0_i32_0 : i32, i32
  }
  func.func @transform_2(%arg0: i32) -> (i32, i32, i32) {
    %c0_i32 = arith.constant 0 : i32
    %c0_i32_0 = arith.constant 0 : i32
    %c0_i32_1 = arith.constant 0 : i32
    %c0_i32_2 = arith.constant 0 : i32
    return %c0_i32, %c0_i32_0, %c0_i32_1 : i32, i32, i32
  }
  func.func @transform_3(%arg0: i32) -> (i32, i32) {
    %c0_i32 = arith.constant 0 : i32
    %c0_i32_0 = arith.constant 0 : i32
    %c0_i32_1 = arith.constant 0 : i32
    return %c0_i32, %c0_i32_0 : i32, i32
  }
  func.func @transform_4(%arg0: i32) -> (i32, i32, i32) {
    %c0_i32 = arith.constant 0 : i32
    %c0_i32_0 = arith.constant 0 : i32
    %c0_i32_1 = arith.constant 0 : i32
    %c0_i32_2 = arith.constant 0 : i32
    return %c0_i32, %c0_i32_0, %c0_i32_1 : i32, i32, i32
  }
  func.func @transform_5(%arg0: i32) -> (i32, i32) {
    %c0_i32 = arith.constant 0 : i32
    %c0_i32_0 = arith.constant 0 : i32
    %c0_i32_1 = arith.constant 0 : i32
    return %c0_i32, %c0_i32_0 : i32, i32
  }
  func.func @transform_6(%arg0: i32) -> i32 {
    %c0_i32 = arith.constant 0 : i32
    %c0_i32_0 = arith.constant 0 : i32
    return %c0_i32 : i32
  }
  func.func @transform_7(%arg0: i32) -> (i32, i32, i32) {
    %c0_i32 = arith.constant 0 : i32
    %c0_i32_0 = arith.constant 0 : i32
    %c0_i32_1 = arith.constant 0 : i32
    return %arg0, %c0_i32, %c0_i32_0 : i32, i32, i32
  }
}

</mosaic_0001>

<llo_original>
// kernel: tpu_custom_call.1
$region0: #{tpu_custom_call.1}
  #allocation0 [shape = 'u32[]', space=smem, size = 0x4, offset = 0x4, fixed_abs, tag = 'smem constant byte address 0x4 - core index']
  #allocation1 [shape = 'u32[144,128]{1,0:T(1,128)}', space=vmem, size = 0x12000, scoped, tag = 'internal scratch']
  #allocation2 [shape = 'bf16[400,128]{1,0:T(8,128)(2,1)}', space=vmem, size = 0x19000, scoped, tag = 'scratch operand']
  %s0 = inlined_call_operand.vmem [shape: bf16[2,400,8], index: 0, kind: input, shape index: {}]
  %s1 = inlined_call_operand.vmem [shape: f32[336,1], index: 1, kind: input, shape index: {}]
  %s2 = inlined_call_operand.vmem [shape: bf16[9,8,128], index: 2, kind: input, shape index: {}]
  %s3 = inlined_call_operand.vmem [shape: bf16[8,128], index: 3, kind: input, shape index: {}]
  %s4 = inlined_call_operand.vmem [shape: bf16[9,128,128], index: 4, kind: input, shape index: {}]
  %s5 = inlined_call_operand.vmem [shape: f32[3,128], index: 5, kind: input, shape index: {}]
  %s6 = inlined_call_operand.vmem [shape: f32[2], index: 6, kind: input, shape index: {}]
  %s7 = inlined_call_operand.hbm [shape: bf16[2,336,128], index: 7, kind: output, shape index: {}]
  %s8 = sld [smem:[#allocation0]]
  $region65: #{tpu_custom_call.1} parent=0
    _
  %s10 = ssub.s32 1, %s8
  %s11 = scalar_select 0, %s10, %s8
  $region1: #{tpu_custom_call.1} parent=0
    #allocation3 [shape = 'u8[512]{0}', space=smem, size = 0x200, scoped, tag = 'input window, operand 6, single buffered']
    #allocation4 [shape = 's32[2]{0}', space=sflag, size = 0x8, scoped, tag = 'scoped memory for tpu_custom_call.1']
    #allocation5 [shape = 's32[2]{0}', space=sflag, size = 0x8, scoped, tag = 'scoped memory for tpu_custom_call.1']
    #allocation6 [shape = 'u8[172032]{0}', space=vmem, size = 0x2a000, scoped, tag = 'output window, operand 0']
    %12 = vsyncpa [#allocation5], 0
    %13 = vsyncpa [#allocation4], 0
    %s14 = scalar_lea.sflag [#allocation4], 1
    %15 = vsyncpa %s14, 0
    loop: start=0, step=1, limit=4
    $region2: #{tpu_custom_call.1} parent=1 // loop_pre_header
      _
    $region3: #{tpu_custom_call.1} parent=1 // loop_header
      %s17 = sphi 0, %s21
      %p18 = scmp.ge.s32.totalorder %s17, 4
      %s27 = sphi 0, %s29
      %s30 = sphi 0, %s27
      %s31 = sphi 0, %s30
      %s47 = sphi 0, %s31
      %s51 = sphi 0, %s51
      %s53 = sphi 0, %s51
      %s54 = sphi 0, %s53
      %s68 = sphi 0, %s54
      %s72 = sphi 0, %s72
      %s74 = sphi 0, %s72
      %s75 = sphi 0, %s74
      %s89 = sphi 0, %s75
      %s93 = sphi 0, %s93
      %s95 = sphi 0, %s93
      %s96 = sphi 0, %s95
      %s110 = sphi 0, %s96
      %s114 = sphi 0, %s114
      %s116 = sphi 0, %s114
      %s117 = sphi 0, %s116
      %s131 = sphi 0, %s117
      %s135 = sphi 0, %s135
      %s137 = sphi 0, %s135
      %s138 = sphi 0, %s137
      %s152 = sphi 0, %s138
      %s156 = sphi 0, %s156
      %s158 = sphi 0, %s156
      %s159 = sphi 0, %s158
      %s173 = sphi 0, %s159
      %s179 = sphi 0, %s181
      %s182 = sphi 0, %s179
      %s183 = sphi 0, %s182
      %s199 = sphi 0, %s183
    $region4: #{tpu_custom_call.1} parent=1 // loop_header_branch
      %20 = sbr.rel (%p18) target = $region8
    $region5: #{tpu_custom_call.1} parent=1 // loop_body
      %s22 = ssub.s32 %s17, 1
      %s23 = ssub.s32 %s17, 2
      %s24 = sadd.s32 %s17, 1
      %s25 = ssub.s32 %s17, %s24
      %p26 = scmp.eq.s32.totalorder %s25, 0
      %s28 = sadd.s32 %s27, 1
      %s29 = scalar_select %p26, %s27, %s28
      %p32 = pneg %p26
      %p33 = scmp.eq.s32.totalorder %s17, 1
      %p34 = por %p32, %p33
      %p35 = scmp.ne.s32.totalorder %s27, %s30
      %p36 = scmp.eq.s32.totalorder %s17, 0
      %p37 = por %p35, %p36
      %p38 = scmp.ne.s32.totalorder %s27, %s30
      %p39 = scmp.eq.s32.totalorder %s22, 1
      %p40 = por %p38, %p39
      %p41 = scmp.ne.s32.totalorder %s30, %s31
      %p42 = scmp.eq.s32.totalorder %s22, 0
      %p43 = por %p41, %p42
      %p44 = scmp.ne.s32.totalorder %s30, %s31
      %p45 = scmp.eq.s32.totalorder %s23, 1
      %p46 = por %p44, %p45
      %p48 = scmp.ne.s32.totalorder %s31, %s47
      %p49 = scmp.eq.s32.totalorder %s23, 0
      %p50 = por %p48, %p49
      %s52 = sadd.s32 %s51, 1
      %p55 = scmp.eq.s32.totalorder %s17, 1
      %p56 = scmp.ne.s32.totalorder %s51, %s53
      %p57 = scmp.eq.s32.totalorder %s17, 0
      %p58 = por %p56, %p57
      %p59 = scmp.ne.s32.totalorder %s51, %s53
      %p60 = scmp.eq.s32.totalorder %s22, 1
      %p61 = por %p59, %p60
      %p62 = scmp.ne.s32.totalorder %s53, %s54
      %p63 = scmp.eq.s32.totalorder %s22, 0
      %p64 = por %p62, %p63
      %p65 = scmp.ne.s32.totalorder %s53, %s54
      %p66 = scmp.eq.s32.totalorder %s23, 1
      %p67 = por %p65, %p66
      %p69 = scmp.ne.s32.totalorder %s54, %s68
      %p70 = scmp.eq.s32.totalorder %s23, 0
      %p71 = por %p69, %p70
      %s73 = sadd.s32 %s72, 1
      %p76 = scmp.eq.s32.totalorder %s17, 1
      %p77 = scmp.ne.s32.totalorder %s72, %s74
      %p78 = scmp.eq.s32.totalorder %s17, 0
      %p79 = por %p77, %p78
      %p80 = scmp.ne.s32.totalorder %s72, %s74
      %p81 = scmp.eq.s32.totalorder %s22, 1
      %p82 = por %p80, %p81
      %p83 = scmp.ne.s32.totalorder %s74, %s75
      %p84 = scmp.eq.s32.totalorder %s22, 0
      %p85 = por %p83, %p84
      %p86 = scmp.ne.s32.totalorder %s74, %s75
      %p87 = scmp.eq.s32.totalorder %s23, 1
      %p88 = por %p86, %p87
      %p90 = scmp.ne.s32.totalorder %s75, %s89
      %p91 = scmp.eq.s32.totalorder %s23, 0
      %p92 = por %p90, %p91
      %s94 = sadd.s32 %s93, 1
      %p97 = scmp.eq.s32.totalorder %s17, 1
      %p98 = scmp.ne.s32.totalorder %s93, %s95
      %p99 = scmp.eq.s32.totalorder %s17, 0
      %p100 = por %p98, %p99
      %p101 = scmp.ne.s32.totalorder %s93, %s95
      %p102 = scmp.eq.s32.totalorder %s22, 1
      %p103 = por %p101, %p102
      %p104 = scmp.ne.s32.totalorder %s95, %s96
      %p105 = scmp.eq.s32.totalorder %s22, 0
      %p106 = por %p104, %p105
      %p107 = scmp.ne.s32.totalorder %s95, %s96
      %p108 = scmp.eq.s32.totalorder %s23, 1
      %p109 = por %p107, %p108
      %p111 = scmp.ne.s32.totalorder %s96, %s110
      %p112 = scmp.eq.s32.totalorder %s23, 0
      %p113 = por %p111, %p112
      %s115 = sadd.s32 %s114, 1
      %p118 = scmp.eq.s32.totalorder %s17, 1
      %p119 = scmp.ne.s32.totalorder %s114, %s116
      %p120 = scmp.eq.s32.totalorder %s17, 0
      %p121 = por %p119, %p120
      %p122 = scmp.ne.s32.totalorder %s114, %s116
      %p123 = scmp.eq.s32.totalorder %s22, 1
      %p124 = por %p122, %p123
      %p125 = scmp.ne.s32.totalorder %s116, %s117
      %p126 = scmp.eq.s32.totalorder %s22, 0
      %p127 = por %p125, %p126
      %p128 = scmp.ne.s32.totalorder %s116, %s117
      %p129 = scmp.eq.s32.totalorder %s23, 1
      %p130 = por %p128, %p129
      %p132 = scmp.ne.s32.totalorder %s117, %s131
      %p133 = scmp.eq.s32.totalorder %s23, 0
      %p134 = por %p132, %p133
      %s136 = sadd.s32 %s135, 1
      %p139 = scmp.eq.s32.totalorder %s17, 1
      %p140 = scmp.ne.s32.totalorder %s135, %s137
      %p141 = scmp.eq.s32.totalorder %s17, 0
      %p142 = por %p140, %p141
      %p143 = scmp.ne.s32.totalorder %s135, %s137
      %p144 = scmp.eq.s32.totalorder %s22, 1
      %p145 = por %p143, %p144
      %p146 = scmp.ne.s32.totalorder %s137, %s138
      %p147 = scmp.eq.s32.totalorder %s22, 0
      %p148 = por %p146, %p147
      %p149 = scmp.ne.s32.totalorder %s137, %s138
      %p150 = scmp.eq.s32.totalorder %s23, 1
      %p151 = por %p149, %p150
      %p153 = scmp.ne.s32.totalorder %s138, %s152
      %p154 = scmp.eq.s32.totalorder %s23, 0
      %p155 = por %p153, %p154
      %s157 = sadd.s32 %s156, 1
      %p160 = scmp.eq.s32.totalorder %s17, 1
      %p161 = scmp.ne.s32.totalorder %s156, %s158
      %p162 = scmp.eq.s32.totalorder %s17, 0
      %p163 = por %p161, %p162
      %p164 = scmp.ne.s32.totalorder %s156, %s158
      %p165 = scmp.eq.s32.totalorder %s22, 1
      %p166 = por %p164, %p165
      %p167 = scmp.ne.s32.totalorder %s158, %s159
      %p168 = scmp.eq.s32.totalorder %s22, 0
      %p169 = por %p167, %p168
      %p170 = scmp.ne.s32.totalorder %s158, %s159
      %p171 = scmp.eq.s32.totalorder %s23, 1
      %p172 = por %p170, %p171
      %p174 = scmp.ne.s32.totalorder %s159, %s173
      %p175 = scmp.eq.s32.totalorder %s23, 0
      %p176 = por %p174, %p175
      %s177 = ssub.s32 %s17, %s24
      %p178 = scmp.eq.s32.totalorder %s177, 0
      %s180 = sadd.s32 %s179, 1
      %s181 = scalar_select %p178, %s179, %s180
      %p184 = pneg %p178
      %p185 = scmp.eq.s32.totalorder %s17, 1
      %p186 = por %p184, %p185
      %p187 = scmp.ne.s32.totalorder %s179, %s182
      %p188 = scmp.eq.s32.totalorder %s17, 0
      %p189 = por %p187, %p188
      %p190 = scmp.ne.s32.totalorder %s179, %s182
      %p191 = scmp.eq.s32.totalorder %s22, 1
      %p192 = por %p190, %p191
      %p193 = scmp.ne.s32.totalorder %s182, %s183
      %p194 = scmp.eq.s32.totalorder %s22, 0
      %p195 = por %p193, %p194
      %p196 = scmp.ne.s32.totalorder %s182, %s183
      %p197 = scmp.eq.s32.totalorder %s23, 1
      %p198 = por %p196, %p197
      %p200 = scmp.ne.s32.totalorder %s183, %s199
      %p201 = scmp.eq.s32.totalorder %s23, 0
      %p202 = por %p200, %p201
      %p203 = scmp.le.s32.totalorder 1, %s17
      %p204 = scmp.lt.s32.totalorder %s17, 3
      %p205 = pnand %p203, %p204
      %p206 = pneg %p205
      // Predicated region
      $region9: #{tpu_custom_call.1} parent=5 // pred_check
        _
      $region10: #{tpu_custom_call.1} parent=5 // pred_check_branch
        %208 = sbr.rel (%p205) target = $region12
      $region11: #{tpu_custom_call.1} parent=5 // pred_region
        %s209 = ssub.s32 %s17, 1
        // Predicated region
        $region13: #{tpu_custom_call.1} parent=11 // pred_check
          %p210 = pneg %p64
        $region14: #{tpu_custom_call.1} parent=11 // pred_check_branch
          %212 = sbr.rel (%p210) target = $region16
        $region15: #{tpu_custom_call.1} parent=11 // pred_region
          _
        $region16: #{tpu_custom_call.1} parent=11 // pred_fallthru
          _
        // Predicated region
        $region17: #{tpu_custom_call.1} parent=11 // pred_check
          %p213 = pneg %p85
        $region18: #{tpu_custom_call.1} parent=11 // pred_check_branch
          %215 = sbr.rel (%p213) target = $region20
        $region19: #{tpu_custom_call.1} parent=11 // pred_region
          _
        $region20: #{tpu_custom_call.1} parent=11 // pred_fallthru
          _
        // Predicated region
        $region21: #{tpu_custom_call.1} parent=11 // pred_check
          %p216 = pneg %p106
        $region22: #{tpu_custom_call.1} parent=11 // pred_check_branch
          %218 = sbr.rel (%p216) target = $region24
        $region23: #{tpu_custom_call.1} parent=11 // pred_region
          _
        $region24: #{tpu_custom_call.1} parent=11 // pred_fallthru
          _
        // Predicated region
        $region25: #{tpu_custom_call.1} parent=11 // pred_check
          %p219 = pneg %p127
        $region26: #{tpu_custom_call.1} parent=11 // pred_check_branch
          %221 = sbr.rel (%p219) target = $region28
        $region27: #{tpu_custom_call.1} parent=11 // pred_region
          _
        $region28: #{tpu_custom_call.1} parent=11 // pred_fallthru
          _
        // Predicated region
        $region29: #{tpu_custom_call.1} parent=11 // pred_check
          %p222 = pneg %p148
        $region30: #{tpu_custom_call.1} parent=11 // pred_check_branch
          %224 = sbr.rel (%p222) target = $region32
        $region31: #{tpu_custom_call.1} parent=11 // pred_region
          _
        $region32: #{tpu_custom_call.1} parent=11 // pred_fallthru
          _
        // Predicated region
        $region33: #{tpu_custom_call.1} parent=11 // pred_check
          %p225 = pneg %p169
        $region34: #{tpu_custom_call.1} parent=11 // pred_check_branch
          %227 = sbr.rel (%p225) target = $region36
        $region35: #{tpu_custom_call.1} parent=11 // pred_region
          %s229 = ssub.s32 16, 16
          %230 = vsyncadd [#allocation5], %s229
          %s232 = sshll.u32 %s6, 4
          %s233 = int_to_ptr.vmem [resolvable:$true] %s232
          %235 = dma.vmem_to_smem %s233, 16, [#allocation3], [#allocation5]
        $region36: #{tpu_custom_call.1} parent=11 // pred_fallthru
          _
      $region12: #{tpu_custom_call.1} parent=5 // pred_fallthru
        _
      %p236 = scmp.lt.s32.totalorder %s17, 2
      // Predicated region
      $region37: #{tpu_custom_call.1} parent=5 // pred_check
        %p237 = pneg %p236
      $region38: #{tpu_custom_call.1} parent=5 // pred_check_branch
        %239 = sbr.rel (%p237) target = $region40
      $region39: #{tpu_custom_call.1} parent=5 // pred_region
        // Predicated region
        $region41: #{tpu_custom_call.1} parent=39 // pred_check
          %p240 = pneg %p37
        $region42: #{tpu_custom_call.1} parent=39 // pred_check_branch
          %242 = sbr.rel (%p240) target = $region44
        $region43: #{tpu_custom_call.1} parent=39 // pred_region
          %p243 = scmp.lt.s32.totalorder %s17, 1
          %s244 = scalar_select %p243, %s17, 1
          %s245 = smul.addr %s244, 50
          %s246 = smul.addr %s245, 4
          %s247 = scalar_lea.vmem %s0, %s246
        $region44: #{tpu_custom_call.1} parent=39 // pred_fallthru
          _
      $region40: #{tpu_custom_call.1} parent=5 // pred_fallthru
        _
      %p248 = scmp.le.s32.totalorder 1, %s17
      %p249 = scmp.lt.s32.totalorder %s17, 3
      %p250 = pnand %p248, %p249
      %p251 = pneg %p250
      // Predicated region
      $region45: #{tpu_custom_call.1} parent=5 // pred_check
        _
      $region46: #{tpu_custom_call.1} parent=5 // pred_check_branch
        %253 = sbr.rel (%p250) target = $region48
      $region47: #{tpu_custom_call.1} parent=5 // pred_region
        %s254 = ssub.s32 %s17, 1
        // Predicated region
        $region49: #{tpu_custom_call.1} parent=47 // pred_check
          %p255 = pneg %p169
        $region50: #{tpu_custom_call.1} parent=47 // pred_check_branch
          %257 = sbr.rel (%p255) target = $region52
        $region51: #{tpu_custom_call.1} parent=47 // pred_region
          %258 = dma.done [#allocation5], 16
        $region52: #{tpu_custom_call.1} parent=47 // pred_fallthru
          _
        %259 = sfence
        %p260 = scmp.lt.s32.totalorder %s22, 1
        %s261 = scalar_select %p260, %s22, 1
        %s262 = smul.addr %s261, 50
        %s263 = smul.addr %s262, 4
        %s264 = scalar_lea.vmem %s0, %s263
        %p265 = pneg %p43
        %p266 = pneg %p40
        %p267 = pneg %p64
        %p268 = pneg %p61
        %p269 = pneg %p85
        %p270 = pneg %p82
        %p271 = pneg %p106
        %p272 = pneg %p103
        %p273 = pneg %p127
        %p274 = pneg %p124
        %p275 = pneg %p148
        %p276 = pneg %p145
        %p277 = pneg %p169
        %p278 = pneg %p166
        %p279 = pneg %p195
        %p280 = pneg %p192
        %s281 = sand.u32 %s182, 1
        %s282 = scalar_lea.sflag [#allocation4], %s281
        %s283 = sand.u32 %s182, 1
        %s284 = smul.addr %s283, 168
        %s285 = scalar_lea.vmem [#allocation6], %s284
        %p286 = scmp.lt.s32.totalorder %s22, 1
        %s287 = scalar_select %p286, %s22, 1
        %s288 = smul.addr %s287, 50
        %s289 = smul.addr %s288, 4
        %s290 = scalar_lea.vmem %s0, %s289
        %s292 = sld [smem:[#allocation3]]
        %s293 = sld [smem:[#allocation3 + $0x1]]
        %v294 = vld [vmem:[%s1] sm:$0xff]
        %v295 = vld [vmem:[%s1 + $0x8] sm:$0xff]
        %v296 = vld [vmem:[%s1 + $0x10] sm:$0xff]
        %v297 = vld [vmem:[%s1 + $0x18] sm:$0xff]
        %v298 = vld [vmem:[%s1 + $0x20] sm:$0xff]
        %v299 = vld [vmem:[%s1 + $0x28] sm:$0xff]
        %v300 = vld [vmem:[%s1 + $0x30] sm:$0xff]
        %v301 = vld [vmem:[%s1 + $0x38] sm:$0xff]
        %v302 = vld [vmem:[%s1 + $0x40] sm:$0xff]
        %v303 = vld [vmem:[%s1 + $0x48] sm:$0xff]
        %v304 = vld [vmem:[%s1 + $0x50] sm:$0xff]
        %v305 = vld [vmem:[%s1 + $0x58] sm:$0xff]
        %v306 = vld [vmem:[%s1 + $0x60] sm:$0xff]
        %v307 = vld [vmem:[%s1 + $0x68] sm:$0xff]
        %v308 = vld [vmem:[%s1 + $0x70] sm:$0xff]
        %v309 = vld [vmem:[%s1 + $0x78] sm:$0xff]
        %v310 = vld [vmem:[%s1 + $0x80] sm:$0xff]
        %v311 = vld [vmem:[%s1 + $0x88] sm:$0xff]
        %v312 = vld [vmem:[%s1 + $0x90] sm:$0xff]
        %v313 = vld [vmem:[%s1 + $0x98] sm:$0xff]
        %v314 = vld [vmem:[%s1 + $0xa0] sm:$0xff]
        %v315 = vld [vmem:[%s1 + $0xa8] sm:$0xff]
        %v316 = vld [vmem:[%s1 + $0xb0] sm:$0xff]
        %v317 = vld [vmem:[%s1 + $0xb8] sm:$0xff]
        %v318 = vld [vmem:[%s1 + $0xc0] sm:$0xff]
        %v319 = vld [vmem:[%s1 + $0xc8] sm:$0xff]
        %v320 = vld [vmem:[%s1 + $0xd0] sm:$0xff]
        %v321 = vld [vmem:[%s1 + $0xd8] sm:$0xff]
        %v322 = vld [vmem:[%s1 + $0xe0] sm:$0xff]
        %v323 = vld [vmem:[%s1 + $0xe8] sm:$0xff]
        %v324 = vld [vmem:[%s1 + $0xf0] sm:$0xff]
        %v325 = vld [vmem:[%s1 + $0xf8] sm:$0xff]
        %v326 = vld [vmem:[%s1 + $0x100] sm:$0xff]
        %v327 = vld [vmem:[%s1 + $0x108] sm:$0xff]
        %v328 = vld [vmem:[%s1 + $0x110] sm:$0xff]
        %v329 = vld [vmem:[%s1 + $0x118] sm:$0xff]
        %v330 = vld [vmem:[%s1 + $0x120] sm:$0xff]
        %v331 = vld [vmem:[%s1 + $0x128] sm:$0xff]
        %v332 = vld [vmem:[%s1 + $0x130] sm:$0xff]
        %v333 = vld [vmem:[%s1 + $0x138] sm:$0xff]
        %v334 = vld [vmem:[%s1 + $0x140] sm:$0xff]
        %v335 = vld [vmem:[%s1 + $0x148] sm:$0xff]
        %337 = vset.pattern.permute.xlu0 0
        %338 = vperm.xlu0 %337, %v294
        %v339 = vpop.permute.xlu0 %338
        %342 = vset.pattern.permute.xlu0 0
        %343 = vperm.xlu0 %342, %v295
        %v344 = vpop.permute.xlu0 %343
        %347 = vset.pattern.permute.xlu0 0
        %348 = vperm.xlu0 %347, %v296
        %v349 = vpop.permute.xlu0 %348
        %352 = vset.pattern.permute.xlu0 0
        %353 = vperm.xlu0 %352, %v297
        %v354 = vpop.permute.xlu0 %353
        %357 = vset.pattern.permute.xlu0 0
        %358 = vperm.xlu0 %357, %v298
        %v359 = vpop.permute.xlu0 %358
        %362 = vset.pattern.permute.xlu0 0
        %363 = vperm.xlu0 %362, %v299
        %v364 = vpop.permute.xlu0 %363
        %367 = vset.pattern.permute.xlu0 0
        %368 = vperm.xlu0 %367, %v300
        %v369 = vpop.permute.xlu0 %368
        %372 = vset.pattern.permute.xlu0 0
        %373 = vperm.xlu0 %372, %v301
        %v374 = vpop.permute.xlu0 %373
        %377 = vset.pattern.permute.xlu0 0
        %378 = vperm.xlu0 %377, %v302
        %v379 = vpop.permute.xlu0 %378
        %382 = vset.pattern.permute.xlu0 0
        %383 = vperm.xlu0 %382, %v303
        %v384 = vpop.permute.xlu0 %383
        %387 = vset.pattern.permute.xlu0 0
        %388 = vperm.xlu0 %387, %v304
        %v389 = vpop.permute.xlu0 %388
        %392 = vset.pattern.permute.xlu0 0
        %393 = vperm.xlu0 %392, %v305
        %v394 = vpop.permute.xlu0 %393
        %397 = vset.pattern.permute.xlu0 0
        %398 = vperm.xlu0 %397, %v306
        %v399 = vpop.permute.xlu0 %398
        %402 = vset.pattern.permute.xlu0 0
        %403 = vperm.xlu0 %402, %v307
        %v404 = vpop.permute.xlu0 %403
        %407 = vset.pattern.permute.xlu0 0
        %408 = vperm.xlu0 %407, %v308
        %v409 = vpop.permute.xlu0 %408
        %412 = vset.pattern.permute.xlu0 0
        %413 = vperm.xlu0 %412, %v309
        %v414 = vpop.permute.xlu0 %413
        %417 = vset.pattern.permute.xlu0 0
        %418 = vperm.xlu0 %417, %v310
        %v419 = vpop.permute.xlu0 %418
        %422 = vset.pattern.permute.xlu0 0
        %423 = vperm.xlu0 %422, %v311
        %v424 = vpop.permute.xlu0 %423
        %427 = vset.pattern.permute.xlu0 0
        %428 = vperm.xlu0 %427, %v312
        %v429 = vpop.permute.xlu0 %428
        %432 = vset.pattern.permute.xlu0 0
        %433 = vperm.xlu0 %432, %v313
        %v434 = vpop.permute.xlu0 %433
        %437 = vset.pattern.permute.xlu0 0
        %438 = vperm.xlu0 %437, %v314
        %v439 = vpop.permute.xlu0 %438
        %442 = vset.pattern.permute.xlu0 0
        %443 = vperm.xlu0 %442, %v315
        %v444 = vpop.permute.xlu0 %443
        %447 = vset.pattern.permute.xlu0 0
        %448 = vperm.xlu0 %447, %v316
        %v449 = vpop.permute.xlu0 %448
        %452 = vset.pattern.permute.xlu0 0
        %453 = vperm.xlu0 %452, %v317
        %v454 = vpop.permute.xlu0 %453
        %457 = vset.pattern.permute.xlu0 0
        %458 = vperm.xlu0 %457, %v318
        %v459 = vpop.permute.xlu0 %458
        %462 = vset.pattern.permute.xlu0 0
        %463 = vperm.xlu0 %462, %v319
        %v464 = vpop.permute.xlu0 %463
        %467 = vset.pattern.permute.xlu0 0
        %468 = vperm.xlu0 %467, %v320
        %v469 = vpop.permute.xlu0 %468
        %472 = vset.pattern.permute.xlu0 0
        %473 = vperm.xlu0 %472, %v321
        %v474 = vpop.permute.xlu0 %473
        %477 = vset.pattern.permute.xlu0 0
        %478 = vperm.xlu0 %477, %v322
        %v479 = vpop.permute.xlu0 %478
        %482 = vset.pattern.permute.xlu0 0
        %483 = vperm.xlu0 %482, %v323
        %v484 = vpop.permute.xlu0 %483
        %487 = vset.pattern.permute.xlu0 0
        %488 = vperm.xlu0 %487, %v324
        %v489 = vpop.permute.xlu0 %488
        %492 = vset.pattern.permute.xlu0 0
        %493 = vperm.xlu0 %492, %v325
        %v494 = vpop.permute.xlu0 %493
        %497 = vset.pattern.permute.xlu0 0
        %498 = vperm.xlu0 %497, %v326
        %v499 = vpop.permute.xlu0 %498
        %502 = vset.pattern.permute.xlu0 0
        %503 = vperm.xlu0 %502, %v327
        %v504 = vpop.permute.xlu0 %503
        %507 = vset.pattern.permute.xlu0 0
        %508 = vperm.xlu0 %507, %v328
        %v509 = vpop.permute.xlu0 %508
        %512 = vset.pattern.permute.xlu0 0
        %513 = vperm.xlu0 %512, %v329
        %v514 = vpop.permute.xlu0 %513
        %517 = vset.pattern.permute.xlu0 0
        %518 = vperm.xlu0 %517, %v330
        %v519 = vpop.permute.xlu0 %518
        %522 = vset.pattern.permute.xlu0 0
        %523 = vperm.xlu0 %522, %v331
        %v524 = vpop.permute.xlu0 %523
        %527 = vset.pattern.permute.xlu0 0
        %528 = vperm.xlu0 %527, %v332
        %v529 = vpop.permute.xlu0 %528
        %532 = vset.pattern.permute.xlu0 0
        %533 = vperm.xlu0 %532, %v333
        %v534 = vpop.permute.xlu0 %533
        %537 = vset.pattern.permute.xlu0 0
        %538 = vperm.xlu0 %537, %v334
        %v539 = vpop.permute.xlu0 %538
        %542 = vset.pattern.permute.xlu0 0
        %543 = vperm.xlu0 %542, %v335
        %v544 = vpop.permute.xlu0 %543
        %v546 = vld [vmem:[%s290 + $0x4] sm:$0xc]
        %v547 = vld [vmem:[%s290 + $0x8] sm:$0xf]
        %v548 = vld [vmem:[%s290 + $0xc] sm:$0xf]
        %v549 = vld [vmem:[%s290 + $0x10] sm:$0xf]
        %v550 = vld [vmem:[%s290 + $0x14] sm:$0xf]
        %v551 = vld [vmem:[%s290 + $0x18] sm:$0xf]
        %v552 = vld [vmem:[%s290 + $0x1c] sm:$0xf]
        %v553 = vld [vmem:[%s290 + $0x20] sm:$0xf]
        %v554 = vld [vmem:[%s290 + $0x24] sm:$0xf]
        %v555 = vld [vmem:[%s290 + $0x28] sm:$0xf]
        %v556 = vld [vmem:[%s290 + $0x2c] sm:$0xf]
        %v557 = vld [vmem:[%s290 + $0x30] sm:$0xf]
        %v558 = vld [vmem:[%s290 + $0x34] sm:$0xf]
        %v559 = vld [vmem:[%s290 + $0x38] sm:$0xf]
        %v560 = vld [vmem:[%s290 + $0x3c] sm:$0xf]
        %v561 = vld [vmem:[%s290 + $0x40] sm:$0xf]
        %v562 = vld [vmem:[%s290 + $0x44] sm:$0xf]
        %v563 = vld [vmem:[%s290 + $0x48] sm:$0xf]
        %v564 = vld [vmem:[%s290 + $0x4c] sm:$0xf]
        %v565 = vld [vmem:[%s290 + $0x50] sm:$0xf]
        %v566 = vld [vmem:[%s290 + $0x54] sm:$0xf]
        %v567 = vld [vmem:[%s290 + $0x58] sm:$0xf]
        %v568 = vld [vmem:[%s290 + $0x5c] sm:$0xf]
        %v569 = vld [vmem:[%s290 + $0x60] sm:$0xf]
        %v570 = vld [vmem:[%s290 + $0x64] sm:$0xf]
        %v571 = vld [vmem:[%s290 + $0x68] sm:$0xf]
        %v572 = vld [vmem:[%s290 + $0x6c] sm:$0xf]
        %v573 = vld [vmem:[%s290 + $0x70] sm:$0xf]
        %v574 = vld [vmem:[%s290 + $0x74] sm:$0xf]
        %v575 = vld [vmem:[%s290 + $0x78] sm:$0xf]
        %v576 = vld [vmem:[%s290 + $0x7c] sm:$0xf]
        %v577 = vld [vmem:[%s290 + $0x80] sm:$0xf]
        %v578 = vld [vmem:[%s290 + $0x84] sm:$0xf]
        %v579 = vld [vmem:[%s290 + $0x88] sm:$0xf]
        %v580 = vld [vmem:[%s290 + $0x8c] sm:$0xf]
        %v581 = vld [vmem:[%s290 + $0x90] sm:$0xf]
        %v582 = vld [vmem:[%s290 + $0x94] sm:$0xf]
        %v583 = vld [vmem:[%s290 + $0x98] sm:$0xf]
        %v584 = vld [vmem:[%s290 + $0x9c] sm:$0xf]
        %v585 = vld [vmem:[%s290 + $0xa0] sm:$0xf]
        %v586 = vld [vmem:[%s290 + $0xa4] sm:$0xf]
        %v587 = vld [vmem:[%s290 + $0xa8] sm:$0xf]
        %v588 = vld [vmem:[%s290 + $0xac] sm:$0x7]
        %v589 = vld [vmem:[%s2] sm:$0xf]
        %v590 = vld [vmem:[%s290 + $0x4] sm:$0x8]
        %s591 = scalar_lea.vmem %s2, 4
        %v592 = vld [vmem:[%s591] sm:$0xf]
        %v636 = vunpack.c.l.b16 %v590
        %v637 = vunpack.c.l.b16 %v547
        %v638 = vunpack.c.l.b16 %v548
        %v639 = vunpack.c.l.b16 %v549
        %v640 = vunpack.c.l.b16 %v550
        %v641 = vunpack.c.l.b16 %v551
        %v642 = vunpack.c.l.b16 %v552
        %v643 = vunpack.c.l.b16 %v553
        %v644 = vunpack.c.l.b16 %v554
        %v645 = vunpack.c.l.b16 %v555
        %v646 = vunpack.c.l.b16 %v556
        %v647 = vunpack.c.l.b16 %v557
        %v648 = vunpack.c.l.b16 %v558
        %v649 = vunpack.c.l.b16 %v559
        %v650 = vunpack.c.l.b16 %v560
        %v651 = vunpack.c.l.b16 %v561
        %v652 = vunpack.c.l.b16 %v562
        %v653 = vunpack.c.l.b16 %v563
        %v654 = vunpack.c.l.b16 %v564
        %v655 = vunpack.c.l.b16 %v565
        %v656 = vunpack.c.l.b16 %v566
        %v657 = vunpack.c.l.b16 %v567
        %v658 = vunpack.c.l.b16 %v568
        %v659 = vunpack.c.l.b16 %v569
        %v660 = vunpack.c.l.b16 %v570
        %v661 = vunpack.c.l.b16 %v571
        %v662 = vunpack.c.l.b16 %v572
        %v663 = vunpack.c.l.b16 %v573
        %v664 = vunpack.c.l.b16 %v574
        %v665 = vunpack.c.l.b16 %v575
        %v666 = vunpack.c.l.b16 %v576
        %v667 = vunpack.c.l.b16 %v577
        %v668 = vunpack.c.l.b16 %v578
        %v669 = vunpack.c.l.b16 %v579
        %v670 = vunpack.c.l.b16 %v580
        %v671 = vunpack.c.l.b16 %v581
        %v672 = vunpack.c.l.b16 %v582
        %v673 = vunpack.c.l.b16 %v583
        %v674 = vunpack.c.l.b16 %v584
        %v675 = vunpack.c.l.b16 %v585
        %v676 = vunpack.c.l.b16 %v586
        %v677 = vunpack.c.l.b16 %v587
        %v678 = vunpack.c.l.b16 %v588
        %v679 = vpack.c.b16 %v637, %v636
        %v680 = vpack.c.b16 %v639, %v638
        %v681 = vpack.c.b16 %v641, %v640
        %v682 = vpack.c.b16 %v643, %v642
        %v683 = vpack.c.b16 %v645, %v644
        %v684 = vpack.c.b16 %v647, %v646
        %v685 = vpack.c.b16 %v649, %v648
        %v686 = vpack.c.b16 %v651, %v650
        %v687 = vpack.c.b16 %v653, %v652
        %v688 = vpack.c.b16 %v655, %v654
        %v689 = vpack.c.b16 %v657, %v656
        %v690 = vpack.c.b16 %v659, %v658
        %v691 = vpack.c.b16 %v661, %v660
        %v692 = vpack.c.b16 %v663, %v662
        %v693 = vpack.c.b16 %v665, %v664
        %v694 = vpack.c.b16 %v667, %v666
        %v695 = vpack.c.b16 %v669, %v668
        %v696 = vpack.c.b16 %v671, %v670
        %v697 = vpack.c.b16 %v673, %v672
        %v698 = vpack.c.b16 %v675, %v674
        %v699 = vpack.c.b16 %v677, %v676
        %v700 = vpack.c.b16 %v678, %v678
        %vm701 = vcmask 1044480
        %v702 = vrot.slane %v679, 3
        %v703 = vrot.slane %v680, 3
        %v704 = vsel %vm701, %v702, %v703
        %v705 = vrot.slane %v681, 3
        %v706 = vsel %vm701, %v703, %v705
        %v707 = vrot.slane %v682, 3
        %v708 = vsel %vm701, %v705, %v707
        %v709 = vrot.slane %v683, 3
        %v710 = vsel %vm701, %v707, %v709
        %v711 = vrot.slane %v684, 3
        %v712 = vsel %vm701, %v709, %v711
        %v713 = vrot.slane %v685, 3
        %v714 = vsel %vm701, %v711, %v713
        %v715 = vrot.slane %v686, 3
        %v716 = vsel %vm701, %v713, %v715
        %v717 = vrot.slane %v687, 3
        %v718 = vsel %vm701, %v715, %v717
        %v719 = vrot.slane %v688, 3
        %v720 = vsel %vm701, %v717, %v719
        %v721 = vrot.slane %v689, 3
        %v722 = vsel %vm701, %v719, %v721
        %v723 = vrot.slane %v690, 3
        %v724 = vsel %vm701, %v721, %v723
        %v725 = vrot.slane %v691, 3
        %v726 = vsel %vm701, %v723, %v725
        %v727 = vrot.slane %v692, 3
        %v728 = vsel %vm701, %v725, %v727
        %v729 = vrot.slane %v693, 3
        %v730 = vsel %vm701, %v727, %v729
        %v731 = vrot.slane %v694, 3
        %v732 = vsel %vm701, %v729, %v731
        %v733 = vrot.slane %v695, 3
        %v734 = vsel %vm701, %v731, %v733
        %v735 = vrot.slane %v696, 3
        %v736 = vsel %vm701, %v733, %v735
        %v737 = vrot.slane %v697, 3
        %v738 = vsel %vm701, %v735, %v737
        %v739 = vrot.slane %v698, 3
        %v740 = vsel %vm701, %v737, %v739
        %v741 = vrot.slane %v699, 3
        %v742 = vsel %vm701, %v739, %v741
        %v743 = vrot.slane %v700, 3
        %v744 = vsel %vm701, %v741, %v743
        %vm745 = vcmask 64512
        %v747 = vsel %vm745, %v704, 0
        %v750 = vsel %vm745, %v706, 0
        %v753 = vsel %vm745, %v708, 0
        %v756 = vsel %vm745, %v710, 0
        %v759 = vsel %vm745, %v712, 0
        %v762 = vsel %vm745, %v714, 0
        %v765 = vsel %vm745, %v716, 0
        %v768 = vsel %vm745, %v718, 0
        %v771 = vsel %vm745, %v720, 0
        %v774 = vsel %vm745, %v722, 0
        %v777 = vsel %vm745, %v724, 0
        %v780 = vsel %vm745, %v726, 0
        %v783 = vsel %vm745, %v728, 0
        %v786 = vsel %vm745, %v730, 0
        %v789 = vsel %vm745, %v732, 0
        %v792 = vsel %vm745, %v734, 0
        %v795 = vsel %vm745, %v736, 0
        %v798 = vsel %vm745, %v738, 0
        %v801 = vsel %vm745, %v740, 0
        %v804 = vsel %vm745, %v742, 0
        %v807 = vsel %vm745, %v744, 0
        %vm809 = vcmask 1043456
        %v811 = vsel %vm809, %v592, 0
        %813 = vmatprep.subr.bf16.mxu0 0
        %814 = vmatpush1.bf16.msra.mxu0 0
        %815 = vmatprep.subr.bf16.mxu0 0
        %816 = vmatpush1.bf16.msra.mxu0 0
        %817 = vmatprep.subr.bf16.mxu0 0
        %818 = vmatpush1.bf16.msra.mxu0 0
        %819 = vmatprep.subr.bf16.mxu0 0
        %820 = vmatpush1.bf16.msra.mxu0 0
        %821 = vmatprep.subr.bf16.mxu0 0
        %822 = vmatpush1.bf16.msra.mxu0 0
        %823 = vmatprep.subr.bf16.mxu0 0
        %824 = vmatpush1.bf16.msra.mxu0 0
        %825 = vmatprep.subr.bf16.mxu0 0
        %826 = vmatpush1.bf16.msra.mxu0 0
        %827 = vmatprep.subr.bf16.mxu0 0
        %828 = vmatpush1.bf16.msra.mxu0 %v811
        %829 = vmatprep.subr.bf16.mxu0 0
        %830 = vmatpush2.bf16.msra.mxu0 0
        %831 = vmatprep.subr.bf16.mxu0 0
        %832 = vmatpush2.bf16.msra.mxu0 0
        %833 = vmatprep.subr.bf16.mxu0 0
        %834 = vmatpush2.bf16.msra.mxu0 0
        %835 = vmatprep.subr.bf16.mxu0 0
        %836 = vmatpush2.bf16.msra.mxu0 0
        %837 = vmatprep.subr.bf16.mxu0 0
        %838 = vmatpush2.bf16.msra.mxu0 0
        %839 = vmatprep.subr.bf16.mxu0 0
        %840 = vmatpush2.bf16.msra.mxu0 0
        %841 = vmatprep.subr.bf16.mxu0 0
        %842 = vmatpush2.bf16.msra.mxu0 0
        %843 = vmatprep.subr.bf16.mxu0 0
        %844 = vmatpush2.bf16.msra.mxu0 0
        %845 = vmatprep.mubr.bf16.mxu0 0
        %846 = vmatmul.mubr.bf16.gmra.mxu0 %v747
        %v847 = vpop.f32.mrf.mxu0
        %v848 = vadd.f32 0.0, %v847
        %v849 = vpop.f32.mrf.mxu0
        %v850 = vpop.f32.mrf.mxu0
        %v851 = vadd.f32 0.0, %v850
        %v852 = vpop.f32.mrf.mxu0
        %853 = vmatprep.mubr.bf16.mxu0 0
        %854 = vmatmul.mubr.bf16.gmra.mxu0 %v750
        %v855 = vpop.f32.mrf.mxu0
        %v856 = vadd.f32 0.0, %v855
        %v857 = vpop.f32.mrf.mxu0
        %v858 = vpop.f32.mrf.mxu0
        %v859 = vadd.f32 0.0, %v858
        %v860 = vpop.f32.mrf.mxu0
        %861 = vmatprep.mubr.bf16.mxu0 0
        %862 = vmatmul.mubr.bf16.gmra.mxu0 %v753
        %v863 = vpop.f32.mrf.mxu0
        %v864 = vadd.f32 0.0, %v863
        %v865 = vpop.f32.mrf.mxu0
        %v866 = vpop.f32.mrf.mxu0
        %v867 = vadd.f32 0.0, %v866
        %v868 = vpop.f32.mrf.mxu0
        %869 = vmatprep.mubr.bf16.mxu0 0
        %870 = vmatmul.mubr.bf16.gmra.mxu0 %v756
        %v871 = vpop.f32.mrf.mxu0
        %v872 = vadd.f32 0.0, %v871
        %v873 = vpop.f32.mrf.mxu0
        %v874 = vpop.f32.mrf.mxu0
        %v875 = vadd.f32 0.0, %v874
        %v876 = vpop.f32.mrf.mxu0
        %877 = vmatprep.mubr.bf16.mxu0 0
        %878 = vmatmul.mubr.bf16.gmra.mxu0 %v759
        %v879 = vpop.f32.mrf.mxu0
        %v880 = vadd.f32 0.0, %v879
        %v881 = vpop.f32.mrf.mxu0
        %v882 = vpop.f32.mrf.mxu0
        %v883 = vadd.f32 0.0, %v882
        %v884 = vpop.f32.mrf.mxu0
        %885 = vmatprep.mubr.bf16.mxu0 0
        %886 = vmatmul.mubr.bf16.gmra.mxu0 %v762
        %v887 = vpop.f32.mrf.mxu0
        %v888 = vadd.f32 0.0, %v887
        %v889 = vpop.f32.mrf.mxu0
        %v890 = vpop.f32.mrf.mxu0
        %v891 = vadd.f32 0.0, %v890
        %v892 = vpop.f32.mrf.mxu0
        %893 = vmatprep.mubr.bf16.mxu0 0
        %894 = vmatmul.mubr.bf16.gmra.mxu0 %v765
        %v895 = vpop.f32.mrf.mxu0
        %v896 = vadd.f32 0.0, %v895
        %v897 = vpop.f32.mrf.mxu0
        %v898 = vpop.f32.mrf.mxu0
        %v899 = vadd.f32 0.0, %v898
        %v900 = vpop.f32.mrf.mxu0
        %901 = vmatprep.mubr.bf16.mxu0 0
        %902 = vmatmul.mubr.bf16.gmra.mxu0 %v768
        %v903 = vpop.f32.mrf.mxu0
        %v904 = vadd.f32 0.0, %v903
        %v905 = vpop.f32.mrf.mxu0
        %v906 = vpop.f32.mrf.mxu0
        %v907 = vadd.f32 0.0, %v906
        %v908 = vpop.f32.mrf.mxu0
        %909 = vmatprep.mubr.bf16.mxu0 0
        %910 = vmatmul.mubr.bf16.gmra.mxu0 %v771
        %v911 = vpop.f32.mrf.mxu0
        %v912 = vadd.f32 0.0, %v911
        %v913 = vpop.f32.mrf.mxu0
        %v914 = vpop.f32.mrf.mxu0
        %v915 = vadd.f32 0.0, %v914
        %v916 = vpop.f32.mrf.mxu0
        %917 = vmatprep.mubr.bf16.mxu0 0
        %918 = vmatmul.mubr.bf16.gmra.mxu0 %v774
        %v919 = vpop.f32.mrf.mxu0
        %v920 = vadd.f32 0.0, %v919
        %v921 = vpop.f32.mrf.mxu0
        %v922 = vpop.f32.mrf.mxu0
        %v923 = vadd.f32 0.0, %v922
        %v924 = vpop.f32.mrf.mxu0
        %925 = vmatprep.mubr.bf16.mxu0 0
        %926 = vmatmul.mubr.bf16.gmra.mxu0 %v777
        %v927 = vpop.f32.mrf.mxu0
        %v928 = vadd.f32 0.0, %v927
        %v929 = vpop.f32.mrf.mxu0
        %v930 = vpop.f32.mrf.mxu0
        %v931 = vadd.f32 0.0, %v930
        %v932 = vpop.f32.mrf.mxu0
        %933 = vmatprep.mubr.bf16.mxu0 0
        %934 = vmatmul.mubr.bf16.gmra.mxu0 %v780
        %v935 = vpop.f32.mrf.mxu0
        %v936 = vadd.f32 0.0, %v935
        %v937 = vpop.f32.mrf.mxu0
        %v938 = vpop.f32.mrf.mxu0
        %v939 = vadd.f32 0.0, %v938
        %v940 = vpop.f32.mrf.mxu0
        %941 = vmatprep.mubr.bf16.mxu0 0
        %942 = vmatmul.mubr.bf16.gmra.mxu0 %v783
        %v943 = vpop.f32.mrf.mxu0
        %v944 = vadd.f32 0.0, %v943
        %v945 = vpop.f32.mrf.mxu0
        %v946 = vpop.f32.mrf.mxu0
        %v947 = vadd.f32 0.0, %v946
        %v948 = vpop.f32.mrf.mxu0
        %949 = vmatprep.mubr.bf16.mxu0 0
        %950 = vmatmul.mubr.bf16.gmra.mxu0 %v786
        %v951 = vpop.f32.mrf.mxu0
        %v952 = vadd.f32 0.0, %v951
        %v953 = vpop.f32.mrf.mxu0
        %v954 = vpop.f32.mrf.mxu0
        %v955 = vadd.f32 0.0, %v954
        %v956 = vpop.f32.mrf.mxu0
        %957 = vmatprep.mubr.bf16.mxu0 0
        %958 = vmatmul.mubr.bf16.gmra.mxu0 %v789
        %v959 = vpop.f32.mrf.mxu0
        %v960 = vadd.f32 0.0, %v959
        %v961 = vpop.f32.mrf.mxu0
        %v962 = vpop.f32.mrf.mxu0
        %v963 = vadd.f32 0.0, %v962
        %v964 = vpop.f32.mrf.mxu0
        %965 = vmatprep.mubr.bf16.mxu0 0
        %966 = vmatmul.mubr.bf16.gmra.mxu0 %v792
        %v967 = vpop.f32.mrf.mxu0
        %v968 = vadd.f32 0.0, %v967
        %v969 = vpop.f32.mrf.mxu0
        %v970 = vpop.f32.mrf.mxu0
        %v971 = vadd.f32 0.0, %v970
        %v972 = vpop.f32.mrf.mxu0
        %973 = vmatprep.mubr.bf16.mxu0 0
        %974 = vmatmul.mubr.bf16.gmra.mxu0 %v795
        %v975 = vpop.f32.mrf.mxu0
        %v976 = vadd.f32 0.0, %v975
        %v977 = vpop.f32.mrf.mxu0
        %v978 = vpop.f32.mrf.mxu0
        %v979 = vadd.f32 0.0, %v978
        %v980 = vpop.f32.mrf.mxu0
        %981 = vmatprep.mubr.bf16.mxu0 0
        %982 = vmatmul.mubr.bf16.gmra.mxu0 %v798
        %v983 = vpop.f32.mrf.mxu0
        %v984 = vadd.f32 0.0, %v983
        %v985 = vpop.f32.mrf.mxu0
        %v986 = vpop.f32.mrf.mxu0
        %v987 = vadd.f32 0.0, %v986
        %v988 = vpop.f32.mrf.mxu0
        %989 = vmatprep.mubr.bf16.mxu0 0
        %990 = vmatmul.mubr.bf16.gmra.mxu0 %v801
        %v991 = vpop.f32.mrf.mxu0
        %v992 = vadd.f32 0.0, %v991
        %v993 = vpop.f32.mrf.mxu0
        %v994 = vpop.f32.mrf.mxu0
        %v995 = vadd.f32 0.0, %v994
        %v996 = vpop.f32.mrf.mxu0
        %997 = vmatprep.mubr.bf16.mxu0 0
        %998 = vmatmul.mubr.bf16.gmra.mxu0 %v804
        %v999 = vpop.f32.mrf.mxu0
        %v1000 = vadd.f32 0.0, %v999
        %v1001 = vpop.f32.mrf.mxu0
        %v1002 = vpop.f32.mrf.mxu0
        %v1003 = vadd.f32 0.0, %v1002
        %v1004 = vpop.f32.mrf.mxu0
        %1005 = vmatprep.mubr.bf16.mxu0 0
        %1006 = vmatmul.mubr.bf16.gmra.mxu0 %v807
        %v1007 = vpop.f32.mrf.mxu0
        %v1008 = vadd.f32 0.0, %v1007
        %v1009 = vpop.f32.mrf.mxu0
        %v1010 = vpop.f32.mrf.mxu0
        %v1011 = vadd.f32 0.0, %v1010
        %v1012 = vpop.f32.mrf.mxu0
        %1013 = vdwg.mxu0
        %v1015 = vunpack.c.l.b16 %v546
        %v1016 = vpack.c.b16 %v637, %v1015
        %vm1017 = vsmask.f32 5376
        %v1019 = vshrl.u32 %v1016, 16
        %v1021 = vrot.slane %v1019, 2
        %v1022 = vshll.u32 %v1016, 16
        %v1024 = vrot.slane %v1022, 3
        %v1025 = vor.u32 %v1021, %v1024
        %v1027 = vshrl.u32 %v680, 16
        %v1029 = vrot.slane %v1027, 2
        %v1030 = vshll.u32 %v680, 16
        %v1032 = vrot.slane %v1030, 3
        %v1033 = vor.u32 %v1029, %v1032
        %v1034 = vsel %vm1017, %v1025, %v1033
        %v1036 = vshrl.u32 %v681, 16
        %v1038 = vrot.slane %v1036, 2
        %v1039 = vshll.u32 %v681, 16
        %v1041 = vrot.slane %v1039, 3
        %v1042 = vor.u32 %v1038, %v1041
        %v1043 = vsel %vm1017, %v1033, %v1042
        %v1045 = vshrl.u32 %v682, 16
        %v1047 = vrot.slane %v1045, 2
        %v1048 = vshll.u32 %v682, 16
        %v1050 = vrot.slane %v1048, 3
        %v1051 = vor.u32 %v1047, %v1050
        %v1052 = vsel %vm1017, %v1042, %v1051
        %v1054 = vshrl.u32 %v683, 16
        %v1056 = vrot.slane %v1054, 2
        %v1057 = vshll.u32 %v683, 16
        %v1059 = vrot.slane %v1057, 3
        %v1060 = vor.u32 %v1056, %v1059
        %v1061 = vsel %vm1017, %v1051, %v1060
        %v1063 = vshrl.u32 %v684, 16
        %v1065 = vrot.slane %v1063, 2
        %v1066 = vshll.u32 %v684, 16
        %v1068 = vrot.slane %v1066, 3
        %v1069 = vor.u32 %v1065, %v1068
        %v1070 = vsel %vm1017, %v1060, %v1069
        %v1072 = vshrl.u32 %v685, 16
        %v1074 = vrot.slane %v1072, 2
        %v1075 = vshll.u32 %v685, 16
        %v1077 = vrot.slane %v1075, 3
        %v1078 = vor.u32 %v1074, %v1077
        %v1079 = vsel %vm1017, %v1069, %v1078
        %v1081 = vshrl.u32 %v686, 16
        %v1083 = vrot.slane %v1081, 2
        %v1084 = vshll.u32 %v686, 16
        %v1086 = vrot.slane %v1084, 3
        %v1087 = vor.u32 %v1083, %v1086
        %v1088 = vsel %vm1017, %v1078, %v1087
        %v1090 = vshrl.u32 %v687, 16
        %v1092 = vrot.slane %v1090, 2
        %v1093 = vshll.u32 %v687, 16
        %v1095 = vrot.slane %v1093, 3
        %v1096 = vor.u32 %v1092, %v1095
        %v1097 = vsel %vm1017, %v1087, %v1096
        %v1099 = vshrl.u32 %v688, 16
        %v1101 = vrot.slane %v1099, 2
        %v1102 = vshll.u32 %v688, 16
        %v1104 = vrot.slane %v1102, 3
        %v1105 = vor.u32 %v1101, %v1104
        %v1106 = vsel %vm1017, %v1096, %v1105
        %v1108 = vshrl.u32 %v689, 16
        %v1110 = vrot.slane %v1108, 2
        %v1111 = vshll.u32 %v689, 16
        %v1113 = vrot.slane %v1111, 3
        %v1114 = vor.u32 %v1110, %v1113
        %v1115 = vsel %vm1017, %v1105, %v1114
        %v1117 = vshrl.u32 %v690, 16
        %v1119 = vrot.slane %v1117, 2
        %v1120 = vshll.u32 %v690, 16
        %v1122 = vrot.slane %v1120, 3
        %v1123 = vor.u32 %v1119, %v1122
        %v1124 = vsel %vm1017, %v1114, %v1123
        %v1126 = vshrl.u32 %v691, 16
        %v1128 = vrot.slane %v1126, 2
        %v1129 = vshll.u32 %v691, 16
        %v1131 = vrot.slane %v1129, 3
        %v1132 = vor.u32 %v1128, %v1131
        %v1133 = vsel %vm1017, %v1123, %v1132
        %v1135 = vshrl.u32 %v692, 16
        %v1137 = vrot.slane %v1135, 2
        %v1138 = vshll.u32 %v692, 16
        %v1140 = vrot.slane %v1138, 3
        %v1141 = vor.u32 %v1137, %v1140
        %v1142 = vsel %vm1017, %v1132, %v1141
        %v1144 = vshrl.u32 %v693, 16
        %v1146 = vrot.slane %v1144, 2
        %v1147 = vshll.u32 %v693, 16
        %v1149 = vrot.slane %v1147, 3
        %v1150 = vor.u32 %v1146, %v1149
        %v1151 = vsel %vm1017, %v1141, %v1150
        %v1153 = vshrl.u32 %v694, 16
        %v1155 = vrot.slane %v1153, 2
        %v1156 = vshll.u32 %v694, 16
        %v1158 = vrot.slane %v1156, 3
        %v1159 = vor.u32 %v1155, %v1158
        %v1160 = vsel %vm1017, %v1150, %v1159
        %v1162 = vshrl.u32 %v695, 16
        %v1164 = vrot.slane %v1162, 2
        %v1165 = vshll.u32 %v695, 16
        %v1167 = vrot.slane %v1165, 3
        %v1168 = vor.u32 %v1164, %v1167
        %v1169 = vsel %vm1017, %v1159, %v1168
        %v1171 = vshrl.u32 %v696, 16
        %v1173 = vrot.slane %v1171, 2
        %v1174 = vshll.u32 %v696, 16
        %v1176 = vrot.slane %v1174, 3
        %v1177 = vor.u32 %v1173, %v1176
        %v1178 = vsel %vm1017, %v1168, %v1177
        %v1180 = vshrl.u32 %v697, 16
        %v1182 = vrot.slane %v1180, 2
        %v1183 = vshll.u32 %v697, 16
        %v1185 = vrot.slane %v1183, 3
        %v1186 = vor.u32 %v1182, %v1185
        %v1187 = vsel %vm1017, %v1177, %v1186
        %v1189 = vshrl.u32 %v698, 16
        %v1191 = vrot.slane %v1189, 2
        %v1192 = vshll.u32 %v698, 16
        %v1194 = vrot.slane %v1192, 3
        %v1195 = vor.u32 %v1191, %v1194
        %v1196 = vsel %vm1017, %v1186, %v1195
        %v1198 = vshrl.u32 %v699, 16
        %v1200 = vrot.slane %v1198, 2
        %v1201 = vshll.u32 %v699, 16
        %v1203 = vrot.slane %v1201, 3
        %v1204 = vor.u32 %v1200, %v1203
        %v1205 = vsel %vm1017, %v1195, %v1204
        %v1207 = vshrl.u32 %v700, 16
        %v1209 = vrot.slane %v1207, 2
        %v1210 = vshll.u32 %v700, 16
        %v1212 = vrot.slane %v1210, 3
        %v1213 = vor.u32 %v1209, %v1212
        %v1214 = vsel %vm1017, %v1204, %v1213
        %v1216 = vsel %vm745, %v1034, 0
        %v1219 = vsel %vm745, %v1043, 0
        %v1222 = vsel %vm745, %v1052, 0
        %v1225 = vsel %vm745, %v1061, 0
        %v1228 = vsel %vm745, %v1070, 0
        %v1231 = vsel %vm745, %v1079, 0
        %v1234 = vsel %vm745, %v1088, 0
        %v1237 = vsel %vm745, %v1097, 0
        %v1240 = vsel %vm745, %v1106, 0
        %v1243 = vsel %vm745, %v1115, 0
        %v1246 = vsel %vm745, %v1124, 0
        %v1249 = vsel %vm745, %v1133, 0
        %v1252 = vsel %vm745, %v1142, 0
        %v1255 = vsel %vm745, %v1151, 0
        %v1258 = vsel %vm745, %v1160, 0
        %v1261 = vsel %vm745, %v1169, 0
        %v1264 = vsel %vm745, %v1178, 0
        %v1267 = vsel %vm745, %v1187, 0
        %v1270 = vsel %vm745, %v1196, 0
        %v1273 = vsel %vm745, %v1205, 0
        %v1276 = vsel %vm745, %v1214, 0
        %v1279 = vsel %vm809, %v589, 0
        %1281 = vmatprep.subr.bf16.mxu0 0
        %1282 = vmatpush1.bf16.msra.mxu0 0
        %1283 = vmatprep.subr.bf16.mxu0 0
        %1284 = vmatpush1.bf16.msra.mxu0 0
        %1285 = vmatprep.subr.bf16.mxu0 0
        %1286 = vmatpush1.bf16.msra.mxu0 0
        %1287 = vmatprep.subr.bf16.mxu0 0
        %1288 = vmatpush1.bf16.msra.mxu0 0
        %1289 = vmatprep.subr.bf16.mxu0 0
        %1290 = vmatpush1.bf16.msra.mxu0 0
        %1291 = vmatprep.subr.bf16.mxu0 0
        %1292 = vmatpush1.bf16.msra.mxu0 0
        %1293 = vmatprep.subr.bf16.mxu0 0
        %1294 = vmatpush1.bf16.msra.mxu0 0
        %1295 = vmatprep.subr.bf16.mxu0 0
        %1296 = vmatpush1.bf16.msra.mxu0 %v1279
        %1297 = vmatprep.subr.bf16.mxu0 0
        %1298 = vmatpush2.bf16.msra.mxu0 0
        %1299 = vmatprep.subr.bf16.mxu0 0
        %1300 = vmatpush2.bf16.msra.mxu0 0
        %1301 = vmatprep.subr.bf16.mxu0 0
        %1302 = vmatpush2.bf16.msra.mxu0 0
        %1303 = vmatprep.subr.bf16.mxu0 0
        %1304 = vmatpush2.bf16.msra.mxu0 0
        %1305 = vmatprep.subr.bf16.mxu0 0
        %1306 = vmatpush2.bf16.msra.mxu0 0
        %1307 = vmatprep.subr.bf16.mxu0 0
        %1308 = vmatpush2.bf16.msra.mxu0 0
        %1309 = vmatprep.subr.bf16.mxu0 0
        %1310 = vmatpush2.bf16.msra.mxu0 0
        %1311 = vmatprep.subr.bf16.mxu0 0
        %1312 = vmatpush2.bf16.msra.mxu0 0
        %1313 = vmatprep.mubr.bf16.mxu0 0
        %1314 = vmatmul.mubr.bf16.gmra.mxu0 %v1216
        %v1315 = vpop.f32.mrf.mxu0
        %v1316 = vadd.f32 %v848, %v1315
        %v1317 = vpop.f32.mrf.mxu0
        %v1318 = vpop.f32.mrf.mxu0
        %v1319 = vadd.f32 %v851, %v1318
        %v1320 = vpop.f32.mrf.mxu0
        %1321 = vmatprep.mubr.bf16.mxu0 0
        %1322 = vmatmul.mubr.bf16.gmra.mxu0 %v1219
        %v1323 = vpop.f32.mrf.mxu0
        %v1324 = vadd.f32 %v856, %v1323
        %v1325 = vpop.f32.mrf.mxu0
        %v1326 = vpop.f32.mrf.mxu0
        %v1327 = vadd.f32 %v859, %v1326
        %v1328 = vpop.f32.mrf.mxu0
        %1329 = vmatprep.mubr.bf16.mxu0 0
        %1330 = vmatmul.mubr.bf16.gmra.mxu0 %v1222
        %v1331 = vpop.f32.mrf.mxu0
        %v1332 = vadd.f32 %v864, %v1331
        %v1333 = vpop.f32.mrf.mxu0
        %v1334 = vpop.f32.mrf.mxu0
        %v1335 = vadd.f32 %v867, %v1334
        %v1336 = vpop.f32.mrf.mxu0
        %1337 = vmatprep.mubr.bf16.mxu0 0
        %1338 = vmatmul.mubr.bf16.gmra.mxu0 %v1225
        %v1339 = vpop.f32.mrf.mxu0
        %v1340 = vadd.f32 %v872, %v1339
        %v1341 = vpop.f32.mrf.mxu0
        %v1342 = vpop.f32.mrf.mxu0
        %v1343 = vadd.f32 %v875, %v1342
        %v1344 = vpop.f32.mrf.mxu0
        %1345 = vmatprep.mubr.bf16.mxu0 0
        %1346 = vmatmul.mubr.bf16.gmra.mxu0 %v1228
        %v1347 = vpop.f32.mrf.mxu0
        %v1348 = vadd.f32 %v880, %v1347
        %v1349 = vpop.f32.mrf.mxu0
        %v1350 = vpop.f32.mrf.mxu0
        %v1351 = vadd.f32 %v883, %v1350
        %v1352 = vpop.f32.mrf.mxu0
        %1353 = vmatprep.mubr.bf16.mxu0 0
        %1354 = vmatmul.mubr.bf16.gmra.mxu0 %v1231
        %v1355 = vpop.f32.mrf.mxu0
        %v1356 = vadd.f32 %v888, %v1355
        %v1357 = vpop.f32.mrf.mxu0
        %v1358 = vpop.f32.mrf.mxu0
        %v1359 = vadd.f32 %v891, %v1358
        %v1360 = vpop.f32.mrf.mxu0
        %1361 = vmatprep.mubr.bf16.mxu0 0
        %1362 = vmatmul.mubr.bf16.gmra.mxu0 %v1234
        %v1363 = vpop.f32.mrf.mxu0
        %v1364 = vadd.f32 %v896, %v1363
        %v1365 = vpop.f32.mrf.mxu0
        %v1366 = vpop.f32.mrf.mxu0
        %v1367 = vadd.f32 %v899, %v1366
        %v1368 = vpop.f32.mrf.mxu0
        %1369 = vmatprep.mubr.bf16.mxu0 0
        %1370 = vmatmul.mubr.bf16.gmra.mxu0 %v1237
        %v1371 = vpop.f32.mrf.mxu0
        %v1372 = vadd.f32 %v904, %v1371
        %v1373 = vpop.f32.mrf.mxu0
        %v1374 = vpop.f32.mrf.mxu0
        %v1375 = vadd.f32 %v907, %v1374
        %v1376 = vpop.f32.mrf.mxu0
        %1377 = vmatprep.mubr.bf16.mxu0 0
        %1378 = vmatmul.mubr.bf16.gmra.mxu0 %v1240
        %v1379 = vpop.f32.mrf.mxu0
        %v1380 = vadd.f32 %v912, %v1379
        %v1381 = vpop.f32.mrf.mxu0
        %v1382 = vpop.f32.mrf.mxu0
        %v1383 = vadd.f32 %v915, %v1382
        %v1384 = vpop.f32.mrf.mxu0
        %1385 = vmatprep.mubr.bf16.mxu0 0
        %1386 = vmatmul.mubr.bf16.gmra.mxu0 %v1243
        %v1387 = vpop.f32.mrf.mxu0
        %v1388 = vadd.f32 %v920, %v1387
        %v1389 = vpop.f32.mrf.mxu0
        %v1390 = vpop.f32.mrf.mxu0
        %v1391 = vadd.f32 %v923, %v1390
        %v1392 = vpop.f32.mrf.mxu0
        %1393 = vmatprep.mubr.bf16.mxu0 0
        %1394 = vmatmul.mubr.bf16.gmra.mxu0 %v1246
        %v1395 = vpop.f32.mrf.mxu0
        %v1396 = vadd.f32 %v928, %v1395
        %v1397 = vpop.f32.mrf.mxu0
        %v1398 = vpop.f32.mrf.mxu0
        %v1399 = vadd.f32 %v931, %v1398
        %v1400 = vpop.f32.mrf.mxu0
        %1401 = vmatprep.mubr.bf16.mxu0 0
        %1402 = vmatmul.mubr.bf16.gmra.mxu0 %v1249
        %v1403 = vpop.f32.mrf.mxu0
        %v1404 = vadd.f32 %v936, %v1403
        %v1405 = vpop.f32.mrf.mxu0
        %v1406 = vpop.f32.mrf.mxu0
        %v1407 = vadd.f32 %v939, %v1406
        %v1408 = vpop.f32.mrf.mxu0
        %1409 = vmatprep.mubr.bf16.mxu0 0
        %1410 = vmatmul.mubr.bf16.gmra.mxu0 %v1252
        %v1411 = vpop.f32.mrf.mxu0
        %v1412 = vadd.f32 %v944, %v1411
        %v1413 = vpop.f32.mrf.mxu0
        %v1414 = vpop.f32.mrf.mxu0
        %v1415 = vadd.f32 %v947, %v1414
        %v1416 = vpop.f32.mrf.mxu0
        %1417 = vmatprep.mubr.bf16.mxu0 0
        %1418 = vmatmul.mubr.bf16.gmra.mxu0 %v1255
        %v1419 = vpop.f32.mrf.mxu0
        %v1420 = vadd.f32 %v952, %v1419
        %v1421 = vpop.f32.mrf.mxu0
        %v1422 = vpop.f32.mrf.mxu0
        %v1423 = vadd.f32 %v955, %v1422
        %v1424 = vpop.f32.mrf.mxu0
        %1425 = vmatprep.mubr.bf16.mxu0 0
        %1426 = vmatmul.mubr.bf16.gmra.mxu0 %v1258
        %v1427 = vpop.f32.mrf.mxu0
        %v1428 = vadd.f32 %v960, %v1427
        %v1429 = vpop.f32.mrf.mxu0
        %v1430 = vpop.f32.mrf.mxu0
        %v1431 = vadd.f32 %v963, %v1430
        %v1432 = vpop.f32.mrf.mxu0
        %1433 = vmatprep.mubr.bf16.mxu0 0
        %1434 = vmatmul.mubr.bf16.gmra.mxu0 %v1261
        %v1435 = vpop.f32.mrf.mxu0
        %v1436 = vadd.f32 %v968, %v1435
        %v1437 = vpop.f32.mrf.mxu0
        %v1438 = vpop.f32.mrf.mxu0
        %v1439 = vadd.f32 %v971, %v1438
        %v1440 = vpop.f32.mrf.mxu0
        %1441 = vmatprep.mubr.bf16.mxu0 0
        %1442 = vmatmul.mubr.bf16.gmra.mxu0 %v1264
        %v1443 = vpop.f32.mrf.mxu0
        %v1444 = vadd.f32 %v976, %v1443
        %v1445 = vpop.f32.mrf.mxu0
        %v1446 = vpop.f32.mrf.mxu0
        %v1447 = vadd.f32 %v979, %v1446
        %v1448 = vpop.f32.mrf.mxu0
        %1449 = vmatprep.mubr.bf16.mxu0 0
        %1450 = vmatmul.mubr.bf16.gmra.mxu0 %v1267
        %v1451 = vpop.f32.mrf.mxu0
        %v1452 = vadd.f32 %v984, %v1451
        %v1453 = vpop.f32.mrf.mxu0
        %v1454 = vpop.f32.mrf.mxu0
        %v1455 = vadd.f32 %v987, %v1454
        %v1456 = vpop.f32.mrf.mxu0
        %1457 = vmatprep.mubr.bf16.mxu0 0
        %1458 = vmatmul.mubr.bf16.gmra.mxu0 %v1270
        %v1459 = vpop.f32.mrf.mxu0
        %v1460 = vadd.f32 %v992, %v1459
        %v1461 = vpop.f32.mrf.mxu0
        %v1462 = vpop.f32.mrf.mxu0
        %v1463 = vadd.f32 %v995, %v1462
        %v1464 = vpop.f32.mrf.mxu0
        %1465 = vmatprep.mubr.bf16.mxu0 0
        %1466 = vmatmul.mubr.bf16.gmra.mxu0 %v1273
        %v1467 = vpop.f32.mrf.mxu0
        %v1468 = vadd.f32 %v1000, %v1467
        %v1469 = vpop.f32.mrf.mxu0
        %v1470 = vpop.f32.mrf.mxu0
        %v1471 = vadd.f32 %v1003, %v1470
        %v1472 = vpop.f32.mrf.mxu0
        %1473 = vmatprep.mubr.bf16.mxu0 0
        %1474 = vmatmul.mubr.bf16.gmra.mxu0 %v1276
        %v1475 = vpop.f32.mrf.mxu0
        %v1476 = vadd.f32 %v1008, %v1475
        %v1477 = vpop.f32.mrf.mxu0
        %v1478 = vpop.f32.mrf.mxu0
        %v1479 = vadd.f32 %v1011, %v1478
        %v1480 = vpop.f32.mrf.mxu0
        %1481 = vdwg.mxu0
        %v1482 = vld [vmem:[%s290 + $0xac] sm:$0xf]
        %s1483 = scalar_lea.vmem %s2, 8
        %v1484 = vld [vmem:[%s1483] sm:$0xf]
        %v1486 = vunpack.c.l.b16 %v1482
        %v1487 = vpack.c.b16 %v1486, %v1486
        %vm1488 = vsmask.f32 4352
        %v1490 = vshrl.u32 %v679, 16
        %v1492 = vrot.slane %v1490, 3
        %v1493 = vshll.u32 %v679, 16
        %v1495 = vrot.slane %v1493, 4
        %v1496 = vor.u32 %v1492, %v1495
        %v1497 = vrot.slane %v1027, 3
        %v1498 = vrot.slane %v1030, 4
        %v1499 = vor.u32 %v1497, %v1498
        %v1500 = vsel %vm1488, %v1496, %v1499
        %v1501 = vrot.slane %v1036, 3
        %v1502 = vrot.slane %v1039, 4
        %v1503 = vor.u32 %v1501, %v1502
        %v1504 = vsel %vm1488, %v1499, %v1503
        %v1505 = vrot.slane %v1045, 3
        %v1506 = vrot.slane %v1048, 4
        %v1507 = vor.u32 %v1505, %v1506
        %v1508 = vsel %vm1488, %v1503, %v1507
        %v1509 = vrot.slane %v1054, 3
        %v1510 = vrot.slane %v1057, 4
        %v1511 = vor.u32 %v1509, %v1510
        %v1512 = vsel %vm1488, %v1507, %v1511
        %v1513 = vrot.slane %v1063, 3
        %v1514 = vrot.slane %v1066, 4
        %v1515 = vor.u32 %v1513, %v1514
        %v1516 = vsel %vm1488, %v1511, %v1515
        %v1517 = vrot.slane %v1072, 3
        %v1518 = vrot.slane %v1075, 4
        %v1519 = vor.u32 %v1517, %v1518
        %v1520 = vsel %vm1488, %v1515, %v1519
        %v1521 = vrot.slane %v1081, 3
        %v1522 = vrot.slane %v1084, 4
        %v1523 = vor.u32 %v1521, %v1522
        %v1524 = vsel %vm1488, %v1519, %v1523
        %v1525 = vrot.slane %v1090, 3
        %v1526 = vrot.slane %v1093, 4
        %v1527 = vor.u32 %v1525, %v1526
        %v1528 = vsel %vm1488, %v1523, %v1527
        %v1529 = vrot.slane %v1099, 3
        %v1530 = vrot.slane %v1102, 4
        %v1531 = vor.u32 %v1529, %v1530
        %v1532 = vsel %vm1488, %v1527, %v1531
        %v1533 = vrot.slane %v1108, 3
        %v1534 = vrot.slane %v1111, 4
        %v1535 = vor.u32 %v1533, %v1534
        %v1536 = vsel %vm1488, %v1531, %v1535
        %v1537 = vrot.slane %v1117, 3
        %v1538 = vrot.slane %v1120, 4
        %v1539 = vor.u32 %v1537, %v1538
        %v1540 = vsel %vm1488, %v1535, %v1539
        %v1541 = vrot.slane %v1126, 3
        %v1542 = vrot.slane %v1129, 4
        %v1543 = vor.u32 %v1541, %v1542
        %v1544 = vsel %vm1488, %v1539, %v1543
        %v1545 = vrot.slane %v1135, 3
        %v1546 = vrot.slane %v1138, 4
        %v1547 = vor.u32 %v1545, %v1546
        %v1548 = vsel %vm1488, %v1543, %v1547
        %v1549 = vrot.slane %v1144, 3
        %v1550 = vrot.slane %v1147, 4
        %v1551 = vor.u32 %v1549, %v1550
        %v1552 = vsel %vm1488, %v1547, %v1551
        %v1553 = vrot.slane %v1153, 3
        %v1554 = vrot.slane %v1156, 4
        %v1555 = vor.u32 %v1553, %v1554
        %v1556 = vsel %vm1488, %v1551, %v1555
        %v1557 = vrot.slane %v1162, 3
        %v1558 = vrot.slane %v1165, 4
        %v1559 = vor.u32 %v1557, %v1558
        %v1560 = vsel %vm1488, %v1555, %v1559
        %v1561 = vrot.slane %v1171, 3
        %v1562 = vrot.slane %v1174, 4
        %v1563 = vor.u32 %v1561, %v1562
        %v1564 = vsel %vm1488, %v1559, %v1563
        %v1565 = vrot.slane %v1180, 3
        %v1566 = vrot.slane %v1183, 4
        %v1567 = vor.u32 %v1565, %v1566
        %v1568 = vsel %vm1488, %v1563, %v1567
        %v1569 = vrot.slane %v1189, 3
        %v1570 = vrot.slane %v1192, 4
        %v1571 = vor.u32 %v1569, %v1570
        %v1572 = vsel %vm1488, %v1567, %v1571
        %v1573 = vrot.slane %v1198, 3
        %v1574 = vrot.slane %v1201, 4
        %v1575 = vor.u32 %v1573, %v1574
        %v1576 = vsel %vm1488, %v1571, %v1575
        %v1578 = vshrl.u32 %v1487, 16
        %v1580 = vrot.slane %v1578, 3
        %v1581 = vshll.u32 %v1487, 16
        %v1583 = vrot.slane %v1581, 4
        %v1584 = vor.u32 %v1580, %v1583
        %v1585 = vsel %vm1488, %v1575, %v1584
        %v1587 = vsel %vm745, %v1500, 0
        %v1590 = vsel %vm745, %v1504, 0
        %v1593 = vsel %vm745, %v1508, 0
        %v1596 = vsel %vm745, %v1512, 0
        %v1599 = vsel %vm745, %v1516, 0
        %v1602 = vsel %vm745, %v1520, 0
        %v1605 = vsel %vm745, %v1524, 0
        %v1608 = vsel %vm745, %v1528, 0
        %v1611 = vsel %vm745, %v1532, 0
        %v1614 = vsel %vm745, %v1536, 0
        %v1617 = vsel %vm745, %v1540, 0
        %v1620 = vsel %vm745, %v1544, 0
        %v1623 = vsel %vm745, %v1548, 0
        %v1626 = vsel %vm745, %v1552, 0
        %v1629 = vsel %vm745, %v1556, 0
        %v1632 = vsel %vm745, %v1560, 0
        %v1635 = vsel %vm745, %v1564, 0
        %v1638 = vsel %vm745, %v1568, 0
        %v1641 = vsel %vm745, %v1572, 0
        %v1644 = vsel %vm745, %v1576, 0
        %v1647 = vsel %vm745, %v1585, 0
        %v1650 = vsel %vm809, %v1484, 0
        %1652 = vmatprep.subr.bf16.mxu0 0
        %1653 = vmatpush1.bf16.msra.mxu0 0
        %1654 = vmatprep.subr.bf16.mxu0 0
        %1655 = vmatpush1.bf16.msra.mxu0 0
        %1656 = vmatprep.subr.bf16.mxu0 0
        %1657 = vmatpush1.bf16.msra.mxu0 0
        %1658 = vmatprep.subr.bf16.mxu0 0
        %1659 = vmatpush1.bf16.msra.mxu0 0
        %1660 = vmatprep.subr.bf16.mxu0 0
        %1661 = vmatpush1.bf16.msra.mxu0 0
        %1662 = vmatprep.subr.bf16.mxu0 0
        %1663 = vmatpush1.bf16.msra.mxu0 0
        %1664 = vmatprep.subr.bf16.mxu0 0
        %1665 = vmatpush1.bf16.msra.mxu0 0
        %1666 = vmatprep.subr.bf16.mxu0 0
        %1667 = vmatpush1.bf16.msra.mxu0 %v1650
        %1668 = vmatprep.subr.bf16.mxu0 0
        %1669 = vmatpush2.bf16.msra.mxu0 0
        %1670 = vmatprep.subr.bf16.mxu0 0
        %1671 = vmatpush2.bf16.msra.mxu0 0
        %1672 = vmatprep.subr.bf16.mxu0 0
        %1673 = vmatpush2.bf16.msra.mxu0 0
        %1674 = vmatprep.subr.bf16.mxu0 0
        %1675 = vmatpush2.bf16.msra.mxu0 0
        %1676 = vmatprep.subr.bf16.mxu0 0
        %1677 = vmatpush2.bf16.msra.mxu0 0
        %1678 = vmatprep.subr.bf16.mxu0 0
        %1679 = vmatpush2.bf16.msra.mxu0 0
        %1680 = vmatprep.subr.bf16.mxu0 0
        %1681 = vmatpush2.bf16.msra.mxu0 0
        %1682 = vmatprep.subr.bf16.mxu0 0
        %1683 = vmatpush2.bf16.msra.mxu0 0
        %1684 = vmatprep.mubr.bf16.mxu0 0
        %1685 = vmatmul.mubr.bf16.gmra.mxu0 %v1587
        %v1686 = vpop.f32.mrf.mxu0
        %v1687 = vadd.f32 0.0, %v1686
        %v1688 = vpop.f32.mrf.mxu0
        %v1689 = vpop.f32.mrf.mxu0
        %v1690 = vadd.f32 0.0, %v1689
        %v1691 = vpop.f32.mrf.mxu0
        %1692 = vmatprep.mubr.bf16.mxu0 0
        %1693 = vmatmul.mubr.bf16.gmra.mxu0 %v1590
        %v1694 = vpop.f32.mrf.mxu0
        %v1695 = vadd.f32 0.0, %v1694
        %v1696 = vpop.f32.mrf.mxu0
        %v1697 = vpop.f32.mrf.mxu0
        %v1698 = vadd.f32 0.0, %v1697
        %v1699 = vpop.f32.mrf.mxu0
        %1700 = vmatprep.mubr.bf16.mxu0 0
        %1701 = vmatmul.mubr.bf16.gmra.mxu0 %v1593
        %v1702 = vpop.f32.mrf.mxu0
        %v1703 = vadd.f32 0.0, %v1702
        %v1704 = vpop.f32.mrf.mxu0
        %v1705 = vpop.f32.mrf.mxu0
        %v1706 = vadd.f32 0.0, %v1705
        %v1707 = vpop.f32.mrf.mxu0
        %1708 = vmatprep.mubr.bf16.mxu0 0
        %1709 = vmatmul.mubr.bf16.gmra.mxu0 %v1596
        %v1710 = vpop.f32.mrf.mxu0
        %v1711 = vadd.f32 0.0, %v1710
        %v1712 = vpop.f32.mrf.mxu0
        %v1713 = vpop.f32.mrf.mxu0
        %v1714 = vadd.f32 0.0, %v1713
        %v1715 = vpop.f32.mrf.mxu0
        %1716 = vmatprep.mubr.bf16.mxu0 0
        %1717 = vmatmul.mubr.bf16.gmra.mxu0 %v1599
        %v1718 = vpop.f32.mrf.mxu0
        %v1719 = vadd.f32 0.0, %v1718
        %v1720 = vpop.f32.mrf.mxu0
        %v1721 = vpop.f32.mrf.mxu0
        %v1722 = vadd.f32 0.0, %v1721
        %v1723 = vpop.f32.mrf.mxu0
        %1724 = vmatprep.mubr.bf16.mxu0 0
        %1725 = vmatmul.mubr.bf16.gmra.mxu0 %v1602
        %v1726 = vpop.f32.mrf.mxu0
        %v1727 = vadd.f32 0.0, %v1726
        %v1728 = vpop.f32.mrf.mxu0
        %v1729 = vpop.f32.mrf.mxu0
        %v1730 = vadd.f32 0.0, %v1729
        %v1731 = vpop.f32.mrf.mxu0
        %1732 = vmatprep.mubr.bf16.mxu0 0
        %1733 = vmatmul.mubr.bf16.gmra.mxu0 %v1605
        %v1734 = vpop.f32.mrf.mxu0
        %v1735 = vadd.f32 0.0, %v1734
        %v1736 = vpop.f32.mrf.mxu0
        %v1737 = vpop.f32.mrf.mxu0
        %v1738 = vadd.f32 0.0, %v1737
        %v1739 = vpop.f32.mrf.mxu0
        %1740 = vmatprep.mubr.bf16.mxu0 0
        %1741 = vmatmul.mubr.bf16.gmra.mxu0 %v1608
        %v1742 = vpop.f32.mrf.mxu0
        %v1743 = vadd.f32 0.0, %v1742
        %v1744 = vpop.f32.mrf.mxu0
        %v1745 = vpop.f32.mrf.mxu0
        %v1746 = vadd.f32 0.0, %v1745
        %v1747 = vpop.f32.mrf.mxu0
        %1748 = vmatprep.mubr.bf16.mxu0 0
        %1749 = vmatmul.mubr.bf16.gmra.mxu0 %v1611
        %v1750 = vpop.f32.mrf.mxu0
        %v1751 = vadd.f32 0.0, %v1750
        %v1752 = vpop.f32.mrf.mxu0
        %v1753 = vpop.f32.mrf.mxu0
        %v1754 = vadd.f32 0.0, %v1753
        %v1755 = vpop.f32.mrf.mxu0
        %1756 = vmatprep.mubr.bf16.mxu0 0
        %1757 = vmatmul.mubr.bf16.gmra.mxu0 %v1614
        %v1758 = vpop.f32.mrf.mxu0
        %v1759 = vadd.f32 0.0, %v1758
        %v1760 = vpop.f32.mrf.mxu0
        %v1761 = vpop.f32.mrf.mxu0
        %v1762 = vadd.f32 0.0, %v1761
        %v1763 = vpop.f32.mrf.mxu0
        %1764 = vmatprep.mubr.bf16.mxu0 0
        %1765 = vmatmul.mubr.bf16.gmra.mxu0 %v1617
        %v1766 = vpop.f32.mrf.mxu0
        %v1767 = vadd.f32 0.0, %v1766
        %v1768 = vpop.f32.mrf.mxu0
        %v1769 = vpop.f32.mrf.mxu0
        %v1770 = vadd.f32 0.0, %v1769
        %v1771 = vpop.f32.mrf.mxu0
        %1772 = vmatprep.mubr.bf16.mxu0 0
        %1773 = vmatmul.mubr.bf16.gmra.mxu0 %v1620
        %v1774 = vpop.f32.mrf.mxu0
        %v1775 = vadd.f32 0.0, %v1774
        %v1776 = vpop.f32.mrf.mxu0
        %v1777 = vpop.f32.mrf.mxu0
        %v1778 = vadd.f32 0.0, %v1777
        %v1779 = vpop.f32.mrf.mxu0
        %1780 = vmatprep.mubr.bf16.mxu0 0
        %1781 = vmatmul.mubr.bf16.gmra.mxu0 %v1623
        %v1782 = vpop.f32.mrf.mxu0
        %v1783 = vadd.f32 0.0, %v1782
        %v1784 = vpop.f32.mrf.mxu0
        %v1785 = vpop.f32.mrf.mxu0
        %v1786 = vadd.f32 0.0, %v1785
        %v1787 = vpop.f32.mrf.mxu0
        %1788 = vmatprep.mubr.bf16.mxu0 0
        %1789 = vmatmul.mubr.bf16.gmra.mxu0 %v1626
        %v1790 = vpop.f32.mrf.mxu0
        %v1791 = vadd.f32 0.0, %v1790
        %v1792 = vpop.f32.mrf.mxu0
        %v1793 = vpop.f32.mrf.mxu0
        %v1794 = vadd.f32 0.0, %v1793
        %v1795 = vpop.f32.mrf.mxu0
        %1796 = vmatprep.mubr.bf16.mxu0 0
        %1797 = vmatmul.mubr.bf16.gmra.mxu0 %v1629
        %v1798 = vpop.f32.mrf.mxu0
        %v1799 = vadd.f32 0.0, %v1798
        %v1800 = vpop.f32.mrf.mxu0
        %v1801 = vpop.f32.mrf.mxu0
        %v1802 = vadd.f32 0.0, %v1801
        %v1803 = vpop.f32.mrf.mxu0
        %1804 = vmatprep.mubr.bf16.mxu0 0
        %1805 = vmatmul.mubr.bf16.gmra.mxu0 %v1632
        %v1806 = vpop.f32.mrf.mxu0
        %v1807 = vadd.f32 0.0, %v1806
        %v1808 = vpop.f32.mrf.mxu0
        %v1809 = vpop.f32.mrf.mxu0
        %v1810 = vadd.f32 0.0, %v1809
        %v1811 = vpop.f32.mrf.mxu0
        %1812 = vmatprep.mubr.bf16.mxu0 0
        %1813 = vmatmul.mubr.bf16.gmra.mxu0 %v1635
        %v1814 = vpop.f32.mrf.mxu0
        %v1815 = vadd.f32 0.0, %v1814
        %v1816 = vpop.f32.mrf.mxu0
        %v1817 = vpop.f32.mrf.mxu0
        %v1818 = vadd.f32 0.0, %v1817
        %v1819 = vpop.f32.mrf.mxu0
        %1820 = vmatprep.mubr.bf16.mxu0 0
        %1821 = vmatmul.mubr.bf16.gmra.mxu0 %v1638
        %v1822 = vpop.f32.mrf.mxu0
        %v1823 = vadd.f32 0.0, %v1822
        %v1824 = vpop.f32.mrf.mxu0
        %v1825 = vpop.f32.mrf.mxu0
        %v1826 = vadd.f32 0.0, %v1825
        %v1827 = vpop.f32.mrf.mxu0
        %1828 = vmatprep.mubr.bf16.mxu0 0
        %1829 = vmatmul.mubr.bf16.gmra.mxu0 %v1641
        %v1830 = vpop.f32.mrf.mxu0
        %v1831 = vadd.f32 0.0, %v1830
        %v1832 = vpop.f32.mrf.mxu0
        %v1833 = vpop.f32.mrf.mxu0
        %v1834 = vadd.f32 0.0, %v1833
        %v1835 = vpop.f32.mrf.mxu0
        %1836 = vmatprep.mubr.bf16.mxu0 0
        %1837 = vmatmul.mubr.bf16.gmra.mxu0 %v1644
        %v1838 = vpop.f32.mrf.mxu0
        %v1839 = vadd.f32 0.0, %v1838
        %v1840 = vpop.f32.mrf.mxu0
        %v1841 = vpop.f32.mrf.mxu0
        %v1842 = vadd.f32 0.0, %v1841
        %v1843 = vpop.f32.mrf.mxu0
        %1844 = vmatprep.mubr.bf16.mxu0 0
        %1845 = vmatmul.mubr.bf16.gmra.mxu0 %v1647
        %v1846 = vpop.f32.mrf.mxu0
        %v1847 = vadd.f32 0.0, %v1846
        %v1848 = vpop.f32.mrf.mxu0
        %v1849 = vpop.f32.mrf.mxu0
        %v1850 = vadd.f32 0.0, %v1849
        %v1851 = vpop.f32.mrf.mxu0
        %1852 = vdwg.mxu0
        %v1853 = vadd.f32 %v1316, %v1687
        %v1854 = vadd.f32 %v1319, %v1690
        %v1855 = vadd.f32 %v1324, %v1695
        %v1856 = vadd.f32 %v1327, %v1698
        %v1857 = vadd.f32 %v1332, %v1703
        %v1858 = vadd.f32 %v1335, %v1706
        %v1859 = vadd.f32 %v1340, %v1711
        %v1860 = vadd.f32 %v1343, %v1714
        %v1861 = vadd.f32 %v1348, %v1719
        %v1862 = vadd.f32 %v1351, %v1722
        %v1863 = vadd.f32 %v1356, %v1727
        %v1864 = vadd.f32 %v1359, %v1730
        %v1865 = vadd.f32 %v1364, %v1735
        %v1866 = vadd.f32 %v1367, %v1738
        %v1867 = vadd.f32 %v1372, %v1743
        %v1868 = vadd.f32 %v1375, %v1746
        %v1869 = vadd.f32 %v1380, %v1751
        %v1870 = vadd.f32 %v1383, %v1754
        %v1871 = vadd.f32 %v1388, %v1759
        %v1872 = vadd.f32 %v1391, %v1762
        %v1873 = vadd.f32 %v1396, %v1767
        %v1874 = vadd.f32 %v1399, %v1770
        %v1875 = vadd.f32 %v1404, %v1775
        %v1876 = vadd.f32 %v1407, %v1778
        %v1877 = vadd.f32 %v1412, %v1783
        %v1878 = vadd.f32 %v1415, %v1786
        %v1879 = vadd.f32 %v1420, %v1791
        %v1880 = vadd.f32 %v1423, %v1794
        %v1881 = vadd.f32 %v1428, %v1799
        %v1882 = vadd.f32 %v1431, %v1802
        %v1883 = vadd.f32 %v1436, %v1807
        %v1884 = vadd.f32 %v1439, %v1810
        %v1885 = vadd.f32 %v1444, %v1815
        %v1886 = vadd.f32 %v1447, %v1818
        %v1887 = vadd.f32 %v1452, %v1823
        %v1888 = vadd.f32 %v1455, %v1826
        %v1889 = vadd.f32 %v1460, %v1831
        %v1890 = vadd.f32 %v1463, %v1834
        %v1891 = vadd.f32 %v1468, %v1839
        %v1892 = vadd.f32 %v1471, %v1842
        %v1893 = vadd.f32 %v1476, %v1847
        %v1894 = vadd.f32 %v1479, %v1850
        %v1895 = vld [vmem:[%s290 + $0xc] sm:$0x8]
        %v1896 = vld [vmem:[%s290 + $0x10] sm:$0xf]
        %v1897 = vld [vmem:[%s290 + $0x14] sm:$0xf]
        %v1898 = vld [vmem:[%s290 + $0x18] sm:$0xf]
        %v1899 = vld [vmem:[%s290 + $0x1c] sm:$0xf]
        %v1900 = vld [vmem:[%s290 + $0x20] sm:$0xf]
        %v1901 = vld [vmem:[%s290 + $0x24] sm:$0xf]
        %v1902 = vld [vmem:[%s290 + $0x28] sm:$0xf]
        %v1903 = vld [vmem:[%s290 + $0x2c] sm:$0xf]
        %v1904 = vld [vmem:[%s290 + $0x30] sm:$0xf]
        %v1905 = vld [vmem:[%s290 + $0x34] sm:$0xf]
        %v1906 = vld [vmem:[%s290 + $0x38] sm:$0xf]
        %v1907 = vld [vmem:[%s290 + $0x3c] sm:$0xf]
        %v1908 = vld [vmem:[%s290 + $0x40] sm:$0xf]
        %v1909 = vld [vmem:[%s290 + $0x44] sm:$0xf]
        %v1910 = vld [vmem:[%s290 + $0x48] sm:$0xf]
        %v1911 = vld [vmem:[%s290 + $0x4c] sm:$0xf]
        %v1912 = vld [vmem:[%s290 + $0x50] sm:$0xf]
        %v1913 = vld [vmem:[%s290 + $0x54] sm:$0xf]
        %v1914 = vld [vmem:[%s290 + $0x58] sm:$0xf]
        %v1915 = vld [vmem:[%s290 + $0x5c] sm:$0xf]
        %v1916 = vld [vmem:[%s290 + $0x60] sm:$0xf]
        %v1917 = vld [vmem:[%s290 + $0x64] sm:$0xf]
        %v1918 = vld [vmem:[%s290 + $0x68] sm:$0xf]
        %v1919 = vld [vmem:[%s290 + $0x6c] sm:$0xf]
        %v1920 = vld [vmem:[%s290 + $0x70] sm:$0xf]
        %v1921 = vld [vmem:[%s290 + $0x74] sm:$0xf]
        %v1922 = vld [vmem:[%s290 + $0x78] sm:$0xf]
        %v1923 = vld [vmem:[%s290 + $0x7c] sm:$0xf]
        %v1924 = vld [vmem:[%s290 + $0x80] sm:$0xf]
        %v1925 = vld [vmem:[%s290 + $0x84] sm:$0xf]
        %v1926 = vld [vmem:[%s290 + $0x88] sm:$0xf]
        %v1927 = vld [vmem:[%s290 + $0x8c] sm:$0xf]
        %v1928 = vld [vmem:[%s290 + $0x90] sm:$0xf]
        %v1929 = vld [vmem:[%s290 + $0x94] sm:$0xf]
        %v1930 = vld [vmem:[%s290 + $0x98] sm:$0xf]
        %v1931 = vld [vmem:[%s290 + $0x9c] sm:$0xf]
        %v1932 = vld [vmem:[%s290 + $0xa0] sm:$0xf]
        %v1933 = vld [vmem:[%s290 + $0xa4] sm:$0xf]
        %v1934 = vld [vmem:[%s290 + $0xa8] sm:$0xf]
        %v1935 = vld [vmem:[%s290 + $0xac] sm:$0xf]
        %v1936 = vld [vmem:[%s290 + $0xb0] sm:$0xf]
        %v1937 = vld [vmem:[%s290 + $0xb4] sm:$0xf]
        %s1938 = scalar_lea.vmem %s2, 12
        %v1939 = vld [vmem:[%s1938] sm:$0xf]
        %v1983 = vunpack.c.l.b16 %v1895
        %v1984 = vunpack.c.l.b16 %v1896
        %v1985 = vunpack.c.l.b16 %v1897
        %v1986 = vunpack.c.l.b16 %v1898
        %v1987 = vunpack.c.l.b16 %v1899
        %v1988 = vunpack.c.l.b16 %v1900
        %v1989 = vunpack.c.l.b16 %v1901
        %v1990 = vunpack.c.l.b16 %v1902
        %v1991 = vunpack.c.l.b16 %v1903
        %v1992 = vunpack.c.l.b16 %v1904
        %v1993 = vunpack.c.l.b16 %v1905
        %v1994 = vunpack.c.l.b16 %v1906
        %v1995 = vunpack.c.l.b16 %v1907
        %v1996 = vunpack.c.l.b16 %v1908
        %v1997 = vunpack.c.l.b16 %v1909
        %v1998 = vunpack.c.l.b16 %v1910
        %v1999 = vunpack.c.l.b16 %v1911
        %v2000 = vunpack.c.l.b16 %v1912
        %v2001 = vunpack.c.l.b16 %v1913
        %v2002 = vunpack.c.l.b16 %v1914
        %v2003 = vunpack.c.l.b16 %v1915
        %v2004 = vunpack.c.l.b16 %v1916
        %v2005 = vunpack.c.l.b16 %v1917
        %v2006 = vunpack.c.l.b16 %v1918
        %v2007 = vunpack.c.l.b16 %v1919
        %v2008 = vunpack.c.l.b16 %v1920
        %v2009 = vunpack.c.l.b16 %v1921
        %v2010 = vunpack.c.l.b16 %v1922
        %v2011 = vunpack.c.l.b16 %v1923
        %v2012 = vunpack.c.l.b16 %v1924
        %v2013 = vunpack.c.l.b16 %v1925
        %v2014 = vunpack.c.l.b16 %v1926
        %v2015 = vunpack.c.l.b16 %v1927
        %v2016 = vunpack.c.l.b16 %v1928
        %v2017 = vunpack.c.l.b16 %v1929
        %v2018 = vunpack.c.l.b16 %v1930
        %v2019 = vunpack.c.l.b16 %v1931
        %v2020 = vunpack.c.l.b16 %v1932
        %v2021 = vunpack.c.l.b16 %v1933
        %v2022 = vunpack.c.l.b16 %v1934
        %v2023 = vunpack.c.l.b16 %v1935
        %v2024 = vunpack.c.l.b16 %v1936
        %v2025 = vunpack.c.l.b16 %v1937
        %v2026 = vpack.c.b16 %v1984, %v1983
        %v2027 = vpack.c.b16 %v1986, %v1985
        %v2028 = vpack.c.b16 %v1988, %v1987
        %v2029 = vpack.c.b16 %v1990, %v1989
        %v2030 = vpack.c.b16 %v1992, %v1991
        %v2031 = vpack.c.b16 %v1994, %v1993
        %v2032 = vpack.c.b16 %v1996, %v1995
        %v2033 = vpack.c.b16 %v1998, %v1997
        %v2034 = vpack.c.b16 %v2000, %v1999
        %v2035 = vpack.c.b16 %v2002, %v2001
        %v2036 = vpack.c.b16 %v2004, %v2003
        %v2037 = vpack.c.b16 %v2006, %v2005
        %v2038 = vpack.c.b16 %v2008, %v2007
        %v2039 = vpack.c.b16 %v2010, %v2009
        %v2040 = vpack.c.b16 %v2012, %v2011
        %v2041 = vpack.c.b16 %v2014, %v2013
        %v2042 = vpack.c.b16 %v2016, %v2015
        %v2043 = vpack.c.b16 %v2018, %v2017
        %v2044 = vpack.c.b16 %v2020, %v2019
        %v2045 = vpack.c.b16 %v2022, %v2021
        %v2046 = vpack.c.b16 %v2024, %v2023
        %v2047 = vpack.c.b16 %v2025, %v2025
        %v2049 = vshrl.u32 %v2026, 16
        %v2051 = vrot.slane %v2049, 3
        %v2052 = vshll.u32 %v2026, 16
        %v2054 = vrot.slane %v2052, 4
        %v2055 = vor.u32 %v2051, %v2054
        %v2057 = vshrl.u32 %v2027, 16
        %v2059 = vrot.slane %v2057, 3
        %v2060 = vshll.u32 %v2027, 16
        %v2062 = vrot.slane %v2060, 4
        %v2063 = vor.u32 %v2059, %v2062
        %v2064 = vsel %vm1488, %v2055, %v2063
        %v2066 = vshrl.u32 %v2028, 16
        %v2068 = vrot.slane %v2066, 3
        %v2069 = vshll.u32 %v2028, 16
        %v2071 = vrot.slane %v2069, 4
        %v2072 = vor.u32 %v2068, %v2071
        %v2073 = vsel %vm1488, %v2063, %v2072
        %v2075 = vshrl.u32 %v2029, 16
        %v2077 = vrot.slane %v2075, 3
        %v2078 = vshll.u32 %v2029, 16
        %v2080 = vrot.slane %v2078, 4
        %v2081 = vor.u32 %v2077, %v2080
        %v2082 = vsel %vm1488, %v2072, %v2081
        %v2084 = vshrl.u32 %v2030, 16
        %v2086 = vrot.slane %v2084, 3
        %v2087 = vshll.u32 %v2030, 16
        %v2089 = vrot.slane %v2087, 4
        %v2090 = vor.u32 %v2086, %v2089
        %v2091 = vsel %vm1488, %v2081, %v2090
        %v2093 = vshrl.u32 %v2031, 16
        %v2095 = vrot.slane %v2093, 3
        %v2096 = vshll.u32 %v2031, 16
        %v2098 = vrot.slane %v2096, 4
        %v2099 = vor.u32 %v2095, %v2098
        %v2100 = vsel %vm1488, %v2090, %v2099
        %v2102 = vshrl.u32 %v2032, 16
        %v2104 = vrot.slane %v2102, 3
        %v2105 = vshll.u32 %v2032, 16
        %v2107 = vrot.slane %v2105, 4
        %v2108 = vor.u32 %v2104, %v2107
        %v2109 = vsel %vm1488, %v2099, %v2108
        %v2111 = vshrl.u32 %v2033, 16
        %v2113 = vrot.slane %v2111, 3
        %v2114 = vshll.u32 %v2033, 16
        %v2116 = vrot.slane %v2114, 4
        %v2117 = vor.u32 %v2113, %v2116
        %v2118 = vsel %vm1488, %v2108, %v2117
        %v2120 = vshrl.u32 %v2034, 16
        %v2122 = vrot.slane %v2120, 3
        %v2123 = vshll.u32 %v2034, 16
        %v2125 = vrot.slane %v2123, 4
        %v2126 = vor.u32 %v2122, %v2125
        %v2127 = vsel %vm1488, %v2117, %v2126
        %v2129 = vshrl.u32 %v2035, 16
        %v2131 = vrot.slane %v2129, 3
        %v2132 = vshll.u32 %v2035, 16
        %v2134 = vrot.slane %v2132, 4
        %v2135 = vor.u32 %v2131, %v2134
        %v2136 = vsel %vm1488, %v2126, %v2135
        %v2138 = vshrl.u32 %v2036, 16
        %v2140 = vrot.slane %v2138, 3
        %v2141 = vshll.u32 %v2036, 16
        %v2143 = vrot.slane %v2141, 4
        %v2144 = vor.u32 %v2140, %v2143
        %v2145 = vsel %vm1488, %v2135, %v2144
        %v2147 = vshrl.u32 %v2037, 16
        %v2149 = vrot.slane %v2147, 3
        %v2150 = vshll.u32 %v2037, 16
        %v2152 = vrot.slane %v2150, 4
        %v2153 = vor.u32 %v2149, %v2152
        %v2154 = vsel %vm1488, %v2144, %v2153
        %v2156 = vshrl.u32 %v2038, 16
        %v2158 = vrot.slane %v2156, 3
        %v2159 = vshll.u32 %v2038, 16
        %v2161 = vrot.slane %v2159, 4
        %v2162 = vor.u32 %v2158, %v2161
        %v2163 = vsel %vm1488, %v2153, %v2162
        %v2165 = vshrl.u32 %v2039, 16
        %v2167 = vrot.slane %v2165, 3
        %v2168 = vshll.u32 %v2039, 16
        %v2170 = vrot.slane %v2168, 4
        %v2171 = vor.u32 %v2167, %v2170
        %v2172 = vsel %vm1488, %v2162, %v2171
        %v2174 = vshrl.u32 %v2040, 16
        %v2176 = vrot.slane %v2174, 3
        %v2177 = vshll.u32 %v2040, 16
        %v2179 = vrot.slane %v2177, 4
        %v2180 = vor.u32 %v2176, %v2179
        %v2181 = vsel %vm1488, %v2171, %v2180
        %v2183 = vshrl.u32 %v2041, 16
        %v2185 = vrot.slane %v2183, 3
        %v2186 = vshll.u32 %v2041, 16
        %v2188 = vrot.slane %v2186, 4
        %v2189 = vor.u32 %v2185, %v2188
        %v2190 = vsel %vm1488, %v2180, %v2189
        %v2192 = vshrl.u32 %v2042, 16
        %v2194 = vrot.slane %v2192, 3
        %v2195 = vshll.u32 %v2042, 16
        %v2197 = vrot.slane %v2195, 4
        %v2198 = vor.u32 %v2194, %v2197
        %v2199 = vsel %vm1488, %v2189, %v2198
        %v2201 = vshrl.u32 %v2043, 16
        %v2203 = vrot.slane %v2201, 3
        %v2204 = vshll.u32 %v2043, 16
        %v2206 = vrot.slane %v2204, 4
        %v2207 = vor.u32 %v2203, %v2206
        %v2208 = vsel %vm1488, %v2198, %v2207
        %v2210 = vshrl.u32 %v2044, 16
        %v2212 = vrot.slane %v2210, 3
        %v2213 = vshll.u32 %v2044, 16
        %v2215 = vrot.slane %v2213, 4
        %v2216 = vor.u32 %v2212, %v2215
        %v2217 = vsel %vm1488, %v2207, %v2216
        %v2219 = vshrl.u32 %v2045, 16
        %v2221 = vrot.slane %v2219, 3
        %v2222 = vshll.u32 %v2045, 16
        %v2224 = vrot.slane %v2222, 4
        %v2225 = vor.u32 %v2221, %v2224
        %v2226 = vsel %vm1488, %v2216, %v2225
        %v2228 = vshrl.u32 %v2046, 16
        %v2230 = vrot.slane %v2228, 3
        %v2231 = vshll.u32 %v2046, 16
        %v2233 = vrot.slane %v2231, 4
        %v2234 = vor.u32 %v2230, %v2233
        %v2235 = vsel %vm1488, %v2225, %v2234
        %v2237 = vshrl.u32 %v2047, 16
        %v2239 = vrot.slane %v2237, 3
        %v2240 = vshll.u32 %v2047, 16
        %v2242 = vrot.slane %v2240, 4
        %v2243 = vor.u32 %v2239, %v2242
        %v2244 = vsel %vm1488, %v2234, %v2243
        %v2246 = vsel %vm745, %v2064, 0
        %v2249 = vsel %vm745, %v2073, 0
        %v2252 = vsel %vm745, %v2082, 0
        %v2255 = vsel %vm745, %v2091, 0
        %v2258 = vsel %vm745, %v2100, 0
        %v2261 = vsel %vm745, %v2109, 0
        %v2264 = vsel %vm745, %v2118, 0
        %v2267 = vsel %vm745, %v2127, 0
        %v2270 = vsel %vm745, %v2136, 0
        %v2273 = vsel %vm745, %v2145, 0
        %v2276 = vsel %vm745, %v2154, 0
        %v2279 = vsel %vm745, %v2163, 0
        %v2282 = vsel %vm745, %v2172, 0
        %v2285 = vsel %vm745, %v2181, 0
        %v2288 = vsel %vm745, %v2190, 0
        %v2291 = vsel %vm745, %v2199, 0
        %v2294 = vsel %vm745, %v2208, 0
        %v2297 = vsel %vm745, %v2217, 0
        %v2300 = vsel %vm745, %v2226, 0
        %v2303 = vsel %vm745, %v2235, 0
        %v2306 = vsel %vm745, %v2244, 0
        %v2309 = vsel %vm809, %v1939, 0
        %2311 = vmatprep.subr.bf16.mxu0 0
        %2312 = vmatpush1.bf16.msra.mxu0 0
        %2313 = vmatprep.subr.bf16.mxu0 0
        %2314 = vmatpush1.bf16.msra.mxu0 0
        %2315 = vmatprep.subr.bf16.mxu0 0
        %2316 = vmatpush1.bf16.msra.mxu0 0
        %2317 = vmatprep.subr.bf16.mxu0 0
        %2318 = vmatpush1.bf16.msra.mxu0 0
        %2319 = vmatprep.subr.bf16.mxu0 0
        %2320 = vmatpush1.bf16.msra.mxu0 0
        %2321 = vmatprep.subr.bf16.mxu0 0
        %2322 = vmatpush1.bf16.msra.mxu0 0
        %2323 = vmatprep.subr.bf16.mxu0 0
        %2324 = vmatpush1.bf16.msra.mxu0 0
        %2325 = vmatprep.subr.bf16.mxu0 0
        %2326 = vmatpush1.bf16.msra.mxu0 %v2309
        %2327 = vmatprep.subr.bf16.mxu0 0
        %2328 = vmatpush2.bf16.msra.mxu0 0
        %2329 = vmatprep.subr.bf16.mxu0 0
        %2330 = vmatpush2.bf16.msra.mxu0 0
        %2331 = vmatprep.subr.bf16.mxu0 0
        %2332 = vmatpush2.bf16.msra.mxu0 0
        %2333 = vmatprep.subr.bf16.mxu0 0
        %2334 = vmatpush2.bf16.msra.mxu0 0
        %2335 = vmatprep.subr.bf16.mxu0 0
        %2336 = vmatpush2.bf16.msra.mxu0 0
        %2337 = vmatprep.subr.bf16.mxu0 0
        %2338 = vmatpush2.bf16.msra.mxu0 0
        %2339 = vmatprep.subr.bf16.mxu0 0
        %2340 = vmatpush2.bf16.msra.mxu0 0
        %2341 = vmatprep.subr.bf16.mxu0 0
        %2342 = vmatpush2.bf16.msra.mxu0 0
        %2343 = vmatprep.mubr.bf16.mxu0 0
        %2344 = vmatmul.mubr.bf16.gmra.mxu0 %v2246
        %v2345 = vpop.f32.mrf.mxu0
        %v2346 = vadd.f32 0.0, %v2345
        %v2347 = vpop.f32.mrf.mxu0
        %v2348 = vpop.f32.mrf.mxu0
        %v2349 = vadd.f32 0.0, %v2348
        %v2350 = vpop.f32.mrf.mxu0
        %2351 = vmatprep.mubr.bf16.mxu0 0
        %2352 = vmatmul.mubr.bf16.gmra.mxu0 %v2249
        %v2353 = vpop.f32.mrf.mxu0
        %v2354 = vadd.f32 0.0, %v2353
        %v2355 = vpop.f32.mrf.mxu0
        %v2356 = vpop.f32.mrf.mxu0
        %v2357 = vadd.f32 0.0, %v2356
        %v2358 = vpop.f32.mrf.mxu0
        %2359 = vmatprep.mubr.bf16.mxu0 0
        %2360 = vmatmul.mubr.bf16.gmra.mxu0 %v2252
        %v2361 = vpop.f32.mrf.mxu0
        %v2362 = vadd.f32 0.0, %v2361
        %v2363 = vpop.f32.mrf.mxu0
        %v2364 = vpop.f32.mrf.mxu0
        %v2365 = vadd.f32 0.0, %v2364
        %v2366 = vpop.f32.mrf.mxu0
        %2367 = vmatprep.mubr.bf16.mxu0 0
        %2368 = vmatmul.mubr.bf16.gmra.mxu0 %v2255
        %v2369 = vpop.f32.mrf.mxu0
        %v2370 = vadd.f32 0.0, %v2369
        %v2371 = vpop.f32.mrf.mxu0
        %v2372 = vpop.f32.mrf.mxu0
        %v2373 = vadd.f32 0.0, %v2372
        %v2374 = vpop.f32.mrf.mxu0
        %2375 = vmatprep.mubr.bf16.mxu0 0
        %2376 = vmatmul.mubr.bf16.gmra.mxu0 %v2258
        %v2377 = vpop.f32.mrf.mxu0
        %v2378 = vadd.f32 0.0, %v2377
        %v2379 = vpop.f32.mrf.mxu0
        %v2380 = vpop.f32.mrf.mxu0
        %v2381 = vadd.f32 0.0, %v2380
        %v2382 = vpop.f32.mrf.mxu0
        %2383 = vmatprep.mubr.bf16.mxu0 0
        %2384 = vmatmul.mubr.bf16.gmra.mxu0 %v2261
        %v2385 = vpop.f32.mrf.mxu0
        %v2386 = vadd.f32 0.0, %v2385
        %v2387 = vpop.f32.mrf.mxu0
        %v2388 = vpop.f32.mrf.mxu0
        %v2389 = vadd.f32 0.0, %v2388
        %v2390 = vpop.f32.mrf.mxu0
        %2391 = vmatprep.mubr.bf16.mxu0 0
        %2392 = vmatmul.mubr.bf16.gmra.mxu0 %v2264
        %v2393 = vpop.f32.mrf.mxu0
        %v2394 = vadd.f32 0.0, %v2393
        %v2395 = vpop.f32.mrf.mxu0
        %v2396 = vpop.f32.mrf.mxu0
        %v2397 = vadd.f32 0.0, %v2396
        %v2398 = vpop.f32.mrf.mxu0
        %2399 = vmatprep.mubr.bf16.mxu0 0
        %2400 = vmatmul.mubr.bf16.gmra.mxu0 %v2267
        %v2401 = vpop.f32.mrf.mxu0
        %v2402 = vadd.f32 0.0, %v2401
        %v2403 = vpop.f32.mrf.mxu0
        %v2404 = vpop.f32.mrf.mxu0
        %v2405 = vadd.f32 0.0, %v2404
        %v2406 = vpop.f32.mrf.mxu0
        %2407 = vmatprep.mubr.bf16.mxu0 0
        %2408 = vmatmul.mubr.bf16.gmra.mxu0 %v2270
        %v2409 = vpop.f32.mrf.mxu0
        %v2410 = vadd.f32 0.0, %v2409
        %v2411 = vpop.f32.mrf.mxu0
        %v2412 = vpop.f32.mrf.mxu0
        %v2413 = vadd.f32 0.0, %v2412
        %v2414 = vpop.f32.mrf.mxu0
        %2415 = vmatprep.mubr.bf16.mxu0 0
        %2416 = vmatmul.mubr.bf16.gmra.mxu0 %v2273
        %v2417 = vpop.f32.mrf.mxu0
        %v2418 = vadd.f32 0.0, %v2417
        %v2419 = vpop.f32.mrf.mxu0
        %v2420 = vpop.f32.mrf.mxu0
        %v2421 = vadd.f32 0.0, %v2420
        %v2422 = vpop.f32.mrf.mxu0
        %2423 = vmatprep.mubr.bf16.mxu0 0
        %2424 = vmatmul.mubr.bf16.gmra.mxu0 %v2276
        %v2425 = vpop.f32.mrf.mxu0
        %v2426 = vadd.f32 0.0, %v2425
        %v2427 = vpop.f32.mrf.mxu0
        %v2428 = vpop.f32.mrf.mxu0
        %v2429 = vadd.f32 0.0, %v2428
        %v2430 = vpop.f32.mrf.mxu0
        %2431 = vmatprep.mubr.bf16.mxu0 0
        %2432 = vmatmul.mubr.bf16.gmra.mxu0 %v2279
        %v2433 = vpop.f32.mrf.mxu0
        %v2434 = vadd.f32 0.0, %v2433
        %v2435 = vpop.f32.mrf.mxu0
        %v2436 = vpop.f32.mrf.mxu0
        %v2437 = vadd.f32 0.0, %v2436
        %v2438 = vpop.f32.mrf.mxu0
        %2439 = vmatprep.mubr.bf16.mxu0 0
        %2440 = vmatmul.mubr.bf16.gmra.mxu0 %v2282
        %v2441 = vpop.f32.mrf.mxu0
        %v2442 = vadd.f32 0.0, %v2441
        %v2443 = vpop.f32.mrf.mxu0
        %v2444 = vpop.f32.mrf.mxu0
        %v2445 = vadd.f32 0.0, %v2444
        %v2446 = vpop.f32.mrf.mxu0
        %2447 = vmatprep.mubr.bf16.mxu0 0
        %2448 = vmatmul.mubr.bf16.gmra.mxu0 %v2285
        %v2449 = vpop.f32.mrf.mxu0
        %v2450 = vadd.f32 0.0, %v2449
        %v2451 = vpop.f32.mrf.mxu0
        %v2452 = vpop.f32.mrf.mxu0
        %v2453 = vadd.f32 0.0, %v2452
        %v2454 = vpop.f32.mrf.mxu0
        %2455 = vmatprep.mubr.bf16.mxu0 0
        %2456 = vmatmul.mubr.bf16.gmra.mxu0 %v2288
        %v2457 = vpop.f32.mrf.mxu0
        %v2458 = vadd.f32 0.0, %v2457
        %v2459 = vpop.f32.mrf.mxu0
        %v2460 = vpop.f32.mrf.mxu0
        %v2461 = vadd.f32 0.0, %v2460
        %v2462 = vpop.f32.mrf.mxu0
        %2463 = vmatprep.mubr.bf16.mxu0 0
        %2464 = vmatmul.mubr.bf16.gmra.mxu0 %v2291
        %v2465 = vpop.f32.mrf.mxu0
        %v2466 = vadd.f32 0.0, %v2465
        %v2467 = vpop.f32.mrf.mxu0
        %v2468 = vpop.f32.mrf.mxu0
        %v2469 = vadd.f32 0.0, %v2468
        %v2470 = vpop.f32.mrf.mxu0
        %2471 = vmatprep.mubr.bf16.mxu0 0
        %2472 = vmatmul.mubr.bf16.gmra.mxu0 %v2294
        %v2473 = vpop.f32.mrf.mxu0
        %v2474 = vadd.f32 0.0, %v2473
        %v2475 = vpop.f32.mrf.mxu0
        %v2476 = vpop.f32.mrf.mxu0
        %v2477 = vadd.f32 0.0, %v2476
        %v2478 = vpop.f32.mrf.mxu0
        %2479 = vmatprep.mubr.bf16.mxu0 0
        %2480 = vmatmul.mubr.bf16.gmra.mxu0 %v2297
        %v2481 = vpop.f32.mrf.mxu0
        %v2482 = vadd.f32 0.0, %v2481
        %v2483 = vpop.f32.mrf.mxu0
        %v2484 = vpop.f32.mrf.mxu0
        %v2485 = vadd.f32 0.0, %v2484
        %v2486 = vpop.f32.mrf.mxu0
        %2487 = vmatprep.mubr.bf16.mxu0 0
        %2488 = vmatmul.mubr.bf16.gmra.mxu0 %v2300
        %v2489 = vpop.f32.mrf.mxu0
        %v2490 = vadd.f32 0.0, %v2489
        %v2491 = vpop.f32.mrf.mxu0
        %v2492 = vpop.f32.mrf.mxu0
        %v2493 = vadd.f32 0.0, %v2492
        %v2494 = vpop.f32.mrf.mxu0
        %2495 = vmatprep.mubr.bf16.mxu0 0
        %2496 = vmatmul.mubr.bf16.gmra.mxu0 %v2303
        %v2497 = vpop.f32.mrf.mxu0
        %v2498 = vadd.f32 0.0, %v2497
        %v2499 = vpop.f32.mrf.mxu0
        %v2500 = vpop.f32.mrf.mxu0
        %v2501 = vadd.f32 0.0, %v2500
        %v2502 = vpop.f32.mrf.mxu0
        %2503 = vmatprep.mubr.bf16.mxu0 0
        %2504 = vmatmul.mubr.bf16.gmra.mxu0 %v2306
        %v2505 = vpop.f32.mrf.mxu0
        %v2506 = vadd.f32 0.0, %v2505
        %v2507 = vpop.f32.mrf.mxu0
        %v2508 = vpop.f32.mrf.mxu0
        %v2509 = vadd.f32 0.0, %v2508
        %v2510 = vpop.f32.mrf.mxu0
        %2511 = vdwg.mxu0
        %v2512 = vadd.f32 %v1853, %v2346
        %v2513 = vadd.f32 %v1854, %v2349
        %v2514 = vadd.f32 %v1855, %v2354
        %v2515 = vadd.f32 %v1856, %v2357
        %v2516 = vadd.f32 %v1857, %v2362
        %v2517 = vadd.f32 %v1858, %v2365
        %v2518 = vadd.f32 %v1859, %v2370
        %v2519 = vadd.f32 %v1860, %v2373
        %v2520 = vadd.f32 %v1861, %v2378
        %v2521 = vadd.f32 %v1862, %v2381
        %v2522 = vadd.f32 %v1863, %v2386
        %v2523 = vadd.f32 %v1864, %v2389
        %v2524 = vadd.f32 %v1865, %v2394
        %v2525 = vadd.f32 %v1866, %v2397
        %v2526 = vadd.f32 %v1867, %v2402
        %v2527 = vadd.f32 %v1868, %v2405
        %v2528 = vadd.f32 %v1869, %v2410
        %v2529 = vadd.f32 %v1870, %v2413
        %v2530 = vadd.f32 %v1871, %v2418
        %v2531 = vadd.f32 %v1872, %v2421
        %v2532 = vadd.f32 %v1873, %v2426
        %v2533 = vadd.f32 %v1874, %v2429
        %v2534 = vadd.f32 %v1875, %v2434
        %v2535 = vadd.f32 %v1876, %v2437
        %v2536 = vadd.f32 %v1877, %v2442
        %v2537 = vadd.f32 %v1878, %v2445
        %v2538 = vadd.f32 %v1879, %v2450
        %v2539 = vadd.f32 %v1880, %v2453
        %v2540 = vadd.f32 %v1881, %v2458
        %v2541 = vadd.f32 %v1882, %v2461
        %v2542 = vadd.f32 %v1883, %v2466
        %v2543 = vadd.f32 %v1884, %v2469
        %v2544 = vadd.f32 %v1885, %v2474
        %v2545 = vadd.f32 %v1886, %v2477
        %v2546 = vadd.f32 %v1887, %v2482
        %v2547 = vadd.f32 %v1888, %v2485
        %v2548 = vadd.f32 %v1889, %v2490
        %v2549 = vadd.f32 %v1890, %v2493
        %v2550 = vadd.f32 %v1891, %v2498
        %v2551 = vadd.f32 %v1892, %v2501
        %v2552 = vadd.f32 %v1893, %v2506
        %v2553 = vadd.f32 %v1894, %v2509
        %s2554 = scalar_lea.vmem %s2, 16
        %v2555 = vld [vmem:[%s2554] sm:$0xf]
        %v2556 = vpack.c.b16 %v1985, %v1984
        %v2557 = vpack.c.b16 %v1987, %v1986
        %v2558 = vpack.c.b16 %v1989, %v1988
        %v2559 = vpack.c.b16 %v1991, %v1990
        %v2560 = vpack.c.b16 %v1993, %v1992
        %v2561 = vpack.c.b16 %v1995, %v1994
        %v2562 = vpack.c.b16 %v1997, %v1996
        %v2563 = vpack.c.b16 %v1999, %v1998
        %v2564 = vpack.c.b16 %v2001, %v2000
        %v2565 = vpack.c.b16 %v2003, %v2002
        %v2566 = vpack.c.b16 %v2005, %v2004
        %v2567 = vpack.c.b16 %v2007, %v2006
        %v2568 = vpack.c.b16 %v2009, %v2008
        %v2569 = vpack.c.b16 %v2011, %v2010
        %v2570 = vpack.c.b16 %v2013, %v2012
        %v2571 = vpack.c.b16 %v2015, %v2014
        %v2572 = vpack.c.b16 %v2017, %v2016
        %v2573 = vpack.c.b16 %v2019, %v2018
        %v2574 = vpack.c.b16 %v2021, %v2020
        %v2575 = vpack.c.b16 %v2023, %v2022
        %v2576 = vpack.c.b16 %v2025, %v2024
        %v2578 = vsel %vm745, %v2556, 0
        %v2581 = vsel %vm745, %v2557, 0
        %v2584 = vsel %vm745, %v2558, 0
        %v2587 = vsel %vm745, %v2559, 0
        %v2590 = vsel %vm745, %v2560, 0
        %v2593 = vsel %vm745, %v2561, 0
        %v2596 = vsel %vm745, %v2562, 0
        %v2599 = vsel %vm745, %v2563, 0
        %v2602 = vsel %vm745, %v2564, 0
        %v2605 = vsel %vm745, %v2565, 0
        %v2608 = vsel %vm745, %v2566, 0
        %v2611 = vsel %vm745, %v2567, 0
        %v2614 = vsel %vm745, %v2568, 0
        %v2617 = vsel %vm745, %v2569, 0
        %v2620 = vsel %vm745, %v2570, 0
        %v2623 = vsel %vm745, %v2571, 0
        %v2626 = vsel %vm745, %v2572, 0
        %v2629 = vsel %vm745, %v2573, 0
        %v2632 = vsel %vm745, %v2574, 0
        %v2635 = vsel %vm745, %v2575, 0
        %v2638 = vsel %vm745, %v2576, 0
        %v2641 = vsel %vm809, %v2555, 0
        %2643 = vmatprep.subr.bf16.mxu0 0
        %2644 = vmatpush1.bf16.msra.mxu0 0
        %2645 = vmatprep.subr.bf16.mxu0 0
        %2646 = vmatpush1.bf16.msra.mxu0 0
        %2647 = vmatprep.subr.bf16.mxu0 0
        %2648 = vmatpush1.bf16.msra.mxu0 0
        %2649 = vmatprep.subr.bf16.mxu0 0
        %2650 = vmatpush1.bf16.msra.mxu0 0
        %2651 = vmatprep.subr.bf16.mxu0 0
        %2652 = vmatpush1.bf16.msra.mxu0 0
        %2653 = vmatprep.subr.bf16.mxu0 0
        %2654 = vmatpush1.bf16.msra.mxu0 0
        %2655 = vmatprep.subr.bf16.mxu0 0
        %2656 = vmatpush1.bf16.msra.mxu0 0
        %2657 = vmatprep.subr.bf16.mxu0 0
        %2658 = vmatpush1.bf16.msra.mxu0 %v2641
        %2659 = vmatprep.subr.bf16.mxu0 0
        %2660 = vmatpush2.bf16.msra.mxu0 0
        %2661 = vmatprep.subr.bf16.mxu0 0
        %2662 = vmatpush2.bf16.msra.mxu0 0
        %2663 = vmatprep.subr.bf16.mxu0 0
        %2664 = vmatpush2.bf16.msra.mxu0 0
        %2665 = vmatprep.subr.bf16.mxu0 0
        %2666 = vmatpush2.bf16.msra.mxu0 0
        %2667 = vmatprep.subr.bf16.mxu0 0
        %2668 = vmatpush2.bf16.msra.mxu0 0
        %2669 = vmatprep.subr.bf16.mxu0 0
        %2670 = vmatpush2.bf16.msra.mxu0 0
        %2671 = vmatprep.subr.bf16.mxu0 0
        %2672 = vmatpush2.bf16.msra.mxu0 0
        %2673 = vmatprep.subr.bf16.mxu0 0
        %2674 = vmatpush2.bf16.msra.mxu0 0
        %2675 = vmatprep.mubr.bf16.mxu0 0
        %2676 = vmatmul.mubr.bf16.gmra.mxu0 %v2578
        %v2677 = vpop.f32.mrf.mxu0
        %v2678 = vadd.f32 0.0, %v2677
        %v2679 = vpop.f32.mrf.mxu0
        %v2680 = vpop.f32.mrf.mxu0
        %v2681 = vadd.f32 0.0, %v2680
        %v2682 = vpop.f32.mrf.mxu0
        %2683 = vmatprep.mubr.bf16.mxu0 0
        %2684 = vmatmul.mubr.bf16.gmra.mxu0 %v2581
        %v2685 = vpop.f32.mrf.mxu0
        %v2686 = vadd.f32 0.0, %v2685
        %v2687 = vpop.f32.mrf.mxu0
        %v2688 = vpop.f32.mrf.mxu0
        %v2689 = vadd.f32 0.0, %v2688
        %v2690 = vpop.f32.mrf.mxu0
        %2691 = vmatprep.mubr.bf16.mxu0 0
        %2692 = vmatmul.mubr.bf16.gmra.mxu0 %v2584
        %v2693 = vpop.f32.mrf.mxu0
        %v2694 = vadd.f32 0.0, %v2693
        %v2695 = vpop.f32.mrf.mxu0
        %v2696 = vpop.f32.mrf.mxu0
        %v2697 = vadd.f32 0.0, %v2696
        %v2698 = vpop.f32.mrf.mxu0
        %2699 = vmatprep.mubr.bf16.mxu0 0
        %2700 = vmatmul.mubr.bf16.gmra.mxu0 %v2587
        %v2701 = vpop.f32.mrf.mxu0
        %v2702 = vadd.f32 0.0, %v2701
        %v2703 = vpop.f32.mrf.mxu0
        %v2704 = vpop.f32.mrf.mxu0
        %v2705 = vadd.f32 0.0, %v2704
        %v2706 = vpop.f32.mrf.mxu0
        %2707 = vmatprep.mubr.bf16.mxu0 0
        %2708 = vmatmul.mubr.bf16.gmra.mxu0 %v2590
        %v2709 = vpop.f32.mrf.mxu0
        %v2710 = vadd.f32 0.0, %v2709
        %v2711 = vpop.f32.mrf.mxu0
        %v2712 = vpop.f32.mrf.mxu0
        %v2713 = vadd.f32 0.0, %v2712
        %v2714 = vpop.f32.mrf.mxu0
        %2715 = vmatprep.mubr.bf16.mxu0 0
        %2716 = vmatmul.mubr.bf16.gmra.mxu0 %v2593
        %v2717 = vpop.f32.mrf.mxu0
        %v2718 = vadd.f32 0.0, %v2717
        %v2719 = vpop.f32.mrf.mxu0
        %v2720 = vpop.f32.mrf.mxu0
        %v2721 = vadd.f32 0.0, %v2720
        %v2722 = vpop.f32.mrf.mxu0
        %2723 = vmatprep.mubr.bf16.mxu0 0
        %2724 = vmatmul.mubr.bf16.gmra.mxu0 %v2596
        %v2725 = vpop.f32.mrf.mxu0
        %v2726 = vadd.f32 0.0, %v2725
        %v2727 = vpop.f32.mrf.mxu0
        %v2728 = vpop.f32.mrf.mxu0
        %v2729 = vadd.f32 0.0, %v2728
        %v2730 = vpop.f32.mrf.mxu0
        %2731 = vmatprep.mubr.bf16.mxu0 0
        %2732 = vmatmul.mubr.bf16.gmra.mxu0 %v2599
        %v2733 = vpop.f32.mrf.mxu0
        %v2734 = vadd.f32 0.0, %v2733
        %v2735 = vpop.f32.mrf.mxu0
        %v2736 = vpop.f32.mrf.mxu0
        %v2737 = vadd.f32 0.0, %v2736
        %v2738 = vpop.f32.mrf.mxu0
        %2739 = vmatprep.mubr.bf16.mxu0 0
        %2740 = vmatmul.mubr.bf16.gmra.mxu0 %v2602
        %v2741 = vpop.f32.mrf.mxu0
        %v2742 = vadd.f32 0.0, %v2741
        %v2743 = vpop.f32.mrf.mxu0
        %v2744 = vpop.f32.mrf.mxu0
        %v2745 = vadd.f32 0.0, %v2744
        %v2746 = vpop.f32.mrf.mxu0
        %2747 = vmatprep.mubr.bf16.mxu0 0
        %2748 = vmatmul.mubr.bf16.gmra.mxu0 %v2605
        %v2749 = vpop.f32.mrf.mxu0
        %v2750 = vadd.f32 0.0, %v2749
        %v2751 = vpop.f32.mrf.mxu0
        %v2752 = vpop.f32.mrf.mxu0
        %v2753 = vadd.f32 0.0, %v2752
        %v2754 = vpop.f32.mrf.mxu0
        %2755 = vmatprep.mubr.bf16.mxu0 0
        %2756 = vmatmul.mubr.bf16.gmra.mxu0 %v2608
        %v2757 = vpop.f32.mrf.mxu0
        %v2758 = vadd.f32 0.0, %v2757
        %v2759 = vpop.f32.mrf.mxu0
        %v2760 = vpop.f32.mrf.mxu0
        %v2761 = vadd.f32 0.0, %v2760
        %v2762 = vpop.f32.mrf.mxu0
        %2763 = vmatprep.mubr.bf16.mxu0 0
        %2764 = vmatmul.mubr.bf16.gmra.mxu0 %v2611
        %v2765 = vpop.f32.mrf.mxu0
        %v2766 = vadd.f32 0.0, %v2765
        %v2767 = vpop.f32.mrf.mxu0
        %v2768 = vpop.f32.mrf.mxu0
        %v2769 = vadd.f32 0.0, %v2768
        %v2770 = vpop.f32.mrf.mxu0
        %2771 = vmatprep.mubr.bf16.mxu0 0
        %2772 = vmatmul.mubr.bf16.gmra.mxu0 %v2614
        %v2773 = vpop.f32.mrf.mxu0
        %v2774 = vadd.f32 0.0, %v2773
        %v2775 = vpop.f32.mrf.mxu0
        %v2776 = vpop.f32.mrf.mxu0
        %v2777 = vadd.f32 0.0, %v2776
        %v2778 = vpop.f32.mrf.mxu0
        %2779 = vmatprep.mubr.bf16.mxu0 0
        %2780 = vmatmul.mubr.bf16.gmra.mxu0 %v2617
        %v2781 = vpop.f32.mrf.mxu0
        %v2782 = vadd.f32 0.0, %v2781
        %v2783 = vpop.f32.mrf.mxu0
        %v2784 = vpop.f32.mrf.mxu0
        %v2785 = vadd.f32 0.0, %v2784
        %v2786 = vpop.f32.mrf.mxu0
        %2787 = vmatprep.mubr.bf16.mxu0 0
        %2788 = vmatmul.mubr.bf16.gmra.mxu0 %v2620
        %v2789 = vpop.f32.mrf.mxu0
        %v2790 = vadd.f32 0.0, %v2789
        %v2791 = vpop.f32.mrf.mxu0
        %v2792 = vpop.f32.mrf.mxu0
        %v2793 = vadd.f32 0.0, %v2792
        %v2794 = vpop.f32.mrf.mxu0
        %2795 = vmatprep.mubr.bf16.mxu0 0
        %2796 = vmatmul.mubr.bf16.gmra.mxu0 %v2623
        %v2797 = vpop.f32.mrf.mxu0
        %v2798 = vadd.f32 0.0, %v2797
        %v2799 = vpop.f32.mrf.mxu0
        %v2800 = vpop.f32.mrf.mxu0
        %v2801 = vadd.f32 0.0, %v2800
        %v2802 = vpop.f32.mrf.mxu0
        %2803 = vmatprep.mubr.bf16.mxu0 0
        %2804 = vmatmul.mubr.bf16.gmra.mxu0 %v2626
        %v2805 = vpop.f32.mrf.mxu0
        %v2806 = vadd.f32 0.0, %v2805
        %v2807 = vpop.f32.mrf.mxu0
        %v2808 = vpop.f32.mrf.mxu0
        %v2809 = vadd.f32 0.0, %v2808
        %v2810 = vpop.f32.mrf.mxu0
        %2811 = vmatprep.mubr.bf16.mxu0 0
        %2812 = vmatmul.mubr.bf16.gmra.mxu0 %v2629
        %v2813 = vpop.f32.mrf.mxu0
        %v2814 = vadd.f32 0.0, %v2813
        %v2815 = vpop.f32.mrf.mxu0
        %v2816 = vpop.f32.mrf.mxu0
        %v2817 = vadd.f32 0.0, %v2816
        %v2818 = vpop.f32.mrf.mxu0
        %2819 = vmatprep.mubr.bf16.mxu0 0
        %2820 = vmatmul.mubr.bf16.gmra.mxu0 %v2632
        %v2821 = vpop.f32.mrf.mxu0
        %v2822 = vadd.f32 0.0, %v2821
        %v2823 = vpop.f32.mrf.mxu0
        %v2824 = vpop.f32.mrf.mxu0
        %v2825 = vadd.f32 0.0, %v2824
        %v2826 = vpop.f32.mrf.mxu0
        %2827 = vmatprep.mubr.bf16.mxu0 0
        %2828 = vmatmul.mubr.bf16.gmra.mxu0 %v2635
        %v2829 = vpop.f32.mrf.mxu0
        %v2830 = vadd.f32 0.0, %v2829
        %v2831 = vpop.f32.mrf.mxu0
        %v2832 = vpop.f32.mrf.mxu0
        %v2833 = vadd.f32 0.0, %v2832
        %v2834 = vpop.f32.mrf.mxu0
        %2835 = vmatprep.mubr.bf16.mxu0 0
        %2836 = vmatmul.mubr.bf16.gmra.mxu0 %v2638
        %v2837 = vpop.f32.mrf.mxu0
        %v2838 = vadd.f32 0.0, %v2837
        %v2839 = vpop.f32.mrf.mxu0
        %v2840 = vpop.f32.mrf.mxu0
        %v2841 = vadd.f32 0.0, %v2840
        %v2842 = vpop.f32.mrf.mxu0
        %2843 = vdwg.mxu0
        %v2844 = vadd.f32 %v2512, %v2678
        %v2845 = vadd.f32 %v2513, %v2681
        %v2846 = vadd.f32 %v2514, %v2686
        %v2847 = vadd.f32 %v2515, %v2689
        %v2848 = vadd.f32 %v2516, %v2694
        %v2849 = vadd.f32 %v2517, %v2697
        %v2850 = vadd.f32 %v2518, %v2702
        %v2851 = vadd.f32 %v2519, %v2705
        %v2852 = vadd.f32 %v2520, %v2710
        %v2853 = vadd.f32 %v2521, %v2713
        %v2854 = vadd.f32 %v2522, %v2718
        %v2855 = vadd.f32 %v2523, %v2721
        %v2856 = vadd.f32 %v2524, %v2726
        %v2857 = vadd.f32 %v2525, %v2729
        %v2858 = vadd.f32 %v2526, %v2734
        %v2859 = vadd.f32 %v2527, %v2737
        %v2860 = vadd.f32 %v2528, %v2742
        %v2861 = vadd.f32 %v2529, %v2745
        %v2862 = vadd.f32 %v2530, %v2750
        %v2863 = vadd.f32 %v2531, %v2753
        %v2864 = vadd.f32 %v2532, %v2758
        %v2865 = vadd.f32 %v2533, %v2761
        %v2866 = vadd.f32 %v2534, %v2766
        %v2867 = vadd.f32 %v2535, %v2769
        %v2868 = vadd.f32 %v2536, %v2774
        %v2869 = vadd.f32 %v2537, %v2777
        %v2870 = vadd.f32 %v2538, %v2782
        %v2871 = vadd.f32 %v2539, %v2785
        %v2872 = vadd.f32 %v2540, %v2790
        %v2873 = vadd.f32 %v2541, %v2793
        %v2874 = vadd.f32 %v2542, %v2798
        %v2875 = vadd.f32 %v2543, %v2801
        %v2876 = vadd.f32 %v2544, %v2806
        %v2877 = vadd.f32 %v2545, %v2809
        %v2878 = vadd.f32 %v2546, %v2814
        %v2879 = vadd.f32 %v2547, %v2817
        %v2880 = vadd.f32 %v2548, %v2822
        %v2881 = vadd.f32 %v2549, %v2825
        %v2882 = vadd.f32 %v2550, %v2830
        %v2883 = vadd.f32 %v2551, %v2833
        %v2884 = vadd.f32 %v2552, %v2838
        %v2885 = vadd.f32 %v2553, %v2841
        %v2886 = vld [vmem:[%s290 + $0x10] sm:$0xf]
        %v2887 = vld [vmem:[%s290 + $0x14] sm:$0xf]
        %v2888 = vld [vmem:[%s290 + $0x18] sm:$0xf]
        %v2889 = vld [vmem:[%s290 + $0x1c] sm:$0xf]
        %v2890 = vld [vmem:[%s290 + $0x20] sm:$0xf]
        %v2891 = vld [vmem:[%s290 + $0x24] sm:$0xf]
        %v2892 = vld [vmem:[%s290 + $0x28] sm:$0xf]
        %v2893 = vld [vmem:[%s290 + $0x2c] sm:$0xf]
        %v2894 = vld [vmem:[%s290 + $0x30] sm:$0xf]
        %v2895 = vld [vmem:[%s290 + $0x34] sm:$0xf]
        %v2896 = vld [vmem:[%s290 + $0x38] sm:$0xf]
        %v2897 = vld [vmem:[%s290 + $0x3c] sm:$0xf]
        %v2898 = vld [vmem:[%s290 + $0x40] sm:$0xf]
        %v2899 = vld [vmem:[%s290 + $0x44] sm:$0xf]
        %v2900 = vld [vmem:[%s290 + $0x48] sm:$0xf]
        %v2901 = vld [vmem:[%s290 + $0x4c] sm:$0xf]
        %v2902 = vld [vmem:[%s290 + $0x50] sm:$0xf]
        %v2903 = vld [vmem:[%s290 + $0x54] sm:$0xf]
        %v2904 = vld [vmem:[%s290 + $0x58] sm:$0xf]
        %v2905 = vld [vmem:[%s290 + $0x5c] sm:$0xf]
        %v2906 = vld [vmem:[%s290 + $0x60] sm:$0xf]
        %v2907 = vld [vmem:[%s290 + $0x64] sm:$0xf]
        %v2908 = vld [vmem:[%s290 + $0x68] sm:$0xf]
        %v2909 = vld [vmem:[%s290 + $0x6c] sm:$0xf]
        %v2910 = vld [vmem:[%s290 + $0x70] sm:$0xf]
        %v2911 = vld [vmem:[%s290 + $0x74] sm:$0xf]
        %v2912 = vld [vmem:[%s290 + $0x78] sm:$0xf]
        %v2913 = vld [vmem:[%s290 + $0x7c] sm:$0xf]
        %v2914 = vld [vmem:[%s290 + $0x80] sm:$0xf]
        %v2915 = vld [vmem:[%s290 + $0x84] sm:$0xf]
        %v2916 = vld [vmem:[%s290 + $0x88] sm:$0xf]
        %v2917 = vld [vmem:[%s290 + $0x8c] sm:$0xf]
        %v2918 = vld [vmem:[%s290 + $0x90] sm:$0xf]
        %v2919 = vld [vmem:[%s290 + $0x94] sm:$0xf]
        %v2920 = vld [vmem:[%s290 + $0x98] sm:$0xf]
        %v2921 = vld [vmem:[%s290 + $0x9c] sm:$0xf]
        %v2922 = vld [vmem:[%s290 + $0xa0] sm:$0xf]
        %v2923 = vld [vmem:[%s290 + $0xa4] sm:$0xf]
        %v2924 = vld [vmem:[%s290 + $0xa8] sm:$0xf]
        %v2925 = vld [vmem:[%s290 + $0xac] sm:$0xf]
        %v2926 = vld [vmem:[%s290 + $0xb0] sm:$0xf]
        %v2927 = vld [vmem:[%s290 + $0xb4] sm:$0xf]
        %v2928 = vld [vmem:[%s290 + $0xb8] sm:$0x1]
        %s2929 = scalar_lea.vmem %s2, 20
        %v2930 = vld [vmem:[%s2929] sm:$0xf]
        %v2974 = vunpack.c.l.b16 %v2886
        %v2975 = vunpack.c.l.b16 %v2887
        %v2976 = vunpack.c.l.b16 %v2888
        %v2977 = vunpack.c.l.b16 %v2889
        %v2978 = vunpack.c.l.b16 %v2890
        %v2979 = vunpack.c.l.b16 %v2891
        %v2980 = vunpack.c.l.b16 %v2892
        %v2981 = vunpack.c.l.b16 %v2893
        %v2982 = vunpack.c.l.b16 %v2894
        %v2983 = vunpack.c.l.b16 %v2895
        %v2984 = vunpack.c.l.b16 %v2896
        %v2985 = vunpack.c.l.b16 %v2897
        %v2986 = vunpack.c.l.b16 %v2898
        %v2987 = vunpack.c.l.b16 %v2899
        %v2988 = vunpack.c.l.b16 %v2900
        %v2989 = vunpack.c.l.b16 %v2901
        %v2990 = vunpack.c.l.b16 %v2902
        %v2991 = vunpack.c.l.b16 %v2903
        %v2992 = vunpack.c.l.b16 %v2904
        %v2993 = vunpack.c.l.b16 %v2905
        %v2994 = vunpack.c.l.b16 %v2906
        %v2995 = vunpack.c.l.b16 %v2907
        %v2996 = vunpack.c.l.b16 %v2908
        %v2997 = vunpack.c.l.b16 %v2909
        %v2998 = vunpack.c.l.b16 %v2910
        %v2999 = vunpack.c.l.b16 %v2911
        %v3000 = vunpack.c.l.b16 %v2912
        %v3001 = vunpack.c.l.b16 %v2913
        %v3002 = vunpack.c.l.b16 %v2914
        %v3003 = vunpack.c.l.b16 %v2915
        %v3004 = vunpack.c.l.b16 %v2916
        %v3005 = vunpack.c.l.b16 %v2917
        %v3006 = vunpack.c.l.b16 %v2918
        %v3007 = vunpack.c.l.b16 %v2919
        %v3008 = vunpack.c.l.b16 %v2920
        %v3009 = vunpack.c.l.b16 %v2921
        %v3010 = vunpack.c.l.b16 %v2922
        %v3011 = vunpack.c.l.b16 %v2923
        %v3012 = vunpack.c.l.b16 %v2924
        %v3013 = vunpack.c.l.b16 %v2925
        %v3014 = vunpack.c.l.b16 %v2926
        %v3015 = vunpack.c.l.b16 %v2927
        %v3016 = vunpack.c.l.b16 %v2928
        %v3017 = vpack.c.b16 %v2975, %v2974
        %v3018 = vpack.c.b16 %v2977, %v2976
        %v3019 = vpack.c.b16 %v2979, %v2978
        %v3020 = vpack.c.b16 %v2981, %v2980
        %v3021 = vpack.c.b16 %v2983, %v2982
        %v3022 = vpack.c.b16 %v2985, %v2984
        %v3023 = vpack.c.b16 %v2987, %v2986
        %v3024 = vpack.c.b16 %v2989, %v2988
        %v3025 = vpack.c.b16 %v2991, %v2990
        %v3026 = vpack.c.b16 %v2993, %v2992
        %v3027 = vpack.c.b16 %v2995, %v2994
        %v3028 = vpack.c.b16 %v2997, %v2996
        %v3029 = vpack.c.b16 %v2999, %v2998
        %v3030 = vpack.c.b16 %v3001, %v3000
        %v3031 = vpack.c.b16 %v3003, %v3002
        %v3032 = vpack.c.b16 %v3005, %v3004
        %v3033 = vpack.c.b16 %v3007, %v3006
        %v3034 = vpack.c.b16 %v3009, %v3008
        %v3035 = vpack.c.b16 %v3011, %v3010
        %v3036 = vpack.c.b16 %v3013, %v3012
        %v3037 = vpack.c.b16 %v3015, %v3014
        %v3038 = vpack.c.b16 %v3016, %v3016
        %vm3039 = vsmask.f32 7424
        %v3041 = vshrl.u32 %v3017, 16
        %v3043 = vshll.u32 %v3017, 16
        %v3045 = vrot.slane %v3043, 1
        %v3046 = vor.u32 %v3041, %v3045
        %v3048 = vshll.u32 %v3018, 16
        %v3050 = vrot.slane %v3048, 1
        %v3051 = vsel %vm3039, %v3046, %v3050
        %v3052 = vshrl.u32 %v3018, 16
        %v3054 = vor.u32 %v3052, %v3050
        %v3056 = vshll.u32 %v3019, 16
        %v3058 = vrot.slane %v3056, 1
        %v3059 = vsel %vm3039, %v3054, %v3058
        %v3060 = vshrl.u32 %v3019, 16
        %v3062 = vor.u32 %v3060, %v3058
        %v3064 = vshll.u32 %v3020, 16
        %v3066 = vrot.slane %v3064, 1
        %v3067 = vsel %vm3039, %v3062, %v3066
        %v3068 = vshrl.u32 %v3020, 16
        %v3070 = vor.u32 %v3068, %v3066
        %v3072 = vshll.u32 %v3021, 16
        %v3074 = vrot.slane %v3072, 1
        %v3075 = vsel %vm3039, %v3070, %v3074
        %v3076 = vshrl.u32 %v3021, 16
        %v3078 = vor.u32 %v3076, %v3074
        %v3080 = vshll.u32 %v3022, 16
        %v3082 = vrot.slane %v3080, 1
        %v3083 = vsel %vm3039, %v3078, %v3082
        %v3084 = vshrl.u32 %v3022, 16
        %v3086 = vor.u32 %v3084, %v3082
        %v3088 = vshll.u32 %v3023, 16
        %v3090 = vrot.slane %v3088, 1
        %v3091 = vsel %vm3039, %v3086, %v3090
        %v3092 = vshrl.u32 %v3023, 16
        %v3094 = vor.u32 %v3092, %v3090
        %v3096 = vshll.u32 %v3024, 16
        %v3098 = vrot.slane %v3096, 1
        %v3099 = vsel %vm3039, %v3094, %v3098
        %v3100 = vshrl.u32 %v3024, 16
        %v3102 = vor.u32 %v3100, %v3098
        %v3104 = vshll.u32 %v3025, 16
        %v3106 = vrot.slane %v3104, 1
        %v3107 = vsel %vm3039, %v3102, %v3106
        %v3108 = vshrl.u32 %v3025, 16
        %v3110 = vor.u32 %v3108, %v3106
        %v3112 = vshll.u32 %v3026, 16
        %v3114 = vrot.slane %v3112, 1
        %v3115 = vsel %vm3039, %v3110, %v3114
        %v3116 = vshrl.u32 %v3026, 16
        %v3118 = vor.u32 %v3116, %v3114
        %v3120 = vshll.u32 %v3027, 16
        %v3122 = vrot.slane %v3120, 1
        %v3123 = vsel %vm3039, %v3118, %v3122
        %v3124 = vshrl.u32 %v3027, 16
        %v3126 = vor.u32 %v3124, %v3122
        %v3128 = vshll.u32 %v3028, 16
        %v3130 = vrot.slane %v3128, 1
        %v3131 = vsel %vm3039, %v3126, %v3130
        %v3132 = vshrl.u32 %v3028, 16
        %v3134 = vor.u32 %v3132, %v3130
        %v3136 = vshll.u32 %v3029, 16
        %v3138 = vrot.slane %v3136, 1
        %v3139 = vsel %vm3039, %v3134, %v3138
        %v3140 = vshrl.u32 %v3029, 16
        %v3142 = vor.u32 %v3140, %v3138
        %v3144 = vshll.u32 %v3030, 16
        %v3146 = vrot.slane %v3144, 1
        %v3147 = vsel %vm3039, %v3142, %v3146
        %v3148 = vshrl.u32 %v3030, 16
        %v3150 = vor.u32 %v3148, %v3146
        %v3152 = vshll.u32 %v3031, 16
        %v3154 = vrot.slane %v3152, 1
        %v3155 = vsel %vm3039, %v3150, %v3154
        %v3156 = vshrl.u32 %v3031, 16
        %v3158 = vor.u32 %v3156, %v3154
        %v3160 = vshll.u32 %v3032, 16
        %v3162 = vrot.slane %v3160, 1
        %v3163 = vsel %vm3039, %v3158, %v3162
        %v3164 = vshrl.u32 %v3032, 16
        %v3166 = vor.u32 %v3164, %v3162
        %v3168 = vshll.u32 %v3033, 16
        %v3170 = vrot.slane %v3168, 1
        %v3171 = vsel %vm3039, %v3166, %v3170
        %v3172 = vshrl.u32 %v3033, 16
        %v3174 = vor.u32 %v3172, %v3170
        %v3176 = vshll.u32 %v3034, 16
        %v3178 = vrot.slane %v3176, 1
        %v3179 = vsel %vm3039, %v3174, %v3178
        %v3180 = vshrl.u32 %v3034, 16
        %v3182 = vor.u32 %v3180, %v3178
        %v3184 = vshll.u32 %v3035, 16
        %v3186 = vrot.slane %v3184, 1
        %v3187 = vsel %vm3039, %v3182, %v3186
        %v3188 = vshrl.u32 %v3035, 16
        %v3190 = vor.u32 %v3188, %v3186
        %v3192 = vshll.u32 %v3036, 16
        %v3194 = vrot.slane %v3192, 1
        %v3195 = vsel %vm3039, %v3190, %v3194
        %v3196 = vshrl.u32 %v3036, 16
        %v3198 = vor.u32 %v3196, %v3194
        %v3200 = vshll.u32 %v3037, 16
        %v3202 = vrot.slane %v3200, 1
        %v3203 = vsel %vm3039, %v3198, %v3202
        %v3204 = vshrl.u32 %v3037, 16
        %v3206 = vor.u32 %v3204, %v3202
        %v3208 = vshll.u32 %v3038, 16
        %v3210 = vrot.slane %v3208, 1
        %v3211 = vsel %vm3039, %v3206, %v3210
        %v3213 = vsel %vm745, %v3051, 0
        %v3216 = vsel %vm745, %v3059, 0
        %v3219 = vsel %vm745, %v3067, 0
        %v3222 = vsel %vm745, %v3075, 0
        %v3225 = vsel %vm745, %v3083, 0
        %v3228 = vsel %vm745, %v3091, 0
        %v3231 = vsel %vm745, %v3099, 0
        %v3234 = vsel %vm745, %v3107, 0
        %v3237 = vsel %vm745, %v3115, 0
        %v3240 = vsel %vm745, %v3123, 0
        %v3243 = vsel %vm745, %v3131, 0
        %v3246 = vsel %vm745, %v3139, 0
        %v3249 = vsel %vm745, %v3147, 0
        %v3252 = vsel %vm745, %v3155, 0
        %v3255 = vsel %vm745, %v3163, 0
        %v3258 = vsel %vm745, %v3171, 0
        %v3261 = vsel %vm745, %v3179, 0
        %v3264 = vsel %vm745, %v3187, 0
        %v3267 = vsel %vm745, %v3195, 0
        %v3270 = vsel %vm745, %v3203, 0
        %v3273 = vsel %vm745, %v3211, 0
        %v3276 = vsel %vm809, %v2930, 0
        %3278 = vmatprep.subr.bf16.mxu0 0
        %3279 = vmatpush1.bf16.msra.mxu0 0
        %3280 = vmatprep.subr.bf16.mxu0 0
        %3281 = vmatpush1.bf16.msra.mxu0 0
        %3282 = vmatprep.subr.bf16.mxu0 0
        %3283 = vmatpush1.bf16.msra.mxu0 0
        %3284 = vmatprep.subr.bf16.mxu0 0
        %3285 = vmatpush1.bf16.msra.mxu0 0
        %3286 = vmatprep.subr.bf16.mxu0 0
        %3287 = vmatpush1.bf16.msra.mxu0 0
        %3288 = vmatprep.subr.bf16.mxu0 0
        %3289 = vmatpush1.bf16.msra.mxu0 0
        %3290 = vmatprep.subr.bf16.mxu0 0
        %3291 = vmatpush1.bf16.msra.mxu0 0
        %3292 = vmatprep.subr.bf16.mxu0 0
        %3293 = vmatpush1.bf16.msra.mxu0 %v3276
        %3294 = vmatprep.subr.bf16.mxu0 0
        %3295 = vmatpush2.bf16.msra.mxu0 0
        %3296 = vmatprep.subr.bf16.mxu0 0
        %3297 = vmatpush2.bf16.msra.mxu0 0
        %3298 = vmatprep.subr.bf16.mxu0 0
        %3299 = vmatpush2.bf16.msra.mxu0 0
        %3300 = vmatprep.subr.bf16.mxu0 0
        %3301 = vmatpush2.bf16.msra.mxu0 0
        %3302 = vmatprep.subr.bf16.mxu0 0
        %3303 = vmatpush2.bf16.msra.mxu0 0
        %3304 = vmatprep.subr.bf16.mxu0 0
        %3305 = vmatpush2.bf16.msra.mxu0 0
        %3306 = vmatprep.subr.bf16.mxu0 0
        %3307 = vmatpush2.bf16.msra.mxu0 0
        %3308 = vmatprep.subr.bf16.mxu0 0
        %3309 = vmatpush2.bf16.msra.mxu0 0
        %3310 = vmatprep.mubr.bf16.mxu0 0
        %3311 = vmatmul.mubr.bf16.gmra.mxu0 %v3213
        %v3312 = vpop.f32.mrf.mxu0
        %v3313 = vadd.f32 0.0, %v3312
        %v3314 = vpop.f32.mrf.mxu0
        %v3315 = vpop.f32.mrf.mxu0
        %v3316 = vadd.f32 0.0, %v3315
        %v3317 = vpop.f32.mrf.mxu0
        %3318 = vmatprep.mubr.bf16.mxu0 0
        %3319 = vmatmul.mubr.bf16.gmra.mxu0 %v3216
        %v3320 = vpop.f32.mrf.mxu0
        %v3321 = vadd.f32 0.0, %v3320
        %v3322 = vpop.f32.mrf.mxu0
        %v3323 = vpop.f32.mrf.mxu0
        %v3324 = vadd.f32 0.0, %v3323
        %v3325 = vpop.f32.mrf.mxu0
        %3326 = vmatprep.mubr.bf16.mxu0 0
        %3327 = vmatmul.mubr.bf16.gmra.mxu0 %v3219
        %v3328 = vpop.f32.mrf.mxu0
        %v3329 = vadd.f32 0.0, %v3328
        %v3330 = vpop.f32.mrf.mxu0
        %v3331 = vpop.f32.mrf.mxu0
        %v3332 = vadd.f32 0.0, %v3331
        %v3333 = vpop.f32.mrf.mxu0
        %3334 = vmatprep.mubr.bf16.mxu0 0
        %3335 = vmatmul.mubr.bf16.gmra.mxu0 %v3222
        %v3336 = vpop.f32.mrf.mxu0
        %v3337 = vadd.f32 0.0, %v3336
        %v3338 = vpop.f32.mrf.mxu0
        %v3339 = vpop.f32.mrf.mxu0
        %v3340 = vadd.f32 0.0, %v3339
        %v3341 = vpop.f32.mrf.mxu0
        %3342 = vmatprep.mubr.bf16.mxu0 0
        %3343 = vmatmul.mubr.bf16.gmra.mxu0 %v3225
        %v3344 = vpop.f32.mrf.mxu0
        %v3345 = vadd.f32 0.0, %v3344
        %v3346 = vpop.f32.mrf.mxu0
        %v3347 = vpop.f32.mrf.mxu0
        %v3348 = vadd.f32 0.0, %v3347
        %v3349 = vpop.f32.mrf.mxu0
        %3350 = vmatprep.mubr.bf16.mxu0 0
        %3351 = vmatmul.mubr.bf16.gmra.mxu0 %v3228
        %v3352 = vpop.f32.mrf.mxu0
        %v3353 = vadd.f32 0.0, %v3352
        %v3354 = vpop.f32.mrf.mxu0
        %v3355 = vpop.f32.mrf.mxu0
        %v3356 = vadd.f32 0.0, %v3355
        %v3357 = vpop.f32.mrf.mxu0
        %3358 = vmatprep.mubr.bf16.mxu0 0
        %3359 = vmatmul.mubr.bf16.gmra.mxu0 %v3231
        %v3360 = vpop.f32.mrf.mxu0
        %v3361 = vadd.f32 0.0, %v3360
        %v3362 = vpop.f32.mrf.mxu0
        %v3363 = vpop.f32.mrf.mxu0
        %v3364 = vadd.f32 0.0, %v3363
        %v3365 = vpop.f32.mrf.mxu0
        %3366 = vmatprep.mubr.bf16.mxu0 0
        %3367 = vmatmul.mubr.bf16.gmra.mxu0 %v3234
        %v3368 = vpop.f32.mrf.mxu0
        %v3369 = vadd.f32 0.0, %v3368
        %v3370 = vpop.f32.mrf.mxu0
        %v3371 = vpop.f32.mrf.mxu0
        %v3372 = vadd.f32 0.0, %v3371
        %v3373 = vpop.f32.mrf.mxu0
        %3374 = vmatprep.mubr.bf16.mxu0 0
        %3375 = vmatmul.mubr.bf16.gmra.mxu0 %v3237
        %v3376 = vpop.f32.mrf.mxu0
        %v3377 = vadd.f32 0.0, %v3376
        %v3378 = vpop.f32.mrf.mxu0
        %v3379 = vpop.f32.mrf.mxu0
        %v3380 = vadd.f32 0.0, %v3379
        %v3381 = vpop.f32.mrf.mxu0
        %3382 = vmatprep.mubr.bf16.mxu0 0
        %3383 = vmatmul.mubr.bf16.gmra.mxu0 %v3240
        %v3384 = vpop.f32.mrf.mxu0
        %v3385 = vadd.f32 0.0, %v3384
        %v3386 = vpop.f32.mrf.mxu0
        %v3387 = vpop.f32.mrf.mxu0
        %v3388 = vadd.f32 0.0, %v3387
        %v3389 = vpop.f32.mrf.mxu0
        %3390 = vmatprep.mubr.bf16.mxu0 0
        %3391 = vmatmul.mubr.bf16.gmra.mxu0 %v3243
        %v3392 = vpop.f32.mrf.mxu0
        %v3393 = vadd.f32 0.0, %v3392
        %v3394 = vpop.f32.mrf.mxu0
        %v3395 = vpop.f32.mrf.mxu0
        %v3396 = vadd.f32 0.0, %v3395
        %v3397 = vpop.f32.mrf.mxu0
        %3398 = vmatprep.mubr.bf16.mxu0 0
        %3399 = vmatmul.mubr.bf16.gmra.mxu0 %v3246
        %v3400 = vpop.f32.mrf.mxu0
        %v3401 = vadd.f32 0.0, %v3400
        %v3402 = vpop.f32.mrf.mxu0
        %v3403 = vpop.f32.mrf.mxu0
        %v3404 = vadd.f32 0.0, %v3403
        %v3405 = vpop.f32.mrf.mxu0
        %3406 = vmatprep.mubr.bf16.mxu0 0
        %3407 = vmatmul.mubr.bf16.gmra.mxu0 %v3249
        %v3408 = vpop.f32.mrf.mxu0
        %v3409 = vadd.f32 0.0, %v3408
        %v3410 = vpop.f32.mrf.mxu0
        %v3411 = vpop.f32.mrf.mxu0
        %v3412 = vadd.f32 0.0, %v3411
        %v3413 = vpop.f32.mrf.mxu0
        %3414 = vmatprep.mubr.bf16.mxu0 0
        %3415 = vmatmul.mubr.bf16.gmra.mxu0 %v3252
        %v3416 = vpop.f32.mrf.mxu0
        %v3417 = vadd.f32 0.0, %v3416
        %v3418 = vpop.f32.mrf.mxu0
        %v3419 = vpop.f32.mrf.mxu0
        %v3420 = vadd.f32 0.0, %v3419
        %v3421 = vpop.f32.mrf.mxu0
        %3422 = vmatprep.mubr.bf16.mxu0 0
        %3423 = vmatmul.mubr.bf16.gmra.mxu0 %v3255
        %v3424 = vpop.f32.mrf.mxu0
        %v3425 = vadd.f32 0.0, %v3424
        %v3426 = vpop.f32.mrf.mxu0
        %v3427 = vpop.f32.mrf.mxu0
        %v3428 = vadd.f32 0.0, %v3427
        %v3429 = vpop.f32.mrf.mxu0
        %3430 = vmatprep.mubr.bf16.mxu0 0
        %3431 = vmatmul.mubr.bf16.gmra.mxu0 %v3258
        %v3432 = vpop.f32.mrf.mxu0
        %v3433 = vadd.f32 0.0, %v3432
        %v3434 = vpop.f32.mrf.mxu0
        %v3435 = vpop.f32.mrf.mxu0
        %v3436 = vadd.f32 0.0, %v3435
        %v3437 = vpop.f32.mrf.mxu0
        %3438 = vmatprep.mubr.bf16.mxu0 0
        %3439 = vmatmul.mubr.bf16.gmra.mxu0 %v3261
        %v3440 = vpop.f32.mrf.mxu0
        %v3441 = vadd.f32 0.0, %v3440
        %v3442 = vpop.f32.mrf.mxu0
        %v3443 = vpop.f32.mrf.mxu0
        %v3444 = vadd.f32 0.0, %v3443
        %v3445 = vpop.f32.mrf.mxu0
        %3446 = vmatprep.mubr.bf16.mxu0 0
        %3447 = vmatmul.mubr.bf16.gmra.mxu0 %v3264
        %v3448 = vpop.f32.mrf.mxu0
        %v3449 = vadd.f32 0.0, %v3448
        %v3450 = vpop.f32.mrf.mxu0
        %v3451 = vpop.f32.mrf.mxu0
        %v3452 = vadd.f32 0.0, %v3451
        %v3453 = vpop.f32.mrf.mxu0
        %3454 = vmatprep.mubr.bf16.mxu0 0
        %3455 = vmatmul.mubr.bf16.gmra.mxu0 %v3267
        %v3456 = vpop.f32.mrf.mxu0
        %v3457 = vadd.f32 0.0, %v3456
        %v3458 = vpop.f32.mrf.mxu0
        %v3459 = vpop.f32.mrf.mxu0
        %v3460 = vadd.f32 0.0, %v3459
        %v3461 = vpop.f32.mrf.mxu0
        %3462 = vmatprep.mubr.bf16.mxu0 0
        %3463 = vmatmul.mubr.bf16.gmra.mxu0 %v3270
        %v3464 = vpop.f32.mrf.mxu0
        %v3465 = vadd.f32 0.0, %v3464
        %v3466 = vpop.f32.mrf.mxu0
        %v3467 = vpop.f32.mrf.mxu0
        %v3468 = vadd.f32 0.0, %v3467
        %v3469 = vpop.f32.mrf.mxu0
        %3470 = vmatprep.mubr.bf16.mxu0 0
        %3471 = vmatmul.mubr.bf16.gmra.mxu0 %v3273
        %v3472 = vpop.f32.mrf.mxu0
        %v3473 = vadd.f32 0.0, %v3472
        %v3474 = vpop.f32.mrf.mxu0
        %v3475 = vpop.f32.mrf.mxu0
        %v3476 = vadd.f32 0.0, %v3475
        %v3477 = vpop.f32.mrf.mxu0
        %3478 = vdwg.mxu0
        %v3479 = vadd.f32 %v2844, %v3313
        %v3480 = vadd.f32 %v2845, %v3316
        %v3481 = vadd.f32 %v2846, %v3321
        %v3482 = vadd.f32 %v2847, %v3324
        %v3483 = vadd.f32 %v2848, %v3329
        %v3484 = vadd.f32 %v2849, %v3332
        %v3485 = vadd.f32 %v2850, %v3337
        %v3486 = vadd.f32 %v2851, %v3340
        %v3487 = vadd.f32 %v2852, %v3345
        %v3488 = vadd.f32 %v2853, %v3348
        %v3489 = vadd.f32 %v2854, %v3353
        %v3490 = vadd.f32 %v2855, %v3356
        %v3491 = vadd.f32 %v2856, %v3361
        %v3492 = vadd.f32 %v2857, %v3364
        %v3493 = vadd.f32 %v2858, %v3369
        %v3494 = vadd.f32 %v2859, %v3372
        %v3495 = vadd.f32 %v2860, %v3377
        %v3496 = vadd.f32 %v2861, %v3380
        %v3497 = vadd.f32 %v2862, %v3385
        %v3498 = vadd.f32 %v2863, %v3388
        %v3499 = vadd.f32 %v2864, %v3393
        %v3500 = vadd.f32 %v2865, %v3396
        %v3501 = vadd.f32 %v2866, %v3401
        %v3502 = vadd.f32 %v2867, %v3404
        %v3503 = vadd.f32 %v2868, %v3409
        %v3504 = vadd.f32 %v2869, %v3412
        %v3505 = vadd.f32 %v2870, %v3417
        %v3506 = vadd.f32 %v2871, %v3420
        %v3507 = vadd.f32 %v2872, %v3425
        %v3508 = vadd.f32 %v2873, %v3428
        %v3509 = vadd.f32 %v2874, %v3433
        %v3510 = vadd.f32 %v2875, %v3436
        %v3511 = vadd.f32 %v2876, %v3441
        %v3512 = vadd.f32 %v2877, %v3444
        %v3513 = vadd.f32 %v2878, %v3449
        %v3514 = vadd.f32 %v2879, %v3452
        %v3515 = vadd.f32 %v2880, %v3457
        %v3516 = vadd.f32 %v2881, %v3460
        %v3517 = vadd.f32 %v2882, %v3465
        %v3518 = vadd.f32 %v2883, %v3468
        %v3519 = vadd.f32 %v2884, %v3473
        %v3520 = vadd.f32 %v2885, %v3476
        %v3521 = vld [vmem:[%s290 + $0x18] sm:$0xf]
        %v3522 = vld [vmem:[%s290 + $0x1c] sm:$0xf]
        %v3523 = vld [vmem:[%s290 + $0x20] sm:$0xf]
        %v3524 = vld [vmem:[%s290 + $0x24] sm:$0xf]
        %v3525 = vld [vmem:[%s290 + $0x28] sm:$0xf]
        %v3526 = vld [vmem:[%s290 + $0x2c] sm:$0xf]
        %v3527 = vld [vmem:[%s290 + $0x30] sm:$0xf]
        %v3528 = vld [vmem:[%s290 + $0x34] sm:$0xf]
        %v3529 = vld [vmem:[%s290 + $0x38] sm:$0xf]
        %v3530 = vld [vmem:[%s290 + $0x3c] sm:$0xf]
        %v3531 = vld [vmem:[%s290 + $0x40] sm:$0xf]
        %v3532 = vld [vmem:[%s290 + $0x44] sm:$0xf]
        %v3533 = vld [vmem:[%s290 + $0x48] sm:$0xf]
        %v3534 = vld [vmem:[%s290 + $0x4c] sm:$0xf]
        %v3535 = vld [vmem:[%s290 + $0x50] sm:$0xf]
        %v3536 = vld [vmem:[%s290 + $0x54] sm:$0xf]
        %v3537 = vld [vmem:[%s290 + $0x58] sm:$0xf]
        %v3538 = vld [vmem:[%s290 + $0x5c] sm:$0xf]
        %v3539 = vld [vmem:[%s290 + $0x60] sm:$0xf]
        %v3540 = vld [vmem:[%s290 + $0x64] sm:$0xf]
        %v3541 = vld [vmem:[%s290 + $0x68] sm:$0xf]
        %v3542 = vld [vmem:[%s290 + $0x6c] sm:$0xf]
        %v3543 = vld [vmem:[%s290 + $0x70] sm:$0xf]
        %v3544 = vld [vmem:[%s290 + $0x74] sm:$0xf]
        %v3545 = vld [vmem:[%s290 + $0x78] sm:$0xf]
        %v3546 = vld [vmem:[%s290 + $0x7c] sm:$0xf]
        %v3547 = vld [vmem:[%s290 + $0x80] sm:$0xf]
        %v3548 = vld [vmem:[%s290 + $0x84] sm:$0xf]
        %v3549 = vld [vmem:[%s290 + $0x88] sm:$0xf]
        %v3550 = vld [vmem:[%s290 + $0x8c] sm:$0xf]
        %v3551 = vld [vmem:[%s290 + $0x90] sm:$0xf]
        %v3552 = vld [vmem:[%s290 + $0x94] sm:$0xf]
        %v3553 = vld [vmem:[%s290 + $0x98] sm:$0xf]
        %v3554 = vld [vmem:[%s290 + $0x9c] sm:$0xf]
        %v3555 = vld [vmem:[%s290 + $0xa0] sm:$0xf]
        %v3556 = vld [vmem:[%s290 + $0xa4] sm:$0xf]
        %v3557 = vld [vmem:[%s290 + $0xa8] sm:$0xf]
        %v3558 = vld [vmem:[%s290 + $0xac] sm:$0xf]
        %v3559 = vld [vmem:[%s290 + $0xb0] sm:$0xf]
        %v3560 = vld [vmem:[%s290 + $0xb4] sm:$0xf]
        %v3561 = vld [vmem:[%s290 + $0xb8] sm:$0xf]
        %v3562 = vld [vmem:[%s290 + $0xbc] sm:$0xf]
        %v3563 = vld [vmem:[%s290 + $0xc0] sm:$0x1]
        %s3564 = scalar_lea.vmem %s2, 24
        %v3565 = vld [vmem:[%s3564] sm:$0xf]
        %v3609 = vunpack.c.l.b16 %v3521
        %v3610 = vunpack.c.l.b16 %v3522
        %v3611 = vunpack.c.l.b16 %v3523
        %v3612 = vunpack.c.l.b16 %v3524
        %v3613 = vunpack.c.l.b16 %v3525
        %v3614 = vunpack.c.l.b16 %v3526
        %v3615 = vunpack.c.l.b16 %v3527
        %v3616 = vunpack.c.l.b16 %v3528
        %v3617 = vunpack.c.l.b16 %v3529
        %v3618 = vunpack.c.l.b16 %v3530
        %v3619 = vunpack.c.l.b16 %v3531
        %v3620 = vunpack.c.l.b16 %v3532
        %v3621 = vunpack.c.l.b16 %v3533
        %v3622 = vunpack.c.l.b16 %v3534
        %v3623 = vunpack.c.l.b16 %v3535
        %v3624 = vunpack.c.l.b16 %v3536
        %v3625 = vunpack.c.l.b16 %v3537
        %v3626 = vunpack.c.l.b16 %v3538
        %v3627 = vunpack.c.l.b16 %v3539
        %v3628 = vunpack.c.l.b16 %v3540
        %v3629 = vunpack.c.l.b16 %v3541
        %v3630 = vunpack.c.l.b16 %v3542
        %v3631 = vunpack.c.l.b16 %v3543
        %v3632 = vunpack.c.l.b16 %v3544
        %v3633 = vunpack.c.l.b16 %v3545
        %v3634 = vunpack.c.l.b16 %v3546
        %v3635 = vunpack.c.l.b16 %v3547
        %v3636 = vunpack.c.l.b16 %v3548
        %v3637 = vunpack.c.l.b16 %v3549
        %v3638 = vunpack.c.l.b16 %v3550
        %v3639 = vunpack.c.l.b16 %v3551
        %v3640 = vunpack.c.l.b16 %v3552
        %v3641 = vunpack.c.l.b16 %v3553
        %v3642 = vunpack.c.l.b16 %v3554
        %v3643 = vunpack.c.l.b16 %v3555
        %v3644 = vunpack.c.l.b16 %v3556
        %v3645 = vunpack.c.l.b16 %v3557
        %v3646 = vunpack.c.l.b16 %v3558
        %v3647 = vunpack.c.l.b16 %v3559
        %v3648 = vunpack.c.l.b16 %v3560
        %v3649 = vunpack.c.l.b16 %v3561
        %v3650 = vunpack.c.l.b16 %v3562
        %v3651 = vunpack.c.l.b16 %v3563
        %v3652 = vpack.c.b16 %v3610, %v3609
        %v3653 = vpack.c.b16 %v3612, %v3611
        %v3654 = vpack.c.b16 %v3614, %v3613
        %v3655 = vpack.c.b16 %v3616, %v3615
        %v3656 = vpack.c.b16 %v3618, %v3617
        %v3657 = vpack.c.b16 %v3620, %v3619
        %v3658 = vpack.c.b16 %v3622, %v3621
        %v3659 = vpack.c.b16 %v3624, %v3623
        %v3660 = vpack.c.b16 %v3626, %v3625
        %v3661 = vpack.c.b16 %v3628, %v3627
        %v3662 = vpack.c.b16 %v3630, %v3629
        %v3663 = vpack.c.b16 %v3632, %v3631
        %v3664 = vpack.c.b16 %v3634, %v3633
        %v3665 = vpack.c.b16 %v3636, %v3635
        %v3666 = vpack.c.b16 %v3638, %v3637
        %v3667 = vpack.c.b16 %v3640, %v3639
        %v3668 = vpack.c.b16 %v3642, %v3641
        %v3669 = vpack.c.b16 %v3644, %v3643
        %v3670 = vpack.c.b16 %v3646, %v3645
        %v3671 = vpack.c.b16 %v3648, %v3647
        %v3672 = vpack.c.b16 %v3650, %v3649
        %v3673 = vpack.c.b16 %v3651, %v3651
        %v3675 = vshrl.u32 %v3652, 16
        %v3677 = vshll.u32 %v3652, 16
        %v3679 = vrot.slane %v3677, 1
        %v3680 = vor.u32 %v3675, %v3679
        %v3682 = vshll.u32 %v3653, 16
        %v3684 = vrot.slane %v3682, 1
        %v3685 = vsel %vm3039, %v3680, %v3684
        %v3686 = vshrl.u32 %v3653, 16
        %v3688 = vor.u32 %v3686, %v3684
        %v3690 = vshll.u32 %v3654, 16
        %v3692 = vrot.slane %v3690, 1
        %v3693 = vsel %vm3039, %v3688, %v3692
        %v3694 = vshrl.u32 %v3654, 16
        %v3696 = vor.u32 %v3694, %v3692
        %v3698 = vshll.u32 %v3655, 16
        %v3700 = vrot.slane %v3698, 1
        %v3701 = vsel %vm3039, %v3696, %v3700
        %v3702 = vshrl.u32 %v3655, 16
        %v3704 = vor.u32 %v3702, %v3700
        %v3706 = vshll.u32 %v3656, 16
        %v3708 = vrot.slane %v3706, 1
        %v3709 = vsel %vm3039, %v3704, %v3708
        %v3710 = vshrl.u32 %v3656, 16
        %v3712 = vor.u32 %v3710, %v3708
        %v3714 = vshll.u32 %v3657, 16
        %v3716 = vrot.slane %v3714, 1
        %v3717 = vsel %vm3039, %v3712, %v3716
        %v3718 = vshrl.u32 %v3657, 16
        %v3720 = vor.u32 %v3718, %v3716
        %v3722 = vshll.u32 %v3658, 16
        %v3724 = vrot.slane %v3722, 1
        %v3725 = vsel %vm3039, %v3720, %v3724
        %v3726 = vshrl.u32 %v3658, 16
        %v3728 = vor.u32 %v3726, %v3724
        %v3730 = vshll.u32 %v3659, 16
        %v3732 = vrot.slane %v3730, 1
        %v3733 = vsel %vm3039, %v3728, %v3732
        %v3734 = vshrl.u32 %v3659, 16
        %v3736 = vor.u32 %v3734, %v3732
        %v3738 = vshll.u32 %v3660, 16
        %v3740 = vrot.slane %v3738, 1
        %v3741 = vsel %vm3039, %v3736, %v3740
        %v3742 = vshrl.u32 %v3660, 16
        %v3744 = vor.u32 %v3742, %v3740
        %v3746 = vshll.u32 %v3661, 16
        %v3748 = vrot.slane %v3746, 1
        %v3749 = vsel %vm3039, %v3744, %v3748
        %v3750 = vshrl.u32 %v3661, 16
        %v3752 = vor.u32 %v3750, %v3748
        %v3754 = vshll.u32 %v3662, 16
        %v3756 = vrot.slane %v3754, 1
        %v3757 = vsel %vm3039, %v3752, %v3756
        %v3758 = vshrl.u32 %v3662, 16
        %v3760 = vor.u32 %v3758, %v3756
        %v3762 = vshll.u32 %v3663, 16
        %v3764 = vrot.slane %v3762, 1
        %v3765 = vsel %vm3039, %v3760, %v3764
        %v3766 = vshrl.u32 %v3663, 16
        %v3768 = vor.u32 %v3766, %v3764
        %v3770 = vshll.u32 %v3664, 16
        %v3772 = vrot.slane %v3770, 1
        %v3773 = vsel %vm3039, %v3768, %v3772
        %v3774 = vshrl.u32 %v3664, 16
        %v3776 = vor.u32 %v3774, %v3772
        %v3778 = vshll.u32 %v3665, 16
        %v3780 = vrot.slane %v3778, 1
        %v3781 = vsel %vm3039, %v3776, %v3780
        %v3782 = vshrl.u32 %v3665, 16
        %v3784 = vor.u32 %v3782, %v3780
        %v3786 = vshll.u32 %v3666, 16
        %v3788 = vrot.slane %v3786, 1
        %v3789 = vsel %vm3039, %v3784, %v3788
        %v3790 = vshrl.u32 %v3666, 16
        %v3792 = vor.u32 %v3790, %v3788
        %v3794 = vshll.u32 %v3667, 16
        %v3796 = vrot.slane %v3794, 1
        %v3797 = vsel %vm3039, %v3792, %v3796
        %v3798 = vshrl.u32 %v3667, 16
        %v3800 = vor.u32 %v3798, %v3796
        %v3802 = vshll.u32 %v3668, 16
        %v3804 = vrot.slane %v3802, 1
        %v3805 = vsel %vm3039, %v3800, %v3804
        %v3806 = vshrl.u32 %v3668, 16
        %v3808 = vor.u32 %v3806, %v3804
        %v3810 = vshll.u32 %v3669, 16
        %v3812 = vrot.slane %v3810, 1
        %v3813 = vsel %vm3039, %v3808, %v3812
        %v3814 = vshrl.u32 %v3669, 16
        %v3816 = vor.u32 %v3814, %v3812
        %v3818 = vshll.u32 %v3670, 16
        %v3820 = vrot.slane %v3818, 1
        %v3821 = vsel %vm3039, %v3816, %v3820
        %v3822 = vshrl.u32 %v3670, 16
        %v3824 = vor.u32 %v3822, %v3820
        %v3826 = vshll.u32 %v3671, 16
        %v3828 = vrot.slane %v3826, 1
        %v3829 = vsel %vm3039, %v3824, %v3828
        %v3830 = vshrl.u32 %v3671, 16
        %v3832 = vor.u32 %v3830, %v3828
        %v3834 = vshll.u32 %v3672, 16
        %v3836 = vrot.slane %v3834, 1
        %v3837 = vsel %vm3039, %v3832, %v3836
        %v3838 = vshrl.u32 %v3672, 16
        %v3840 = vor.u32 %v3838, %v3836
        %v3842 = vshll.u32 %v3673, 16
        %v3844 = vrot.slane %v3842, 1
        %v3845 = vsel %vm3039, %v3840, %v3844
        %v3847 = vsel %vm745, %v3685, 0
        %v3850 = vsel %vm745, %v3693, 0
        %v3853 = vsel %vm745, %v3701, 0
        %v3856 = vsel %vm745, %v3709, 0
        %v3859 = vsel %vm745, %v3717, 0
        %v3862 = vsel %vm745, %v3725, 0
        %v3865 = vsel %vm745, %v3733, 0
        %v3868 = vsel %vm745, %v3741, 0
        %v3871 = vsel %vm745, %v3749, 0
        %v3874 = vsel %vm745, %v3757, 0
        %v3877 = vsel %vm745, %v3765, 0
        %v3880 = vsel %vm745, %v3773, 0
        %v3883 = vsel %vm745, %v3781, 0
        %v3886 = vsel %vm745, %v3789, 0
        %v3889 = vsel %vm745, %v3797, 0
        %v3892 = vsel %vm745, %v3805, 0
        %v3895 = vsel %vm745, %v3813, 0
        %v3898 = vsel %vm745, %v3821, 0
        %v3901 = vsel %vm745, %v3829, 0
        %v3904 = vsel %vm745, %v3837, 0
        %v3907 = vsel %vm745, %v3845, 0
        %v3910 = vsel %vm809, %v3565, 0
        %3912 = vmatprep.subr.bf16.mxu0 0
        %3913 = vmatpush1.bf16.msra.mxu0 0
        %3914 = vmatprep.subr.bf16.mxu0 0
        %3915 = vmatpush1.bf16.msra.mxu0 0
        %3916 = vmatprep.subr.bf16.mxu0 0
        %3917 = vmatpush1.bf16.msra.mxu0 0
        %3918 = vmatprep.subr.bf16.mxu0 0
        %3919 = vmatpush1.bf16.msra.mxu0 0
        %3920 = vmatprep.subr.bf16.mxu0 0
        %3921 = vmatpush1.bf16.msra.mxu0 0
        %3922 = vmatprep.subr.bf16.mxu0 0
        %3923 = vmatpush1.bf16.msra.mxu0 0
        %3924 = vmatprep.subr.bf16.mxu0 0
        %3925 = vmatpush1.bf16.msra.mxu0 0
        %3926 = vmatprep.subr.bf16.mxu0 0
        %3927 = vmatpush1.bf16.msra.mxu0 %v3910
        %3928 = vmatprep.subr.bf16.mxu0 0
        %3929 = vmatpush2.bf16.msra.mxu0 0
        %3930 = vmatprep.subr.bf16.mxu0 0
        %3931 = vmatpush2.bf16.msra.mxu0 0
        %3932 = vmatprep.subr.bf16.mxu0 0
        %3933 = vmatpush2.bf16.msra.mxu0 0
        %3934 = vmatprep.subr.bf16.mxu0 0
        %3935 = vmatpush2.bf16.msra.mxu0 0
        %3936 = vmatprep.subr.bf16.mxu0 0
        %3937 = vmatpush2.bf16.msra.mxu0 0
        %3938 = vmatprep.subr.bf16.mxu0 0
        %3939 = vmatpush2.bf16.msra.mxu0 0
        %3940 = vmatprep.subr.bf16.mxu0 0
        %3941 = vmatpush2.bf16.msra.mxu0 0
        %3942 = vmatprep.subr.bf16.mxu0 0
        %3943 = vmatpush2.bf16.msra.mxu0 0
        %3944 = vmatprep.mubr.bf16.mxu0 0
        %3945 = vmatmul.mubr.bf16.gmra.mxu0 %v3847
        %v3946 = vpop.f32.mrf.mxu0
        %v3947 = vadd.f32 0.0, %v3946
        %v3948 = vpop.f32.mrf.mxu0
        %v3949 = vpop.f32.mrf.mxu0
        %v3950 = vadd.f32 0.0, %v3949
        %v3951 = vpop.f32.mrf.mxu0
        %3952 = vmatprep.mubr.bf16.mxu0 0
        %3953 = vmatmul.mubr.bf16.gmra.mxu0 %v3850
        %v3954 = vpop.f32.mrf.mxu0
        %v3955 = vadd.f32 0.0, %v3954
        %v3956 = vpop.f32.mrf.mxu0
        %v3957 = vpop.f32.mrf.mxu0
        %v3958 = vadd.f32 0.0, %v3957
        %v3959 = vpop.f32.mrf.mxu0
        %3960 = vmatprep.mubr.bf16.mxu0 0
        %3961 = vmatmul.mubr.bf16.gmra.mxu0 %v3853
        %v3962 = vpop.f32.mrf.mxu0
        %v3963 = vadd.f32 0.0, %v3962
        %v3964 = vpop.f32.mrf.mxu0
        %v3965 = vpop.f32.mrf.mxu0
        %v3966 = vadd.f32 0.0, %v3965
        %v3967 = vpop.f32.mrf.mxu0
        %3968 = vmatprep.mubr.bf16.mxu0 0
        %3969 = vmatmul.mubr.bf16.gmra.mxu0 %v3856
        %v3970 = vpop.f32.mrf.mxu0
        %v3971 = vadd.f32 0.0, %v3970
        %v3972 = vpop.f32.mrf.mxu0
        %v3973 = vpop.f32.mrf.mxu0
        %v3974 = vadd.f32 0.0, %v3973
        %v3975 = vpop.f32.mrf.mxu0
        %3976 = vmatprep.mubr.bf16.mxu0 0
        %3977 = vmatmul.mubr.bf16.gmra.mxu0 %v3859
        %v3978 = vpop.f32.mrf.mxu0
        %v3979 = vadd.f32 0.0, %v3978
        %v3980 = vpop.f32.mrf.mxu0
        %v3981 = vpop.f32.mrf.mxu0
        %v3982 = vadd.f32 0.0, %v3981
        %v3983 = vpop.f32.mrf.mxu0
        %3984 = vmatprep.mubr.bf16.mxu0 0
        %3985 = vmatmul.mubr.bf16.gmra.mxu0 %v3862
        %v3986 = vpop.f32.mrf.mxu0
        %v3987 = vadd.f32 0.0, %v3986
        %v3988 = vpop.f32.mrf.mxu0
        %v3989 = vpop.f32.mrf.mxu0
        %v3990 = vadd.f32 0.0, %v3989
        %v3991 = vpop.f32.mrf.mxu0
        %3992 = vmatprep.mubr.bf16.mxu0 0
        %3993 = vmatmul.mubr.bf16.gmra.mxu0 %v3865
        %v3994 = vpop.f32.mrf.mxu0
        %v3995 = vadd.f32 0.0, %v3994
        %v3996 = vpop.f32.mrf.mxu0
        %v3997 = vpop.f32.mrf.mxu0
        %v3998 = vadd.f32 0.0, %v3997
        %v3999 = vpop.f32.mrf.mxu0
        %4000 = vmatprep.mubr.bf16.mxu0 0
        %4001 = vmatmul.mubr.bf16.gmra.mxu0 %v3868
        %v4002 = vpop.f32.mrf.mxu0
        %v4003 = vadd.f32 0.0, %v4002
        %v4004 = vpop.f32.mrf.mxu0
        %v4005 = vpop.f32.mrf.mxu0
        %v4006 = vadd.f32 0.0, %v4005
        %v4007 = vpop.f32.mrf.mxu0
        %4008 = vmatprep.mubr.bf16.mxu0 0
        %4009 = vmatmul.mubr.bf16.gmra.mxu0 %v3871
        %v4010 = vpop.f32.mrf.mxu0
        %v4011 = vadd.f32 0.0, %v4010
        %v4012 = vpop.f32.mrf.mxu0
        %v4013 = vpop.f32.mrf.mxu0
        %v4014 = vadd.f32 0.0, %v4013
        %v4015 = vpop.f32.mrf.mxu0
        %4016 = vmatprep.mubr.bf16.mxu0 0
        %4017 = vmatmul.mubr.bf16.gmra.mxu0 %v3874
        %v4018 = vpop.f32.mrf.mxu0
        %v4019 = vadd.f32 0.0, %v4018
        %v4020 = vpop.f32.mrf.mxu0
        %v4021 = vpop.f32.mrf.mxu0
        %v4022 = vadd.f32 0.0, %v4021
        %v4023 = vpop.f32.mrf.mxu0
        %4024 = vmatprep.mubr.bf16.mxu0 0
        %4025 = vmatmul.mubr.bf16.gmra.mxu0 %v3877
        %v4026 = vpop.f32.mrf.mxu0
        %v4027 = vadd.f32 0.0, %v4026
        %v4028 = vpop.f32.mrf.mxu0
        %v4029 = vpop.f32.mrf.mxu0
        %v4030 = vadd.f32 0.0, %v4029
        %v4031 = vpop.f32.mrf.mxu0
        %4032 = vmatprep.mubr.bf16.mxu0 0
        %4033 = vmatmul.mubr.bf16.gmra.mxu0 %v3880
        %v4034 = vpop.f32.mrf.mxu0
        %v4035 = vadd.f32 0.0, %v4034
        %v4036 = vpop.f32.mrf.mxu0
        %v4037 = vpop.f32.mrf.mxu0
        %v4038 = vadd.f32 0.0, %v4037
        %v4039 = vpop.f32.mrf.mxu0
        %4040 = vmatprep.mubr.bf16.mxu0 0
        %4041 = vmatmul.mubr.bf16.gmra.mxu0 %v3883
        %v4042 = vpop.f32.mrf.mxu0
        %v4043 = vadd.f32 0.0, %v4042
        %v4044 = vpop.f32.mrf.mxu0
        %v4045 = vpop.f32.mrf.mxu0
        %v4046 = vadd.f32 0.0, %v4045
        %v4047 = vpop.f32.mrf.mxu0
        %4048 = vmatprep.mubr.bf16.mxu0 0
        %4049 = vmatmul.mubr.bf16.gmra.mxu0 %v3886
        %v4050 = vpop.f32.mrf.mxu0
        %v4051 = vadd.f32 0.0, %v4050
        %v4052 = vpop.f32.mrf.mxu0
        %v4053 = vpop.f32.mrf.mxu0
        %v4054 = vadd.f32 0.0, %v4053
        %v4055 = vpop.f32.mrf.mxu0
        %4056 = vmatprep.mubr.bf16.mxu0 0
        %4057 = vmatmul.mubr.bf16.gmra.mxu0 %v3889
        %v4058 = vpop.f32.mrf.mxu0
        %v4059 = vadd.f32 0.0, %v4058
        %v4060 = vpop.f32.mrf.mxu0
        %v4061 = vpop.f32.mrf.mxu0
        %v4062 = vadd.f32 0.0, %v4061
        %v4063 = vpop.f32.mrf.mxu0
        %4064 = vmatprep.mubr.bf16.mxu0 0
        %4065 = vmatmul.mubr.bf16.gmra.mxu0 %v3892
        %v4066 = vpop.f32.mrf.mxu0
        %v4067 = vadd.f32 0.0, %v4066
        %v4068 = vpop.f32.mrf.mxu0
        %v4069 = vpop.f32.mrf.mxu0
        %v4070 = vadd.f32 0.0, %v4069
        %v4071 = vpop.f32.mrf.mxu0
        %4072 = vmatprep.mubr.bf16.mxu0 0
        %4073 = vmatmul.mubr.bf16.gmra.mxu0 %v3895
        %v4074 = vpop.f32.mrf.mxu0
        %v4075 = vadd.f32 0.0, %v4074
        %v4076 = vpop.f32.mrf.mxu0
        %v4077 = vpop.f32.mrf.mxu0
        %v4078 = vadd.f32 0.0, %v4077
        %v4079 = vpop.f32.mrf.mxu0
        %4080 = vmatprep.mubr.bf16.mxu0 0
        %4081 = vmatmul.mubr.bf16.gmra.mxu0 %v3898
        %v4082 = vpop.f32.mrf.mxu0
        %v4083 = vadd.f32 0.0, %v4082
        %v4084 = vpop.f32.mrf.mxu0
        %v4085 = vpop.f32.mrf.mxu0
        %v4086 = vadd.f32 0.0, %v4085
        %v4087 = vpop.f32.mrf.mxu0
        %4088 = vmatprep.mubr.bf16.mxu0 0
        %4089 = vmatmul.mubr.bf16.gmra.mxu0 %v3901
        %v4090 = vpop.f32.mrf.mxu0
        %v4091 = vadd.f32 0.0, %v4090
        %v4092 = vpop.f32.mrf.mxu0
        %v4093 = vpop.f32.mrf.mxu0
        %v4094 = vadd.f32 0.0, %v4093
        %v4095 = vpop.f32.mrf.mxu0
        %4096 = vmatprep.mubr.bf16.mxu0 0
        %4097 = vmatmul.mubr.bf16.gmra.mxu0 %v3904
        %v4098 = vpop.f32.mrf.mxu0
        %v4099 = vadd.f32 0.0, %v4098
        %v4100 = vpop.f32.mrf.mxu0
        %v4101 = vpop.f32.mrf.mxu0
        %v4102 = vadd.f32 0.0, %v4101
        %v4103 = vpop.f32.mrf.mxu0
        %4104 = vmatprep.mubr.bf16.mxu0 0
        %4105 = vmatmul.mubr.bf16.gmra.mxu0 %v3907
        %v4106 = vpop.f32.mrf.mxu0
        %v4107 = vadd.f32 0.0, %v4106
        %v4108 = vpop.f32.mrf.mxu0
        %v4109 = vpop.f32.mrf.mxu0
        %v4110 = vadd.f32 0.0, %v4109
        %v4111 = vpop.f32.mrf.mxu0
        %4112 = vdwg.mxu0
        %v4113 = vadd.f32 %v3479, %v3947
        %v4114 = vadd.f32 %v3480, %v3950
        %v4115 = vadd.f32 %v3481, %v3955
        %v4116 = vadd.f32 %v3482, %v3958
        %v4117 = vadd.f32 %v3483, %v3963
        %v4118 = vadd.f32 %v3484, %v3966
        %v4119 = vadd.f32 %v3485, %v3971
        %v4120 = vadd.f32 %v3486, %v3974
        %v4121 = vadd.f32 %v3487, %v3979
        %v4122 = vadd.f32 %v3488, %v3982
        %v4123 = vadd.f32 %v3489, %v3987
        %v4124 = vadd.f32 %v3490, %v3990
        %v4125 = vadd.f32 %v3491, %v3995
        %v4126 = vadd.f32 %v3492, %v3998
        %v4127 = vadd.f32 %v3493, %v4003
        %v4128 = vadd.f32 %v3494, %v4006
        %v4129 = vadd.f32 %v3495, %v4011
        %v4130 = vadd.f32 %v3496, %v4014
        %v4131 = vadd.f32 %v3497, %v4019
        %v4132 = vadd.f32 %v3498, %v4022
        %v4133 = vadd.f32 %v3499, %v4027
        %v4134 = vadd.f32 %v3500, %v4030
        %v4135 = vadd.f32 %v3501, %v4035
        %v4136 = vadd.f32 %v3502, %v4038
        %v4137 = vadd.f32 %v3503, %v4043
        %v4138 = vadd.f32 %v3504, %v4046
        %v4139 = vadd.f32 %v3505, %v4051
        %v4140 = vadd.f32 %v3506, %v4054
        %v4141 = vadd.f32 %v3507, %v4059
        %v4142 = vadd.f32 %v3508, %v4062
        %v4143 = vadd.f32 %v3509, %v4067
        %v4144 = vadd.f32 %v3510, %v4070
        %v4145 = vadd.f32 %v3511, %v4075
        %v4146 = vadd.f32 %v3512, %v4078
        %v4147 = vadd.f32 %v3513, %v4083
        %v4148 = vadd.f32 %v3514, %v4086
        %v4149 = vadd.f32 %v3515, %v4091
        %v4150 = vadd.f32 %v3516, %v4094
        %v4151 = vadd.f32 %v3517, %v4099
        %v4152 = vadd.f32 %v3518, %v4102
        %v4153 = vadd.f32 %v3519, %v4107
        %v4154 = vadd.f32 %v3520, %v4110
        %v4155 = vld [vmem:[%s290 + $0x18] sm:$0xe]
        %s4156 = scalar_lea.vmem %s2, 28
        %v4157 = vld [vmem:[%s4156] sm:$0xf]
        %v4159 = vunpack.c.l.b16 %v4155
        %v4160 = vpack.c.b16 %v3610, %v4159
        %vm4161 = vcmask 1046528
        %v4162 = vrot.slane %v4160, 1
        %v4163 = vrot.slane %v3653, 1
        %v4164 = vsel %vm4161, %v4162, %v4163
        %v4165 = vrot.slane %v3654, 1
        %v4166 = vsel %vm4161, %v4163, %v4165
        %v4167 = vrot.slane %v3655, 1
        %v4168 = vsel %vm4161, %v4165, %v4167
        %v4169 = vrot.slane %v3656, 1
        %v4170 = vsel %vm4161, %v4167, %v4169
        %v4171 = vrot.slane %v3657, 1
        %v4172 = vsel %vm4161, %v4169, %v4171
        %v4173 = vrot.slane %v3658, 1
        %v4174 = vsel %vm4161, %v4171, %v4173
        %v4175 = vrot.slane %v3659, 1
        %v4176 = vsel %vm4161, %v4173, %v4175
        %v4177 = vrot.slane %v3660, 1
        %v4178 = vsel %vm4161, %v4175, %v4177
        %v4179 = vrot.slane %v3661, 1
        %v4180 = vsel %vm4161, %v4177, %v4179
        %v4181 = vrot.slane %v3662, 1
        %v4182 = vsel %vm4161, %v4179, %v4181
        %v4183 = vrot.slane %v3663, 1
        %v4184 = vsel %vm4161, %v4181, %v4183
        %v4185 = vrot.slane %v3664, 1
        %v4186 = vsel %vm4161, %v4183, %v4185
        %v4187 = vrot.slane %v3665, 1
        %v4188 = vsel %vm4161, %v4185, %v4187
        %v4189 = vrot.slane %v3666, 1
        %v4190 = vsel %vm4161, %v4187, %v4189
        %v4191 = vrot.slane %v3667, 1
        %v4192 = vsel %vm4161, %v4189, %v4191
        %v4193 = vrot.slane %v3668, 1
        %v4194 = vsel %vm4161, %v4191, %v4193
        %v4195 = vrot.slane %v3669, 1
        %v4196 = vsel %vm4161, %v4193, %v4195
        %v4197 = vrot.slane %v3670, 1
        %v4198 = vsel %vm4161, %v4195, %v4197
        %v4199 = vrot.slane %v3671, 1
        %v4200 = vsel %vm4161, %v4197, %v4199
        %v4201 = vrot.slane %v3672, 1
        %v4202 = vsel %vm4161, %v4199, %v4201
        %v4203 = vrot.slane %v3673, 1
        %v4204 = vsel %vm4161, %v4201, %v4203
        %v4206 = vsel %vm745, %v4164, 0
        %v4209 = vsel %vm745, %v4166, 0
        %v4212 = vsel %vm745, %v4168, 0
        %v4215 = vsel %vm745, %v4170, 0
        %v4218 = vsel %vm745, %v4172, 0
        %v4221 = vsel %vm745, %v4174, 0
        %v4224 = vsel %vm745, %v4176, 0
        %v4227 = vsel %vm745, %v4178, 0
        %v4230 = vsel %vm745, %v4180, 0
        %v4233 = vsel %vm745, %v4182, 0
        %v4236 = vsel %vm745, %v4184, 0
        %v4239 = vsel %vm745, %v4186, 0
        %v4242 = vsel %vm745, %v4188, 0
        %v4245 = vsel %vm745, %v4190, 0
        %v4248 = vsel %vm745, %v4192, 0
        %v4251 = vsel %vm745, %v4194, 0
        %v4254 = vsel %vm745, %v4196, 0
        %v4257 = vsel %vm745, %v4198, 0
        %v4260 = vsel %vm745, %v4200, 0
        %v4263 = vsel %vm745, %v4202, 0
        %v4266 = vsel %vm745, %v4204, 0
        %v4269 = vsel %vm809, %v4157, 0
        %4271 = vmatprep.subr.bf16.mxu0 0
        %4272 = vmatpush1.bf16.msra.mxu0 0
        %4273 = vmatprep.subr.bf16.mxu0 0
        %4274 = vmatpush1.bf16.msra.mxu0 0
        %4275 = vmatprep.subr.bf16.mxu0 0
        %4276 = vmatpush1.bf16.msra.mxu0 0
        %4277 = vmatprep.subr.bf16.mxu0 0
        %4278 = vmatpush1.bf16.msra.mxu0 0
        %4279 = vmatprep.subr.bf16.mxu0 0
        %4280 = vmatpush1.bf16.msra.mxu0 0
        %4281 = vmatprep.subr.bf16.mxu0 0
        %4282 = vmatpush1.bf16.msra.mxu0 0
        %4283 = vmatprep.subr.bf16.mxu0 0
        %4284 = vmatpush1.bf16.msra.mxu0 0
        %4285 = vmatprep.subr.bf16.mxu0 0
        %4286 = vmatpush1.bf16.msra.mxu0 %v4269
        %4287 = vmatprep.subr.bf16.mxu0 0
        %4288 = vmatpush2.bf16.msra.mxu0 0
        %4289 = vmatprep.subr.bf16.mxu0 0
        %4290 = vmatpush2.bf16.msra.mxu0 0
        %4291 = vmatprep.subr.bf16.mxu0 0
        %4292 = vmatpush2.bf16.msra.mxu0 0
        %4293 = vmatprep.subr.bf16.mxu0 0
        %4294 = vmatpush2.bf16.msra.mxu0 0
        %4295 = vmatprep.subr.bf16.mxu0 0
        %4296 = vmatpush2.bf16.msra.mxu0 0
        %4297 = vmatprep.subr.bf16.mxu0 0
        %4298 = vmatpush2.bf16.msra.mxu0 0
        %4299 = vmatprep.subr.bf16.mxu0 0
        %4300 = vmatpush2.bf16.msra.mxu0 0
        %4301 = vmatprep.subr.bf16.mxu0 0
        %4302 = vmatpush2.bf16.msra.mxu0 0
        %4303 = vmatprep.mubr.bf16.mxu0 0
        %4304 = vmatmul.mubr.bf16.gmra.mxu0 %v4206
        %v4305 = vpop.f32.mrf.mxu0
        %v4306 = vadd.f32 0.0, %v4305
        %v4307 = vpop.f32.mrf.mxu0
        %v4308 = vpop.f32.mrf.mxu0
        %v4309 = vadd.f32 0.0, %v4308
        %v4310 = vpop.f32.mrf.mxu0
        %4311 = vmatprep.mubr.bf16.mxu0 0
        %4312 = vmatmul.mubr.bf16.gmra.mxu0 %v4209
        %v4313 = vpop.f32.mrf.mxu0
        %v4314 = vadd.f32 0.0, %v4313
        %v4315 = vpop.f32.mrf.mxu0
        %v4316 = vpop.f32.mrf.mxu0
        %v4317 = vadd.f32 0.0, %v4316
        %v4318 = vpop.f32.mrf.mxu0
        %4319 = vmatprep.mubr.bf16.mxu0 0
        %4320 = vmatmul.mubr.bf16.gmra.mxu0 %v4212
        %v4321 = vpop.f32.mrf.mxu0
        %v4322 = vadd.f32 0.0, %v4321
        %v4323 = vpop.f32.mrf.mxu0
        %v4324 = vpop.f32.mrf.mxu0
        %v4325 = vadd.f32 0.0, %v4324
        %v4326 = vpop.f32.mrf.mxu0
        %4327 = vmatprep.mubr.bf16.mxu0 0
        %4328 = vmatmul.mubr.bf16.gmra.mxu0 %v4215
        %v4329 = vpop.f32.mrf.mxu0
        %v4330 = vadd.f32 0.0, %v4329
        %v4331 = vpop.f32.mrf.mxu0
        %v4332 = vpop.f32.mrf.mxu0
        %v4333 = vadd.f32 0.0, %v4332
        %v4334 = vpop.f32.mrf.mxu0
        %4335 = vmatprep.mubr.bf16.mxu0 0
        %4336 = vmatmul.mubr.bf16.gmra.mxu0 %v4218
        %v4337 = vpop.f32.mrf.mxu0
        %v4338 = vadd.f32 0.0, %v4337
        %v4339 = vpop.f32.mrf.mxu0
        %v4340 = vpop.f32.mrf.mxu0
        %v4341 = vadd.f32 0.0, %v4340
        %v4342 = vpop.f32.mrf.mxu0
        %4343 = vmatprep.mubr.bf16.mxu0 0
        %4344 = vmatmul.mubr.bf16.gmra.mxu0 %v4221
        %v4345 = vpop.f32.mrf.mxu0
        %v4346 = vadd.f32 0.0, %v4345
        %v4347 = vpop.f32.mrf.mxu0
        %v4348 = vpop.f32.mrf.mxu0
        %v4349 = vadd.f32 0.0, %v4348
        %v4350 = vpop.f32.mrf.mxu0
        %4351 = vmatprep.mubr.bf16.mxu0 0
        %4352 = vmatmul.mubr.bf16.gmra.mxu0 %v4224
        %v4353 = vpop.f32.mrf.mxu0
        %v4354 = vadd.f32 0.0, %v4353
        %v4355 = vpop.f32.mrf.mxu0
        %v4356 = vpop.f32.mrf.mxu0
        %v4357 = vadd.f32 0.0, %v4356
        %v4358 = vpop.f32.mrf.mxu0
        %4359 = vmatprep.mubr.bf16.mxu0 0
        %4360 = vmatmul.mubr.bf16.gmra.mxu0 %v4227
        %v4361 = vpop.f32.mrf.mxu0
        %v4362 = vadd.f32 0.0, %v4361
        %v4363 = vpop.f32.mrf.mxu0
        %v4364 = vpop.f32.mrf.mxu0
        %v4365 = vadd.f32 0.0, %v4364
        %v4366 = vpop.f32.mrf.mxu0
        %4367 = vmatprep.mubr.bf16.mxu0 0
        %4368 = vmatmul.mubr.bf16.gmra.mxu0 %v4230
        %v4369 = vpop.f32.mrf.mxu0
        %v4370 = vadd.f32 0.0, %v4369
        %v4371 = vpop.f32.mrf.mxu0
        %v4372 = vpop.f32.mrf.mxu0
        %v4373 = vadd.f32 0.0, %v4372
        %v4374 = vpop.f32.mrf.mxu0
        %4375 = vmatprep.mubr.bf16.mxu0 0
        %4376 = vmatmul.mubr.bf16.gmra.mxu0 %v4233
        %v4377 = vpop.f32.mrf.mxu0
        %v4378 = vadd.f32 0.0, %v4377
        %v4379 = vpop.f32.mrf.mxu0
        %v4380 = vpop.f32.mrf.mxu0
        %v4381 = vadd.f32 0.0, %v4380
        %v4382 = vpop.f32.mrf.mxu0
        %4383 = vmatprep.mubr.bf16.mxu0 0
        %4384 = vmatmul.mubr.bf16.gmra.mxu0 %v4236
        %v4385 = vpop.f32.mrf.mxu0
        %v4386 = vadd.f32 0.0, %v4385
        %v4387 = vpop.f32.mrf.mxu0
        %v4388 = vpop.f32.mrf.mxu0
        %v4389 = vadd.f32 0.0, %v4388
        %v4390 = vpop.f32.mrf.mxu0
        %4391 = vmatprep.mubr.bf16.mxu0 0
        %4392 = vmatmul.mubr.bf16.gmra.mxu0 %v4239
        %v4393 = vpop.f32.mrf.mxu0
        %v4394 = vadd.f32 0.0, %v4393
        %v4395 = vpop.f32.mrf.mxu0
        %v4396 = vpop.f32.mrf.mxu0
        %v4397 = vadd.f32 0.0, %v4396
        %v4398 = vpop.f32.mrf.mxu0
        %4399 = vmatprep.mubr.bf16.mxu0 0
        %4400 = vmatmul.mubr.bf16.gmra.mxu0 %v4242
        %v4401 = vpop.f32.mrf.mxu0
        %v4402 = vadd.f32 0.0, %v4401
        %v4403 = vpop.f32.mrf.mxu0
        %v4404 = vpop.f32.mrf.mxu0
        %v4405 = vadd.f32 0.0, %v4404
        %v4406 = vpop.f32.mrf.mxu0
        %4407 = vmatprep.mubr.bf16.mxu0 0
        %4408 = vmatmul.mubr.bf16.gmra.mxu0 %v4245
        %v4409 = vpop.f32.mrf.mxu0
        %v4410 = vadd.f32 0.0, %v4409
        %v4411 = vpop.f32.mrf.mxu0
        %v4412 = vpop.f32.mrf.mxu0
        %v4413 = vadd.f32 0.0, %v4412
        %v4414 = vpop.f32.mrf.mxu0
        %4415 = vmatprep.mubr.bf16.mxu0 0
        %4416 = vmatmul.mubr.bf16.gmra.mxu0 %v4248
        %v4417 = vpop.f32.mrf.mxu0
        %v4418 = vadd.f32 0.0, %v4417
        %v4419 = vpop.f32.mrf.mxu0
        %v4420 = vpop.f32.mrf.mxu0
        %v4421 = vadd.f32 0.0, %v4420
        %v4422 = vpop.f32.mrf.mxu0
        %4423 = vmatprep.mubr.bf16.mxu0 0
        %4424 = vmatmul.mubr.bf16.gmra.mxu0 %v4251
        %v4425 = vpop.f32.mrf.mxu0
        %v4426 = vadd.f32 0.0, %v4425
        %v4427 = vpop.f32.mrf.mxu0
        %v4428 = vpop.f32.mrf.mxu0
        %v4429 = vadd.f32 0.0, %v4428
        %v4430 = vpop.f32.mrf.mxu0
        %4431 = vmatprep.mubr.bf16.mxu0 0
        %4432 = vmatmul.mubr.bf16.gmra.mxu0 %v4254
        %v4433 = vpop.f32.mrf.mxu0
        %v4434 = vadd.f32 0.0, %v4433
        %v4435 = vpop.f32.mrf.mxu0
        %v4436 = vpop.f32.mrf.mxu0
        %v4437 = vadd.f32 0.0, %v4436
        %v4438 = vpop.f32.mrf.mxu0
        %4439 = vmatprep.mubr.bf16.mxu0 0
        %4440 = vmatmul.mubr.bf16.gmra.mxu0 %v4257
        %v4441 = vpop.f32.mrf.mxu0
        %v4442 = vadd.f32 0.0, %v4441
        %v4443 = vpop.f32.mrf.mxu0
        %v4444 = vpop.f32.mrf.mxu0
        %v4445 = vadd.f32 0.0, %v4444
        %v4446 = vpop.f32.mrf.mxu0
        %4447 = vmatprep.mubr.bf16.mxu0 0
        %4448 = vmatmul.mubr.bf16.gmra.mxu0 %v4260
        %v4449 = vpop.f32.mrf.mxu0
        %v4450 = vadd.f32 0.0, %v4449
        %v4451 = vpop.f32.mrf.mxu0
        %v4452 = vpop.f32.mrf.mxu0
        %v4453 = vadd.f32 0.0, %v4452
        %v4454 = vpop.f32.mrf.mxu0
        %4455 = vmatprep.mubr.bf16.mxu0 0
        %4456 = vmatmul.mubr.bf16.gmra.mxu0 %v4263
        %v4457 = vpop.f32.mrf.mxu0
        %v4458 = vadd.f32 0.0, %v4457
        %v4459 = vpop.f32.mrf.mxu0
        %v4460 = vpop.f32.mrf.mxu0
        %v4461 = vadd.f32 0.0, %v4460
        %v4462 = vpop.f32.mrf.mxu0
        %4463 = vmatprep.mubr.bf16.mxu0 0
        %4464 = vmatmul.mubr.bf16.gmra.mxu0 %v4266
        %v4465 = vpop.f32.mrf.mxu0
        %v4466 = vadd.f32 0.0, %v4465
        %v4467 = vpop.f32.mrf.mxu0
        %v4468 = vpop.f32.mrf.mxu0
        %v4469 = vadd.f32 0.0, %v4468
        %v4470 = vpop.f32.mrf.mxu0
        %4471 = vdwg.mxu0
        %v4472 = vadd.f32 %v4113, %v4306
        %v4473 = vadd.f32 %v4114, %v4309
        %v4474 = vadd.f32 %v4115, %v4314
        %v4475 = vadd.f32 %v4116, %v4317
        %v4476 = vadd.f32 %v4117, %v4322
        %v4477 = vadd.f32 %v4118, %v4325
        %v4478 = vadd.f32 %v4119, %v4330
        %v4479 = vadd.f32 %v4120, %v4333
        %v4480 = vadd.f32 %v4121, %v4338
        %v4481 = vadd.f32 %v4122, %v4341
        %v4482 = vadd.f32 %v4123, %v4346
        %v4483 = vadd.f32 %v4124, %v4349
        %v4484 = vadd.f32 %v4125, %v4354
        %v4485 = vadd.f32 %v4126, %v4357
        %v4486 = vadd.f32 %v4127, %v4362
        %v4487 = vadd.f32 %v4128, %v4365
        %v4488 = vadd.f32 %v4129, %v4370
        %v4489 = vadd.f32 %v4130, %v4373
        %v4490 = vadd.f32 %v4131, %v4378
        %v4491 = vadd.f32 %v4132, %v4381
        %v4492 = vadd.f32 %v4133, %v4386
        %v4493 = vadd.f32 %v4134, %v4389
        %v4494 = vadd.f32 %v4135, %v4394
        %v4495 = vadd.f32 %v4136, %v4397
        %v4496 = vadd.f32 %v4137, %v4402
        %v4497 = vadd.f32 %v4138, %v4405
        %v4498 = vadd.f32 %v4139, %v4410
        %v4499 = vadd.f32 %v4140, %v4413
        %v4500 = vadd.f32 %v4141, %v4418
        %v4501 = vadd.f32 %v4142, %v4421
        %v4502 = vadd.f32 %v4143, %v4426
        %v4503 = vadd.f32 %v4144, %v4429
        %v4504 = vadd.f32 %v4145, %v4434
        %v4505 = vadd.f32 %v4146, %v4437
        %v4506 = vadd.f32 %v4147, %v4442
        %v4507 = vadd.f32 %v4148, %v4445
        %v4508 = vadd.f32 %v4149, %v4450
        %v4509 = vadd.f32 %v4150, %v4453
        %v4510 = vadd.f32 %v4151, %v4458
        %v4511 = vadd.f32 %v4152, %v4461
        %v4512 = vadd.f32 %v4153, %v4466
        %v4513 = vadd.f32 %v4154, %v4469
        %v4514 = vld [vmem:[%s290 + $0xc0] sm:$0x3]
        %s4515 = scalar_lea.vmem %s2, 32
        %v4516 = vld [vmem:[%s4515] sm:$0xf]
        %v4518 = vunpack.c.l.b16 %v4514
        %v4519 = vpack.c.b16 %v4518, %v4518
        %vm4520 = vsmask.f32 6400
        %v4522 = vshrl.u32 %v4160, 16
        %v4524 = vrot.slane %v4522, 1
        %v4525 = vshll.u32 %v4160, 16
        %v4527 = vrot.slane %v4525, 2
        %v4528 = vor.u32 %v4524, %v4527
        %v4529 = vrot.slane %v3686, 1
        %v4530 = vrot.slane %v3682, 2
        %v4531 = vor.u32 %v4529, %v4530
        %v4532 = vsel %vm4520, %v4528, %v4531
        %v4533 = vrot.slane %v3694, 1
        %v4534 = vrot.slane %v3690, 2
        %v4535 = vor.u32 %v4533, %v4534
        %v4536 = vsel %vm4520, %v4531, %v4535
        %v4537 = vrot.slane %v3702, 1
        %v4538 = vrot.slane %v3698, 2
        %v4539 = vor.u32 %v4537, %v4538
        %v4540 = vsel %vm4520, %v4535, %v4539
        %v4541 = vrot.slane %v3710, 1
        %v4542 = vrot.slane %v3706, 2
        %v4543 = vor.u32 %v4541, %v4542
        %v4544 = vsel %vm4520, %v4539, %v4543
        %v4545 = vrot.slane %v3718, 1
        %v4546 = vrot.slane %v3714, 2
        %v4547 = vor.u32 %v4545, %v4546
        %v4548 = vsel %vm4520, %v4543, %v4547
        %v4549 = vrot.slane %v3726, 1
        %v4550 = vrot.slane %v3722, 2
        %v4551 = vor.u32 %v4549, %v4550
        %v4552 = vsel %vm4520, %v4547, %v4551
        %v4553 = vrot.slane %v3734, 1
        %v4554 = vrot.slane %v3730, 2
        %v4555 = vor.u32 %v4553, %v4554
        %v4556 = vsel %vm4520, %v4551, %v4555
        %v4557 = vrot.slane %v3742, 1
        %v4558 = vrot.slane %v3738, 2
        %v4559 = vor.u32 %v4557, %v4558
        %v4560 = vsel %vm4520, %v4555, %v4559
        %v4561 = vrot.slane %v3750, 1
        %v4562 = vrot.slane %v3746, 2
        %v4563 = vor.u32 %v4561, %v4562
        %v4564 = vsel %vm4520, %v4559, %v4563
        %v4565 = vrot.slane %v3758, 1
        %v4566 = vrot.slane %v3754, 2
        %v4567 = vor.u32 %v4565, %v4566
        %v4568 = vsel %vm4520, %v4563, %v4567
        %v4569 = vrot.slane %v3766, 1
        %v4570 = vrot.slane %v3762, 2
        %v4571 = vor.u32 %v4569, %v4570
        %v4572 = vsel %vm4520, %v4567, %v4571
        %v4573 = vrot.slane %v3774, 1
        %v4574 = vrot.slane %v3770, 2
        %v4575 = vor.u32 %v4573, %v4574
        %v4576 = vsel %vm4520, %v4571, %v4575
        %v4577 = vrot.slane %v3782, 1
        %v4578 = vrot.slane %v3778, 2
        %v4579 = vor.u32 %v4577, %v4578
        %v4580 = vsel %vm4520, %v4575, %v4579
        %v4581 = vrot.slane %v3790, 1
        %v4582 = vrot.slane %v3786, 2
        %v4583 = vor.u32 %v4581, %v4582
        %v4584 = vsel %vm4520, %v4579, %v4583
        %v4585 = vrot.slane %v3798, 1
        %v4586 = vrot.slane %v3794, 2
        %v4587 = vor.u32 %v4585, %v4586
        %v4588 = vsel %vm4520, %v4583, %v4587
        %v4589 = vrot.slane %v3806, 1
        %v4590 = vrot.slane %v3802, 2
        %v4591 = vor.u32 %v4589, %v4590
        %v4592 = vsel %vm4520, %v4587, %v4591
        %v4593 = vrot.slane %v3814, 1
        %v4594 = vrot.slane %v3810, 2
        %v4595 = vor.u32 %v4593, %v4594
        %v4596 = vsel %vm4520, %v4591, %v4595
        %v4597 = vrot.slane %v3822, 1
        %v4598 = vrot.slane %v3818, 2
        %v4599 = vor.u32 %v4597, %v4598
        %v4600 = vsel %vm4520, %v4595, %v4599
        %v4601 = vrot.slane %v3830, 1
        %v4602 = vrot.slane %v3826, 2
        %v4603 = vor.u32 %v4601, %v4602
        %v4604 = vsel %vm4520, %v4599, %v4603
        %v4605 = vrot.slane %v3838, 1
        %v4606 = vrot.slane %v3834, 2
        %v4607 = vor.u32 %v4605, %v4606
        %v4608 = vsel %vm4520, %v4603, %v4607
        %v4610 = vshrl.u32 %v4519, 16
        %v4612 = vrot.slane %v4610, 1
        %v4613 = vshll.u32 %v4519, 16
        %v4615 = vrot.slane %v4613, 2
        %v4616 = vor.u32 %v4612, %v4615
        %v4617 = vsel %vm4520, %v4607, %v4616
        %v4619 = vsel %vm745, %v4532, 0
        %v4622 = vsel %vm745, %v4536, 0
        %v4625 = vsel %vm745, %v4540, 0
        %v4628 = vsel %vm745, %v4544, 0
        %v4631 = vsel %vm745, %v4548, 0
        %v4634 = vsel %vm745, %v4552, 0
        %v4637 = vsel %vm745, %v4556, 0
        %v4640 = vsel %vm745, %v4560, 0
        %v4643 = vsel %vm745, %v4564, 0
        %v4646 = vsel %vm745, %v4568, 0
        %v4649 = vsel %vm745, %v4572, 0
        %v4652 = vsel %vm745, %v4576, 0
        %v4655 = vsel %vm745, %v4580, 0
        %v4658 = vsel %vm745, %v4584, 0
        %v4661 = vsel %vm745, %v4588, 0
        %v4664 = vsel %vm745, %v4592, 0
        %v4667 = vsel %vm745, %v4596, 0
        %v4670 = vsel %vm745, %v4600, 0
        %v4673 = vsel %vm745, %v4604, 0
        %v4676 = vsel %vm745, %v4608, 0
        %v4679 = vsel %vm745, %v4617, 0
        %v4682 = vsel %vm809, %v4516, 0
        %4684 = vmatprep.subr.bf16.mxu0 0
        %4685 = vmatpush1.bf16.msra.mxu0 0
        %4686 = vmatprep.subr.bf16.mxu0 0
        %4687 = vmatpush1.bf16.msra.mxu0 0
        %4688 = vmatprep.subr.bf16.mxu0 0
        %4689 = vmatpush1.bf16.msra.mxu0 0
        %4690 = vmatprep.subr.bf16.mxu0 0
        %4691 = vmatpush1.bf16.msra.mxu0 0
        %4692 = vmatprep.subr.bf16.mxu0 0
        %4693 = vmatpush1.bf16.msra.mxu0 0
        %4694 = vmatprep.subr.bf16.mxu0 0
        %4695 = vmatpush1.bf16.msra.mxu0 0
        %4696 = vmatprep.subr.bf16.mxu0 0
        %4697 = vmatpush1.bf16.msra.mxu0 0
        %4698 = vmatprep.subr.bf16.mxu0 0
        %4699 = vmatpush1.bf16.msra.mxu0 %v4682
        %4700 = vmatprep.subr.bf16.mxu0 0
        %4701 = vmatpush2.bf16.msra.mxu0 0
        %4702 = vmatprep.subr.bf16.mxu0 0
        %4703 = vmatpush2.bf16.msra.mxu0 0
        %4704 = vmatprep.subr.bf16.mxu0 0
        %4705 = vmatpush2.bf16.msra.mxu0 0
        %4706 = vmatprep.subr.bf16.mxu0 0
        %4707 = vmatpush2.bf16.msra.mxu0 0
        %4708 = vmatprep.subr.bf16.mxu0 0
        %4709 = vmatpush2.bf16.msra.mxu0 0
        %4710 = vmatprep.subr.bf16.mxu0 0
        %4711 = vmatpush2.bf16.msra.mxu0 0
        %4712 = vmatprep.subr.bf16.mxu0 0
        %4713 = vmatpush2.bf16.msra.mxu0 0
        %4714 = vmatprep.subr.bf16.mxu0 0
        %4715 = vmatpush2.bf16.msra.mxu0 0
        %4716 = vmatprep.mubr.bf16.mxu0 0
        %4717 = vmatmul.mubr.bf16.gmra.mxu0 %v4619
        %v4718 = vpop.f32.mrf.mxu0
        %v4719 = vadd.f32 0.0, %v4718
        %v4720 = vpop.f32.mrf.mxu0
        %v4721 = vpop.f32.mrf.mxu0
        %v4722 = vadd.f32 0.0, %v4721
        %v4723 = vpop.f32.mrf.mxu0
        %4724 = vmatprep.mubr.bf16.mxu0 0
        %4725 = vmatmul.mubr.bf16.gmra.mxu0 %v4622
        %v4726 = vpop.f32.mrf.mxu0
        %v4727 = vadd.f32 0.0, %v4726
        %v4728 = vpop.f32.mrf.mxu0
        %v4729 = vpop.f32.mrf.mxu0
        %v4730 = vadd.f32 0.0, %v4729
        %v4731 = vpop.f32.mrf.mxu0
        %4732 = vmatprep.mubr.bf16.mxu0 0
        %4733 = vmatmul.mubr.bf16.gmra.mxu0 %v4625
        %v4734 = vpop.f32.mrf.mxu0
        %v4735 = vadd.f32 0.0, %v4734
        %v4736 = vpop.f32.mrf.mxu0
        %v4737 = vpop.f32.mrf.mxu0
        %v4738 = vadd.f32 0.0, %v4737
        %v4739 = vpop.f32.mrf.mxu0
        %4740 = vmatprep.mubr.bf16.mxu0 0
        %4741 = vmatmul.mubr.bf16.gmra.mxu0 %v4628
        %v4742 = vpop.f32.mrf.mxu0
        %v4743 = vadd.f32 0.0, %v4742
        %v4744 = vpop.f32.mrf.mxu0
        %v4745 = vpop.f32.mrf.mxu0
        %v4746 = vadd.f32 0.0, %v4745
        %v4747 = vpop.f32.mrf.mxu0
        %4748 = vmatprep.mubr.bf16.mxu0 0
        %4749 = vmatmul.mubr.bf16.gmra.mxu0 %v4631
        %v4750 = vpop.f32.mrf.mxu0
        %v4751 = vadd.f32 0.0, %v4750
        %v4752 = vpop.f32.mrf.mxu0
        %v4753 = vpop.f32.mrf.mxu0
        %v4754 = vadd.f32 0.0, %v4753
        %v4755 = vpop.f32.mrf.mxu0
        %4756 = vmatprep.mubr.bf16.mxu0 0
        %4757 = vmatmul.mubr.bf16.gmra.mxu0 %v4634
        %v4758 = vpop.f32.mrf.mxu0
        %v4759 = vadd.f32 0.0, %v4758
        %v4760 = vpop.f32.mrf.mxu0
        %v4761 = vpop.f32.mrf.mxu0
        %v4762 = vadd.f32 0.0, %v4761
        %v4763 = vpop.f32.mrf.mxu0
        %4764 = vmatprep.mubr.bf16.mxu0 0
        %4765 = vmatmul.mubr.bf16.gmra.mxu0 %v4637
        %v4766 = vpop.f32.mrf.mxu0
        %v4767 = vadd.f32 0.0, %v4766
        %v4768 = vpop.f32.mrf.mxu0
        %v4769 = vpop.f32.mrf.mxu0
        %v4770 = vadd.f32 0.0, %v4769
        %v4771 = vpop.f32.mrf.mxu0
        %4772 = vmatprep.mubr.bf16.mxu0 0
        %4773 = vmatmul.mubr.bf16.gmra.mxu0 %v4640
        %v4774 = vpop.f32.mrf.mxu0
        %v4775 = vadd.f32 0.0, %v4774
        %v4776 = vpop.f32.mrf.mxu0
        %v4777 = vpop.f32.mrf.mxu0
        %v4778 = vadd.f32 0.0, %v4777
        %v4779 = vpop.f32.mrf.mxu0
        %4780 = vmatprep.mubr.bf16.mxu0 0
        %4781 = vmatmul.mubr.bf16.gmra.mxu0 %v4643
        %v4782 = vpop.f32.mrf.mxu0
        %v4783 = vadd.f32 0.0, %v4782
        %v4784 = vpop.f32.mrf.mxu0
        %v4785 = vpop.f32.mrf.mxu0
        %v4786 = vadd.f32 0.0, %v4785
        %v4787 = vpop.f32.mrf.mxu0
        %4788 = vmatprep.mubr.bf16.mxu0 0
        %4789 = vmatmul.mubr.bf16.gmra.mxu0 %v4646
        %v4790 = vpop.f32.mrf.mxu0
        %v4791 = vadd.f32 0.0, %v4790
        %v4792 = vpop.f32.mrf.mxu0
        %v4793 = vpop.f32.mrf.mxu0
        %v4794 = vadd.f32 0.0, %v4793
        %v4795 = vpop.f32.mrf.mxu0
        %4796 = vmatprep.mubr.bf16.mxu0 0
        %4797 = vmatmul.mubr.bf16.gmra.mxu0 %v4649
        %v4798 = vpop.f32.mrf.mxu0
        %v4799 = vadd.f32 0.0, %v4798
        %v4800 = vpop.f32.mrf.mxu0
        %v4801 = vpop.f32.mrf.mxu0
        %v4802 = vadd.f32 0.0, %v4801
        %v4803 = vpop.f32.mrf.mxu0
        %4804 = vmatprep.mubr.bf16.mxu0 0
        %4805 = vmatmul.mubr.bf16.gmra.mxu0 %v4652
        %v4806 = vpop.f32.mrf.mxu0
        %v4807 = vadd.f32 0.0, %v4806
        %v4808 = vpop.f32.mrf.mxu0
        %v4809 = vpop.f32.mrf.mxu0
        %v4810 = vadd.f32 0.0, %v4809
        %v4811 = vpop.f32.mrf.mxu0
        %4812 = vmatprep.mubr.bf16.mxu0 0
        %4813 = vmatmul.mubr.bf16.gmra.mxu0 %v4655
        %v4814 = vpop.f32.mrf.mxu0
        %v4815 = vadd.f32 0.0, %v4814
        %v4816 = vpop.f32.mrf.mxu0
        %v4817 = vpop.f32.mrf.mxu0
        %v4818 = vadd.f32 0.0, %v4817
        %v4819 = vpop.f32.mrf.mxu0
        %4820 = vmatprep.mubr.bf16.mxu0 0
        %4821 = vmatmul.mubr.bf16.gmra.mxu0 %v4658
        %v4822 = vpop.f32.mrf.mxu0
        %v4823 = vadd.f32 0.0, %v4822
        %v4824 = vpop.f32.mrf.mxu0
        %v4825 = vpop.f32.mrf.mxu0
        %v4826 = vadd.f32 0.0, %v4825
        %v4827 = vpop.f32.mrf.mxu0
        %4828 = vmatprep.mubr.bf16.mxu0 0
        %4829 = vmatmul.mubr.bf16.gmra.mxu0 %v4661
        %v4830 = vpop.f32.mrf.mxu0
        %v4831 = vadd.f32 0.0, %v4830
        %v4832 = vpop.f32.mrf.mxu0
        %v4833 = vpop.f32.mrf.mxu0
        %v4834 = vadd.f32 0.0, %v4833
        %v4835 = vpop.f32.mrf.mxu0
        %4836 = vmatprep.mubr.bf16.mxu0 0
        %4837 = vmatmul.mubr.bf16.gmra.mxu0 %v4664
        %v4838 = vpop.f32.mrf.mxu0
        %v4839 = vadd.f32 0.0, %v4838
        %v4840 = vpop.f32.mrf.mxu0
        %v4841 = vpop.f32.mrf.mxu0
        %v4842 = vadd.f32 0.0, %v4841
        %v4843 = vpop.f32.mrf.mxu0
        %4844 = vmatprep.mubr.bf16.mxu0 0
        %4845 = vmatmul.mubr.bf16.gmra.mxu0 %v4667
        %v4846 = vpop.f32.mrf.mxu0
        %v4847 = vadd.f32 0.0, %v4846
        %v4848 = vpop.f32.mrf.mxu0
        %v4849 = vpop.f32.mrf.mxu0
        %v4850 = vadd.f32 0.0, %v4849
        %v4851 = vpop.f32.mrf.mxu0
        %4852 = vmatprep.mubr.bf16.mxu0 0
        %4853 = vmatmul.mubr.bf16.gmra.mxu0 %v4670
        %v4854 = vpop.f32.mrf.mxu0
        %v4855 = vadd.f32 0.0, %v4854
        %v4856 = vpop.f32.mrf.mxu0
        %v4857 = vpop.f32.mrf.mxu0
        %v4858 = vadd.f32 0.0, %v4857
        %v4859 = vpop.f32.mrf.mxu0
        %4860 = vmatprep.mubr.bf16.mxu0 0
        %4861 = vmatmul.mubr.bf16.gmra.mxu0 %v4673
        %v4862 = vpop.f32.mrf.mxu0
        %v4863 = vadd.f32 0.0, %v4862
        %v4864 = vpop.f32.mrf.mxu0
        %v4865 = vpop.f32.mrf.mxu0
        %v4866 = vadd.f32 0.0, %v4865
        %v4867 = vpop.f32.mrf.mxu0
        %4868 = vmatprep.mubr.bf16.mxu0 0
        %4869 = vmatmul.mubr.bf16.gmra.mxu0 %v4676
        %v4870 = vpop.f32.mrf.mxu0
        %v4871 = vadd.f32 0.0, %v4870
        %v4872 = vpop.f32.mrf.mxu0
        %v4873 = vpop.f32.mrf.mxu0
        %v4874 = vadd.f32 0.0, %v4873
        %v4875 = vpop.f32.mrf.mxu0
        %4876 = vmatprep.mubr.bf16.mxu0 0
        %4877 = vmatmul.mubr.bf16.gmra.mxu0 %v4679
        %v4878 = vpop.f32.mrf.mxu0
        %v4879 = vadd.f32 0.0, %v4878
        %v4880 = vpop.f32.mrf.mxu0
        %v4881 = vpop.f32.mrf.mxu0
        %v4882 = vadd.f32 0.0, %v4881
        %v4883 = vpop.f32.mrf.mxu0
        %4884 = vdwg.mxu0
        %v4885 = vadd.f32 %v4472, %v4719
        %v4886 = vadd.f32 %v4473, %v4722
        %v4887 = vadd.f32 %v4474, %v4727
        %v4888 = vadd.f32 %v4475, %v4730
        %v4889 = vadd.f32 %v4476, %v4735
        %v4890 = vadd.f32 %v4477, %v4738
        %v4891 = vadd.f32 %v4478, %v4743
        %v4892 = vadd.f32 %v4479, %v4746
        %v4893 = vadd.f32 %v4480, %v4751
        %v4894 = vadd.f32 %v4481, %v4754
        %v4895 = vadd.f32 %v4482, %v4759
        %v4896 = vadd.f32 %v4483, %v4762
        %v4897 = vadd.f32 %v4484, %v4767
        %v4898 = vadd.f32 %v4485, %v4770
        %v4899 = vadd.f32 %v4486, %v4775
        %v4900 = vadd.f32 %v4487, %v4778
        %v4901 = vadd.f32 %v4488, %v4783
        %v4902 = vadd.f32 %v4489, %v4786
        %v4903 = vadd.f32 %v4490, %v4791
        %v4904 = vadd.f32 %v4491, %v4794
        %v4905 = vadd.f32 %v4492, %v4799
        %v4906 = vadd.f32 %v4493, %v4802
        %v4907 = vadd.f32 %v4494, %v4807
        %v4908 = vadd.f32 %v4495, %v4810
        %v4909 = vadd.f32 %v4496, %v4815
        %v4910 = vadd.f32 %v4497, %v4818
        %v4911 = vadd.f32 %v4498, %v4823
        %v4912 = vadd.f32 %v4499, %v4826
        %v4913 = vadd.f32 %v4500, %v4831
        %v4914 = vadd.f32 %v4501, %v4834
        %v4915 = vadd.f32 %v4502, %v4839
        %v4916 = vadd.f32 %v4503, %v4842
        %v4917 = vadd.f32 %v4504, %v4847
        %v4918 = vadd.f32 %v4505, %v4850
        %v4919 = vadd.f32 %v4506, %v4855
        %v4920 = vadd.f32 %v4507, %v4858
        %v4921 = vadd.f32 %v4508, %v4863
        %v4922 = vadd.f32 %v4509, %v4866
        %v4923 = vadd.f32 %v4510, %v4871
        %v4924 = vadd.f32 %v4511, %v4874
        %v4925 = vadd.f32 %v4512, %v4879
        %v4926 = vadd.f32 %v4513, %v4882
        %v4927 = vld [vmem:[%s5] sm:$0x1]
        %v4928 = vlaneseq
        %v4929 = vshrl.u32 %v4928, 7
        %v4930 = vsub.s32 0, %v4929
        %v4931 = vrot.slane %v4927, %v4930
        %v4932 = vadd.f32 %v4885, %v4931
        %v4933 = vadd.f32 %v4886, %v4931
        %v4934 = vadd.f32 %v4887, %v4931
        %v4935 = vadd.f32 %v4888, %v4931
        %v4936 = vadd.f32 %v4889, %v4931
        %v4937 = vadd.f32 %v4890, %v4931
        %v4938 = vadd.f32 %v4891, %v4931
        %v4939 = vadd.f32 %v4892, %v4931
        %v4940 = vadd.f32 %v4893, %v4931
        %v4941 = vadd.f32 %v4894, %v4931
        %v4942 = vadd.f32 %v4895, %v4931
        %v4943 = vadd.f32 %v4896, %v4931
        %v4944 = vadd.f32 %v4897, %v4931
        %v4945 = vadd.f32 %v4898, %v4931
        %v4946 = vadd.f32 %v4899, %v4931
        %v4947 = vadd.f32 %v4900, %v4931
        %v4948 = vadd.f32 %v4901, %v4931
        %v4949 = vadd.f32 %v4902, %v4931
        %v4950 = vadd.f32 %v4903, %v4931
        %v4951 = vadd.f32 %v4904, %v4931
        %v4952 = vadd.f32 %v4905, %v4931
        %v4953 = vadd.f32 %v4906, %v4931
        %v4954 = vadd.f32 %v4907, %v4931
        %v4955 = vadd.f32 %v4908, %v4931
        %v4956 = vadd.f32 %v4909, %v4931
        %v4957 = vadd.f32 %v4910, %v4931
        %v4958 = vadd.f32 %v4911, %v4931
        %v4959 = vadd.f32 %v4912, %v4931
        %v4960 = vadd.f32 %v4913, %v4931
        %v4961 = vadd.f32 %v4914, %v4931
        %v4962 = vadd.f32 %v4915, %v4931
        %v4963 = vadd.f32 %v4916, %v4931
        %v4964 = vadd.f32 %v4917, %v4931
        %v4965 = vadd.f32 %v4918, %v4931
        %v4966 = vadd.f32 %v4919, %v4931
        %v4967 = vadd.f32 %v4920, %v4931
        %v4968 = vadd.f32 %v4921, %v4931
        %v4969 = vadd.f32 %v4922, %v4931
        %v4970 = vadd.f32 %v4923, %v4931
        %v4971 = vadd.f32 %v4924, %v4931
        %v4972 = vadd.f32 %v4925, %v4931
        %v4973 = vadd.f32 %v4926, %v4931
        %vm4974 = vcmp.gt.f32.partialorder %v4932, 0.0
        %vm4975 = vcmp.gt.f32.partialorder %v4933, 0.0
        %vm4976 = vcmp.gt.f32.partialorder %v4934, 0.0
        %vm4977 = vcmp.gt.f32.partialorder %v4935, 0.0
        %vm4978 = vcmp.gt.f32.partialorder %v4936, 0.0
        %vm4979 = vcmp.gt.f32.partialorder %v4937, 0.0
        %vm4980 = vcmp.gt.f32.partialorder %v4938, 0.0
        %vm4981 = vcmp.gt.f32.partialorder %v4939, 0.0
        %vm4982 = vcmp.gt.f32.partialorder %v4940, 0.0
        %vm4983 = vcmp.gt.f32.partialorder %v4941, 0.0
        %vm4984 = vcmp.gt.f32.partialorder %v4942, 0.0
        %vm4985 = vcmp.gt.f32.partialorder %v4943, 0.0
        %vm4986 = vcmp.gt.f32.partialorder %v4944, 0.0
        %vm4987 = vcmp.gt.f32.partialorder %v4945, 0.0
        %vm4988 = vcmp.gt.f32.partialorder %v4946, 0.0
        %vm4989 = vcmp.gt.f32.partialorder %v4947, 0.0
        %vm4990 = vcmp.gt.f32.partialorder %v4948, 0.0
        %vm4991 = vcmp.gt.f32.partialorder %v4949, 0.0
        %vm4992 = vcmp.gt.f32.partialorder %v4950, 0.0
        %vm4993 = vcmp.gt.f32.partialorder %v4951, 0.0
        %vm4994 = vcmp.gt.f32.partialorder %v4952, 0.0
        %vm4995 = vcmp.gt.f32.partialorder %v4953, 0.0
        %vm4996 = vcmp.gt.f32.partialorder %v4954, 0.0
        %vm4997 = vcmp.gt.f32.partialorder %v4955, 0.0
        %vm4998 = vcmp.gt.f32.partialorder %v4956, 0.0
        %vm4999 = vcmp.gt.f32.partialorder %v4957, 0.0
        %vm5000 = vcmp.gt.f32.partialorder %v4958, 0.0
        %vm5001 = vcmp.gt.f32.partialorder %v4959, 0.0
        %vm5002 = vcmp.gt.f32.partialorder %v4960, 0.0
        %vm5003 = vcmp.gt.f32.partialorder %v4961, 0.0
        %vm5004 = vcmp.gt.f32.partialorder %v4962, 0.0
        %vm5005 = vcmp.gt.f32.partialorder %v4963, 0.0
        %vm5006 = vcmp.gt.f32.partialorder %v4964, 0.0
        %vm5007 = vcmp.gt.f32.partialorder %v4965, 0.0
        %vm5008 = vcmp.gt.f32.partialorder %v4966, 0.0
        %vm5009 = vcmp.gt.f32.partialorder %v4967, 0.0
        %vm5010 = vcmp.gt.f32.partialorder %v4968, 0.0
        %vm5011 = vcmp.gt.f32.partialorder %v4969, 0.0
        %vm5012 = vcmp.gt.f32.partialorder %v4970, 0.0
        %vm5013 = vcmp.gt.f32.partialorder %v4971, 0.0
        %vm5014 = vcmp.gt.f32.partialorder %v4972, 0.0
        %vm5015 = vcmp.gt.f32.partialorder %v4973, 0.0
        %v5016 = vstv %s292
        %v5017 = vmul.f32 %v5016, %v4932
        %v5018 = vmul.f32 %v5016, %v4933
        %v5019 = vmul.f32 %v5016, %v4934
        %v5020 = vmul.f32 %v5016, %v4935
        %v5021 = vmul.f32 %v5016, %v4936
        %v5022 = vmul.f32 %v5016, %v4937
        %v5023 = vmul.f32 %v5016, %v4938
        %v5024 = vmul.f32 %v5016, %v4939
        %v5025 = vmul.f32 %v5016, %v4940
        %v5026 = vmul.f32 %v5016, %v4941
        %v5027 = vmul.f32 %v5016, %v4942
        %v5028 = vmul.f32 %v5016, %v4943
        %v5029 = vmul.f32 %v5016, %v4944
        %v5030 = vmul.f32 %v5016, %v4945
        %v5031 = vmul.f32 %v5016, %v4946
        %v5032 = vmul.f32 %v5016, %v4947
        %v5033 = vmul.f32 %v5016, %v4948
        %v5034 = vmul.f32 %v5016, %v4949
        %v5035 = vmul.f32 %v5016, %v4950
        %v5036 = vmul.f32 %v5016, %v4951
        %v5037 = vmul.f32 %v5016, %v4952
        %v5038 = vmul.f32 %v5016, %v4953
        %v5039 = vmul.f32 %v5016, %v4954
        %v5040 = vmul.f32 %v5016, %v4955
        %v5041 = vmul.f32 %v5016, %v4956
        %v5042 = vmul.f32 %v5016, %v4957
        %v5043 = vmul.f32 %v5016, %v4958
        %v5044 = vmul.f32 %v5016, %v4959
        %v5045 = vmul.f32 %v5016, %v4960
        %v5046 = vmul.f32 %v5016, %v4961
        %v5047 = vmul.f32 %v5016, %v4962
        %v5048 = vmul.f32 %v5016, %v4963
        %v5049 = vmul.f32 %v5016, %v4964
        %v5050 = vmul.f32 %v5016, %v4965
        %v5051 = vmul.f32 %v5016, %v4966
        %v5052 = vmul.f32 %v5016, %v4967
        %v5053 = vmul.f32 %v5016, %v4968
        %v5054 = vmul.f32 %v5016, %v4969
        %v5055 = vmul.f32 %v5016, %v4970
        %v5056 = vmul.f32 %v5016, %v4971
        %v5057 = vmul.f32 %v5016, %v4972
        %v5058 = vmul.f32 %v5016, %v4973
        %v5059 = vsel %vm4974, %v4932, %v5017
        %v5060 = vsel %vm4975, %v4933, %v5018
        %v5061 = vsel %vm4976, %v4934, %v5019
        %v5062 = vsel %vm4977, %v4935, %v5020
        %v5063 = vsel %vm4978, %v4936, %v5021
        %v5064 = vsel %vm4979, %v4937, %v5022
        %v5065 = vsel %vm4980, %v4938, %v5023
        %v5066 = vsel %vm4981, %v4939, %v5024
        %v5067 = vsel %vm4982, %v4940, %v5025
        %v5068 = vsel %vm4983, %v4941, %v5026
        %v5069 = vsel %vm4984, %v4942, %v5027
        %v5070 = vsel %vm4985, %v4943, %v5028
        %v5071 = vsel %vm4986, %v4944, %v5029
        %v5072 = vsel %vm4987, %v4945, %v5030
        %v5073 = vsel %vm4988, %v4946, %v5031
        %v5074 = vsel %vm4989, %v4947, %v5032
        %v5075 = vsel %vm4990, %v4948, %v5033
        %v5076 = vsel %vm4991, %v4949, %v5034
        %v5077 = vsel %vm4992, %v4950, %v5035
        %v5078 = vsel %vm4993, %v4951, %v5036
        %v5079 = vsel %vm4994, %v4952, %v5037
        %v5080 = vsel %vm4995, %v4953, %v5038
        %v5081 = vsel %vm4996, %v4954, %v5039
        %v5082 = vsel %vm4997, %v4955, %v5040
        %v5083 = vsel %vm4998, %v4956, %v5041
        %v5084 = vsel %vm4999, %v4957, %v5042
        %v5085 = vsel %vm5000, %v4958, %v5043
        %v5086 = vsel %vm5001, %v4959, %v5044
        %v5087 = vsel %vm5002, %v4960, %v5045
        %v5088 = vsel %vm5003, %v4961, %v5046
        %v5089 = vsel %vm5004, %v4962, %v5047
        %v5090 = vsel %vm5005, %v4963, %v5048
        %v5091 = vsel %vm5006, %v4964, %v5049
        %v5092 = vsel %vm5007, %v4965, %v5050
        %v5093 = vsel %vm5008, %v4966, %v5051
        %v5094 = vsel %vm5009, %v4967, %v5052
        %v5095 = vsel %vm5010, %v4968, %v5053
        %v5096 = vsel %vm5011, %v4969, %v5054
        %v5097 = vsel %vm5012, %v4970, %v5055
        %v5098 = vsel %vm5013, %v4971, %v5056
        %v5099 = vsel %vm5014, %v4972, %v5057
        %v5100 = vsel %vm5015, %v4973, %v5058
        %v5101 = vmul.f32 %v5059, %v339
        %v5102 = vmul.f32 %v5060, %v344
        %v5103 = vmul.f32 %v5061, %v349
        %v5104 = vmul.f32 %v5062, %v354
        %v5105 = vmul.f32 %v5063, %v359
        %v5106 = vmul.f32 %v5064, %v364
        %v5107 = vmul.f32 %v5065, %v369
        %v5108 = vmul.f32 %v5066, %v374
        %v5109 = vmul.f32 %v5067, %v379
        %v5110 = vmul.f32 %v5068, %v384
        %v5111 = vmul.f32 %v5069, %v389
        %v5112 = vmul.f32 %v5070, %v394
        %v5113 = vmul.f32 %v5071, %v399
        %v5114 = vmul.f32 %v5072, %v404
        %v5115 = vmul.f32 %v5073, %v409
        %v5116 = vmul.f32 %v5074, %v414
        %v5117 = vmul.f32 %v5075, %v419
        %v5118 = vmul.f32 %v5076, %v424
        %v5119 = vmul.f32 %v5077, %v429
        %v5120 = vmul.f32 %v5078, %v434
        %v5121 = vmul.f32 %v5079, %v439
        %v5122 = vmul.f32 %v5080, %v444
        %v5123 = vmul.f32 %v5081, %v449
        %v5124 = vmul.f32 %v5082, %v454
        %v5125 = vmul.f32 %v5083, %v459
        %v5126 = vmul.f32 %v5084, %v464
        %v5127 = vmul.f32 %v5085, %v469
        %v5128 = vmul.f32 %v5086, %v474
        %v5129 = vmul.f32 %v5087, %v479
        %v5130 = vmul.f32 %v5088, %v484
        %v5131 = vmul.f32 %v5089, %v489
        %v5132 = vmul.f32 %v5090, %v494
        %v5133 = vmul.f32 %v5091, %v499
        %v5134 = vmul.f32 %v5092, %v504
        %v5135 = vmul.f32 %v5093, %v509
        %v5136 = vmul.f32 %v5094, %v514
        %v5137 = vmul.f32 %v5095, %v519
        %v5138 = vmul.f32 %v5096, %v524
        %v5139 = vmul.f32 %v5097, %v529
        %v5140 = vmul.f32 %v5098, %v534
        %v5141 = vmul.f32 %v5099, %v539
        %v5142 = vmul.f32 %v5100, %v544
        %5143 = vst [vmem:[#allocation2] sm:$0xf] 0
        %5144 = vst [vmem:[#allocation2 + $0x4] sm:$0xf] 0
        %5145 = vst [vmem:[#allocation2 + $0x8] sm:$0xf] 0
        %5146 = vst [vmem:[#allocation2 + $0xc] sm:$0xf] 0
        %5147 = vst [vmem:[#allocation2 + $0xb8] sm:$0xf] 0
        %5148 = vst [vmem:[#allocation2 + $0xbc] sm:$0xf] 0
        %5149 = vst [vmem:[#allocation2 + $0xc0] sm:$0xf] 0
        %5150 = vst [vmem:[#allocation2 + $0xc4] sm:$0xf] 0
        %v5151 = vpack.c.bf16 %v5102, %v5101
        %v5152 = vpack.c.bf16 %v5104, %v5103
        %v5153 = vpack.c.bf16 %v5106, %v5105
        %v5154 = vpack.c.bf16 %v5108, %v5107
        %v5155 = vpack.c.bf16 %v5110, %v5109
        %v5156 = vpack.c.bf16 %v5112, %v5111
        %v5157 = vpack.c.bf16 %v5114, %v5113
        %v5158 = vpack.c.bf16 %v5116, %v5115
        %v5159 = vpack.c.bf16 %v5118, %v5117
        %v5160 = vpack.c.bf16 %v5120, %v5119
        %v5161 = vpack.c.bf16 %v5122, %v5121
        %v5162 = vpack.c.bf16 %v5124, %v5123
        %v5163 = vpack.c.bf16 %v5126, %v5125
        %v5164 = vpack.c.bf16 %v5128, %v5127
        %v5165 = vpack.c.bf16 %v5130, %v5129
        %v5166 = vpack.c.bf16 %v5132, %v5131
        %v5167 = vpack.c.bf16 %v5134, %v5133
        %v5168 = vpack.c.bf16 %v5136, %v5135
        %v5169 = vpack.c.bf16 %v5138, %v5137
        %v5170 = vpack.c.bf16 %v5140, %v5139
        %v5171 = vpack.c.bf16 %v5142, %v5141
        %v5193 = vunpack.c.l.b16 %v5151
        %v5194 = vunpack.c.h.b16 %v5151
        %v5195 = vunpack.c.l.b16 %v5152
        %v5196 = vunpack.c.h.b16 %v5152
        %v5197 = vunpack.c.l.b16 %v5153
        %v5198 = vunpack.c.h.b16 %v5153
        %v5199 = vunpack.c.l.b16 %v5154
        %v5200 = vunpack.c.h.b16 %v5154
        %v5201 = vunpack.c.l.b16 %v5155
        %v5202 = vunpack.c.h.b16 %v5155
        %v5203 = vunpack.c.l.b16 %v5156
        %v5204 = vunpack.c.h.b16 %v5156
        %v5205 = vunpack.c.l.b16 %v5157
        %v5206 = vunpack.c.h.b16 %v5157
        %v5207 = vunpack.c.l.b16 %v5158
        %v5208 = vunpack.c.h.b16 %v5158
        %v5209 = vunpack.c.l.b16 %v5159
        %v5210 = vunpack.c.h.b16 %v5159
        %v5211 = vunpack.c.l.b16 %v5160
        %v5212 = vunpack.c.h.b16 %v5160
        %v5213 = vunpack.c.l.b16 %v5161
        %v5214 = vunpack.c.h.b16 %v5161
        %v5215 = vunpack.c.l.b16 %v5162
        %v5216 = vunpack.c.h.b16 %v5162
        %v5217 = vunpack.c.l.b16 %v5163
        %v5218 = vunpack.c.h.b16 %v5163
        %v5219 = vunpack.c.l.b16 %v5164
        %v5220 = vunpack.c.h.b16 %v5164
        %v5221 = vunpack.c.l.b16 %v5165
        %v5222 = vunpack.c.h.b16 %v5165
        %v5223 = vunpack.c.l.b16 %v5166
        %v5224 = vunpack.c.h.b16 %v5166
        %v5225 = vunpack.c.l.b16 %v5167
        %v5226 = vunpack.c.h.b16 %v5167
        %v5227 = vunpack.c.l.b16 %v5168
        %v5228 = vunpack.c.h.b16 %v5168
        %v5229 = vunpack.c.l.b16 %v5169
        %v5230 = vunpack.c.h.b16 %v5169
        %v5231 = vunpack.c.l.b16 %v5170
        %v5232 = vunpack.c.h.b16 %v5170
        %v5233 = vunpack.c.l.b16 %v5171
        %v5234 = vunpack.c.h.b16 %v5171
        %v5235 = vpack.c.b16 %v5193, %v5193
        %v5236 = vpack.c.b16 %v5194, %v5194
        %v5237 = vpack.c.b16 %v5195, %v5195
        %v5238 = vpack.c.b16 %v5196, %v5196
        %v5239 = vpack.c.b16 %v5197, %v5197
        %v5240 = vpack.c.b16 %v5198, %v5198
        %v5241 = vpack.c.b16 %v5199, %v5199
        %v5242 = vpack.c.b16 %v5200, %v5200
        %v5243 = vpack.c.b16 %v5201, %v5201
        %v5244 = vpack.c.b16 %v5202, %v5202
        %v5245 = vpack.c.b16 %v5203, %v5203
        %v5246 = vpack.c.b16 %v5204, %v5204
        %v5247 = vpack.c.b16 %v5205, %v5205
        %v5248 = vpack.c.b16 %v5206, %v5206
        %v5249 = vpack.c.b16 %v5207, %v5207
        %v5250 = vpack.c.b16 %v5208, %v5208
        %v5251 = vpack.c.b16 %v5209, %v5209
        %v5252 = vpack.c.b16 %v5210, %v5210
        %v5253 = vpack.c.b16 %v5211, %v5211
        %v5254 = vpack.c.b16 %v5212, %v5212
        %v5255 = vpack.c.b16 %v5213, %v5213
        %v5256 = vpack.c.b16 %v5214, %v5214
        %v5257 = vpack.c.b16 %v5215, %v5215
        %v5258 = vpack.c.b16 %v5216, %v5216
        %v5259 = vpack.c.b16 %v5217, %v5217
        %v5260 = vpack.c.b16 %v5218, %v5218
        %v5261 = vpack.c.b16 %v5219, %v5219
        %v5262 = vpack.c.b16 %v5220, %v5220
        %v5263 = vpack.c.b16 %v5221, %v5221
        %v5264 = vpack.c.b16 %v5222, %v5222
        %v5265 = vpack.c.b16 %v5223, %v5223
        %v5266 = vpack.c.b16 %v5224, %v5224
        %v5267 = vpack.c.b16 %v5225, %v5225
        %v5268 = vpack.c.b16 %v5226, %v5226
        %v5269 = vpack.c.b16 %v5227, %v5227
        %v5270 = vpack.c.b16 %v5228, %v5228
        %v5271 = vpack.c.b16 %v5229, %v5229
        %v5272 = vpack.c.b16 %v5230, %v5230
        %v5273 = vpack.c.b16 %v5231, %v5231
        %v5274 = vpack.c.b16 %v5232, %v5232
        %v5275 = vpack.c.b16 %v5233, %v5233
        %v5276 = vpack.c.b16 %v5234, %v5234
        %5319 = vst [vmem:[#allocation2 + $0x10] sm:$0xf] %v5235
        %5320 = vst [vmem:[#allocation2 + $0x14] sm:$0xf] %v5236
        %5321 = vst [vmem:[#allocation2 + $0x18] sm:$0xf] %v5237
        %5322 = vst [vmem:[#allocation2 + $0x1c] sm:$0xf] %v5238
        %5323 = vst [vmem:[#allocation2 + $0x20] sm:$0xf] %v5239
        %5324 = vst [vmem:[#allocation2 + $0x24] sm:$0xf] %v5240
        %5325 = vst [vmem:[#allocation2 + $0x28] sm:$0xf] %v5241
        %5326 = vst [vmem:[#allocation2 + $0x2c] sm:$0xf] %v5242
        %5327 = vst [vmem:[#allocation2 + $0x30] sm:$0xf] %v5243
        %5328 = vst [vmem:[#allocation2 + $0x34] sm:$0xf] %v5244
        %5329 = vst [vmem:[#allocation2 + $0x38] sm:$0xf] %v5245
        %5330 = vst [vmem:[#allocation2 + $0x3c] sm:$0xf] %v5246
        %5331 = vst [vmem:[#allocation2 + $0x40] sm:$0xf] %v5247
        %5332 = vst [vmem:[#allocation2 + $0x44] sm:$0xf] %v5248
        %5333 = vst [vmem:[#allocation2 + $0x48] sm:$0xf] %v5249
        %5334 = vst [vmem:[#allocation2 + $0x4c] sm:$0xf] %v5250
        %5335 = vst [vmem:[#allocation2 + $0x50] sm:$0xf] %v5251
        %5336 = vst [vmem:[#allocation2 + $0x54] sm:$0xf] %v5252
        %5337 = vst [vmem:[#allocation2 + $0x58] sm:$0xf] %v5253
        %5338 = vst [vmem:[#allocation2 + $0x5c] sm:$0xf] %v5254
        %5339 = vst [vmem:[#allocation2 + $0x60] sm:$0xf] %v5255
        %5340 = vst [vmem:[#allocation2 + $0x64] sm:$0xf] %v5256
        %5341 = vst [vmem:[#allocation2 + $0x68] sm:$0xf] %v5257
        %5342 = vst [vmem:[#allocation2 + $0x6c] sm:$0xf] %v5258
        %5343 = vst [vmem:[#allocation2 + $0x70] sm:$0xf] %v5259
        %5344 = vst [vmem:[#allocation2 + $0x74] sm:$0xf] %v5260
        %5345 = vst [vmem:[#allocation2 + $0x78] sm:$0xf] %v5261
        %5346 = vst [vmem:[#allocation2 + $0x7c] sm:$0xf] %v5262
        %5347 = vst [vmem:[#allocation2 + $0x80] sm:$0xf] %v5263
        %5348 = vst [vmem:[#allocation2 + $0x84] sm:$0xf] %v5264
        %5349 = vst [vmem:[#allocation2 + $0x88] sm:$0xf] %v5265
        %5350 = vst [vmem:[#allocation2 + $0x8c] sm:$0xf] %v5266
        %5351 = vst [vmem:[#allocation2 + $0x90] sm:$0xf] %v5267
        %5352 = vst [vmem:[#allocation2 + $0x94] sm:$0xf] %v5268
        %5353 = vst [vmem:[#allocation2 + $0x98] sm:$0xf] %v5269
        %5354 = vst [vmem:[#allocation2 + $0x9c] sm:$0xf] %v5270
        %5355 = vst [vmem:[#allocation2 + $0xa0] sm:$0xf] %v5271
        %5356 = vst [vmem:[#allocation2 + $0xa4] sm:$0xf] %v5272
        %5357 = vst [vmem:[#allocation2 + $0xa8] sm:$0xf] %v5273
        %5358 = vst [vmem:[#allocation2 + $0xac] sm:$0xf] %v5274
        %5359 = vst [vmem:[#allocation2 + $0xb0] sm:$0xf] %v5275
        %5360 = vst [vmem:[#allocation2 + $0xb4] sm:$0xf] %v5276
        %v5361 = vld [vmem:[%s290 + $0x10] sm:$0xf]
        %v5362 = vld [vmem:[%s290 + $0x14] sm:$0xf]
        %v5363 = vld [vmem:[%s290 + $0x18] sm:$0xf]
        %v5364 = vld [vmem:[%s290 + $0x1c] sm:$0xf]
        %v5365 = vld [vmem:[%s290 + $0x20] sm:$0xf]
        %v5366 = vld [vmem:[%s290 + $0x24] sm:$0xf]
        %v5367 = vld [vmem:[%s290 + $0x28] sm:$0xf]
        %v5368 = vld [vmem:[%s290 + $0x2c] sm:$0xf]
        %v5369 = vld [vmem:[%s290 + $0x30] sm:$0xf]
        %v5370 = vld [vmem:[%s290 + $0x34] sm:$0xf]
        %v5371 = vld [vmem:[%s290 + $0x38] sm:$0xf]
        %v5372 = vld [vmem:[%s290 + $0x3c] sm:$0xf]
        %v5373 = vld [vmem:[%s290 + $0x40] sm:$0xf]
        %v5374 = vld [vmem:[%s290 + $0x44] sm:$0xf]
        %v5375 = vld [vmem:[%s290 + $0x48] sm:$0xf]
        %v5376 = vld [vmem:[%s290 + $0x4c] sm:$0xf]
        %v5377 = vld [vmem:[%s290 + $0x50] sm:$0xf]
        %v5378 = vld [vmem:[%s290 + $0x54] sm:$0xf]
        %v5379 = vld [vmem:[%s290 + $0x58] sm:$0xf]
        %v5380 = vld [vmem:[%s290 + $0x5c] sm:$0xf]
        %v5381 = vld [vmem:[%s290 + $0x60] sm:$0xf]
        %v5382 = vld [vmem:[%s290 + $0x64] sm:$0xf]
        %v5383 = vld [vmem:[%s290 + $0x68] sm:$0xf]
        %v5384 = vld [vmem:[%s290 + $0x6c] sm:$0xf]
        %v5385 = vld [vmem:[%s290 + $0x70] sm:$0xf]
        %v5386 = vld [vmem:[%s290 + $0x74] sm:$0xf]
        %v5387 = vld [vmem:[%s290 + $0x78] sm:$0xf]
        %v5388 = vld [vmem:[%s290 + $0x7c] sm:$0xf]
        %v5389 = vld [vmem:[%s290 + $0x80] sm:$0xf]
        %v5390 = vld [vmem:[%s290 + $0x84] sm:$0xf]
        %v5391 = vld [vmem:[%s290 + $0x88] sm:$0xf]
        %v5392 = vld [vmem:[%s290 + $0x8c] sm:$0xf]
        %v5393 = vld [vmem:[%s290 + $0x90] sm:$0xf]
        %v5394 = vld [vmem:[%s290 + $0x94] sm:$0xf]
        %v5395 = vld [vmem:[%s290 + $0x98] sm:$0xf]
        %v5396 = vld [vmem:[%s290 + $0x9c] sm:$0xf]
        %v5397 = vld [vmem:[%s290 + $0xa0] sm:$0xf]
        %v5398 = vld [vmem:[%s290 + $0xa4] sm:$0xf]
        %v5399 = vld [vmem:[%s290 + $0xa8] sm:$0xf]
        %v5400 = vld [vmem:[%s290 + $0xac] sm:$0xf]
        %v5401 = vld [vmem:[%s290 + $0xb0] sm:$0xf]
        %v5402 = vld [vmem:[%s290 + $0xb4] sm:$0xf]
        %v5403 = vld [vmem:[%s3] sm:$0xf]
        %v5404 = vld [vmem:[%s5 + $0x1] sm:$0x1]
        %v5405 = vlaneseq
        %v5406 = vshrl.u32 %v5405, 7
        %v5407 = vsub.s32 0, %v5406
        %v5408 = vrot.slane %v5404, %v5407
        %v5451 = vunpack.c.l.b16 %v5361
        %v5452 = vunpack.c.l.b16 %v5362
        %v5453 = vunpack.c.l.b16 %v5363
        %v5454 = vunpack.c.l.b16 %v5364
        %v5455 = vunpack.c.l.b16 %v5365
        %v5456 = vunpack.c.l.b16 %v5366
        %v5457 = vunpack.c.l.b16 %v5367
        %v5458 = vunpack.c.l.b16 %v5368
        %v5459 = vunpack.c.l.b16 %v5369
        %v5460 = vunpack.c.l.b16 %v5370
        %v5461 = vunpack.c.l.b16 %v5371
        %v5462 = vunpack.c.l.b16 %v5372
        %v5463 = vunpack.c.l.b16 %v5373
        %v5464 = vunpack.c.l.b16 %v5374
        %v5465 = vunpack.c.l.b16 %v5375
        %v5466 = vunpack.c.l.b16 %v5376
        %v5467 = vunpack.c.l.b16 %v5377
        %v5468 = vunpack.c.l.b16 %v5378
        %v5469 = vunpack.c.l.b16 %v5379
        %v5470 = vunpack.c.l.b16 %v5380
        %v5471 = vunpack.c.l.b16 %v5381
        %v5472 = vunpack.c.l.b16 %v5382
        %v5473 = vunpack.c.l.b16 %v5383
        %v5474 = vunpack.c.l.b16 %v5384
        %v5475 = vunpack.c.l.b16 %v5385
        %v5476 = vunpack.c.l.b16 %v5386
        %v5477 = vunpack.c.l.b16 %v5387
        %v5478 = vunpack.c.l.b16 %v5388
        %v5479 = vunpack.c.l.b16 %v5389
        %v5480 = vunpack.c.l.b16 %v5390
        %v5481 = vunpack.c.l.b16 %v5391
        %v5482 = vunpack.c.l.b16 %v5392
        %v5483 = vunpack.c.l.b16 %v5393
        %v5484 = vunpack.c.l.b16 %v5394
        %v5485 = vunpack.c.l.b16 %v5395
        %v5486 = vunpack.c.l.b16 %v5396
        %v5487 = vunpack.c.l.b16 %v5397
        %v5488 = vunpack.c.l.b16 %v5398
        %v5489 = vunpack.c.l.b16 %v5399
        %v5490 = vunpack.c.l.b16 %v5400
        %v5491 = vunpack.c.l.b16 %v5401
        %v5492 = vunpack.c.l.b16 %v5402
        %v5493 = vpack.c.b16 %v5452, %v5451
        %v5494 = vpack.c.b16 %v5454, %v5453
        %v5495 = vpack.c.b16 %v5456, %v5455
        %v5496 = vpack.c.b16 %v5458, %v5457
        %v5497 = vpack.c.b16 %v5460, %v5459
        %v5498 = vpack.c.b16 %v5462, %v5461
        %v5499 = vpack.c.b16 %v5464, %v5463
        %v5500 = vpack.c.b16 %v5466, %v5465
        %v5501 = vpack.c.b16 %v5468, %v5467
        %v5502 = vpack.c.b16 %v5470, %v5469
        %v5503 = vpack.c.b16 %v5472, %v5471
        %v5504 = vpack.c.b16 %v5474, %v5473
        %v5505 = vpack.c.b16 %v5476, %v5475
        %v5506 = vpack.c.b16 %v5478, %v5477
        %v5507 = vpack.c.b16 %v5480, %v5479
        %v5508 = vpack.c.b16 %v5482, %v5481
        %v5509 = vpack.c.b16 %v5484, %v5483
        %v5510 = vpack.c.b16 %v5486, %v5485
        %v5511 = vpack.c.b16 %v5488, %v5487
        %v5512 = vpack.c.b16 %v5490, %v5489
        %v5513 = vpack.c.b16 %v5492, %v5491
        %v5515 = vsel %vm745, %v5493, 0
        %v5518 = vsel %vm745, %v5494, 0
        %v5521 = vsel %vm745, %v5495, 0
        %v5524 = vsel %vm745, %v5496, 0
        %v5527 = vsel %vm745, %v5497, 0
        %v5530 = vsel %vm745, %v5498, 0
        %v5533 = vsel %vm745, %v5499, 0
        %v5536 = vsel %vm745, %v5500, 0
        %v5539 = vsel %vm745, %v5501, 0
        %v5542 = vsel %vm745, %v5502, 0
        %v5545 = vsel %vm745, %v5503, 0
        %v5548 = vsel %vm745, %v5504, 0
        %v5551 = vsel %vm745, %v5505, 0
        %v5554 = vsel %vm745, %v5506, 0
        %v5557 = vsel %vm745, %v5507, 0
        %v5560 = vsel %vm745, %v5508, 0
        %v5563 = vsel %vm745, %v5509, 0
        %v5566 = vsel %vm745, %v5510, 0
        %v5569 = vsel %vm745, %v5511, 0
        %v5572 = vsel %vm745, %v5512, 0
        %v5575 = vsel %vm745, %v5513, 0
        %v5578 = vsel %vm809, %v5403, 0
        %5580 = vmatprep.subr.bf16.mxu0 0
        %5581 = vmatpush1.bf16.msra.mxu0 0
        %5582 = vmatprep.subr.bf16.mxu0 0
        %5583 = vmatpush1.bf16.msra.mxu0 0
        %5584 = vmatprep.subr.bf16.mxu0 0
        %5585 = vmatpush1.bf16.msra.mxu0 0
        %5586 = vmatprep.subr.bf16.mxu0 0
        %5587 = vmatpush1.bf16.msra.mxu0 0
        %5588 = vmatprep.subr.bf16.mxu0 0
        %5589 = vmatpush1.bf16.msra.mxu0 0
        %5590 = vmatprep.subr.bf16.mxu0 0
        %5591 = vmatpush1.bf16.msra.mxu0 0
        %5592 = vmatprep.subr.bf16.mxu0 0
        %5593 = vmatpush1.bf16.msra.mxu0 0
        %5594 = vmatprep.subr.bf16.mxu0 0
        %5595 = vmatpush1.bf16.msra.mxu0 %v5578
        %5596 = vmatprep.subr.bf16.mxu0 0
        %5597 = vmatpush2.bf16.msra.mxu0 0
        %5598 = vmatprep.subr.bf16.mxu0 0
        %5599 = vmatpush2.bf16.msra.mxu0 0
        %5600 = vmatprep.subr.bf16.mxu0 0
        %5601 = vmatpush2.bf16.msra.mxu0 0
        %5602 = vmatprep.subr.bf16.mxu0 0
        %5603 = vmatpush2.bf16.msra.mxu0 0
        %5604 = vmatprep.subr.bf16.mxu0 0
        %5605 = vmatpush2.bf16.msra.mxu0 0
        %5606 = vmatprep.subr.bf16.mxu0 0
        %5607 = vmatpush2.bf16.msra.mxu0 0
        %5608 = vmatprep.subr.bf16.mxu0 0
        %5609 = vmatpush2.bf16.msra.mxu0 0
        %5610 = vmatprep.subr.bf16.mxu0 0
        %5611 = vmatpush2.bf16.msra.mxu0 0
        %5612 = vmatprep.mubr.bf16.mxu0 0
        %5613 = vmatmul.mubr.bf16.gmra.mxu0 %v5515
        %v5614 = vpop.f32.mrf.mxu0
        %v5615 = vadd.f32 %v5408, %v5614
        %v5616 = vpop.f32.mrf.mxu0
        %v5617 = vpop.f32.mrf.mxu0
        %v5618 = vadd.f32 %v5408, %v5617
        %v5619 = vpop.f32.mrf.mxu0
        %5620 = vmatprep.mubr.bf16.mxu0 0
        %5621 = vmatmul.mubr.bf16.gmra.mxu0 %v5518
        %v5622 = vpop.f32.mrf.mxu0
        %v5623 = vadd.f32 %v5408, %v5622
        %v5624 = vpop.f32.mrf.mxu0
        %v5625 = vpop.f32.mrf.mxu0
        %v5626 = vadd.f32 %v5408, %v5625
        %v5627 = vpop.f32.mrf.mxu0
        %5628 = vmatprep.mubr.bf16.mxu0 0
        %5629 = vmatmul.mubr.bf16.gmra.mxu0 %v5521
        %v5630 = vpop.f32.mrf.mxu0
        %v5631 = vadd.f32 %v5408, %v5630
        %v5632 = vpop.f32.mrf.mxu0
        %v5633 = vpop.f32.mrf.mxu0
        %v5634 = vadd.f32 %v5408, %v5633
        %v5635 = vpop.f32.mrf.mxu0
        %5636 = vmatprep.mubr.bf16.mxu0 0
        %5637 = vmatmul.mubr.bf16.gmra.mxu0 %v5524
        %v5638 = vpop.f32.mrf.mxu0
        %v5639 = vadd.f32 %v5408, %v5638
        %v5640 = vpop.f32.mrf.mxu0
        %v5641 = vpop.f32.mrf.mxu0
        %v5642 = vadd.f32 %v5408, %v5641
        %v5643 = vpop.f32.mrf.mxu0
        %5644 = vmatprep.mubr.bf16.mxu0 0
        %5645 = vmatmul.mubr.bf16.gmra.mxu0 %v5527
        %v5646 = vpop.f32.mrf.mxu0
        %v5647 = vadd.f32 %v5408, %v5646
        %v5648 = vpop.f32.mrf.mxu0
        %v5649 = vpop.f32.mrf.mxu0
        %v5650 = vadd.f32 %v5408, %v5649
        %v5651 = vpop.f32.mrf.mxu0
        %5652 = vmatprep.mubr.bf16.mxu0 0
        %5653 = vmatmul.mubr.bf16.gmra.mxu0 %v5530
        %v5654 = vpop.f32.mrf.mxu0
        %v5655 = vadd.f32 %v5408, %v5654
        %v5656 = vpop.f32.mrf.mxu0
        %v5657 = vpop.f32.mrf.mxu0
        %v5658 = vadd.f32 %v5408, %v5657
        %v5659 = vpop.f32.mrf.mxu0
        %5660 = vmatprep.mubr.bf16.mxu0 0
        %5661 = vmatmul.mubr.bf16.gmra.mxu0 %v5533
        %v5662 = vpop.f32.mrf.mxu0
        %v5663 = vadd.f32 %v5408, %v5662
        %v5664 = vpop.f32.mrf.mxu0
        %v5665 = vpop.f32.mrf.mxu0
        %v5666 = vadd.f32 %v5408, %v5665
        %v5667 = vpop.f32.mrf.mxu0
        %5668 = vmatprep.mubr.bf16.mxu0 0
        %5669 = vmatmul.mubr.bf16.gmra.mxu0 %v5536
        %v5670 = vpop.f32.mrf.mxu0
        %v5671 = vadd.f32 %v5408, %v5670
        %v5672 = vpop.f32.mrf.mxu0
        %v5673 = vpop.f32.mrf.mxu0
        %v5674 = vadd.f32 %v5408, %v5673
        %v5675 = vpop.f32.mrf.mxu0
        %5676 = vmatprep.mubr.bf16.mxu0 0
        %5677 = vmatmul.mubr.bf16.gmra.mxu0 %v5539
        %v5678 = vpop.f32.mrf.mxu0
        %v5679 = vadd.f32 %v5408, %v5678
        %v5680 = vpop.f32.mrf.mxu0
        %v5681 = vpop.f32.mrf.mxu0
        %v5682 = vadd.f32 %v5408, %v5681
        %v5683 = vpop.f32.mrf.mxu0
        %5684 = vmatprep.mubr.bf16.mxu0 0
        %5685 = vmatmul.mubr.bf16.gmra.mxu0 %v5542
        %v5686 = vpop.f32.mrf.mxu0
        %v5687 = vadd.f32 %v5408, %v5686
        %v5688 = vpop.f32.mrf.mxu0
        %v5689 = vpop.f32.mrf.mxu0
        %v5690 = vadd.f32 %v5408, %v5689
        %v5691 = vpop.f32.mrf.mxu0
        %5692 = vmatprep.mubr.bf16.mxu0 0
        %5693 = vmatmul.mubr.bf16.gmra.mxu0 %v5545
        %v5694 = vpop.f32.mrf.mxu0
        %v5695 = vadd.f32 %v5408, %v5694
        %v5696 = vpop.f32.mrf.mxu0
        %v5697 = vpop.f32.mrf.mxu0
        %v5698 = vadd.f32 %v5408, %v5697
        %v5699 = vpop.f32.mrf.mxu0
        %5700 = vmatprep.mubr.bf16.mxu0 0
        %5701 = vmatmul.mubr.bf16.gmra.mxu0 %v5548
        %v5702 = vpop.f32.mrf.mxu0
        %v5703 = vadd.f32 %v5408, %v5702
        %v5704 = vpop.f32.mrf.mxu0
        %v5705 = vpop.f32.mrf.mxu0
        %v5706 = vadd.f32 %v5408, %v5705
        %v5707 = vpop.f32.mrf.mxu0
        %5708 = vmatprep.mubr.bf16.mxu0 0
        %5709 = vmatmul.mubr.bf16.gmra.mxu0 %v5551
        %v5710 = vpop.f32.mrf.mxu0
        %v5711 = vadd.f32 %v5408, %v5710
        %v5712 = vpop.f32.mrf.mxu0
        %v5713 = vpop.f32.mrf.mxu0
        %v5714 = vadd.f32 %v5408, %v5713
        %v5715 = vpop.f32.mrf.mxu0
        %5716 = vmatprep.mubr.bf16.mxu0 0
        %5717 = vmatmul.mubr.bf16.gmra.mxu0 %v5554
        %v5718 = vpop.f32.mrf.mxu0
        %v5719 = vadd.f32 %v5408, %v5718
        %v5720 = vpop.f32.mrf.mxu0
        %v5721 = vpop.f32.mrf.mxu0
        %v5722 = vadd.f32 %v5408, %v5721
        %v5723 = vpop.f32.mrf.mxu0
        %5724 = vmatprep.mubr.bf16.mxu0 0
        %5725 = vmatmul.mubr.bf16.gmra.mxu0 %v5557
        %v5726 = vpop.f32.mrf.mxu0
        %v5727 = vadd.f32 %v5408, %v5726
        %v5728 = vpop.f32.mrf.mxu0
        %v5729 = vpop.f32.mrf.mxu0
        %v5730 = vadd.f32 %v5408, %v5729
        %v5731 = vpop.f32.mrf.mxu0
        %5732 = vmatprep.mubr.bf16.mxu0 0
        %5733 = vmatmul.mubr.bf16.gmra.mxu0 %v5560
        %v5734 = vpop.f32.mrf.mxu0
        %v5735 = vadd.f32 %v5408, %v5734
        %v5736 = vpop.f32.mrf.mxu0
        %v5737 = vpop.f32.mrf.mxu0
        %v5738 = vadd.f32 %v5408, %v5737
        %v5739 = vpop.f32.mrf.mxu0
        %5740 = vmatprep.mubr.bf16.mxu0 0
        %5741 = vmatmul.mubr.bf16.gmra.mxu0 %v5563
        %v5742 = vpop.f32.mrf.mxu0
        %v5743 = vadd.f32 %v5408, %v5742
        %v5744 = vpop.f32.mrf.mxu0
        %v5745 = vpop.f32.mrf.mxu0
        %v5746 = vadd.f32 %v5408, %v5745
        %v5747 = vpop.f32.mrf.mxu0
        %5748 = vmatprep.mubr.bf16.mxu0 0
        %5749 = vmatmul.mubr.bf16.gmra.mxu0 %v5566
        %v5750 = vpop.f32.mrf.mxu0
        %v5751 = vadd.f32 %v5408, %v5750
        %v5752 = vpop.f32.mrf.mxu0
        %v5753 = vpop.f32.mrf.mxu0
        %v5754 = vadd.f32 %v5408, %v5753
        %v5755 = vpop.f32.mrf.mxu0
        %5756 = vmatprep.mubr.bf16.mxu0 0
        %5757 = vmatmul.mubr.bf16.gmra.mxu0 %v5569
        %v5758 = vpop.f32.mrf.mxu0
        %v5759 = vadd.f32 %v5408, %v5758
        %v5760 = vpop.f32.mrf.mxu0
        %v5761 = vpop.f32.mrf.mxu0
        %v5762 = vadd.f32 %v5408, %v5761
        %v5763 = vpop.f32.mrf.mxu0
        %5764 = vmatprep.mubr.bf16.mxu0 0
        %5765 = vmatmul.mubr.bf16.gmra.mxu0 %v5572
        %v5766 = vpop.f32.mrf.mxu0
        %v5767 = vadd.f32 %v5408, %v5766
        %v5768 = vpop.f32.mrf.mxu0
        %v5769 = vpop.f32.mrf.mxu0
        %v5770 = vadd.f32 %v5408, %v5769
        %v5771 = vpop.f32.mrf.mxu0
        %5772 = vmatprep.mubr.bf16.mxu0 0
        %5773 = vmatmul.mubr.bf16.gmra.mxu0 %v5575
        %v5774 = vpop.f32.mrf.mxu0
        %v5775 = vadd.f32 %v5408, %v5774
        %v5776 = vpop.f32.mrf.mxu0
        %v5777 = vpop.f32.mrf.mxu0
        %v5778 = vadd.f32 %v5408, %v5777
        %v5779 = vpop.f32.mrf.mxu0
        %5780 = vdwg.mxu0
        %v5781 = vpack.c.bf16 %v5618, %v5615
        %v5782 = vpack.c.bf16 %v5626, %v5623
        %v5783 = vpack.c.bf16 %v5634, %v5631
        %v5784 = vpack.c.bf16 %v5642, %v5639
        %v5785 = vpack.c.bf16 %v5650, %v5647
        %v5786 = vpack.c.bf16 %v5658, %v5655
        %v5787 = vpack.c.bf16 %v5666, %v5663
        %v5788 = vpack.c.bf16 %v5674, %v5671
        %v5789 = vpack.c.bf16 %v5682, %v5679
        %v5790 = vpack.c.bf16 %v5690, %v5687
        %v5791 = vpack.c.bf16 %v5698, %v5695
        %v5792 = vpack.c.bf16 %v5706, %v5703
        %v5793 = vpack.c.bf16 %v5714, %v5711
        %v5794 = vpack.c.bf16 %v5722, %v5719
        %v5795 = vpack.c.bf16 %v5730, %v5727
        %v5796 = vpack.c.bf16 %v5738, %v5735
        %v5797 = vpack.c.bf16 %v5746, %v5743
        %v5798 = vpack.c.bf16 %v5754, %v5751
        %v5799 = vpack.c.bf16 %v5762, %v5759
        %v5800 = vpack.c.bf16 %v5770, %v5767
        %v5801 = vpack.c.bf16 %v5778, %v5775
        %v5802 = vld [vmem:[#allocation2 + $0x4] sm:$0xc]
        %v5803 = vld [vmem:[#allocation2 + $0x8] sm:$0xf]
        %v5804 = vld [vmem:[#allocation2 + $0xc] sm:$0xf]
        %v5805 = vld [vmem:[#allocation2 + $0x10] sm:$0xf]
        %v5806 = vld [vmem:[#allocation2 + $0x14] sm:$0xf]
        %v5807 = vld [vmem:[#allocation2 + $0x18] sm:$0xf]
        %v5808 = vld [vmem:[#allocation2 + $0x1c] sm:$0xf]
        %v5809 = vld [vmem:[#allocation2 + $0x20] sm:$0xf]
        %v5810 = vld [vmem:[#allocation2 + $0x24] sm:$0xf]
        %v5811 = vld [vmem:[#allocation2 + $0x28] sm:$0xf]
        %v5812 = vld [vmem:[#allocation2 + $0x2c] sm:$0xf]
        %v5813 = vld [vmem:[#allocation2 + $0x30] sm:$0xf]
        %v5814 = vld [vmem:[#allocation2 + $0x34] sm:$0xf]
        %v5815 = vld [vmem:[#allocation2 + $0x38] sm:$0xf]
        %v5816 = vld [vmem:[#allocation2 + $0x3c] sm:$0xf]
        %v5817 = vld [vmem:[#allocation2 + $0x40] sm:$0xf]
        %v5818 = vld [vmem:[#allocation2 + $0x44] sm:$0xf]
        %v5819 = vld [vmem:[#allocation2 + $0x48] sm:$0xf]
        %v5820 = vld [vmem:[#allocation2 + $0x4c] sm:$0xf]
        %v5821 = vld [vmem:[#allocation2 + $0x50] sm:$0xf]
        %v5822 = vld [vmem:[#allocation2 + $0x54] sm:$0xf]
        %v5823 = vld [vmem:[#allocation2 + $0x58] sm:$0xf]
        %v5824 = vld [vmem:[#allocation2 + $0x5c] sm:$0xf]
        %v5825 = vld [vmem:[#allocation2 + $0x60] sm:$0xf]
        %v5826 = vld [vmem:[#allocation2 + $0x64] sm:$0xf]
        %v5827 = vld [vmem:[#allocation2 + $0x68] sm:$0xf]
        %v5828 = vld [vmem:[#allocation2 + $0x6c] sm:$0xf]
        %v5829 = vld [vmem:[#allocation2 + $0x70] sm:$0xf]
        %v5830 = vld [vmem:[#allocation2 + $0x74] sm:$0xf]
        %v5831 = vld [vmem:[#allocation2 + $0x78] sm:$0xf]
        %v5832 = vld [vmem:[#allocation2 + $0x7c] sm:$0xf]
        %v5833 = vld [vmem:[#allocation2 + $0x80] sm:$0xf]
        %v5834 = vld [vmem:[#allocation2 + $0x84] sm:$0xf]
        %v5835 = vld [vmem:[#allocation2 + $0x88] sm:$0xf]
        %v5836 = vld [vmem:[#allocation2 + $0x8c] sm:$0xf]
        %v5837 = vld [vmem:[#allocation2 + $0x90] sm:$0xf]
        %v5838 = vld [vmem:[#allocation2 + $0x94] sm:$0xf]
        %v5839 = vld [vmem:[#allocation2 + $0x98] sm:$0xf]
        %v5840 = vld [vmem:[#allocation2 + $0x9c] sm:$0xf]
        %v5841 = vld [vmem:[#allocation2 + $0xa0] sm:$0xf]
        %v5842 = vld [vmem:[#allocation2 + $0xa4] sm:$0xf]
        %v5843 = vld [vmem:[#allocation2 + $0xa8] sm:$0xf]
        %v5844 = vld [vmem:[#allocation2 + $0xac] sm:$0x7]
        %v5845 = vld [vmem:[%s4] sm:$0xf]
        %v5846 = vld [vmem:[%s4 + $0x4] sm:$0xf]
        %v5847 = vld [vmem:[%s4 + $0x8] sm:$0xf]
        %v5848 = vld [vmem:[%s4 + $0xc] sm:$0xf]
        %v5849 = vld [vmem:[%s4 + $0x10] sm:$0xf]
        %v5850 = vld [vmem:[%s4 + $0x14] sm:$0xf]
        %v5851 = vld [vmem:[%s4 + $0x18] sm:$0xf]
        %v5852 = vld [vmem:[%s4 + $0x1c] sm:$0xf]
        %v5853 = vld [vmem:[%s4 + $0x20] sm:$0xf]
        %v5854 = vld [vmem:[%s4 + $0x24] sm:$0xf]
        %v5855 = vld [vmem:[%s4 + $0x28] sm:$0xf]
        %v5856 = vld [vmem:[%s4 + $0x2c] sm:$0xf]
        %v5857 = vld [vmem:[%s4 + $0x30] sm:$0xf]
        %v5858 = vld [vmem:[%s4 + $0x34] sm:$0xf]
        %v5859 = vld [vmem:[%s4 + $0x38] sm:$0xf]
        %v5860 = vld [vmem:[%s4 + $0x3c] sm:$0xf]
        %v5861 = vld [vmem:[#allocation2 + $0x4] sm:$0x8]
        %s5862 = scalar_lea.vmem %s4, 64
        %v5863 = vld [vmem:[%s5862] sm:$0xf]
        %v5864 = vld [vmem:[%s5862 + $0x4] sm:$0xf]
        %v5865 = vld [vmem:[%s5862 + $0x8] sm:$0xf]
        %v5866 = vld [vmem:[%s5862 + $0xc] sm:$0xf]
        %v5867 = vld [vmem:[%s5862 + $0x10] sm:$0xf]
        %v5868 = vld [vmem:[%s5862 + $0x14] sm:$0xf]
        %v5869 = vld [vmem:[%s5862 + $0x18] sm:$0xf]
        %v5870 = vld [vmem:[%s5862 + $0x1c] sm:$0xf]
        %v5871 = vld [vmem:[%s5862 + $0x20] sm:$0xf]
        %v5872 = vld [vmem:[%s5862 + $0x24] sm:$0xf]
        %v5873 = vld [vmem:[%s5862 + $0x28] sm:$0xf]
        %v5874 = vld [vmem:[%s5862 + $0x2c] sm:$0xf]
        %v5875 = vld [vmem:[%s5862 + $0x30] sm:$0xf]
        %v5876 = vld [vmem:[%s5862 + $0x34] sm:$0xf]
        %v5877 = vld [vmem:[%s5862 + $0x38] sm:$0xf]
        %v5878 = vld [vmem:[%s5862 + $0x3c] sm:$0xf]
        %v5922 = vunpack.c.l.b16 %v5861
        %v5923 = vunpack.c.l.b16 %v5803
        %v5924 = vunpack.c.l.b16 %v5804
        %v5925 = vunpack.c.l.b16 %v5805
        %v5926 = vunpack.c.l.b16 %v5806
        %v5927 = vunpack.c.l.b16 %v5807
        %v5928 = vunpack.c.l.b16 %v5808
        %v5929 = vunpack.c.l.b16 %v5809
        %v5930 = vunpack.c.l.b16 %v5810
        %v5931 = vunpack.c.l.b16 %v5811
        %v5932 = vunpack.c.l.b16 %v5812
        %v5933 = vunpack.c.l.b16 %v5813
        %v5934 = vunpack.c.l.b16 %v5814
        %v5935 = vunpack.c.l.b16 %v5815
        %v5936 = vunpack.c.l.b16 %v5816
        %v5937 = vunpack.c.l.b16 %v5817
        %v5938 = vunpack.c.l.b16 %v5818
        %v5939 = vunpack.c.l.b16 %v5819
        %v5940 = vunpack.c.l.b16 %v5820
        %v5941 = vunpack.c.l.b16 %v5821
        %v5942 = vunpack.c.l.b16 %v5822
        %v5943 = vunpack.c.l.b16 %v5823
        %v5944 = vunpack.c.l.b16 %v5824
        %v5945 = vunpack.c.l.b16 %v5825
        %v5946 = vunpack.c.l.b16 %v5826
        %v5947 = vunpack.c.l.b16 %v5827
        %v5948 = vunpack.c.l.b16 %v5828
        %v5949 = vunpack.c.l.b16 %v5829
        %v5950 = vunpack.c.l.b16 %v5830
        %v5951 = vunpack.c.l.b16 %v5831
        %v5952 = vunpack.c.l.b16 %v5832
        %v5953 = vunpack.c.l.b16 %v5833
        %v5954 = vunpack.c.l.b16 %v5834
        %v5955 = vunpack.c.l.b16 %v5835
        %v5956 = vunpack.c.l.b16 %v5836
        %v5957 = vunpack.c.l.b16 %v5837
        %v5958 = vunpack.c.l.b16 %v5838
        %v5959 = vunpack.c.l.b16 %v5839
        %v5960 = vunpack.c.l.b16 %v5840
        %v5961 = vunpack.c.l.b16 %v5841
        %v5962 = vunpack.c.l.b16 %v5842
        %v5963 = vunpack.c.l.b16 %v5843
        %v5964 = vunpack.c.l.b16 %v5844
        %v5965 = vpack.c.b16 %v5923, %v5922
        %v5966 = vpack.c.b16 %v5925, %v5924
        %v5967 = vpack.c.b16 %v5927, %v5926
        %v5968 = vpack.c.b16 %v5929, %v5928
        %v5969 = vpack.c.b16 %v5931, %v5930
        %v5970 = vpack.c.b16 %v5933, %v5932
        %v5971 = vpack.c.b16 %v5935, %v5934
        %v5972 = vpack.c.b16 %v5937, %v5936
        %v5973 = vpack.c.b16 %v5939, %v5938
        %v5974 = vpack.c.b16 %v5941, %v5940
        %v5975 = vpack.c.b16 %v5943, %v5942
        %v5976 = vpack.c.b16 %v5945, %v5944
        %v5977 = vpack.c.b16 %v5947, %v5946
        %v5978 = vpack.c.b16 %v5949, %v5948
        %v5979 = vpack.c.b16 %v5951, %v5950
        %v5980 = vpack.c.b16 %v5953, %v5952
        %v5981 = vpack.c.b16 %v5955, %v5954
        %v5982 = vpack.c.b16 %v5957, %v5956
        %v5983 = vpack.c.b16 %v5959, %v5958
        %v5984 = vpack.c.b16 %v5961, %v5960
        %v5985 = vpack.c.b16 %v5963, %v5962
        %v5986 = vpack.c.b16 %v5964, %v5964
        %v5987 = vrot.slane %v5965, 3
        %v5988 = vrot.slane %v5966, 3
        %v5989 = vsel %vm701, %v5987, %v5988
        %v5990 = vrot.slane %v5967, 3
        %v5991 = vsel %vm701, %v5988, %v5990
        %v5992 = vrot.slane %v5968, 3
        %v5993 = vsel %vm701, %v5990, %v5992
        %v5994 = vrot.slane %v5969, 3
        %v5995 = vsel %vm701, %v5992, %v5994
        %v5996 = vrot.slane %v5970, 3
        %v5997 = vsel %vm701, %v5994, %v5996
        %v5998 = vrot.slane %v5971, 3
        %v5999 = vsel %vm701, %v5996, %v5998
        %v6000 = vrot.slane %v5972, 3
        %v6001 = vsel %vm701, %v5998, %v6000
        %v6002 = vrot.slane %v5973, 3
        %v6003 = vsel %vm701, %v6000, %v6002
        %v6004 = vrot.slane %v5974, 3
        %v6005 = vsel %vm701, %v6002, %v6004
        %v6006 = vrot.slane %v5975, 3
        %v6007 = vsel %vm701, %v6004, %v6006
        %v6008 = vrot.slane %v5976, 3
        %v6009 = vsel %vm701, %v6006, %v6008
        %v6010 = vrot.slane %v5977, 3
        %v6011 = vsel %vm701, %v6008, %v6010
        %v6012 = vrot.slane %v5978, 3
        %v6013 = vsel %vm701, %v6010, %v6012
        %v6014 = vrot.slane %v5979, 3
        %v6015 = vsel %vm701, %v6012, %v6014
        %v6016 = vrot.slane %v5980, 3
        %v6017 = vsel %vm701, %v6014, %v6016
        %v6018 = vrot.slane %v5981, 3
        %v6019 = vsel %vm701, %v6016, %v6018
        %v6020 = vrot.slane %v5982, 3
        %v6021 = vsel %vm701, %v6018, %v6020
        %v6022 = vrot.slane %v5983, 3
        %v6023 = vsel %vm701, %v6020, %v6022
        %v6024 = vrot.slane %v5984, 3
        %v6025 = vsel %vm701, %v6022, %v6024
        %v6026 = vrot.slane %v5985, 3
        %v6027 = vsel %vm701, %v6024, %v6026
        %v6028 = vrot.slane %v5986, 3
        %v6029 = vsel %vm701, %v6026, %v6028
        %v6067 = vunpack.c.l.b16 %v5863
        %v6068 = vunpack.c.l.b16 %v5864
        %v6069 = vunpack.c.l.b16 %v5865
        %v6070 = vunpack.c.l.b16 %v5866
        %v6071 = vunpack.c.l.b16 %v5867
        %v6072 = vunpack.c.l.b16 %v5868
        %v6073 = vunpack.c.l.b16 %v5869
        %v6074 = vunpack.c.l.b16 %v5870
        %v6075 = vunpack.c.l.b16 %v5871
        %v6076 = vunpack.c.l.b16 %v5872
        %v6077 = vunpack.c.l.b16 %v5873
        %v6078 = vunpack.c.l.b16 %v5874
        %v6079 = vunpack.c.l.b16 %v5875
        %v6080 = vunpack.c.l.b16 %v5876
        %v6081 = vunpack.c.l.b16 %v5877
        %v6082 = vunpack.c.l.b16 %v5878
        %v6083 = vpack.c.b16 %v6068, %v6067
        %v6084 = vpack.c.b16 %v6070, %v6069
        %v6085 = vpack.c.b16 %v6072, %v6071
        %v6086 = vpack.c.b16 %v6074, %v6073
        %v6087 = vpack.c.b16 %v6076, %v6075
        %v6088 = vpack.c.b16 %v6078, %v6077
        %v6089 = vpack.c.b16 %v6080, %v6079
        %v6090 = vpack.c.b16 %v6082, %v6081
        %6099 = vmatprep.subr.bf16.mxu0 0
        %6100 = vmatpush1.bf16.msra.mxu0 %v6090
        %6101 = vmatprep.subr.bf16.mxu0 0
        %6102 = vmatpush1.bf16.msra.mxu0 %v6089
        %6103 = vmatprep.subr.bf16.mxu0 0
        %6104 = vmatpush1.bf16.msra.mxu0 %v6088
        %6105 = vmatprep.subr.bf16.mxu0 0
        %6106 = vmatpush1.bf16.msra.mxu0 %v6087
        %6107 = vmatprep.subr.bf16.mxu0 0
        %6108 = vmatpush1.bf16.msra.mxu0 %v6086
        %6109 = vmatprep.subr.bf16.mxu0 0
        %6110 = vmatpush1.bf16.msra.mxu0 %v6085
        %6111 = vmatprep.subr.bf16.mxu0 0
        %6112 = vmatpush1.bf16.msra.mxu0 %v6084
        %6113 = vmatprep.subr.bf16.mxu0 0
        %6114 = vmatpush1.bf16.msra.mxu0 %v6083
        %6115 = vmatprep.subr.bf16.mxu0 0
        %6116 = vmatpush2.bf16.msra.mxu0 0
        %6117 = vmatprep.subr.bf16.mxu0 0
        %6118 = vmatpush2.bf16.msra.mxu0 0
        %6119 = vmatprep.subr.bf16.mxu0 0
        %6120 = vmatpush2.bf16.msra.mxu0 0
        %6121 = vmatprep.subr.bf16.mxu0 0
        %6122 = vmatpush2.bf16.msra.mxu0 0
        %6123 = vmatprep.subr.bf16.mxu0 0
        %6124 = vmatpush2.bf16.msra.mxu0 0
        %6125 = vmatprep.subr.bf16.mxu0 0
        %6126 = vmatpush2.bf16.msra.mxu0 0
        %6127 = vmatprep.subr.bf16.mxu0 0
        %6128 = vmatpush2.bf16.msra.mxu0 0
        %6129 = vmatprep.subr.bf16.mxu0 0
        %6130 = vmatpush2.bf16.msra.mxu0 0
        %6131 = vmatprep.mubr.bf16.mxu0 0
        %6132 = vmatmul.mubr.bf16.gmra.mxu0 %v5989
        %v6133 = vpop.f32.mrf.mxu0
        %v6134 = vadd.f32 0.0, %v6133
        %v6135 = vpop.f32.mrf.mxu0
        %v6136 = vpop.f32.mrf.mxu0
        %v6137 = vadd.f32 0.0, %v6136
        %v6138 = vpop.f32.mrf.mxu0
        %6139 = vmatprep.mubr.bf16.mxu0 0
        %6140 = vmatmul.mubr.bf16.gmra.mxu0 %v5991
        %v6141 = vpop.f32.mrf.mxu0
        %v6142 = vadd.f32 0.0, %v6141
        %v6143 = vpop.f32.mrf.mxu0
        %v6144 = vpop.f32.mrf.mxu0
        %v6145 = vadd.f32 0.0, %v6144
        %v6146 = vpop.f32.mrf.mxu0
        %6147 = vmatprep.mubr.bf16.mxu0 0
        %6148 = vmatmul.mubr.bf16.gmra.mxu0 %v5993
        %v6149 = vpop.f32.mrf.mxu0
        %v6150 = vadd.f32 0.0, %v6149
        %v6151 = vpop.f32.mrf.mxu0
        %v6152 = vpop.f32.mrf.mxu0
        %v6153 = vadd.f32 0.0, %v6152
        %v6154 = vpop.f32.mrf.mxu0
        %6155 = vmatprep.mubr.bf16.mxu0 0
        %6156 = vmatmul.mubr.bf16.gmra.mxu0 %v5995
        %v6157 = vpop.f32.mrf.mxu0
        %v6158 = vadd.f32 0.0, %v6157
        %v6159 = vpop.f32.mrf.mxu0
        %v6160 = vpop.f32.mrf.mxu0
        %v6161 = vadd.f32 0.0, %v6160
        %v6162 = vpop.f32.mrf.mxu0
        %6163 = vmatprep.mubr.bf16.mxu0 0
        %6164 = vmatmul.mubr.bf16.gmra.mxu0 %v5997
        %v6165 = vpop.f32.mrf.mxu0
        %v6166 = vadd.f32 0.0, %v6165
        %v6167 = vpop.f32.mrf.mxu0
        %v6168 = vpop.f32.mrf.mxu0
        %v6169 = vadd.f32 0.0, %v6168
        %v6170 = vpop.f32.mrf.mxu0
        %6171 = vmatprep.mubr.bf16.mxu0 0
        %6172 = vmatmul.mubr.bf16.gmra.mxu0 %v5999
        %v6173 = vpop.f32.mrf.mxu0
        %v6174 = vadd.f32 0.0, %v6173
        %v6175 = vpop.f32.mrf.mxu0
        %v6176 = vpop.f32.mrf.mxu0
        %v6177 = vadd.f32 0.0, %v6176
        %v6178 = vpop.f32.mrf.mxu0
        %6179 = vmatprep.mubr.bf16.mxu0 0
        %6180 = vmatmul.mubr.bf16.gmra.mxu0 %v6001
        %v6181 = vpop.f32.mrf.mxu0
        %v6182 = vadd.f32 0.0, %v6181
        %v6183 = vpop.f32.mrf.mxu0
        %v6184 = vpop.f32.mrf.mxu0
        %v6185 = vadd.f32 0.0, %v6184
        %v6186 = vpop.f32.mrf.mxu0
        %6187 = vmatprep.mubr.bf16.mxu0 0
        %6188 = vmatmul.mubr.bf16.gmra.mxu0 %v6003
        %v6189 = vpop.f32.mrf.mxu0
        %v6190 = vadd.f32 0.0, %v6189
        %v6191 = vpop.f32.mrf.mxu0
        %v6192 = vpop.f32.mrf.mxu0
        %v6193 = vadd.f32 0.0, %v6192
        %v6194 = vpop.f32.mrf.mxu0
        %6195 = vmatprep.mubr.bf16.mxu0 0
        %6196 = vmatmul.mubr.bf16.gmra.mxu0 %v6005
        %v6197 = vpop.f32.mrf.mxu0
        %v6198 = vadd.f32 0.0, %v6197
        %v6199 = vpop.f32.mrf.mxu0
        %v6200 = vpop.f32.mrf.mxu0
        %v6201 = vadd.f32 0.0, %v6200
        %v6202 = vpop.f32.mrf.mxu0
        %6203 = vmatprep.mubr.bf16.mxu0 0
        %6204 = vmatmul.mubr.bf16.gmra.mxu0 %v6007
        %v6205 = vpop.f32.mrf.mxu0
        %v6206 = vadd.f32 0.0, %v6205
        %v6207 = vpop.f32.mrf.mxu0
        %v6208 = vpop.f32.mrf.mxu0
        %v6209 = vadd.f32 0.0, %v6208
        %v6210 = vpop.f32.mrf.mxu0
        %6211 = vmatprep.mubr.bf16.mxu0 0
        %6212 = vmatmul.mubr.bf16.gmra.mxu0 %v6009
        %v6213 = vpop.f32.mrf.mxu0
        %v6214 = vadd.f32 0.0, %v6213
        %v6215 = vpop.f32.mrf.mxu0
        %v6216 = vpop.f32.mrf.mxu0
        %v6217 = vadd.f32 0.0, %v6216
        %v6218 = vpop.f32.mrf.mxu0
        %6219 = vmatprep.mubr.bf16.mxu0 0
        %6220 = vmatmul.mubr.bf16.gmra.mxu0 %v6011
        %v6221 = vpop.f32.mrf.mxu0
        %v6222 = vadd.f32 0.0, %v6221
        %v6223 = vpop.f32.mrf.mxu0
        %v6224 = vpop.f32.mrf.mxu0
        %v6225 = vadd.f32 0.0, %v6224
        %v6226 = vpop.f32.mrf.mxu0
        %6227 = vmatprep.mubr.bf16.mxu0 0
        %6228 = vmatmul.mubr.bf16.gmra.mxu0 %v6013
        %v6229 = vpop.f32.mrf.mxu0
        %v6230 = vadd.f32 0.0, %v6229
        %v6231 = vpop.f32.mrf.mxu0
        %v6232 = vpop.f32.mrf.mxu0
        %v6233 = vadd.f32 0.0, %v6232
        %v6234 = vpop.f32.mrf.mxu0
        %6235 = vmatprep.mubr.bf16.mxu0 0
        %6236 = vmatmul.mubr.bf16.gmra.mxu0 %v6015
        %v6237 = vpop.f32.mrf.mxu0
        %v6238 = vadd.f32 0.0, %v6237
        %v6239 = vpop.f32.mrf.mxu0
        %v6240 = vpop.f32.mrf.mxu0
        %v6241 = vadd.f32 0.0, %v6240
        %v6242 = vpop.f32.mrf.mxu0
        %6243 = vmatprep.mubr.bf16.mxu0 0
        %6244 = vmatmul.mubr.bf16.gmra.mxu0 %v6017
        %v6245 = vpop.f32.mrf.mxu0
        %v6246 = vadd.f32 0.0, %v6245
        %v6247 = vpop.f32.mrf.mxu0
        %v6248 = vpop.f32.mrf.mxu0
        %v6249 = vadd.f32 0.0, %v6248
        %v6250 = vpop.f32.mrf.mxu0
        %6251 = vmatprep.mubr.bf16.mxu0 0
        %6252 = vmatmul.mubr.bf16.gmra.mxu0 %v6019
        %v6253 = vpop.f32.mrf.mxu0
        %v6254 = vadd.f32 0.0, %v6253
        %v6255 = vpop.f32.mrf.mxu0
        %v6256 = vpop.f32.mrf.mxu0
        %v6257 = vadd.f32 0.0, %v6256
        %v6258 = vpop.f32.mrf.mxu0
        %6259 = vmatprep.mubr.bf16.mxu0 0
        %6260 = vmatmul.mubr.bf16.gmra.mxu0 %v6021
        %v6261 = vpop.f32.mrf.mxu0
        %v6262 = vadd.f32 0.0, %v6261
        %v6263 = vpop.f32.mrf.mxu0
        %v6264 = vpop.f32.mrf.mxu0
        %v6265 = vadd.f32 0.0, %v6264
        %v6266 = vpop.f32.mrf.mxu0
        %6267 = vmatprep.mubr.bf16.mxu0 0
        %6268 = vmatmul.mubr.bf16.gmra.mxu0 %v6023
        %v6269 = vpop.f32.mrf.mxu0
        %v6270 = vadd.f32 0.0, %v6269
        %v6271 = vpop.f32.mrf.mxu0
        %v6272 = vpop.f32.mrf.mxu0
        %v6273 = vadd.f32 0.0, %v6272
        %v6274 = vpop.f32.mrf.mxu0
        %6275 = vmatprep.mubr.bf16.mxu0 0
        %6276 = vmatmul.mubr.bf16.gmra.mxu0 %v6025
        %v6277 = vpop.f32.mrf.mxu0
        %v6278 = vadd.f32 0.0, %v6277
        %v6279 = vpop.f32.mrf.mxu0
        %v6280 = vpop.f32.mrf.mxu0
        %v6281 = vadd.f32 0.0, %v6280
        %v6282 = vpop.f32.mrf.mxu0
        %6283 = vmatprep.mubr.bf16.mxu0 0
        %6284 = vmatmul.mubr.bf16.gmra.mxu0 %v6027
        %v6285 = vpop.f32.mrf.mxu0
        %v6286 = vadd.f32 0.0, %v6285
        %v6287 = vpop.f32.mrf.mxu0
        %v6288 = vpop.f32.mrf.mxu0
        %v6289 = vadd.f32 0.0, %v6288
        %v6290 = vpop.f32.mrf.mxu0
        %6291 = vmatprep.mubr.bf16.mxu0 0
        %6292 = vmatmul.mubr.bf16.gmra.mxu0 %v6029
        %v6293 = vpop.f32.mrf.mxu0
        %v6294 = vadd.f32 0.0, %v6293
        %v6295 = vpop.f32.mrf.mxu0
        %v6296 = vpop.f32.mrf.mxu0
        %v6297 = vadd.f32 0.0, %v6296
        %v6298 = vpop.f32.mrf.mxu0
        %6299 = vdwg.mxu0
        %v6301 = vunpack.c.l.b16 %v5802
        %v6302 = vpack.c.b16 %v5923, %v6301
        %v6304 = vshrl.u32 %v6302, 16
        %v6306 = vrot.slane %v6304, 2
        %v6307 = vshll.u32 %v6302, 16
        %v6309 = vrot.slane %v6307, 3
        %v6310 = vor.u32 %v6306, %v6309
        %v6312 = vshrl.u32 %v5966, 16
        %v6314 = vrot.slane %v6312, 2
        %v6315 = vshll.u32 %v5966, 16
        %v6317 = vrot.slane %v6315, 3
        %v6318 = vor.u32 %v6314, %v6317
        %v6319 = vsel %vm1017, %v6310, %v6318
        %v6321 = vshrl.u32 %v5967, 16
        %v6323 = vrot.slane %v6321, 2
        %v6324 = vshll.u32 %v5967, 16
        %v6326 = vrot.slane %v6324, 3
        %v6327 = vor.u32 %v6323, %v6326
        %v6328 = vsel %vm1017, %v6318, %v6327
        %v6330 = vshrl.u32 %v5968, 16
        %v6332 = vrot.slane %v6330, 2
        %v6333 = vshll.u32 %v5968, 16
        %v6335 = vrot.slane %v6333, 3
        %v6336 = vor.u32 %v6332, %v6335
        %v6337 = vsel %vm1017, %v6327, %v6336
        %v6339 = vshrl.u32 %v5969, 16
        %v6341 = vrot.slane %v6339, 2
        %v6342 = vshll.u32 %v5969, 16
        %v6344 = vrot.slane %v6342, 3
        %v6345 = vor.u32 %v6341, %v6344
        %v6346 = vsel %vm1017, %v6336, %v6345
        %v6348 = vshrl.u32 %v5970, 16
        %v6350 = vrot.slane %v6348, 2
        %v6351 = vshll.u32 %v5970, 16
        %v6353 = vrot.slane %v6351, 3
        %v6354 = vor.u32 %v6350, %v6353
        %v6355 = vsel %vm1017, %v6345, %v6354
        %v6357 = vshrl.u32 %v5971, 16
        %v6359 = vrot.slane %v6357, 2
        %v6360 = vshll.u32 %v5971, 16
        %v6362 = vrot.slane %v6360, 3
        %v6363 = vor.u32 %v6359, %v6362
        %v6364 = vsel %vm1017, %v6354, %v6363
        %v6366 = vshrl.u32 %v5972, 16
        %v6368 = vrot.slane %v6366, 2
        %v6369 = vshll.u32 %v5972, 16
        %v6371 = vrot.slane %v6369, 3
        %v6372 = vor.u32 %v6368, %v6371
        %v6373 = vsel %vm1017, %v6363, %v6372
        %v6375 = vshrl.u32 %v5973, 16
        %v6377 = vrot.slane %v6375, 2
        %v6378 = vshll.u32 %v5973, 16
        %v6380 = vrot.slane %v6378, 3
        %v6381 = vor.u32 %v6377, %v6380
        %v6382 = vsel %vm1017, %v6372, %v6381
        %v6384 = vshrl.u32 %v5974, 16
        %v6386 = vrot.slane %v6384, 2
        %v6387 = vshll.u32 %v5974, 16
        %v6389 = vrot.slane %v6387, 3
        %v6390 = vor.u32 %v6386, %v6389
        %v6391 = vsel %vm1017, %v6381, %v6390
        %v6393 = vshrl.u32 %v5975, 16
        %v6395 = vrot.slane %v6393, 2
        %v6396 = vshll.u32 %v5975, 16
        %v6398 = vrot.slane %v6396, 3
        %v6399 = vor.u32 %v6395, %v6398
        %v6400 = vsel %vm1017, %v6390, %v6399
        %v6402 = vshrl.u32 %v5976, 16
        %v6404 = vrot.slane %v6402, 2
        %v6405 = vshll.u32 %v5976, 16
        %v6407 = vrot.slane %v6405, 3
        %v6408 = vor.u32 %v6404, %v6407
        %v6409 = vsel %vm1017, %v6399, %v6408
        %v6411 = vshrl.u32 %v5977, 16
        %v6413 = vrot.slane %v6411, 2
        %v6414 = vshll.u32 %v5977, 16
        %v6416 = vrot.slane %v6414, 3
        %v6417 = vor.u32 %v6413, %v6416
        %v6418 = vsel %vm1017, %v6408, %v6417
        %v6420 = vshrl.u32 %v5978, 16
        %v6422 = vrot.slane %v6420, 2
        %v6423 = vshll.u32 %v5978, 16
        %v6425 = vrot.slane %v6423, 3
        %v6426 = vor.u32 %v6422, %v6425
        %v6427 = vsel %vm1017, %v6417, %v6426
        %v6429 = vshrl.u32 %v5979, 16
        %v6431 = vrot.slane %v6429, 2
        %v6432 = vshll.u32 %v5979, 16
        %v6434 = vrot.slane %v6432, 3
        %v6435 = vor.u32 %v6431, %v6434
        %v6436 = vsel %vm1017, %v6426, %v6435
        %v6438 = vshrl.u32 %v5980, 16
        %v6440 = vrot.slane %v6438, 2
        %v6441 = vshll.u32 %v5980, 16
        %v6443 = vrot.slane %v6441, 3
        %v6444 = vor.u32 %v6440, %v6443
        %v6445 = vsel %vm1017, %v6435, %v6444
        %v6447 = vshrl.u32 %v5981, 16
        %v6449 = vrot.slane %v6447, 2
        %v6450 = vshll.u32 %v5981, 16
        %v6452 = vrot.slane %v6450, 3
        %v6453 = vor.u32 %v6449, %v6452
        %v6454 = vsel %vm1017, %v6444, %v6453
        %v6456 = vshrl.u32 %v5982, 16
        %v6458 = vrot.slane %v6456, 2
        %v6459 = vshll.u32 %v5982, 16
        %v6461 = vrot.slane %v6459, 3
        %v6462 = vor.u32 %v6458, %v6461
        %v6463 = vsel %vm1017, %v6453, %v6462
        %v6465 = vshrl.u32 %v5983, 16
        %v6467 = vrot.slane %v6465, 2
        %v6468 = vshll.u32 %v5983, 16
        %v6470 = vrot.slane %v6468, 3
        %v6471 = vor.u32 %v6467, %v6470
        %v6472 = vsel %vm1017, %v6462, %v6471
        %v6474 = vshrl.u32 %v5984, 16
        %v6476 = vrot.slane %v6474, 2
        %v6477 = vshll.u32 %v5984, 16
        %v6479 = vrot.slane %v6477, 3
        %v6480 = vor.u32 %v6476, %v6479
        %v6481 = vsel %vm1017, %v6471, %v6480
        %v6483 = vshrl.u32 %v5985, 16
        %v6485 = vrot.slane %v6483, 2
        %v6486 = vshll.u32 %v5985, 16
        %v6488 = vrot.slane %v6486, 3
        %v6489 = vor.u32 %v6485, %v6488
        %v6490 = vsel %vm1017, %v6480, %v6489
        %v6492 = vshrl.u32 %v5986, 16
        %v6494 = vrot.slane %v6492, 2
        %v6495 = vshll.u32 %v5986, 16
        %v6497 = vrot.slane %v6495, 3
        %v6498 = vor.u32 %v6494, %v6497
        %v6499 = vsel %vm1017, %v6489, %v6498
        %v6537 = vunpack.c.l.b16 %v5845
        %v6538 = vunpack.c.l.b16 %v5846
        %v6539 = vunpack.c.l.b16 %v5847
        %v6540 = vunpack.c.l.b16 %v5848
        %v6541 = vunpack.c.l.b16 %v5849
        %v6542 = vunpack.c.l.b16 %v5850
        %v6543 = vunpack.c.l.b16 %v5851
        %v6544 = vunpack.c.l.b16 %v5852
        %v6545 = vunpack.c.l.b16 %v5853
        %v6546 = vunpack.c.l.b16 %v5854
        %v6547 = vunpack.c.l.b16 %v5855
        %v6548 = vunpack.c.l.b16 %v5856
        %v6549 = vunpack.c.l.b16 %v5857
        %v6550 = vunpack.c.l.b16 %v5858
        %v6551 = vunpack.c.l.b16 %v5859
        %v6552 = vunpack.c.l.b16 %v5860
        %v6553 = vpack.c.b16 %v6538, %v6537
        %v6554 = vpack.c.b16 %v6540, %v6539
        %v6555 = vpack.c.b16 %v6542, %v6541
        %v6556 = vpack.c.b16 %v6544, %v6543
        %v6557 = vpack.c.b16 %v6546, %v6545
        %v6558 = vpack.c.b16 %v6548, %v6547
        %v6559 = vpack.c.b16 %v6550, %v6549
        %v6560 = vpack.c.b16 %v6552, %v6551
        %6569 = vmatprep.subr.bf16.mxu0 0
        %6570 = vmatpush1.bf16.msra.mxu0 %v6560
        %6571 = vmatprep.subr.bf16.mxu0 0
        %6572 = vmatpush1.bf16.msra.mxu0 %v6559
        %6573 = vmatprep.subr.bf16.mxu0 0
        %6574 = vmatpush1.bf16.msra.mxu0 %v6558
        %6575 = vmatprep.subr.bf16.mxu0 0
        %6576 = vmatpush1.bf16.msra.mxu0 %v6557
        %6577 = vmatprep.subr.bf16.mxu0 0
        %6578 = vmatpush1.bf16.msra.mxu0 %v6556
        %6579 = vmatprep.subr.bf16.mxu0 0
        %6580 = vmatpush1.bf16.msra.mxu0 %v6555
        %6581 = vmatprep.subr.bf16.mxu0 0
        %6582 = vmatpush1.bf16.msra.mxu0 %v6554
        %6583 = vmatprep.subr.bf16.mxu0 0
        %6584 = vmatpush1.bf16.msra.mxu0 %v6553
        %6585 = vmatprep.subr.bf16.mxu0 0
        %6586 = vmatpush2.bf16.msra.mxu0 0
        %6587 = vmatprep.subr.bf16.mxu0 0
        %6588 = vmatpush2.bf16.msra.mxu0 0
        %6589 = vmatprep.subr.bf16.mxu0 0
        %6590 = vmatpush2.bf16.msra.mxu0 0
        %6591 = vmatprep.subr.bf16.mxu0 0
        %6592 = vmatpush2.bf16.msra.mxu0 0
        %6593 = vmatprep.subr.bf16.mxu0 0
        %6594 = vmatpush2.bf16.msra.mxu0 0
        %6595 = vmatprep.subr.bf16.mxu0 0
        %6596 = vmatpush2.bf16.msra.mxu0 0
        %6597 = vmatprep.subr.bf16.mxu0 0
        %6598 = vmatpush2.bf16.msra.mxu0 0
        %6599 = vmatprep.subr.bf16.mxu0 0
        %6600 = vmatpush2.bf16.msra.mxu0 0
        %6601 = vmatprep.mubr.bf16.mxu0 0
        %6602 = vmatmul.mubr.bf16.gmra.mxu0 %v6319
        %v6603 = vpop.f32.mrf.mxu0
        %v6604 = vadd.f32 %v6134, %v6603
        %v6605 = vpop.f32.mrf.mxu0
        %v6606 = vpop.f32.mrf.mxu0
        %v6607 = vadd.f32 %v6137, %v6606
        %v6608 = vpop.f32.mrf.mxu0
        %6609 = vmatprep.mubr.bf16.mxu0 0
        %6610 = vmatmul.mubr.bf16.gmra.mxu0 %v6328
        %v6611 = vpop.f32.mrf.mxu0
        %v6612 = vadd.f32 %v6142, %v6611
        %v6613 = vpop.f32.mrf.mxu0
        %v6614 = vpop.f32.mrf.mxu0
        %v6615 = vadd.f32 %v6145, %v6614
        %v6616 = vpop.f32.mrf.mxu0
        %6617 = vmatprep.mubr.bf16.mxu0 0
        %6618 = vmatmul.mubr.bf16.gmra.mxu0 %v6337
        %v6619 = vpop.f32.mrf.mxu0
        %v6620 = vadd.f32 %v6150, %v6619
        %v6621 = vpop.f32.mrf.mxu0
        %v6622 = vpop.f32.mrf.mxu0
        %v6623 = vadd.f32 %v6153, %v6622
        %v6624 = vpop.f32.mrf.mxu0
        %6625 = vmatprep.mubr.bf16.mxu0 0
        %6626 = vmatmul.mubr.bf16.gmra.mxu0 %v6346
        %v6627 = vpop.f32.mrf.mxu0
        %v6628 = vadd.f32 %v6158, %v6627
        %v6629 = vpop.f32.mrf.mxu0
        %v6630 = vpop.f32.mrf.mxu0
        %v6631 = vadd.f32 %v6161, %v6630
        %v6632 = vpop.f32.mrf.mxu0
        %6633 = vmatprep.mubr.bf16.mxu0 0
        %6634 = vmatmul.mubr.bf16.gmra.mxu0 %v6355
        %v6635 = vpop.f32.mrf.mxu0
        %v6636 = vadd.f32 %v6166, %v6635
        %v6637 = vpop.f32.mrf.mxu0
        %v6638 = vpop.f32.mrf.mxu0
        %v6639 = vadd.f32 %v6169, %v6638
        %v6640 = vpop.f32.mrf.mxu0
        %6641 = vmatprep.mubr.bf16.mxu0 0
        %6642 = vmatmul.mubr.bf16.gmra.mxu0 %v6364
        %v6643 = vpop.f32.mrf.mxu0
        %v6644 = vadd.f32 %v6174, %v6643
        %v6645 = vpop.f32.mrf.mxu0
        %v6646 = vpop.f32.mrf.mxu0
        %v6647 = vadd.f32 %v6177, %v6646
        %v6648 = vpop.f32.mrf.mxu0
        %6649 = vmatprep.mubr.bf16.mxu0 0
        %6650 = vmatmul.mubr.bf16.gmra.mxu0 %v6373
        %v6651 = vpop.f32.mrf.mxu0
        %v6652 = vadd.f32 %v6182, %v6651
        %v6653 = vpop.f32.mrf.mxu0
        %v6654 = vpop.f32.mrf.mxu0
        %v6655 = vadd.f32 %v6185, %v6654
        %v6656 = vpop.f32.mrf.mxu0
        %6657 = vmatprep.mubr.bf16.mxu0 0
        %6658 = vmatmul.mubr.bf16.gmra.mxu0 %v6382
        %v6659 = vpop.f32.mrf.mxu0
        %v6660 = vadd.f32 %v6190, %v6659
        %v6661 = vpop.f32.mrf.mxu0
        %v6662 = vpop.f32.mrf.mxu0
        %v6663 = vadd.f32 %v6193, %v6662
        %v6664 = vpop.f32.mrf.mxu0
        %6665 = vmatprep.mubr.bf16.mxu0 0
        %6666 = vmatmul.mubr.bf16.gmra.mxu0 %v6391
        %v6667 = vpop.f32.mrf.mxu0
        %v6668 = vadd.f32 %v6198, %v6667
        %v6669 = vpop.f32.mrf.mxu0
        %v6670 = vpop.f32.mrf.mxu0
        %v6671 = vadd.f32 %v6201, %v6670
        %v6672 = vpop.f32.mrf.mxu0
        %6673 = vmatprep.mubr.bf16.mxu0 0
        %6674 = vmatmul.mubr.bf16.gmra.mxu0 %v6400
        %v6675 = vpop.f32.mrf.mxu0
        %v6676 = vadd.f32 %v6206, %v6675
        %v6677 = vpop.f32.mrf.mxu0
        %v6678 = vpop.f32.mrf.mxu0
        %v6679 = vadd.f32 %v6209, %v6678
        %v6680 = vpop.f32.mrf.mxu0
        %6681 = vmatprep.mubr.bf16.mxu0 0
        %6682 = vmatmul.mubr.bf16.gmra.mxu0 %v6409
        %v6683 = vpop.f32.mrf.mxu0
        %v6684 = vadd.f32 %v6214, %v6683
        %v6685 = vpop.f32.mrf.mxu0
        %v6686 = vpop.f32.mrf.mxu0
        %v6687 = vadd.f32 %v6217, %v6686
        %v6688 = vpop.f32.mrf.mxu0
        %6689 = vmatprep.mubr.bf16.mxu0 0
        %6690 = vmatmul.mubr.bf16.gmra.mxu0 %v6418
        %v6691 = vpop.f32.mrf.mxu0
        %v6692 = vadd.f32 %v6222, %v6691
        %v6693 = vpop.f32.mrf.mxu0
        %v6694 = vpop.f32.mrf.mxu0
        %v6695 = vadd.f32 %v6225, %v6694
        %v6696 = vpop.f32.mrf.mxu0
        %6697 = vmatprep.mubr.bf16.mxu0 0
        %6698 = vmatmul.mubr.bf16.gmra.mxu0 %v6427
        %v6699 = vpop.f32.mrf.mxu0
        %v6700 = vadd.f32 %v6230, %v6699
        %v6701 = vpop.f32.mrf.mxu0
        %v6702 = vpop.f32.mrf.mxu0
        %v6703 = vadd.f32 %v6233, %v6702
        %v6704 = vpop.f32.mrf.mxu0
        %6705 = vmatprep.mubr.bf16.mxu0 0
        %6706 = vmatmul.mubr.bf16.gmra.mxu0 %v6436
        %v6707 = vpop.f32.mrf.mxu0
        %v6708 = vadd.f32 %v6238, %v6707
        %v6709 = vpop.f32.mrf.mxu0
        %v6710 = vpop.f32.mrf.mxu0
        %v6711 = vadd.f32 %v6241, %v6710
        %v6712 = vpop.f32.mrf.mxu0
        %6713 = vmatprep.mubr.bf16.mxu0 0
        %6714 = vmatmul.mubr.bf16.gmra.mxu0 %v6445
        %v6715 = vpop.f32.mrf.mxu0
        %v6716 = vadd.f32 %v6246, %v6715
        %v6717 = vpop.f32.mrf.mxu0
        %v6718 = vpop.f32.mrf.mxu0
        %v6719 = vadd.f32 %v6249, %v6718
        %v6720 = vpop.f32.mrf.mxu0
        %6721 = vmatprep.mubr.bf16.mxu0 0
        %6722 = vmatmul.mubr.bf16.gmra.mxu0 %v6454
        %v6723 = vpop.f32.mrf.mxu0
        %v6724 = vadd.f32 %v6254, %v6723
        %v6725 = vpop.f32.mrf.mxu0
        %v6726 = vpop.f32.mrf.mxu0
        %v6727 = vadd.f32 %v6257, %v6726
        %v6728 = vpop.f32.mrf.mxu0
        %6729 = vmatprep.mubr.bf16.mxu0 0
        %6730 = vmatmul.mubr.bf16.gmra.mxu0 %v6463
        %v6731 = vpop.f32.mrf.mxu0
        %v6732 = vadd.f32 %v6262, %v6731
        %v6733 = vpop.f32.mrf.mxu0
        %v6734 = vpop.f32.mrf.mxu0
        %v6735 = vadd.f32 %v6265, %v6734
        %v6736 = vpop.f32.mrf.mxu0
        %6737 = vmatprep.mubr.bf16.mxu0 0
        %6738 = vmatmul.mubr.bf16.gmra.mxu0 %v6472
        %v6739 = vpop.f32.mrf.mxu0
        %v6740 = vadd.f32 %v6270, %v6739
        %v6741 = vpop.f32.mrf.mxu0
        %v6742 = vpop.f32.mrf.mxu0
        %v6743 = vadd.f32 %v6273, %v6742
        %v6744 = vpop.f32.mrf.mxu0
        %6745 = vmatprep.mubr.bf16.mxu0 0
        %6746 = vmatmul.mubr.bf16.gmra.mxu0 %v6481
        %v6747 = vpop.f32.mrf.mxu0
        %v6748 = vadd.f32 %v6278, %v6747
        %v6749 = vpop.f32.mrf.mxu0
        %v6750 = vpop.f32.mrf.mxu0
        %v6751 = vadd.f32 %v6281, %v6750
        %v6752 = vpop.f32.mrf.mxu0
        %6753 = vmatprep.mubr.bf16.mxu0 0
        %6754 = vmatmul.mubr.bf16.gmra.mxu0 %v6490
        %v6755 = vpop.f32.mrf.mxu0
        %v6756 = vadd.f32 %v6286, %v6755
        %v6757 = vpop.f32.mrf.mxu0
        %v6758 = vpop.f32.mrf.mxu0
        %v6759 = vadd.f32 %v6289, %v6758
        %v6760 = vpop.f32.mrf.mxu0
        %6761 = vmatprep.mubr.bf16.mxu0 0
        %6762 = vmatmul.mubr.bf16.gmra.mxu0 %v6499
        %v6763 = vpop.f32.mrf.mxu0
        %v6764 = vadd.f32 %v6294, %v6763
        %v6765 = vpop.f32.mrf.mxu0
        %v6766 = vpop.f32.mrf.mxu0
        %v6767 = vadd.f32 %v6297, %v6766
        %v6768 = vpop.f32.mrf.mxu0
        %6769 = vdwg.mxu0
        %v6770 = vld [vmem:[#allocation2 + $0xac] sm:$0xf]
        %s6771 = scalar_lea.vmem %s4, 128
        %v6772 = vld [vmem:[%s6771] sm:$0xf]
        %v6773 = vld [vmem:[%s6771 + $0x4] sm:$0xf]
        %v6774 = vld [vmem:[%s6771 + $0x8] sm:$0xf]
        %v6775 = vld [vmem:[%s6771 + $0xc] sm:$0xf]
        %v6776 = vld [vmem:[%s6771 + $0x10] sm:$0xf]
        %v6777 = vld [vmem:[%s6771 + $0x14] sm:$0xf]
        %v6778 = vld [vmem:[%s6771 + $0x18] sm:$0xf]
        %v6779 = vld [vmem:[%s6771 + $0x1c] sm:$0xf]
        %v6780 = vld [vmem:[%s6771 + $0x20] sm:$0xf]
        %v6781 = vld [vmem:[%s6771 + $0x24] sm:$0xf]
        %v6782 = vld [vmem:[%s6771 + $0x28] sm:$0xf]
        %v6783 = vld [vmem:[%s6771 + $0x2c] sm:$0xf]
        %v6784 = vld [vmem:[%s6771 + $0x30] sm:$0xf]
        %v6785 = vld [vmem:[%s6771 + $0x34] sm:$0xf]
        %v6786 = vld [vmem:[%s6771 + $0x38] sm:$0xf]
        %v6787 = vld [vmem:[%s6771 + $0x3c] sm:$0xf]
        %v6789 = vunpack.c.l.b16 %v6770
        %v6790 = vpack.c.b16 %v6789, %v6789
        %v6792 = vshrl.u32 %v5965, 16
        %v6794 = vrot.slane %v6792, 3
        %v6795 = vshll.u32 %v5965, 16
        %v6797 = vrot.slane %v6795, 4
        %v6798 = vor.u32 %v6794, %v6797
        %v6799 = vrot.slane %v6312, 3
        %v6800 = vrot.slane %v6315, 4
        %v6801 = vor.u32 %v6799, %v6800
        %v6802 = vsel %vm1488, %v6798, %v6801
        %v6803 = vrot.slane %v6321, 3
        %v6804 = vrot.slane %v6324, 4
        %v6805 = vor.u32 %v6803, %v6804
        %v6806 = vsel %vm1488, %v6801, %v6805
        %v6807 = vrot.slane %v6330, 3
        %v6808 = vrot.slane %v6333, 4
        %v6809 = vor.u32 %v6807, %v6808
        %v6810 = vsel %vm1488, %v6805, %v6809
        %v6811 = vrot.slane %v6339, 3
        %v6812 = vrot.slane %v6342, 4
        %v6813 = vor.u32 %v6811, %v6812
        %v6814 = vsel %vm1488, %v6809, %v6813
        %v6815 = vrot.slane %v6348, 3
        %v6816 = vrot.slane %v6351, 4
        %v6817 = vor.u32 %v6815, %v6816
        %v6818 = vsel %vm1488, %v6813, %v6817
        %v6819 = vrot.slane %v6357, 3
        %v6820 = vrot.slane %v6360, 4
        %v6821 = vor.u32 %v6819, %v6820
        %v6822 = vsel %vm1488, %v6817, %v6821
        %v6823 = vrot.slane %v6366, 3
        %v6824 = vrot.slane %v6369, 4
        %v6825 = vor.u32 %v6823, %v6824
        %v6826 = vsel %vm1488, %v6821, %v6825
        %v6827 = vrot.slane %v6375, 3
        %v6828 = vrot.slane %v6378, 4
        %v6829 = vor.u32 %v6827, %v6828
        %v6830 = vsel %vm1488, %v6825, %v6829
        %v6831 = vrot.slane %v6384, 3
        %v6832 = vrot.slane %v6387, 4
        %v6833 = vor.u32 %v6831, %v6832
        %v6834 = vsel %vm1488, %v6829, %v6833
        %v6835 = vrot.slane %v6393, 3
        %v6836 = vrot.slane %v6396, 4
        %v6837 = vor.u32 %v6835, %v6836
        %v6838 = vsel %vm1488, %v6833, %v6837
        %v6839 = vrot.slane %v6402, 3
        %v6840 = vrot.slane %v6405, 4
        %v6841 = vor.u32 %v6839, %v6840
        %v6842 = vsel %vm1488, %v6837, %v6841
        %v6843 = vrot.slane %v6411, 3
        %v6844 = vrot.slane %v6414, 4
        %v6845 = vor.u32 %v6843, %v6844
        %v6846 = vsel %vm1488, %v6841, %v6845
        %v6847 = vrot.slane %v6420, 3
        %v6848 = vrot.slane %v6423, 4
        %v6849 = vor.u32 %v6847, %v6848
        %v6850 = vsel %vm1488, %v6845, %v6849
        %v6851 = vrot.slane %v6429, 3
        %v6852 = vrot.slane %v6432, 4
        %v6853 = vor.u32 %v6851, %v6852
        %v6854 = vsel %vm1488, %v6849, %v6853
        %v6855 = vrot.slane %v6438, 3
        %v6856 = vrot.slane %v6441, 4
        %v6857 = vor.u32 %v6855, %v6856
        %v6858 = vsel %vm1488, %v6853, %v6857
        %v6859 = vrot.slane %v6447, 3
        %v6860 = vrot.slane %v6450, 4
        %v6861 = vor.u32 %v6859, %v6860
        %v6862 = vsel %vm1488, %v6857, %v6861
        %v6863 = vrot.slane %v6456, 3
        %v6864 = vrot.slane %v6459, 4
        %v6865 = vor.u32 %v6863, %v6864
        %v6866 = vsel %vm1488, %v6861, %v6865
        %v6867 = vrot.slane %v6465, 3
        %v6868 = vrot.slane %v6468, 4
        %v6869 = vor.u32 %v6867, %v6868
        %v6870 = vsel %vm1488, %v6865, %v6869
        %v6871 = vrot.slane %v6474, 3
        %v6872 = vrot.slane %v6477, 4
        %v6873 = vor.u32 %v6871, %v6872
        %v6874 = vsel %vm1488, %v6869, %v6873
        %v6875 = vrot.slane %v6483, 3
        %v6876 = vrot.slane %v6486, 4
        %v6877 = vor.u32 %v6875, %v6876
        %v6878 = vsel %vm1488, %v6873, %v6877
        %v6880 = vshrl.u32 %v6790, 16
        %v6882 = vrot.slane %v6880, 3
        %v6883 = vshll.u32 %v6790, 16
        %v6885 = vrot.slane %v6883, 4
        %v6886 = vor.u32 %v6882, %v6885
        %v6887 = vsel %vm1488, %v6877, %v6886
        %v6925 = vunpack.c.l.b16 %v6772
        %v6926 = vunpack.c.l.b16 %v6773
        %v6927 = vunpack.c.l.b16 %v6774
        %v6928 = vunpack.c.l.b16 %v6775
        %v6929 = vunpack.c.l.b16 %v6776
        %v6930 = vunpack.c.l.b16 %v6777
        %v6931 = vunpack.c.l.b16 %v6778
        %v6932 = vunpack.c.l.b16 %v6779
        %v6933 = vunpack.c.l.b16 %v6780
        %v6934 = vunpack.c.l.b16 %v6781
        %v6935 = vunpack.c.l.b16 %v6782
        %v6936 = vunpack.c.l.b16 %v6783
        %v6937 = vunpack.c.l.b16 %v6784
        %v6938 = vunpack.c.l.b16 %v6785
        %v6939 = vunpack.c.l.b16 %v6786
        %v6940 = vunpack.c.l.b16 %v6787
        %v6941 = vpack.c.b16 %v6926, %v6925
        %v6942 = vpack.c.b16 %v6928, %v6927
        %v6943 = vpack.c.b16 %v6930, %v6929
        %v6944 = vpack.c.b16 %v6932, %v6931
        %v6945 = vpack.c.b16 %v6934, %v6933
        %v6946 = vpack.c.b16 %v6936, %v6935
        %v6947 = vpack.c.b16 %v6938, %v6937
        %v6948 = vpack.c.b16 %v6940, %v6939
        %6957 = vmatprep.subr.bf16.mxu0 0
        %6958 = vmatpush1.bf16.msra.mxu0 %v6948
        %6959 = vmatprep.subr.bf16.mxu0 0
        %6960 = vmatpush1.bf16.msra.mxu0 %v6947
        %6961 = vmatprep.subr.bf16.mxu0 0
        %6962 = vmatpush1.bf16.msra.mxu0 %v6946
        %6963 = vmatprep.subr.bf16.mxu0 0
        %6964 = vmatpush1.bf16.msra.mxu0 %v6945
        %6965 = vmatprep.subr.bf16.mxu0 0
        %6966 = vmatpush1.bf16.msra.mxu0 %v6944
        %6967 = vmatprep.subr.bf16.mxu0 0
        %6968 = vmatpush1.bf16.msra.mxu0 %v6943
        %6969 = vmatprep.subr.bf16.mxu0 0
        %6970 = vmatpush1.bf16.msra.mxu0 %v6942
        %6971 = vmatprep.subr.bf16.mxu0 0
        %6972 = vmatpush1.bf16.msra.mxu0 %v6941
        %6973 = vmatprep.subr.bf16.mxu0 0
        %6974 = vmatpush2.bf16.msra.mxu0 0
        %6975 = vmatprep.subr.bf16.mxu0 0
        %6976 = vmatpush2.bf16.msra.mxu0 0
        %6977 = vmatprep.subr.bf16.mxu0 0
        %6978 = vmatpush2.bf16.msra.mxu0 0
        %6979 = vmatprep.subr.bf16.mxu0 0
        %6980 = vmatpush2.bf16.msra.mxu0 0
        %6981 = vmatprep.subr.bf16.mxu0 0
        %6982 = vmatpush2.bf16.msra.mxu0 0
        %6983 = vmatprep.subr.bf16.mxu0 0
        %6984 = vmatpush2.bf16.msra.mxu0 0
        %6985 = vmatprep.subr.bf16.mxu0 0
        %6986 = vmatpush2.bf16.msra.mxu0 0
        %6987 = vmatprep.subr.bf16.mxu0 0
        %6988 = vmatpush2.bf16.msra.mxu0 0
        %6989 = vmatprep.mubr.bf16.mxu0 0
        %6990 = vmatmul.mubr.bf16.gmra.mxu0 %v6802
        %v6991 = vpop.f32.mrf.mxu0
        %v6992 = vadd.f32 0.0, %v6991
        %v6993 = vpop.f32.mrf.mxu0
        %v6994 = vpop.f32.mrf.mxu0
        %v6995 = vadd.f32 0.0, %v6994
        %v6996 = vpop.f32.mrf.mxu0
        %6997 = vmatprep.mubr.bf16.mxu0 0
        %6998 = vmatmul.mubr.bf16.gmra.mxu0 %v6806
        %v6999 = vpop.f32.mrf.mxu0
        %v7000 = vadd.f32 0.0, %v6999
        %v7001 = vpop.f32.mrf.mxu0
        %v7002 = vpop.f32.mrf.mxu0
        %v7003 = vadd.f32 0.0, %v7002
        %v7004 = vpop.f32.mrf.mxu0
        %7005 = vmatprep.mubr.bf16.mxu0 0
        %7006 = vmatmul.mubr.bf16.gmra.mxu0 %v6810
        %v7007 = vpop.f32.mrf.mxu0
        %v7008 = vadd.f32 0.0, %v7007
        %v7009 = vpop.f32.mrf.mxu0
        %v7010 = vpop.f32.mrf.mxu0
        %v7011 = vadd.f32 0.0, %v7010
        %v7012 = vpop.f32.mrf.mxu0
        %7013 = vmatprep.mubr.bf16.mxu0 0
        %7014 = vmatmul.mubr.bf16.gmra.mxu0 %v6814
        %v7015 = vpop.f32.mrf.mxu0
        %v7016 = vadd.f32 0.0, %v7015
        %v7017 = vpop.f32.mrf.mxu0
        %v7018 = vpop.f32.mrf.mxu0
        %v7019 = vadd.f32 0.0, %v7018
        %v7020 = vpop.f32.mrf.mxu0
        %7021 = vmatprep.mubr.bf16.mxu0 0
        %7022 = vmatmul.mubr.bf16.gmra.mxu0 %v6818
        %v7023 = vpop.f32.mrf.mxu0
        %v7024 = vadd.f32 0.0, %v7023
        %v7025 = vpop.f32.mrf.mxu0
        %v7026 = vpop.f32.mrf.mxu0
        %v7027 = vadd.f32 0.0, %v7026
        %v7028 = vpop.f32.mrf.mxu0
        %7029 = vmatprep.mubr.bf16.mxu0 0
        %7030 = vmatmul.mubr.bf16.gmra.mxu0 %v6822
        %v7031 = vpop.f32.mrf.mxu0
        %v7032 = vadd.f32 0.0, %v7031
        %v7033 = vpop.f32.mrf.mxu0
        %v7034 = vpop.f32.mrf.mxu0
        %v7035 = vadd.f32 0.0, %v7034
        %v7036 = vpop.f32.mrf.mxu0
        %7037 = vmatprep.mubr.bf16.mxu0 0
        %7038 = vmatmul.mubr.bf16.gmra.mxu0 %v6826
        %v7039 = vpop.f32.mrf.mxu0
        %v7040 = vadd.f32 0.0, %v7039
        %v7041 = vpop.f32.mrf.mxu0
        %v7042 = vpop.f32.mrf.mxu0
        %v7043 = vadd.f32 0.0, %v7042
        %v7044 = vpop.f32.mrf.mxu0
        %7045 = vmatprep.mubr.bf16.mxu0 0
        %7046 = vmatmul.mubr.bf16.gmra.mxu0 %v6830
        %v7047 = vpop.f32.mrf.mxu0
        %v7048 = vadd.f32 0.0, %v7047
        %v7049 = vpop.f32.mrf.mxu0
        %v7050 = vpop.f32.mrf.mxu0
        %v7051 = vadd.f32 0.0, %v7050
        %v7052 = vpop.f32.mrf.mxu0
        %7053 = vmatprep.mubr.bf16.mxu0 0
        %7054 = vmatmul.mubr.bf16.gmra.mxu0 %v6834
        %v7055 = vpop.f32.mrf.mxu0
        %v7056 = vadd.f32 0.0, %v7055
        %v7057 = vpop.f32.mrf.mxu0
        %v7058 = vpop.f32.mrf.mxu0
        %v7059 = vadd.f32 0.0, %v7058
        %v7060 = vpop.f32.mrf.mxu0
        %7061 = vmatprep.mubr.bf16.mxu0 0
        %7062 = vmatmul.mubr.bf16.gmra.mxu0 %v6838
        %v7063 = vpop.f32.mrf.mxu0
        %v7064 = vadd.f32 0.0, %v7063
        %v7065 = vpop.f32.mrf.mxu0
        %v7066 = vpop.f32.mrf.mxu0
        %v7067 = vadd.f32 0.0, %v7066
        %v7068 = vpop.f32.mrf.mxu0
        %7069 = vmatprep.mubr.bf16.mxu0 0
        %7070 = vmatmul.mubr.bf16.gmra.mxu0 %v6842
        %v7071 = vpop.f32.mrf.mxu0
        %v7072 = vadd.f32 0.0, %v7071
        %v7073 = vpop.f32.mrf.mxu0
        %v7074 = vpop.f32.mrf.mxu0
        %v7075 = vadd.f32 0.0, %v7074
        %v7076 = vpop.f32.mrf.mxu0
        %7077 = vmatprep.mubr.bf16.mxu0 0
        %7078 = vmatmul.mubr.bf16.gmra.mxu0 %v6846
        %v7079 = vpop.f32.mrf.mxu0
        %v7080 = vadd.f32 0.0, %v7079
        %v7081 = vpop.f32.mrf.mxu0
        %v7082 = vpop.f32.mrf.mxu0
        %v7083 = vadd.f32 0.0, %v7082
        %v7084 = vpop.f32.mrf.mxu0
        %7085 = vmatprep.mubr.bf16.mxu0 0
        %7086 = vmatmul.mubr.bf16.gmra.mxu0 %v6850
        %v7087 = vpop.f32.mrf.mxu0
        %v7088 = vadd.f32 0.0, %v7087
        %v7089 = vpop.f32.mrf.mxu0
        %v7090 = vpop.f32.mrf.mxu0
        %v7091 = vadd.f32 0.0, %v7090
        %v7092 = vpop.f32.mrf.mxu0
        %7093 = vmatprep.mubr.bf16.mxu0 0
        %7094 = vmatmul.mubr.bf16.gmra.mxu0 %v6854
        %v7095 = vpop.f32.mrf.mxu0
        %v7096 = vadd.f32 0.0, %v7095
        %v7097 = vpop.f32.mrf.mxu0
        %v7098 = vpop.f32.mrf.mxu0
        %v7099 = vadd.f32 0.0, %v7098
        %v7100 = vpop.f32.mrf.mxu0
        %7101 = vmatprep.mubr.bf16.mxu0 0
        %7102 = vmatmul.mubr.bf16.gmra.mxu0 %v6858
        %v7103 = vpop.f32.mrf.mxu0
        %v7104 = vadd.f32 0.0, %v7103
        %v7105 = vpop.f32.mrf.mxu0
        %v7106 = vpop.f32.mrf.mxu0
        %v7107 = vadd.f32 0.0, %v7106
        %v7108 = vpop.f32.mrf.mxu0
        %7109 = vmatprep.mubr.bf16.mxu0 0
        %7110 = vmatmul.mubr.bf16.gmra.mxu0 %v6862
        %v7111 = vpop.f32.mrf.mxu0
        %v7112 = vadd.f32 0.0, %v7111
        %v7113 = vpop.f32.mrf.mxu0
        %v7114 = vpop.f32.mrf.mxu0
        %v7115 = vadd.f32 0.0, %v7114
        %v7116 = vpop.f32.mrf.mxu0
        %7117 = vmatprep.mubr.bf16.mxu0 0
        %7118 = vmatmul.mubr.bf16.gmra.mxu0 %v6866
        %v7119 = vpop.f32.mrf.mxu0
        %v7120 = vadd.f32 0.0, %v7119
        %v7121 = vpop.f32.mrf.mxu0
        %v7122 = vpop.f32.mrf.mxu0
        %v7123 = vadd.f32 0.0, %v7122
        %v7124 = vpop.f32.mrf.mxu0
        %7125 = vmatprep.mubr.bf16.mxu0 0
        %7126 = vmatmul.mubr.bf16.gmra.mxu0 %v6870
        %v7127 = vpop.f32.mrf.mxu0
        %v7128 = vadd.f32 0.0, %v7127
        %v7129 = vpop.f32.mrf.mxu0
        %v7130 = vpop.f32.mrf.mxu0
        %v7131 = vadd.f32 0.0, %v7130
        %v7132 = vpop.f32.mrf.mxu0
        %7133 = vmatprep.mubr.bf16.mxu0 0
        %7134 = vmatmul.mubr.bf16.gmra.mxu0 %v6874
        %v7135 = vpop.f32.mrf.mxu0
        %v7136 = vadd.f32 0.0, %v7135
        %v7137 = vpop.f32.mrf.mxu0
        %v7138 = vpop.f32.mrf.mxu0
        %v7139 = vadd.f32 0.0, %v7138
        %v7140 = vpop.f32.mrf.mxu0
        %7141 = vmatprep.mubr.bf16.mxu0 0
        %7142 = vmatmul.mubr.bf16.gmra.mxu0 %v6878
        %v7143 = vpop.f32.mrf.mxu0
        %v7144 = vadd.f32 0.0, %v7143
        %v7145 = vpop.f32.mrf.mxu0
        %v7146 = vpop.f32.mrf.mxu0
        %v7147 = vadd.f32 0.0, %v7146
        %v7148 = vpop.f32.mrf.mxu0
        %7149 = vmatprep.mubr.bf16.mxu0 0
        %7150 = vmatmul.mubr.bf16.gmra.mxu0 %v6887
        %v7151 = vpop.f32.mrf.mxu0
        %v7152 = vadd.f32 0.0, %v7151
        %v7153 = vpop.f32.mrf.mxu0
        %v7154 = vpop.f32.mrf.mxu0
        %v7155 = vadd.f32 0.0, %v7154
        %v7156 = vpop.f32.mrf.mxu0
        %7157 = vdwg.mxu0
        %v7158 = vadd.f32 %v6604, %v6992
        %v7159 = vadd.f32 %v6607, %v6995
        %v7160 = vadd.f32 %v6612, %v7000
        %v7161 = vadd.f32 %v6615, %v7003
        %v7162 = vadd.f32 %v6620, %v7008
        %v7163 = vadd.f32 %v6623, %v7011
        %v7164 = vadd.f32 %v6628, %v7016
        %v7165 = vadd.f32 %v6631, %v7019
        %v7166 = vadd.f32 %v6636, %v7024
        %v7167 = vadd.f32 %v6639, %v7027
        %v7168 = vadd.f32 %v6644, %v7032
        %v7169 = vadd.f32 %v6647, %v7035
        %v7170 = vadd.f32 %v6652, %v7040
        %v7171 = vadd.f32 %v6655, %v7043
        %v7172 = vadd.f32 %v6660, %v7048
        %v7173 = vadd.f32 %v6663, %v7051
        %v7174 = vadd.f32 %v6668, %v7056
        %v7175 = vadd.f32 %v6671, %v7059
        %v7176 = vadd.f32 %v6676, %v7064
        %v7177 = vadd.f32 %v6679, %v7067
        %v7178 = vadd.f32 %v6684, %v7072
        %v7179 = vadd.f32 %v6687, %v7075
        %v7180 = vadd.f32 %v6692, %v7080
        %v7181 = vadd.f32 %v6695, %v7083
        %v7182 = vadd.f32 %v6700, %v7088
        %v7183 = vadd.f32 %v6703, %v7091
        %v7184 = vadd.f32 %v6708, %v7096
        %v7185 = vadd.f32 %v6711, %v7099
        %v7186 = vadd.f32 %v6716, %v7104
        %v7187 = vadd.f32 %v6719, %v7107
        %v7188 = vadd.f32 %v6724, %v7112
        %v7189 = vadd.f32 %v6727, %v7115
        %v7190 = vadd.f32 %v6732, %v7120
        %v7191 = vadd.f32 %v6735, %v7123
        %v7192 = vadd.f32 %v6740, %v7128
        %v7193 = vadd.f32 %v6743, %v7131
        %v7194 = vadd.f32 %v6748, %v7136
        %v7195 = vadd.f32 %v6751, %v7139
        %v7196 = vadd.f32 %v6756, %v7144
        %v7197 = vadd.f32 %v6759, %v7147
        %v7198 = vadd.f32 %v6764, %v7152
        %v7199 = vadd.f32 %v6767, %v7155
        %v7200 = vld [vmem:[#allocation2 + $0xc] sm:$0x8]
        %v7201 = vld [vmem:[#allocation2 + $0x10] sm:$0xf]
        %v7202 = vld [vmem:[#allocation2 + $0x14] sm:$0xf]
        %v7203 = vld [vmem:[#allocation2 + $0x18] sm:$0xf]
        %v7204 = vld [vmem:[#allocation2 + $0x1c] sm:$0xf]
        %v7205 = vld [vmem:[#allocation2 + $0x20] sm:$0xf]
        %v7206 = vld [vmem:[#allocation2 + $0x24] sm:$0xf]
        %v7207 = vld [vmem:[#allocation2 + $0x28] sm:$0xf]
        %v7208 = vld [vmem:[#allocation2 + $0x2c] sm:$0xf]
        %v7209 = vld [vmem:[#allocation2 + $0x30] sm:$0xf]
        %v7210 = vld [vmem:[#allocation2 + $0x34] sm:$0xf]
        %v7211 = vld [vmem:[#allocation2 + $0x38] sm:$0xf]
        %v7212 = vld [vmem:[#allocation2 + $0x3c] sm:$0xf]
        %v7213 = vld [vmem:[#allocation2 + $0x40] sm:$0xf]
        %v7214 = vld [vmem:[#allocation2 + $0x44] sm:$0xf]
        %v7215 = vld [vmem:[#allocation2 + $0x48] sm:$0xf]
        %v7216 = vld [vmem:[#allocation2 + $0x4c] sm:$0xf]
        %v7217 = vld [vmem:[#allocation2 + $0x50] sm:$0xf]
        %v7218 = vld [vmem:[#allocation2 + $0x54] sm:$0xf]
        %v7219 = vld [vmem:[#allocation2 + $0x58] sm:$0xf]
        %v7220 = vld [vmem:[#allocation2 + $0x5c] sm:$0xf]
        %v7221 = vld [vmem:[#allocation2 + $0x60] sm:$0xf]
        %v7222 = vld [vmem:[#allocation2 + $0x64] sm:$0xf]
        %v7223 = vld [vmem:[#allocation2 + $0x68] sm:$0xf]
        %v7224 = vld [vmem:[#allocation2 + $0x6c] sm:$0xf]
        %v7225 = vld [vmem:[#allocation2 + $0x70] sm:$0xf]
        %v7226 = vld [vmem:[#allocation2 + $0x74] sm:$0xf]
        %v7227 = vld [vmem:[#allocation2 + $0x78] sm:$0xf]
        %v7228 = vld [vmem:[#allocation2 + $0x7c] sm:$0xf]
        %v7229 = vld [vmem:[#allocation2 + $0x80] sm:$0xf]
        %v7230 = vld [vmem:[#allocation2 + $0x84] sm:$0xf]
        %v7231 = vld [vmem:[#allocation2 + $0x88] sm:$0xf]
        %v7232 = vld [vmem:[#allocation2 + $0x8c] sm:$0xf]
        %v7233 = vld [vmem:[#allocation2 + $0x90] sm:$0xf]
        %v7234 = vld [vmem:[#allocation2 + $0x94] sm:$0xf]
        %v7235 = vld [vmem:[#allocation2 + $0x98] sm:$0xf]
        %v7236 = vld [vmem:[#allocation2 + $0x9c] sm:$0xf]
        %v7237 = vld [vmem:[#allocation2 + $0xa0] sm:$0xf]
        %v7238 = vld [vmem:[#allocation2 + $0xa4] sm:$0xf]
        %v7239 = vld [vmem:[#allocation2 + $0xa8] sm:$0xf]
        %v7240 = vld [vmem:[#allocation2 + $0xac] sm:$0xf]
        %v7241 = vld [vmem:[#allocation2 + $0xb0] sm:$0xf]
        %v7242 = vld [vmem:[#allocation2 + $0xb4] sm:$0xf]
        %s7243 = scalar_lea.vmem %s4, 192
        %v7244 = vld [vmem:[%s7243] sm:$0xf]
        %v7245 = vld [vmem:[%s7243 + $0x4] sm:$0xf]
        %v7246 = vld [vmem:[%s7243 + $0x8] sm:$0xf]
        %v7247 = vld [vmem:[%s7243 + $0xc] sm:$0xf]
        %v7248 = vld [vmem:[%s7243 + $0x10] sm:$0xf]
        %v7249 = vld [vmem:[%s7243 + $0x14] sm:$0xf]
        %v7250 = vld [vmem:[%s7243 + $0x18] sm:$0xf]
        %v7251 = vld [vmem:[%s7243 + $0x1c] sm:$0xf]
        %v7252 = vld [vmem:[%s7243 + $0x20] sm:$0xf]
        %v7253 = vld [vmem:[%s7243 + $0x24] sm:$0xf]
        %v7254 = vld [vmem:[%s7243 + $0x28] sm:$0xf]
        %v7255 = vld [vmem:[%s7243 + $0x2c] sm:$0xf]
        %v7256 = vld [vmem:[%s7243 + $0x30] sm:$0xf]
        %v7257 = vld [vmem:[%s7243 + $0x34] sm:$0xf]
        %v7258 = vld [vmem:[%s7243 + $0x38] sm:$0xf]
        %v7259 = vld [vmem:[%s7243 + $0x3c] sm:$0xf]
        %v7303 = vunpack.c.l.b16 %v7200
        %v7304 = vunpack.c.l.b16 %v7201
        %v7305 = vunpack.c.l.b16 %v7202
        %v7306 = vunpack.c.l.b16 %v7203
        %v7307 = vunpack.c.l.b16 %v7204
        %v7308 = vunpack.c.l.b16 %v7205
        %v7309 = vunpack.c.l.b16 %v7206
        %v7310 = vunpack.c.l.b16 %v7207
        %v7311 = vunpack.c.l.b16 %v7208
        %v7312 = vunpack.c.l.b16 %v7209
        %v7313 = vunpack.c.l.b16 %v7210
        %v7314 = vunpack.c.l.b16 %v7211
        %v7315 = vunpack.c.l.b16 %v7212
        %v7316 = vunpack.c.l.b16 %v7213
        %v7317 = vunpack.c.l.b16 %v7214
        %v7318 = vunpack.c.l.b16 %v7215
        %v7319 = vunpack.c.l.b16 %v7216
        %v7320 = vunpack.c.l.b16 %v7217
        %v7321 = vunpack.c.l.b16 %v7218
        %v7322 = vunpack.c.l.b16 %v7219
        %v7323 = vunpack.c.l.b16 %v7220
        %v7324 = vunpack.c.l.b16 %v7221
        %v7325 = vunpack.c.l.b16 %v7222
        %v7326 = vunpack.c.l.b16 %v7223
        %v7327 = vunpack.c.l.b16 %v7224
        %v7328 = vunpack.c.l.b16 %v7225
        %v7329 = vunpack.c.l.b16 %v7226
        %v7330 = vunpack.c.l.b16 %v7227
        %v7331 = vunpack.c.l.b16 %v7228
        %v7332 = vunpack.c.l.b16 %v7229
        %v7333 = vunpack.c.l.b16 %v7230
        %v7334 = vunpack.c.l.b16 %v7231
        %v7335 = vunpack.c.l.b16 %v7232
        %v7336 = vunpack.c.l.b16 %v7233
        %v7337 = vunpack.c.l.b16 %v7234
        %v7338 = vunpack.c.l.b16 %v7235
        %v7339 = vunpack.c.l.b16 %v7236
        %v7340 = vunpack.c.l.b16 %v7237
        %v7341 = vunpack.c.l.b16 %v7238
        %v7342 = vunpack.c.l.b16 %v7239
        %v7343 = vunpack.c.l.b16 %v7240
        %v7344 = vunpack.c.l.b16 %v7241
        %v7345 = vunpack.c.l.b16 %v7242
        %v7346 = vpack.c.b16 %v7304, %v7303
        %v7347 = vpack.c.b16 %v7306, %v7305
        %v7348 = vpack.c.b16 %v7308, %v7307
        %v7349 = vpack.c.b16 %v7310, %v7309
        %v7350 = vpack.c.b16 %v7312, %v7311
        %v7351 = vpack.c.b16 %v7314, %v7313
        %v7352 = vpack.c.b16 %v7316, %v7315
        %v7353 = vpack.c.b16 %v7318, %v7317
        %v7354 = vpack.c.b16 %v7320, %v7319
        %v7355 = vpack.c.b16 %v7322, %v7321
        %v7356 = vpack.c.b16 %v7324, %v7323
        %v7357 = vpack.c.b16 %v7326, %v7325
        %v7358 = vpack.c.b16 %v7328, %v7327
        %v7359 = vpack.c.b16 %v7330, %v7329
        %v7360 = vpack.c.b16 %v7332, %v7331
        %v7361 = vpack.c.b16 %v7334, %v7333
        %v7362 = vpack.c.b16 %v7336, %v7335
        %v7363 = vpack.c.b16 %v7338, %v7337
        %v7364 = vpack.c.b16 %v7340, %v7339
        %v7365 = vpack.c.b16 %v7342, %v7341
        %v7366 = vpack.c.b16 %v7344, %v7343
        %v7367 = vpack.c.b16 %v7345, %v7345
        %v7369 = vshrl.u32 %v7346, 16
        %v7371 = vrot.slane %v7369, 3
        %v7372 = vshll.u32 %v7346, 16
        %v7374 = vrot.slane %v7372, 4
        %v7375 = vor.u32 %v7371, %v7374
        %v7377 = vshrl.u32 %v7347, 16
        %v7379 = vrot.slane %v7377, 3
        %v7380 = vshll.u32 %v7347, 16
        %v7382 = vrot.slane %v7380, 4
        %v7383 = vor.u32 %v7379, %v7382
        %v7384 = vsel %vm1488, %v7375, %v7383
        %v7386 = vshrl.u32 %v7348, 16
        %v7388 = vrot.slane %v7386, 3
        %v7389 = vshll.u32 %v7348, 16
        %v7391 = vrot.slane %v7389, 4
        %v7392 = vor.u32 %v7388, %v7391
        %v7393 = vsel %vm1488, %v7383, %v7392
        %v7395 = vshrl.u32 %v7349, 16
        %v7397 = vrot.slane %v7395, 3
        %v7398 = vshll.u32 %v7349, 16
        %v7400 = vrot.slane %v7398, 4
        %v7401 = vor.u32 %v7397, %v7400
        %v7402 = vsel %vm1488, %v7392, %v7401
        %v7404 = vshrl.u32 %v7350, 16
        %v7406 = vrot.slane %v7404, 3
        %v7407 = vshll.u32 %v7350, 16
        %v7409 = vrot.slane %v7407, 4
        %v7410 = vor.u32 %v7406, %v7409
        %v7411 = vsel %vm1488, %v7401, %v7410
        %v7413 = vshrl.u32 %v7351, 16
        %v7415 = vrot.slane %v7413, 3
        %v7416 = vshll.u32 %v7351, 16
        %v7418 = vrot.slane %v7416, 4
        %v7419 = vor.u32 %v7415, %v7418
        %v7420 = vsel %vm1488, %v7410, %v7419
        %v7422 = vshrl.u32 %v7352, 16
        %v7424 = vrot.slane %v7422, 3
        %v7425 = vshll.u32 %v7352, 16
        %v7427 = vrot.slane %v7425, 4
        %v7428 = vor.u32 %v7424, %v7427
        %v7429 = vsel %vm1488, %v7419, %v7428
        %v7431 = vshrl.u32 %v7353, 16
        %v7433 = vrot.slane %v7431, 3
        %v7434 = vshll.u32 %v7353, 16
        %v7436 = vrot.slane %v7434, 4
        %v7437 = vor.u32 %v7433, %v7436
        %v7438 = vsel %vm1488, %v7428, %v7437
        %v7440 = vshrl.u32 %v7354, 16
        %v7442 = vrot.slane %v7440, 3
        %v7443 = vshll.u32 %v7354, 16
        %v7445 = vrot.slane %v7443, 4
        %v7446 = vor.u32 %v7442, %v7445
        %v7447 = vsel %vm1488, %v7437, %v7446
        %v7449 = vshrl.u32 %v7355, 16
        %v7451 = vrot.slane %v7449, 3
        %v7452 = vshll.u32 %v7355, 16
        %v7454 = vrot.slane %v7452, 4
        %v7455 = vor.u32 %v7451, %v7454
        %v7456 = vsel %vm1488, %v7446, %v7455
        %v7458 = vshrl.u32 %v7356, 16
        %v7460 = vrot.slane %v7458, 3
        %v7461 = vshll.u32 %v7356, 16
        %v7463 = vrot.slane %v7461, 4
        %v7464 = vor.u32 %v7460, %v7463
        %v7465 = vsel %vm1488, %v7455, %v7464
        %v7467 = vshrl.u32 %v7357, 16
        %v7469 = vrot.slane %v7467, 3
        %v7470 = vshll.u32 %v7357, 16
        %v7472 = vrot.slane %v7470, 4
        %v7473 = vor.u32 %v7469, %v7472
        %v7474 = vsel %vm1488, %v7464, %v7473
        %v7476 = vshrl.u32 %v7358, 16
        %v7478 = vrot.slane %v7476, 3
        %v7479 = vshll.u32 %v7358, 16
        %v7481 = vrot.slane %v7479, 4
        %v7482 = vor.u32 %v7478, %v7481
        %v7483 = vsel %vm1488, %v7473, %v7482
        %v7485 = vshrl.u32 %v7359, 16
        %v7487 = vrot.slane %v7485, 3
        %v7488 = vshll.u32 %v7359, 16
        %v7490 = vrot.slane %v7488, 4
        %v7491 = vor.u32 %v7487, %v7490
        %v7492 = vsel %vm1488, %v7482, %v7491
        %v7494 = vshrl.u32 %v7360, 16
        %v7496 = vrot.slane %v7494, 3
        %v7497 = vshll.u32 %v7360, 16
        %v7499 = vrot.slane %v7497, 4
        %v7500 = vor.u32 %v7496, %v7499
        %v7501 = vsel %vm1488, %v7491, %v7500
        %v7503 = vshrl.u32 %v7361, 16
        %v7505 = vrot.slane %v7503, 3
        %v7506 = vshll.u32 %v7361, 16
        %v7508 = vrot.slane %v7506, 4
        %v7509 = vor.u32 %v7505, %v7508
        %v7510 = vsel %vm1488, %v7500, %v7509
        %v7512 = vshrl.u32 %v7362, 16
        %v7514 = vrot.slane %v7512, 3
        %v7515 = vshll.u32 %v7362, 16
        %v7517 = vrot.slane %v7515, 4
        %v7518 = vor.u32 %v7514, %v7517
        %v7519 = vsel %vm1488, %v7509, %v7518
        %v7521 = vshrl.u32 %v7363, 16
        %v7523 = vrot.slane %v7521, 3
        %v7524 = vshll.u32 %v7363, 16
        %v7526 = vrot.slane %v7524, 4
        %v7527 = vor.u32 %v7523, %v7526
        %v7528 = vsel %vm1488, %v7518, %v7527
        %v7530 = vshrl.u32 %v7364, 16
        %v7532 = vrot.slane %v7530, 3
        %v7533 = vshll.u32 %v7364, 16
        %v7535 = vrot.slane %v7533, 4
        %v7536 = vor.u32 %v7532, %v7535
        %v7537 = vsel %vm1488, %v7527, %v7536
        %v7539 = vshrl.u32 %v7365, 16
        %v7541 = vrot.slane %v7539, 3
        %v7542 = vshll.u32 %v7365, 16
        %v7544 = vrot.slane %v7542, 4
        %v7545 = vor.u32 %v7541, %v7544
        %v7546 = vsel %vm1488, %v7536, %v7545
        %v7548 = vshrl.u32 %v7366, 16
        %v7550 = vrot.slane %v7548, 3
        %v7551 = vshll.u32 %v7366, 16
        %v7553 = vrot.slane %v7551, 4
        %v7554 = vor.u32 %v7550, %v7553
        %v7555 = vsel %vm1488, %v7545, %v7554
        %v7557 = vshrl.u32 %v7367, 16
        %v7559 = vrot.slane %v7557, 3
        %v7560 = vshll.u32 %v7367, 16
        %v7562 = vrot.slane %v7560, 4
        %v7563 = vor.u32 %v7559, %v7562
        %v7564 = vsel %vm1488, %v7554, %v7563
        %v7602 = vunpack.c.l.b16 %v7244
        %v7603 = vunpack.c.l.b16 %v7245
        %v7604 = vunpack.c.l.b16 %v7246
        %v7605 = vunpack.c.l.b16 %v7247
        %v7606 = vunpack.c.l.b16 %v7248
        %v7607 = vunpack.c.l.b16 %v7249
        %v7608 = vunpack.c.l.b16 %v7250
        %v7609 = vunpack.c.l.b16 %v7251
        %v7610 = vunpack.c.l.b16 %v7252
        %v7611 = vunpack.c.l.b16 %v7253
        %v7612 = vunpack.c.l.b16 %v7254
        %v7613 = vunpack.c.l.b16 %v7255
        %v7614 = vunpack.c.l.b16 %v7256
        %v7615 = vunpack.c.l.b16 %v7257
        %v7616 = vunpack.c.l.b16 %v7258
        %v7617 = vunpack.c.l.b16 %v7259
        %v7618 = vpack.c.b16 %v7603, %v7602
        %v7619 = vpack.c.b16 %v7605, %v7604
        %v7620 = vpack.c.b16 %v7607, %v7606
        %v7621 = vpack.c.b16 %v7609, %v7608
        %v7622 = vpack.c.b16 %v7611, %v7610
        %v7623 = vpack.c.b16 %v7613, %v7612
        %v7624 = vpack.c.b16 %v7615, %v7614
        %v7625 = vpack.c.b16 %v7617, %v7616
        %7634 = vmatprep.subr.bf16.mxu0 0
        %7635 = vmatpush1.bf16.msra.mxu0 %v7625
        %7636 = vmatprep.subr.bf16.mxu0 0
        %7637 = vmatpush1.bf16.msra.mxu0 %v7624
        %7638 = vmatprep.subr.bf16.mxu0 0
        %7639 = vmatpush1.bf16.msra.mxu0 %v7623
        %7640 = vmatprep.subr.bf16.mxu0 0
        %7641 = vmatpush1.bf16.msra.mxu0 %v7622
        %7642 = vmatprep.subr.bf16.mxu0 0
        %7643 = vmatpush1.bf16.msra.mxu0 %v7621
        %7644 = vmatprep.subr.bf16.mxu0 0
        %7645 = vmatpush1.bf16.msra.mxu0 %v7620
        %7646 = vmatprep.subr.bf16.mxu0 0
        %7647 = vmatpush1.bf16.msra.mxu0 %v7619
        %7648 = vmatprep.subr.bf16.mxu0 0
        %7649 = vmatpush1.bf16.msra.mxu0 %v7618
        %7650 = vmatprep.subr.bf16.mxu0 0
        %7651 = vmatpush2.bf16.msra.mxu0 0
        %7652 = vmatprep.subr.bf16.mxu0 0
        %7653 = vmatpush2.bf16.msra.mxu0 0
        %7654 = vmatprep.subr.bf16.mxu0 0
        %7655 = vmatpush2.bf16.msra.mxu0 0
        %7656 = vmatprep.subr.bf16.mxu0 0
        %7657 = vmatpush2.bf16.msra.mxu0 0
        %7658 = vmatprep.subr.bf16.mxu0 0
        %7659 = vmatpush2.bf16.msra.mxu0 0
        %7660 = vmatprep.subr.bf16.mxu0 0
        %7661 = vmatpush2.bf16.msra.mxu0 0
        %7662 = vmatprep.subr.bf16.mxu0 0
        %7663 = vmatpush2.bf16.msra.mxu0 0
        %7664 = vmatprep.subr.bf16.mxu0 0
        %7665 = vmatpush2.bf16.msra.mxu0 0
        %7666 = vmatprep.mubr.bf16.mxu0 0
        %7667 = vmatmul.mubr.bf16.gmra.mxu0 %v7384
        %v7668 = vpop.f32.mrf.mxu0
        %v7669 = vadd.f32 0.0, %v7668
        %v7670 = vpop.f32.mrf.mxu0
        %v7671 = vpop.f32.mrf.mxu0
        %v7672 = vadd.f32 0.0, %v7671
        %v7673 = vpop.f32.mrf.mxu0
        %7674 = vmatprep.mubr.bf16.mxu0 0
        %7675 = vmatmul.mubr.bf16.gmra.mxu0 %v7393
        %v7676 = vpop.f32.mrf.mxu0
        %v7677 = vadd.f32 0.0, %v7676
        %v7678 = vpop.f32.mrf.mxu0
        %v7679 = vpop.f32.mrf.mxu0
        %v7680 = vadd.f32 0.0, %v7679
        %v7681 = vpop.f32.mrf.mxu0
        %7682 = vmatprep.mubr.bf16.mxu0 0
        %7683 = vmatmul.mubr.bf16.gmra.mxu0 %v7402
        %v7684 = vpop.f32.mrf.mxu0
        %v7685 = vadd.f32 0.0, %v7684
        %v7686 = vpop.f32.mrf.mxu0
        %v7687 = vpop.f32.mrf.mxu0
        %v7688 = vadd.f32 0.0, %v7687
        %v7689 = vpop.f32.mrf.mxu0
        %7690 = vmatprep.mubr.bf16.mxu0 0
        %7691 = vmatmul.mubr.bf16.gmra.mxu0 %v7411
        %v7692 = vpop.f32.mrf.mxu0
        %v7693 = vadd.f32 0.0, %v7692
        %v7694 = vpop.f32.mrf.mxu0
        %v7695 = vpop.f32.mrf.mxu0
        %v7696 = vadd.f32 0.0, %v7695
        %v7697 = vpop.f32.mrf.mxu0
        %7698 = vmatprep.mubr.bf16.mxu0 0
        %7699 = vmatmul.mubr.bf16.gmra.mxu0 %v7420
        %v7700 = vpop.f32.mrf.mxu0
        %v7701 = vadd.f32 0.0, %v7700
        %v7702 = vpop.f32.mrf.mxu0
        %v7703 = vpop.f32.mrf.mxu0
        %v7704 = vadd.f32 0.0, %v7703
        %v7705 = vpop.f32.mrf.mxu0
        %7706 = vmatprep.mubr.bf16.mxu0 0
        %7707 = vmatmul.mubr.bf16.gmra.mxu0 %v7429
        %v7708 = vpop.f32.mrf.mxu0
        %v7709 = vadd.f32 0.0, %v7708
        %v7710 = vpop.f32.mrf.mxu0
        %v7711 = vpop.f32.mrf.mxu0
        %v7712 = vadd.f32 0.0, %v7711
        %v7713 = vpop.f32.mrf.mxu0
        %7714 = vmatprep.mubr.bf16.mxu0 0
        %7715 = vmatmul.mubr.bf16.gmra.mxu0 %v7438
        %v7716 = vpop.f32.mrf.mxu0
        %v7717 = vadd.f32 0.0, %v7716
        %v7718 = vpop.f32.mrf.mxu0
        %v7719 = vpop.f32.mrf.mxu0
        %v7720 = vadd.f32 0.0, %v7719
        %v7721 = vpop.f32.mrf.mxu0
        %7722 = vmatprep.mubr.bf16.mxu0 0
        %7723 = vmatmul.mubr.bf16.gmra.mxu0 %v7447
        %v7724 = vpop.f32.mrf.mxu0
        %v7725 = vadd.f32 0.0, %v7724
        %v7726 = vpop.f32.mrf.mxu0
        %v7727 = vpop.f32.mrf.mxu0
        %v7728 = vadd.f32 0.0, %v7727
        %v7729 = vpop.f32.mrf.mxu0
        %7730 = vmatprep.mubr.bf16.mxu0 0
        %7731 = vmatmul.mubr.bf16.gmra.mxu0 %v7456
        %v7732 = vpop.f32.mrf.mxu0
        %v7733 = vadd.f32 0.0, %v7732
        %v7734 = vpop.f32.mrf.mxu0
        %v7735 = vpop.f32.mrf.mxu0
        %v7736 = vadd.f32 0.0, %v7735
        %v7737 = vpop.f32.mrf.mxu0
        %7738 = vmatprep.mubr.bf16.mxu0 0
        %7739 = vmatmul.mubr.bf16.gmra.mxu0 %v7465
        %v7740 = vpop.f32.mrf.mxu0
        %v7741 = vadd.f32 0.0, %v7740
        %v7742 = vpop.f32.mrf.mxu0
        %v7743 = vpop.f32.mrf.mxu0
        %v7744 = vadd.f32 0.0, %v7743
        %v7745 = vpop.f32.mrf.mxu0
        %7746 = vmatprep.mubr.bf16.mxu0 0
        %7747 = vmatmul.mubr.bf16.gmra.mxu0 %v7474
        %v7748 = vpop.f32.mrf.mxu0
        %v7749 = vadd.f32 0.0, %v7748
        %v7750 = vpop.f32.mrf.mxu0
        %v7751 = vpop.f32.mrf.mxu0
        %v7752 = vadd.f32 0.0, %v7751
        %v7753 = vpop.f32.mrf.mxu0
        %7754 = vmatprep.mubr.bf16.mxu0 0
        %7755 = vmatmul.mubr.bf16.gmra.mxu0 %v7483
        %v7756 = vpop.f32.mrf.mxu0
        %v7757 = vadd.f32 0.0, %v7756
        %v7758 = vpop.f32.mrf.mxu0
        %v7759 = vpop.f32.mrf.mxu0
        %v7760 = vadd.f32 0.0, %v7759
        %v7761 = vpop.f32.mrf.mxu0
        %7762 = vmatprep.mubr.bf16.mxu0 0
        %7763 = vmatmul.mubr.bf16.gmra.mxu0 %v7492
        %v7764 = vpop.f32.mrf.mxu0
        %v7765 = vadd.f32 0.0, %v7764
        %v7766 = vpop.f32.mrf.mxu0
        %v7767 = vpop.f32.mrf.mxu0
        %v7768 = vadd.f32 0.0, %v7767
        %v7769 = vpop.f32.mrf.mxu0
        %7770 = vmatprep.mubr.bf16.mxu0 0
        %7771 = vmatmul.mubr.bf16.gmra.mxu0 %v7501
        %v7772 = vpop.f32.mrf.mxu0
        %v7773 = vadd.f32 0.0, %v7772
        %v7774 = vpop.f32.mrf.mxu0
        %v7775 = vpop.f32.mrf.mxu0
        %v7776 = vadd.f32 0.0, %v7775
        %v7777 = vpop.f32.mrf.mxu0
        %7778 = vmatprep.mubr.bf16.mxu0 0
        %7779 = vmatmul.mubr.bf16.gmra.mxu0 %v7510
        %v7780 = vpop.f32.mrf.mxu0
        %v7781 = vadd.f32 0.0, %v7780
        %v7782 = vpop.f32.mrf.mxu0
        %v7783 = vpop.f32.mrf.mxu0
        %v7784 = vadd.f32 0.0, %v7783
        %v7785 = vpop.f32.mrf.mxu0
        %7786 = vmatprep.mubr.bf16.mxu0 0
        %7787 = vmatmul.mubr.bf16.gmra.mxu0 %v7519
        %v7788 = vpop.f32.mrf.mxu0
        %v7789 = vadd.f32 0.0, %v7788
        %v7790 = vpop.f32.mrf.mxu0
        %v7791 = vpop.f32.mrf.mxu0
        %v7792 = vadd.f32 0.0, %v7791
        %v7793 = vpop.f32.mrf.mxu0
        %7794 = vmatprep.mubr.bf16.mxu0 0
        %7795 = vmatmul.mubr.bf16.gmra.mxu0 %v7528
        %v7796 = vpop.f32.mrf.mxu0
        %v7797 = vadd.f32 0.0, %v7796
        %v7798 = vpop.f32.mrf.mxu0
        %v7799 = vpop.f32.mrf.mxu0
        %v7800 = vadd.f32 0.0, %v7799
        %v7801 = vpop.f32.mrf.mxu0
        %7802 = vmatprep.mubr.bf16.mxu0 0
        %7803 = vmatmul.mubr.bf16.gmra.mxu0 %v7537
        %v7804 = vpop.f32.mrf.mxu0
        %v7805 = vadd.f32 0.0, %v7804
        %v7806 = vpop.f32.mrf.mxu0
        %v7807 = vpop.f32.mrf.mxu0
        %v7808 = vadd.f32 0.0, %v7807
        %v7809 = vpop.f32.mrf.mxu0
        %7810 = vmatprep.mubr.bf16.mxu0 0
        %7811 = vmatmul.mubr.bf16.gmra.mxu0 %v7546
        %v7812 = vpop.f32.mrf.mxu0
        %v7813 = vadd.f32 0.0, %v7812
        %v7814 = vpop.f32.mrf.mxu0
        %v7815 = vpop.f32.mrf.mxu0
        %v7816 = vadd.f32 0.0, %v7815
        %v7817 = vpop.f32.mrf.mxu0
        %7818 = vmatprep.mubr.bf16.mxu0 0
        %7819 = vmatmul.mubr.bf16.gmra.mxu0 %v7555
        %v7820 = vpop.f32.mrf.mxu0
        %v7821 = vadd.f32 0.0, %v7820
        %v7822 = vpop.f32.mrf.mxu0
        %v7823 = vpop.f32.mrf.mxu0
        %v7824 = vadd.f32 0.0, %v7823
        %v7825 = vpop.f32.mrf.mxu0
        %7826 = vmatprep.mubr.bf16.mxu0 0
        %7827 = vmatmul.mubr.bf16.gmra.mxu0 %v7564
        %v7828 = vpop.f32.mrf.mxu0
        %v7829 = vadd.f32 0.0, %v7828
        %v7830 = vpop.f32.mrf.mxu0
        %v7831 = vpop.f32.mrf.mxu0
        %v7832 = vadd.f32 0.0, %v7831
        %v7833 = vpop.f32.mrf.mxu0
        %7834 = vdwg.mxu0
        %v7835 = vadd.f32 %v7158, %v7669
        %v7836 = vadd.f32 %v7159, %v7672
        %v7837 = vadd.f32 %v7160, %v7677
        %v7838 = vadd.f32 %v7161, %v7680
        %v7839 = vadd.f32 %v7162, %v7685
        %v7840 = vadd.f32 %v7163, %v7688
        %v7841 = vadd.f32 %v7164, %v7693
        %v7842 = vadd.f32 %v7165, %v7696
        %v7843 = vadd.f32 %v7166, %v7701
        %v7844 = vadd.f32 %v7167, %v7704
        %v7845 = vadd.f32 %v7168, %v7709
        %v7846 = vadd.f32 %v7169, %v7712
        %v7847 = vadd.f32 %v7170, %v7717
        %v7848 = vadd.f32 %v7171, %v7720
        %v7849 = vadd.f32 %v7172, %v7725
        %v7850 = vadd.f32 %v7173, %v7728
        %v7851 = vadd.f32 %v7174, %v7733
        %v7852 = vadd.f32 %v7175, %v7736
        %v7853 = vadd.f32 %v7176, %v7741
        %v7854 = vadd.f32 %v7177, %v7744
        %v7855 = vadd.f32 %v7178, %v7749
        %v7856 = vadd.f32 %v7179, %v7752
        %v7857 = vadd.f32 %v7180, %v7757
        %v7858 = vadd.f32 %v7181, %v7760
        %v7859 = vadd.f32 %v7182, %v7765
        %v7860 = vadd.f32 %v7183, %v7768
        %v7861 = vadd.f32 %v7184, %v7773
        %v7862 = vadd.f32 %v7185, %v7776
        %v7863 = vadd.f32 %v7186, %v7781
        %v7864 = vadd.f32 %v7187, %v7784
        %v7865 = vadd.f32 %v7188, %v7789
        %v7866 = vadd.f32 %v7189, %v7792
        %v7867 = vadd.f32 %v7190, %v7797
        %v7868 = vadd.f32 %v7191, %v7800
        %v7869 = vadd.f32 %v7192, %v7805
        %v7870 = vadd.f32 %v7193, %v7808
        %v7871 = vadd.f32 %v7194, %v7813
        %v7872 = vadd.f32 %v7195, %v7816
        %v7873 = vadd.f32 %v7196, %v7821
        %v7874 = vadd.f32 %v7197, %v7824
        %v7875 = vadd.f32 %v7198, %v7829
        %v7876 = vadd.f32 %v7199, %v7832
        %s7877 = scalar_lea.vmem %s4, 256
        %v7878 = vld [vmem:[%s7877] sm:$0xf]
        %v7879 = vld [vmem:[%s7877 + $0x4] sm:$0xf]
        %v7880 = vld [vmem:[%s7877 + $0x8] sm:$0xf]
        %v7881 = vld [vmem:[%s7877 + $0xc] sm:$0xf]
        %v7882 = vld [vmem:[%s7877 + $0x10] sm:$0xf]
        %v7883 = vld [vmem:[%s7877 + $0x14] sm:$0xf]
        %v7884 = vld [vmem:[%s7877 + $0x18] sm:$0xf]
        %v7885 = vld [vmem:[%s7877 + $0x1c] sm:$0xf]
        %v7886 = vld [vmem:[%s7877 + $0x20] sm:$0xf]
        %v7887 = vld [vmem:[%s7877 + $0x24] sm:$0xf]
        %v7888 = vld [vmem:[%s7877 + $0x28] sm:$0xf]
        %v7889 = vld [vmem:[%s7877 + $0x2c] sm:$0xf]
        %v7890 = vld [vmem:[%s7877 + $0x30] sm:$0xf]
        %v7891 = vld [vmem:[%s7877 + $0x34] sm:$0xf]
        %v7892 = vld [vmem:[%s7877 + $0x38] sm:$0xf]
        %v7893 = vld [vmem:[%s7877 + $0x3c] sm:$0xf]
        %v7894 = vpack.c.b16 %v7305, %v7304
        %v7895 = vpack.c.b16 %v7307, %v7306
        %v7896 = vpack.c.b16 %v7309, %v7308
        %v7897 = vpack.c.b16 %v7311, %v7310
        %v7898 = vpack.c.b16 %v7313, %v7312
        %v7899 = vpack.c.b16 %v7315, %v7314
        %v7900 = vpack.c.b16 %v7317, %v7316
        %v7901 = vpack.c.b16 %v7319, %v7318
        %v7902 = vpack.c.b16 %v7321, %v7320
        %v7903 = vpack.c.b16 %v7323, %v7322
        %v7904 = vpack.c.b16 %v7325, %v7324
        %v7905 = vpack.c.b16 %v7327, %v7326
        %v7906 = vpack.c.b16 %v7329, %v7328
        %v7907 = vpack.c.b16 %v7331, %v7330
        %v7908 = vpack.c.b16 %v7333, %v7332
        %v7909 = vpack.c.b16 %v7335, %v7334
        %v7910 = vpack.c.b16 %v7337, %v7336
        %v7911 = vpack.c.b16 %v7339, %v7338
        %v7912 = vpack.c.b16 %v7341, %v7340
        %v7913 = vpack.c.b16 %v7343, %v7342
        %v7914 = vpack.c.b16 %v7345, %v7344
        %v7952 = vunpack.c.l.b16 %v7878
        %v7953 = vunpack.c.l.b16 %v7879
        %v7954 = vunpack.c.l.b16 %v7880
        %v7955 = vunpack.c.l.b16 %v7881
        %v7956 = vunpack.c.l.b16 %v7882
        %v7957 = vunpack.c.l.b16 %v7883
        %v7958 = vunpack.c.l.b16 %v7884
        %v7959 = vunpack.c.l.b16 %v7885
        %v7960 = vunpack.c.l.b16 %v7886
        %v7961 = vunpack.c.l.b16 %v7887
        %v7962 = vunpack.c.l.b16 %v7888
        %v7963 = vunpack.c.l.b16 %v7889
        %v7964 = vunpack.c.l.b16 %v7890
        %v7965 = vunpack.c.l.b16 %v7891
        %v7966 = vunpack.c.l.b16 %v7892
        %v7967 = vunpack.c.l.b16 %v7893
        %v7968 = vpack.c.b16 %v7953, %v7952
        %v7969 = vpack.c.b16 %v7955, %v7954
        %v7970 = vpack.c.b16 %v7957, %v7956
        %v7971 = vpack.c.b16 %v7959, %v7958
        %v7972 = vpack.c.b16 %v7961, %v7960
        %v7973 = vpack.c.b16 %v7963, %v7962
        %v7974 = vpack.c.b16 %v7965, %v7964
        %v7975 = vpack.c.b16 %v7967, %v7966
        %7984 = vmatprep.subr.bf16.mxu0 0
        %7985 = vmatpush1.bf16.msra.mxu0 %v7975
        %7986 = vmatprep.subr.bf16.mxu0 0
        %7987 = vmatpush1.bf16.msra.mxu0 %v7974
        %7988 = vmatprep.subr.bf16.mxu0 0
        %7989 = vmatpush1.bf16.msra.mxu0 %v7973
        %7990 = vmatprep.subr.bf16.mxu0 0
        %7991 = vmatpush1.bf16.msra.mxu0 %v7972
        %7992 = vmatprep.subr.bf16.mxu0 0
        %7993 = vmatpush1.bf16.msra.mxu0 %v7971
        %7994 = vmatprep.subr.bf16.mxu0 0
        %7995 = vmatpush1.bf16.msra.mxu0 %v7970
        %7996 = vmatprep.subr.bf16.mxu0 0
        %7997 = vmatpush1.bf16.msra.mxu0 %v7969
        %7998 = vmatprep.subr.bf16.mxu0 0
        %7999 = vmatpush1.bf16.msra.mxu0 %v7968
        %8000 = vmatprep.subr.bf16.mxu0 0
        %8001 = vmatpush2.bf16.msra.mxu0 0
        %8002 = vmatprep.subr.bf16.mxu0 0
        %8003 = vmatpush2.bf16.msra.mxu0 0
        %8004 = vmatprep.subr.bf16.mxu0 0
        %8005 = vmatpush2.bf16.msra.mxu0 0
        %8006 = vmatprep.subr.bf16.mxu0 0
        %8007 = vmatpush2.bf16.msra.mxu0 0
        %8008 = vmatprep.subr.bf16.mxu0 0
        %8009 = vmatpush2.bf16.msra.mxu0 0
        %8010 = vmatprep.subr.bf16.mxu0 0
        %8011 = vmatpush2.bf16.msra.mxu0 0
        %8012 = vmatprep.subr.bf16.mxu0 0
        %8013 = vmatpush2.bf16.msra.mxu0 0
        %8014 = vmatprep.subr.bf16.mxu0 0
        %8015 = vmatpush2.bf16.msra.mxu0 0
        %8016 = vmatprep.mubr.bf16.mxu0 0
        %8017 = vmatmul.mubr.bf16.gmra.mxu0 %v7894
        %v8018 = vpop.f32.mrf.mxu0
        %v8019 = vadd.f32 0.0, %v8018
        %v8020 = vpop.f32.mrf.mxu0
        %v8021 = vpop.f32.mrf.mxu0
        %v8022 = vadd.f32 0.0, %v8021
        %v8023 = vpop.f32.mrf.mxu0
        %8024 = vmatprep.mubr.bf16.mxu0 0
        %8025 = vmatmul.mubr.bf16.gmra.mxu0 %v7895
        %v8026 = vpop.f32.mrf.mxu0
        %v8027 = vadd.f32 0.0, %v8026
        %v8028 = vpop.f32.mrf.mxu0
        %v8029 = vpop.f32.mrf.mxu0
        %v8030 = vadd.f32 0.0, %v8029
        %v8031 = vpop.f32.mrf.mxu0
        %8032 = vmatprep.mubr.bf16.mxu0 0
        %8033 = vmatmul.mubr.bf16.gmra.mxu0 %v7896
        %v8034 = vpop.f32.mrf.mxu0
        %v8035 = vadd.f32 0.0, %v8034
        %v8036 = vpop.f32.mrf.mxu0
        %v8037 = vpop.f32.mrf.mxu0
        %v8038 = vadd.f32 0.0, %v8037
        %v8039 = vpop.f32.mrf.mxu0
        %8040 = vmatprep.mubr.bf16.mxu0 0
        %8041 = vmatmul.mubr.bf16.gmra.mxu0 %v7897
        %v8042 = vpop.f32.mrf.mxu0
        %v8043 = vadd.f32 0.0, %v8042
        %v8044 = vpop.f32.mrf.mxu0
        %v8045 = vpop.f32.mrf.mxu0
        %v8046 = vadd.f32 0.0, %v8045
        %v8047 = vpop.f32.mrf.mxu0
        %8048 = vmatprep.mubr.bf16.mxu0 0
        %8049 = vmatmul.mubr.bf16.gmra.mxu0 %v7898
        %v8050 = vpop.f32.mrf.mxu0
        %v8051 = vadd.f32 0.0, %v8050
        %v8052 = vpop.f32.mrf.mxu0
        %v8053 = vpop.f32.mrf.mxu0
        %v8054 = vadd.f32 0.0, %v8053
        %v8055 = vpop.f32.mrf.mxu0
        %8056 = vmatprep.mubr.bf16.mxu0 0
        %8057 = vmatmul.mubr.bf16.gmra.mxu0 %v7899
        %v8058 = vpop.f32.mrf.mxu0
        %v8059 = vadd.f32 0.0, %v8058
        %v8060 = vpop.f32.mrf.mxu0
        %v8061 = vpop.f32.mrf.mxu0
        %v8062 = vadd.f32 0.0, %v8061
        %v8063 = vpop.f32.mrf.mxu0
        %8064 = vmatprep.mubr.bf16.mxu0 0
        %8065 = vmatmul.mubr.bf16.gmra.mxu0 %v7900
        %v8066 = vpop.f32.mrf.mxu0
        %v8067 = vadd.f32 0.0, %v8066
        %v8068 = vpop.f32.mrf.mxu0
        %v8069 = vpop.f32.mrf.mxu0
        %v8070 = vadd.f32 0.0, %v8069
        %v8071 = vpop.f32.mrf.mxu0
        %8072 = vmatprep.mubr.bf16.mxu0 0
        %8073 = vmatmul.mubr.bf16.gmra.mxu0 %v7901
        %v8074 = vpop.f32.mrf.mxu0
        %v8075 = vadd.f32 0.0, %v8074
        %v8076 = vpop.f32.mrf.mxu0
        %v8077 = vpop.f32.mrf.mxu0
        %v8078 = vadd.f32 0.0, %v8077
        %v8079 = vpop.f32.mrf.mxu0
        %8080 = vmatprep.mubr.bf16.mxu0 0
        %8081 = vmatmul.mubr.bf16.gmra.mxu0 %v7902
        %v8082 = vpop.f32.mrf.mxu0
        %v8083 = vadd.f32 0.0, %v8082
        %v8084 = vpop.f32.mrf.mxu0
        %v8085 = vpop.f32.mrf.mxu0
        %v8086 = vadd.f32 0.0, %v8085
        %v8087 = vpop.f32.mrf.mxu0
        %8088 = vmatprep.mubr.bf16.mxu0 0
        %8089 = vmatmul.mubr.bf16.gmra.mxu0 %v7903
        %v8090 = vpop.f32.mrf.mxu0
        %v8091 = vadd.f32 0.0, %v8090
        %v8092 = vpop.f32.mrf.mxu0
        %v8093 = vpop.f32.mrf.mxu0
        %v8094 = vadd.f32 0.0, %v8093
        %v8095 = vpop.f32.mrf.mxu0
        %8096 = vmatprep.mubr.bf16.mxu0 0
        %8097 = vmatmul.mubr.bf16.gmra.mxu0 %v7904
        %v8098 = vpop.f32.mrf.mxu0
        %v8099 = vadd.f32 0.0, %v8098
        %v8100 = vpop.f32.mrf.mxu0
        %v8101 = vpop.f32.mrf.mxu0
        %v8102 = vadd.f32 0.0, %v8101
        %v8103 = vpop.f32.mrf.mxu0
        %8104 = vmatprep.mubr.bf16.mxu0 0
        %8105 = vmatmul.mubr.bf16.gmra.mxu0 %v7905
        %v8106 = vpop.f32.mrf.mxu0
        %v8107 = vadd.f32 0.0, %v8106
        %v8108 = vpop.f32.mrf.mxu0
        %v8109 = vpop.f32.mrf.mxu0
        %v8110 = vadd.f32 0.0, %v8109
        %v8111 = vpop.f32.mrf.mxu0
        %8112 = vmatprep.mubr.bf16.mxu0 0
        %8113 = vmatmul.mubr.bf16.gmra.mxu0 %v7906
        %v8114 = vpop.f32.mrf.mxu0
        %v8115 = vadd.f32 0.0, %v8114
        %v8116 = vpop.f32.mrf.mxu0
        %v8117 = vpop.f32.mrf.mxu0
        %v8118 = vadd.f32 0.0, %v8117
        %v8119 = vpop.f32.mrf.mxu0
        %8120 = vmatprep.mubr.bf16.mxu0 0
        %8121 = vmatmul.mubr.bf16.gmra.mxu0 %v7907
        %v8122 = vpop.f32.mrf.mxu0
        %v8123 = vadd.f32 0.0, %v8122
        %v8124 = vpop.f32.mrf.mxu0
        %v8125 = vpop.f32.mrf.mxu0
        %v8126 = vadd.f32 0.0, %v8125
        %v8127 = vpop.f32.mrf.mxu0
        %8128 = vmatprep.mubr.bf16.mxu0 0
        %8129 = vmatmul.mubr.bf16.gmra.mxu0 %v7908
        %v8130 = vpop.f32.mrf.mxu0
        %v8131 = vadd.f32 0.0, %v8130
        %v8132 = vpop.f32.mrf.mxu0
        %v8133 = vpop.f32.mrf.mxu0
        %v8134 = vadd.f32 0.0, %v8133
        %v8135 = vpop.f32.mrf.mxu0
        %8136 = vmatprep.mubr.bf16.mxu0 0
        %8137 = vmatmul.mubr.bf16.gmra.mxu0 %v7909
        %v8138 = vpop.f32.mrf.mxu0
        %v8139 = vadd.f32 0.0, %v8138
        %v8140 = vpop.f32.mrf.mxu0
        %v8141 = vpop.f32.mrf.mxu0
        %v8142 = vadd.f32 0.0, %v8141
        %v8143 = vpop.f32.mrf.mxu0
        %8144 = vmatprep.mubr.bf16.mxu0 0
        %8145 = vmatmul.mubr.bf16.gmra.mxu0 %v7910
        %v8146 = vpop.f32.mrf.mxu0
        %v8147 = vadd.f32 0.0, %v8146
        %v8148 = vpop.f32.mrf.mxu0
        %v8149 = vpop.f32.mrf.mxu0
        %v8150 = vadd.f32 0.0, %v8149
        %v8151 = vpop.f32.mrf.mxu0
        %8152 = vmatprep.mubr.bf16.mxu0 0
        %8153 = vmatmul.mubr.bf16.gmra.mxu0 %v7911
        %v8154 = vpop.f32.mrf.mxu0
        %v8155 = vadd.f32 0.0, %v8154
        %v8156 = vpop.f32.mrf.mxu0
        %v8157 = vpop.f32.mrf.mxu0
        %v8158 = vadd.f32 0.0, %v8157
        %v8159 = vpop.f32.mrf.mxu0
        %8160 = vmatprep.mubr.bf16.mxu0 0
        %8161 = vmatmul.mubr.bf16.gmra.mxu0 %v7912
        %v8162 = vpop.f32.mrf.mxu0
        %v8163 = vadd.f32 0.0, %v8162
        %v8164 = vpop.f32.mrf.mxu0
        %v8165 = vpop.f32.mrf.mxu0
        %v8166 = vadd.f32 0.0, %v8165
        %v8167 = vpop.f32.mrf.mxu0
        %8168 = vmatprep.mubr.bf16.mxu0 0
        %8169 = vmatmul.mubr.bf16.gmra.mxu0 %v7913
        %v8170 = vpop.f32.mrf.mxu0
        %v8171 = vadd.f32 0.0, %v8170
        %v8172 = vpop.f32.mrf.mxu0
        %v8173 = vpop.f32.mrf.mxu0
        %v8174 = vadd.f32 0.0, %v8173
        %v8175 = vpop.f32.mrf.mxu0
        %8176 = vmatprep.mubr.bf16.mxu0 0
        %8177 = vmatmul.mubr.bf16.gmra.mxu0 %v7914
        %v8178 = vpop.f32.mrf.mxu0
        %v8179 = vadd.f32 0.0, %v8178
        %v8180 = vpop.f32.mrf.mxu0
        %v8181 = vpop.f32.mrf.mxu0
        %v8182 = vadd.f32 0.0, %v8181
        %v8183 = vpop.f32.mrf.mxu0
        %8184 = vdwg.mxu0
        %v8185 = vadd.f32 %v7835, %v8019
        %v8186 = vadd.f32 %v7836, %v8022
        %v8187 = vadd.f32 %v7837, %v8027
        %v8188 = vadd.f32 %v7838, %v8030
        %v8189 = vadd.f32 %v7839, %v8035
        %v8190 = vadd.f32 %v7840, %v8038
        %v8191 = vadd.f32 %v7841, %v8043
        %v8192 = vadd.f32 %v7842, %v8046
        %v8193 = vadd.f32 %v7843, %v8051
        %v8194 = vadd.f32 %v7844, %v8054
        %v8195 = vadd.f32 %v7845, %v8059
        %v8196 = vadd.f32 %v7846, %v8062
        %v8197 = vadd.f32 %v7847, %v8067
        %v8198 = vadd.f32 %v7848, %v8070
        %v8199 = vadd.f32 %v7849, %v8075
        %v8200 = vadd.f32 %v7850, %v8078
        %v8201 = vadd.f32 %v7851, %v8083
        %v8202 = vadd.f32 %v7852, %v8086
        %v8203 = vadd.f32 %v7853, %v8091
        %v8204 = vadd.f32 %v7854, %v8094
        %v8205 = vadd.f32 %v7855, %v8099
        %v8206 = vadd.f32 %v7856, %v8102
        %v8207 = vadd.f32 %v7857, %v8107
        %v8208 = vadd.f32 %v7858, %v8110
        %v8209 = vadd.f32 %v7859, %v8115
        %v8210 = vadd.f32 %v7860, %v8118
        %v8211 = vadd.f32 %v7861, %v8123
        %v8212 = vadd.f32 %v7862, %v8126
        %v8213 = vadd.f32 %v7863, %v8131
        %v8214 = vadd.f32 %v7864, %v8134
        %v8215 = vadd.f32 %v7865, %v8139
        %v8216 = vadd.f32 %v7866, %v8142
        %v8217 = vadd.f32 %v7867, %v8147
        %v8218 = vadd.f32 %v7868, %v8150
        %v8219 = vadd.f32 %v7869, %v8155
        %v8220 = vadd.f32 %v7870, %v8158
        %v8221 = vadd.f32 %v7871, %v8163
        %v8222 = vadd.f32 %v7872, %v8166
        %v8223 = vadd.f32 %v7873, %v8171
        %v8224 = vadd.f32 %v7874, %v8174
        %v8225 = vadd.f32 %v7875, %v8179
        %v8226 = vadd.f32 %v7876, %v8182
        %v8227 = vld [vmem:[#allocation2 + $0x10] sm:$0xf]
        %v8228 = vld [vmem:[#allocation2 + $0x14] sm:$0xf]
        %v8229 = vld [vmem:[#allocation2 + $0x18] sm:$0xf]
        %v8230 = vld [vmem:[#allocation2 + $0x1c] sm:$0xf]
        %v8231 = vld [vmem:[#allocation2 + $0x20] sm:$0xf]
        %v8232 = vld [vmem:[#allocation2 + $0x24] sm:$0xf]
        %v8233 = vld [vmem:[#allocation2 + $0x28] sm:$0xf]
        %v8234 = vld [vmem:[#allocation2 + $0x2c] sm:$0xf]
        %v8235 = vld [vmem:[#allocation2 + $0x30] sm:$0xf]
        %v8236 = vld [vmem:[#allocation2 + $0x34] sm:$0xf]
        %v8237 = vld [vmem:[#allocation2 + $0x38] sm:$0xf]
        %v8238 = vld [vmem:[#allocation2 + $0x3c] sm:$0xf]
        %v8239 = vld [vmem:[#allocation2 + $0x40] sm:$0xf]
        %v8240 = vld [vmem:[#allocation2 + $0x44] sm:$0xf]
        %v8241 = vld [vmem:[#allocation2 + $0x48] sm:$0xf]
        %v8242 = vld [vmem:[#allocation2 + $0x4c] sm:$0xf]
        %v8243 = vld [vmem:[#allocation2 + $0x50] sm:$0xf]
        %v8244 = vld [vmem:[#allocation2 + $0x54] sm:$0xf]
        %v8245 = vld [vmem:[#allocation2 + $0x58] sm:$0xf]
        %v8246 = vld [vmem:[#allocation2 + $0x5c] sm:$0xf]
        %v8247 = vld [vmem:[#allocation2 + $0x60] sm:$0xf]
        %v8248 = vld [vmem:[#allocation2 + $0x64] sm:$0xf]
        %v8249 = vld [vmem:[#allocation2 + $0x68] sm:$0xf]
        %v8250 = vld [vmem:[#allocation2 + $0x6c] sm:$0xf]
        %v8251 = vld [vmem:[#allocation2 + $0x70] sm:$0xf]
        %v8252 = vld [vmem:[#allocation2 + $0x74] sm:$0xf]
        %v8253 = vld [vmem:[#allocation2 + $0x78] sm:$0xf]
        %v8254 = vld [vmem:[#allocation2 + $0x7c] sm:$0xf]
        %v8255 = vld [vmem:[#allocation2 + $0x80] sm:$0xf]
        %v8256 = vld [vmem:[#allocation2 + $0x84] sm:$0xf]
        %v8257 = vld [vmem:[#allocation2 + $0x88] sm:$0xf]
        %v8258 = vld [vmem:[#allocation2 + $0x8c] sm:$0xf]
        %v8259 = vld [vmem:[#allocation2 + $0x90] sm:$0xf]
        %v8260 = vld [vmem:[#allocation2 + $0x94] sm:$0xf]
        %v8261 = vld [vmem:[#allocation2 + $0x98] sm:$0xf]
        %v8262 = vld [vmem:[#allocation2 + $0x9c] sm:$0xf]
        %v8263 = vld [vmem:[#allocation2 + $0xa0] sm:$0xf]
        %v8264 = vld [vmem:[#allocation2 + $0xa4] sm:$0xf]
        %v8265 = vld [vmem:[#allocation2 + $0xa8] sm:$0xf]
        %v8266 = vld [vmem:[#allocation2 + $0xac] sm:$0xf]
        %v8267 = vld [vmem:[#allocation2 + $0xb0] sm:$0xf]
        %v8268 = vld [vmem:[#allocation2 + $0xb4] sm:$0xf]
        %v8269 = vld [vmem:[#allocation2 + $0xb8] sm:$0x1]
        %s8270 = scalar_lea.vmem %s4, 320
        %v8271 = vld [vmem:[%s8270] sm:$0xf]
        %v8272 = vld [vmem:[%s8270 + $0x4] sm:$0xf]
        %v8273 = vld [vmem:[%s8270 + $0x8] sm:$0xf]
        %v8274 = vld [vmem:[%s8270 + $0xc] sm:$0xf]
        %v8275 = vld [vmem:[%s8270 + $0x10] sm:$0xf]
        %v8276 = vld [vmem:[%s8270 + $0x14] sm:$0xf]
        %v8277 = vld [vmem:[%s8270 + $0x18] sm:$0xf]
        %v8278 = vld [vmem:[%s8270 + $0x1c] sm:$0xf]
        %v8279 = vld [vmem:[%s8270 + $0x20] sm:$0xf]
        %v8280 = vld [vmem:[%s8270 + $0x24] sm:$0xf]
        %v8281 = vld [vmem:[%s8270 + $0x28] sm:$0xf]
        %v8282 = vld [vmem:[%s8270 + $0x2c] sm:$0xf]
        %v8283 = vld [vmem:[%s8270 + $0x30] sm:$0xf]
        %v8284 = vld [vmem:[%s8270 + $0x34] sm:$0xf]
        %v8285 = vld [vmem:[%s8270 + $0x38] sm:$0xf]
        %v8286 = vld [vmem:[%s8270 + $0x3c] sm:$0xf]
        %v8330 = vunpack.c.l.b16 %v8227
        %v8331 = vunpack.c.l.b16 %v8228
        %v8332 = vunpack.c.l.b16 %v8229
        %v8333 = vunpack.c.l.b16 %v8230
        %v8334 = vunpack.c.l.b16 %v8231
        %v8335 = vunpack.c.l.b16 %v8232
        %v8336 = vunpack.c.l.b16 %v8233
        %v8337 = vunpack.c.l.b16 %v8234
        %v8338 = vunpack.c.l.b16 %v8235
        %v8339 = vunpack.c.l.b16 %v8236
        %v8340 = vunpack.c.l.b16 %v8237
        %v8341 = vunpack.c.l.b16 %v8238
        %v8342 = vunpack.c.l.b16 %v8239
        %v8343 = vunpack.c.l.b16 %v8240
        %v8344 = vunpack.c.l.b16 %v8241
        %v8345 = vunpack.c.l.b16 %v8242
        %v8346 = vunpack.c.l.b16 %v8243
        %v8347 = vunpack.c.l.b16 %v8244
        %v8348 = vunpack.c.l.b16 %v8245
        %v8349 = vunpack.c.l.b16 %v8246
        %v8350 = vunpack.c.l.b16 %v8247
        %v8351 = vunpack.c.l.b16 %v8248
        %v8352 = vunpack.c.l.b16 %v8249
        %v8353 = vunpack.c.l.b16 %v8250
        %v8354 = vunpack.c.l.b16 %v8251
        %v8355 = vunpack.c.l.b16 %v8252
        %v8356 = vunpack.c.l.b16 %v8253
        %v8357 = vunpack.c.l.b16 %v8254
        %v8358 = vunpack.c.l.b16 %v8255
        %v8359 = vunpack.c.l.b16 %v8256
        %v8360 = vunpack.c.l.b16 %v8257
        %v8361 = vunpack.c.l.b16 %v8258
        %v8362 = vunpack.c.l.b16 %v8259
        %v8363 = vunpack.c.l.b16 %v8260
        %v8364 = vunpack.c.l.b16 %v8261
        %v8365 = vunpack.c.l.b16 %v8262
        %v8366 = vunpack.c.l.b16 %v8263
        %v8367 = vunpack.c.l.b16 %v8264
        %v8368 = vunpack.c.l.b16 %v8265
        %v8369 = vunpack.c.l.b16 %v8266
        %v8370 = vunpack.c.l.b16 %v8267
        %v8371 = vunpack.c.l.b16 %v8268
        %v8372 = vunpack.c.l.b16 %v8269
        %v8373 = vpack.c.b16 %v8331, %v8330
        %v8374 = vpack.c.b16 %v8333, %v8332
        %v8375 = vpack.c.b16 %v8335, %v8334
        %v8376 = vpack.c.b16 %v8337, %v8336
        %v8377 = vpack.c.b16 %v8339, %v8338
        %v8378 = vpack.c.b16 %v8341, %v8340
        %v8379 = vpack.c.b16 %v8343, %v8342
        %v8380 = vpack.c.b16 %v8345, %v8344
        %v8381 = vpack.c.b16 %v8347, %v8346
        %v8382 = vpack.c.b16 %v8349, %v8348
        %v8383 = vpack.c.b16 %v8351, %v8350
        %v8384 = vpack.c.b16 %v8353, %v8352
        %v8385 = vpack.c.b16 %v8355, %v8354
        %v8386 = vpack.c.b16 %v8357, %v8356
        %v8387 = vpack.c.b16 %v8359, %v8358
        %v8388 = vpack.c.b16 %v8361, %v8360
        %v8389 = vpack.c.b16 %v8363, %v8362
        %v8390 = vpack.c.b16 %v8365, %v8364
        %v8391 = vpack.c.b16 %v8367, %v8366
        %v8392 = vpack.c.b16 %v8369, %v8368
        %v8393 = vpack.c.b16 %v8371, %v8370
        %v8394 = vpack.c.b16 %v8372, %v8372
        %v8396 = vshrl.u32 %v8373, 16
        %v8398 = vshll.u32 %v8373, 16
        %v8400 = vrot.slane %v8398, 1
        %v8401 = vor.u32 %v8396, %v8400
        %v8403 = vshll.u32 %v8374, 16
        %v8405 = vrot.slane %v8403, 1
        %v8406 = vsel %vm3039, %v8401, %v8405
        %v8407 = vshrl.u32 %v8374, 16
        %v8409 = vor.u32 %v8407, %v8405
        %v8411 = vshll.u32 %v8375, 16
        %v8413 = vrot.slane %v8411, 1
        %v8414 = vsel %vm3039, %v8409, %v8413
        %v8415 = vshrl.u32 %v8375, 16
        %v8417 = vor.u32 %v8415, %v8413
        %v8419 = vshll.u32 %v8376, 16
        %v8421 = vrot.slane %v8419, 1
        %v8422 = vsel %vm3039, %v8417, %v8421
        %v8423 = vshrl.u32 %v8376, 16
        %v8425 = vor.u32 %v8423, %v8421
        %v8427 = vshll.u32 %v8377, 16
        %v8429 = vrot.slane %v8427, 1
        %v8430 = vsel %vm3039, %v8425, %v8429
        %v8431 = vshrl.u32 %v8377, 16
        %v8433 = vor.u32 %v8431, %v8429
        %v8435 = vshll.u32 %v8378, 16
        %v8437 = vrot.slane %v8435, 1
        %v8438 = vsel %vm3039, %v8433, %v8437
        %v8439 = vshrl.u32 %v8378, 16
        %v8441 = vor.u32 %v8439, %v8437
        %v8443 = vshll.u32 %v8379, 16
        %v8445 = vrot.slane %v8443, 1
        %v8446 = vsel %vm3039, %v8441, %v8445
        %v8447 = vshrl.u32 %v8379, 16
        %v8449 = vor.u32 %v8447, %v8445
        %v8451 = vshll.u32 %v8380, 16
        %v8453 = vrot.slane %v8451, 1
        %v8454 = vsel %vm3039, %v8449, %v8453
        %v8455 = vshrl.u32 %v8380, 16
        %v8457 = vor.u32 %v8455, %v8453
        %v8459 = vshll.u32 %v8381, 16
        %v8461 = vrot.slane %v8459, 1
        %v8462 = vsel %vm3039, %v8457, %v8461
        %v8463 = vshrl.u32 %v8381, 16
        %v8465 = vor.u32 %v8463, %v8461
        %v8467 = vshll.u32 %v8382, 16
        %v8469 = vrot.slane %v8467, 1
        %v8470 = vsel %vm3039, %v8465, %v8469
        %v8471 = vshrl.u32 %v8382, 16
        %v8473 = vor.u32 %v8471, %v8469
        %v8475 = vshll.u32 %v8383, 16
        %v8477 = vrot.slane %v8475, 1
        %v8478 = vsel %vm3039, %v8473, %v8477
        %v8479 = vshrl.u32 %v8383, 16
        %v8481 = vor.u32 %v8479, %v8477
        %v8483 = vshll.u32 %v8384, 16
        %v8485 = vrot.slane %v8483, 1
        %v8486 = vsel %vm3039, %v8481, %v8485
        %v8487 = vshrl.u32 %v8384, 16
        %v8489 = vor.u32 %v8487, %v8485
        %v8491 = vshll.u32 %v8385, 16
        %v8493 = vrot.slane %v8491, 1
        %v8494 = vsel %vm3039, %v8489, %v8493
        %v8495 = vshrl.u32 %v8385, 16
        %v8497 = vor.u32 %v8495, %v8493
        %v8499 = vshll.u32 %v8386, 16
        %v8501 = vrot.slane %v8499, 1
        %v8502 = vsel %vm3039, %v8497, %v8501
        %v8503 = vshrl.u32 %v8386, 16
        %v8505 = vor.u32 %v8503, %v8501
        %v8507 = vshll.u32 %v8387, 16
        %v8509 = vrot.slane %v8507, 1
        %v8510 = vsel %vm3039, %v8505, %v8509
        %v8511 = vshrl.u32 %v8387, 16
        %v8513 = vor.u32 %v8511, %v8509
        %v8515 = vshll.u32 %v8388, 16
        %v8517 = vrot.slane %v8515, 1
        %v8518 = vsel %vm3039, %v8513, %v8517
        %v8519 = vshrl.u32 %v8388, 16
        %v8521 = vor.u32 %v8519, %v8517
        %v8523 = vshll.u32 %v8389, 16
        %v8525 = vrot.slane %v8523, 1
        %v8526 = vsel %vm3039, %v8521, %v8525
        %v8527 = vshrl.u32 %v8389, 16
        %v8529 = vor.u32 %v8527, %v8525
        %v8531 = vshll.u32 %v8390, 16
        %v8533 = vrot.slane %v8531, 1
        %v8534 = vsel %vm3039, %v8529, %v8533
        %v8535 = vshrl.u32 %v8390, 16
        %v8537 = vor.u32 %v8535, %v8533
        %v8539 = vshll.u32 %v8391, 16
        %v8541 = vrot.slane %v8539, 1
        %v8542 = vsel %vm3039, %v8537, %v8541
        %v8543 = vshrl.u32 %v8391, 16
        %v8545 = vor.u32 %v8543, %v8541
        %v8547 = vshll.u32 %v8392, 16
        %v8549 = vrot.slane %v8547, 1
        %v8550 = vsel %vm3039, %v8545, %v8549
        %v8551 = vshrl.u32 %v8392, 16
        %v8553 = vor.u32 %v8551, %v8549
        %v8555 = vshll.u32 %v8393, 16
        %v8557 = vrot.slane %v8555, 1
        %v8558 = vsel %vm3039, %v8553, %v8557
        %v8559 = vshrl.u32 %v8393, 16
        %v8561 = vor.u32 %v8559, %v8557
        %v8563 = vshll.u32 %v8394, 16
        %v8565 = vrot.slane %v8563, 1
        %v8566 = vsel %vm3039, %v8561, %v8565
        %v8604 = vunpack.c.l.b16 %v8271
        %v8605 = vunpack.c.l.b16 %v8272
        %v8606 = vunpack.c.l.b16 %v8273
        %v8607 = vunpack.c.l.b16 %v8274
        %v8608 = vunpack.c.l.b16 %v8275
        %v8609 = vunpack.c.l.b16 %v8276
        %v8610 = vunpack.c.l.b16 %v8277
        %v8611 = vunpack.c.l.b16 %v8278
        %v8612 = vunpack.c.l.b16 %v8279
        %v8613 = vunpack.c.l.b16 %v8280
        %v8614 = vunpack.c.l.b16 %v8281
        %v8615 = vunpack.c.l.b16 %v8282
        %v8616 = vunpack.c.l.b16 %v8283
        %v8617 = vunpack.c.l.b16 %v8284
        %v8618 = vunpack.c.l.b16 %v8285
        %v8619 = vunpack.c.l.b16 %v8286
        %v8620 = vpack.c.b16 %v8605, %v8604
        %v8621 = vpack.c.b16 %v8607, %v8606
        %v8622 = vpack.c.b16 %v8609, %v8608
        %v8623 = vpack.c.b16 %v8611, %v8610
        %v8624 = vpack.c.b16 %v8613, %v8612
        %v8625 = vpack.c.b16 %v8615, %v8614
        %v8626 = vpack.c.b16 %v8617, %v8616
        %v8627 = vpack.c.b16 %v8619, %v8618
        %8636 = vmatprep.subr.bf16.mxu0 0
        %8637 = vmatpush1.bf16.msra.mxu0 %v8627
        %8638 = vmatprep.subr.bf16.mxu0 0
        %8639 = vmatpush1.bf16.msra.mxu0 %v8626
        %8640 = vmatprep.subr.bf16.mxu0 0
        %8641 = vmatpush1.bf16.msra.mxu0 %v8625
        %8642 = vmatprep.subr.bf16.mxu0 0
        %8643 = vmatpush1.bf16.msra.mxu0 %v8624
        %8644 = vmatprep.subr.bf16.mxu0 0
        %8645 = vmatpush1.bf16.msra.mxu0 %v8623
        %8646 = vmatprep.subr.bf16.mxu0 0
        %8647 = vmatpush1.bf16.msra.mxu0 %v8622
        %8648 = vmatprep.subr.bf16.mxu0 0
        %8649 = vmatpush1.bf16.msra.mxu0 %v8621
        %8650 = vmatprep.subr.bf16.mxu0 0
        %8651 = vmatpush1.bf16.msra.mxu0 %v8620
        %8652 = vmatprep.subr.bf16.mxu0 0
        %8653 = vmatpush2.bf16.msra.mxu0 0
        %8654 = vmatprep.subr.bf16.mxu0 0
        %8655 = vmatpush2.bf16.msra.mxu0 0
        %8656 = vmatprep.subr.bf16.mxu0 0
        %8657 = vmatpush2.bf16.msra.mxu0 0
        %8658 = vmatprep.subr.bf16.mxu0 0
        %8659 = vmatpush2.bf16.msra.mxu0 0
        %8660 = vmatprep.subr.bf16.mxu0 0
        %8661 = vmatpush2.bf16.msra.mxu0 0
        %8662 = vmatprep.subr.bf16.mxu0 0
        %8663 = vmatpush2.bf16.msra.mxu0 0
        %8664 = vmatprep.subr.bf16.mxu0 0
        %8665 = vmatpush2.bf16.msra.mxu0 0
        %8666 = vmatprep.subr.bf16.mxu0 0
        %8667 = vmatpush2.bf16.msra.mxu0 0
        %8668 = vmatprep.mubr.bf16.mxu0 0
        %8669 = vmatmul.mubr.bf16.gmra.mxu0 %v8406
        %v8670 = vpop.f32.mrf.mxu0
        %v8671 = vadd.f32 0.0, %v8670
        %v8672 = vpop.f32.mrf.mxu0
        %v8673 = vpop.f32.mrf.mxu0
        %v8674 = vadd.f32 0.0, %v8673
        %v8675 = vpop.f32.mrf.mxu0
        %8676 = vmatprep.mubr.bf16.mxu0 0
        %8677 = vmatmul.mubr.bf16.gmra.mxu0 %v8414
        %v8678 = vpop.f32.mrf.mxu0
        %v8679 = vadd.f32 0.0, %v8678
        %v8680 = vpop.f32.mrf.mxu0
        %v8681 = vpop.f32.mrf.mxu0
        %v8682 = vadd.f32 0.0, %v8681
        %v8683 = vpop.f32.mrf.mxu0
        %8684 = vmatprep.mubr.bf16.mxu0 0
        %8685 = vmatmul.mubr.bf16.gmra.mxu0 %v8422
        %v8686 = vpop.f32.mrf.mxu0
        %v8687 = vadd.f32 0.0, %v8686
        %v8688 = vpop.f32.mrf.mxu0
        %v8689 = vpop.f32.mrf.mxu0
        %v8690 = vadd.f32 0.0, %v8689
        %v8691 = vpop.f32.mrf.mxu0
        %8692 = vmatprep.mubr.bf16.mxu0 0
        %8693 = vmatmul.mubr.bf16.gmra.mxu0 %v8430
        %v8694 = vpop.f32.mrf.mxu0
        %v8695 = vadd.f32 0.0, %v8694
        %v8696 = vpop.f32.mrf.mxu0
        %v8697 = vpop.f32.mrf.mxu0
        %v8698 = vadd.f32 0.0, %v8697
        %v8699 = vpop.f32.mrf.mxu0
        %8700 = vmatprep.mubr.bf16.mxu0 0
        %8701 = vmatmul.mubr.bf16.gmra.mxu0 %v8438
        %v8702 = vpop.f32.mrf.mxu0
        %v8703 = vadd.f32 0.0, %v8702
        %v8704 = vpop.f32.mrf.mxu0
        %v8705 = vpop.f32.mrf.mxu0
        %v8706 = vadd.f32 0.0, %v8705
        %v8707 = vpop.f32.mrf.mxu0
        %8708 = vmatprep.mubr.bf16.mxu0 0
        %8709 = vmatmul.mubr.bf16.gmra.mxu0 %v8446
        %v8710 = vpop.f32.mrf.mxu0
        %v8711 = vadd.f32 0.0, %v8710
        %v8712 = vpop.f32.mrf.mxu0
        %v8713 = vpop.f32.mrf.mxu0
        %v8714 = vadd.f32 0.0, %v8713
        %v8715 = vpop.f32.mrf.mxu0
        %8716 = vmatprep.mubr.bf16.mxu0 0
        %8717 = vmatmul.mubr.bf16.gmra.mxu0 %v8454
        %v8718 = vpop.f32.mrf.mxu0
        %v8719 = vadd.f32 0.0, %v8718
        %v8720 = vpop.f32.mrf.mxu0
        %v8721 = vpop.f32.mrf.mxu0
        %v8722 = vadd.f32 0.0, %v8721
        %v8723 = vpop.f32.mrf.mxu0
        %8724 = vmatprep.mubr.bf16.mxu0 0
        %8725 = vmatmul.mubr.bf16.gmra.mxu0 %v8462
        %v8726 = vpop.f32.mrf.mxu0
        %v8727 = vadd.f32 0.0, %v8726
        %v8728 = vpop.f32.mrf.mxu0
        %v8729 = vpop.f32.mrf.mxu0
        %v8730 = vadd.f32 0.0, %v8729
        %v8731 = vpop.f32.mrf.mxu0
        %8732 = vmatprep.mubr.bf16.mxu0 0
        %8733 = vmatmul.mubr.bf16.gmra.mxu0 %v8470
        %v8734 = vpop.f32.mrf.mxu0
        %v8735 = vadd.f32 0.0, %v8734
        %v8736 = vpop.f32.mrf.mxu0
        %v8737 = vpop.f32.mrf.mxu0
        %v8738 = vadd.f32 0.0, %v8737
        %v8739 = vpop.f32.mrf.mxu0
        %8740 = vmatprep.mubr.bf16.mxu0 0
        %8741 = vmatmul.mubr.bf16.gmra.mxu0 %v8478
        %v8742 = vpop.f32.mrf.mxu0
        %v8743 = vadd.f32 0.0, %v8742
        %v8744 = vpop.f32.mrf.mxu0
        %v8745 = vpop.f32.mrf.mxu0
        %v8746 = vadd.f32 0.0, %v8745
        %v8747 = vpop.f32.mrf.mxu0
        %8748 = vmatprep.mubr.bf16.mxu0 0
        %8749 = vmatmul.mubr.bf16.gmra.mxu0 %v8486
        %v8750 = vpop.f32.mrf.mxu0
        %v8751 = vadd.f32 0.0, %v8750
        %v8752 = vpop.f32.mrf.mxu0
        %v8753 = vpop.f32.mrf.mxu0
        %v8754 = vadd.f32 0.0, %v8753
        %v8755 = vpop.f32.mrf.mxu0
        %8756 = vmatprep.mubr.bf16.mxu0 0
        %8757 = vmatmul.mubr.bf16.gmra.mxu0 %v8494
        %v8758 = vpop.f32.mrf.mxu0
        %v8759 = vadd.f32 0.0, %v8758
        %v8760 = vpop.f32.mrf.mxu0
        %v8761 = vpop.f32.mrf.mxu0
        %v8762 = vadd.f32 0.0, %v8761
        %v8763 = vpop.f32.mrf.mxu0
        %8764 = vmatprep.mubr.bf16.mxu0 0
        %8765 = vmatmul.mubr.bf16.gmra.mxu0 %v8502
        %v8766 = vpop.f32.mrf.mxu0
        %v8767 = vadd.f32 0.0, %v8766
        %v8768 = vpop.f32.mrf.mxu0
        %v8769 = vpop.f32.mrf.mxu0
        %v8770 = vadd.f32 0.0, %v8769
        %v8771 = vpop.f32.mrf.mxu0
        %8772 = vmatprep.mubr.bf16.mxu0 0
        %8773 = vmatmul.mubr.bf16.gmra.mxu0 %v8510
        %v8774 = vpop.f32.mrf.mxu0
        %v8775 = vadd.f32 0.0, %v8774
        %v8776 = vpop.f32.mrf.mxu0
        %v8777 = vpop.f32.mrf.mxu0
        %v8778 = vadd.f32 0.0, %v8777
        %v8779 = vpop.f32.mrf.mxu0
        %8780 = vmatprep.mubr.bf16.mxu0 0
        %8781 = vmatmul.mubr.bf16.gmra.mxu0 %v8518
        %v8782 = vpop.f32.mrf.mxu0
        %v8783 = vadd.f32 0.0, %v8782
        %v8784 = vpop.f32.mrf.mxu0
        %v8785 = vpop.f32.mrf.mxu0
        %v8786 = vadd.f32 0.0, %v8785
        %v8787 = vpop.f32.mrf.mxu0
        %8788 = vmatprep.mubr.bf16.mxu0 0
        %8789 = vmatmul.mubr.bf16.gmra.mxu0 %v8526
        %v8790 = vpop.f32.mrf.mxu0
        %v8791 = vadd.f32 0.0, %v8790
        %v8792 = vpop.f32.mrf.mxu0
        %v8793 = vpop.f32.mrf.mxu0
        %v8794 = vadd.f32 0.0, %v8793
        %v8795 = vpop.f32.mrf.mxu0
        %8796 = vmatprep.mubr.bf16.mxu0 0
        %8797 = vmatmul.mubr.bf16.gmra.mxu0 %v8534
        %v8798 = vpop.f32.mrf.mxu0
        %v8799 = vadd.f32 0.0, %v8798
        %v8800 = vpop.f32.mrf.mxu0
        %v8801 = vpop.f32.mrf.mxu0
        %v8802 = vadd.f32 0.0, %v8801
        %v8803 = vpop.f32.mrf.mxu0
        %8804 = vmatprep.mubr.bf16.mxu0 0
        %8805 = vmatmul.mubr.bf16.gmra.mxu0 %v8542
        %v8806 = vpop.f32.mrf.mxu0
        %v8807 = vadd.f32 0.0, %v8806
        %v8808 = vpop.f32.mrf.mxu0
        %v8809 = vpop.f32.mrf.mxu0
        %v8810 = vadd.f32 0.0, %v8809
        %v8811 = vpop.f32.mrf.mxu0
        %8812 = vmatprep.mubr.bf16.mxu0 0
        %8813 = vmatmul.mubr.bf16.gmra.mxu0 %v8550
        %v8814 = vpop.f32.mrf.mxu0
        %v8815 = vadd.f32 0.0, %v8814
        %v8816 = vpop.f32.mrf.mxu0
        %v8817 = vpop.f32.mrf.mxu0
        %v8818 = vadd.f32 0.0, %v8817
        %v8819 = vpop.f32.mrf.mxu0
        %8820 = vmatprep.mubr.bf16.mxu0 0
        %8821 = vmatmul.mubr.bf16.gmra.mxu0 %v8558
        %v8822 = vpop.f32.mrf.mxu0
        %v8823 = vadd.f32 0.0, %v8822
        %v8824 = vpop.f32.mrf.mxu0
        %v8825 = vpop.f32.mrf.mxu0
        %v8826 = vadd.f32 0.0, %v8825
        %v8827 = vpop.f32.mrf.mxu0
        %8828 = vmatprep.mubr.bf16.mxu0 0
        %8829 = vmatmul.mubr.bf16.gmra.mxu0 %v8566
        %v8830 = vpop.f32.mrf.mxu0
        %v8831 = vadd.f32 0.0, %v8830
        %v8832 = vpop.f32.mrf.mxu0
        %v8833 = vpop.f32.mrf.mxu0
        %v8834 = vadd.f32 0.0, %v8833
        %v8835 = vpop.f32.mrf.mxu0
        %8836 = vdwg.mxu0
        %v8837 = vadd.f32 %v8185, %v8671
        %v8838 = vadd.f32 %v8186, %v8674
        %v8839 = vadd.f32 %v8187, %v8679
        %v8840 = vadd.f32 %v8188, %v8682
        %v8841 = vadd.f32 %v8189, %v8687
        %v8842 = vadd.f32 %v8190, %v8690
        %v8843 = vadd.f32 %v8191, %v8695
        %v8844 = vadd.f32 %v8192, %v8698
        %v8845 = vadd.f32 %v8193, %v8703
        %v8846 = vadd.f32 %v8194, %v8706
        %v8847 = vadd.f32 %v8195, %v8711
        %v8848 = vadd.f32 %v8196, %v8714
        %v8849 = vadd.f32 %v8197, %v8719
        %v8850 = vadd.f32 %v8198, %v8722
        %v8851 = vadd.f32 %v8199, %v8727
        %v8852 = vadd.f32 %v8200, %v8730
        %v8853 = vadd.f32 %v8201, %v8735
        %v8854 = vadd.f32 %v8202, %v8738
        %v8855 = vadd.f32 %v8203, %v8743
        %v8856 = vadd.f32 %v8204, %v8746
        %v8857 = vadd.f32 %v8205, %v8751
        %v8858 = vadd.f32 %v8206, %v8754
        %v8859 = vadd.f32 %v8207, %v8759
        %v8860 = vadd.f32 %v8208, %v8762
        %v8861 = vadd.f32 %v8209, %v8767
        %v8862 = vadd.f32 %v8210, %v8770
        %v8863 = vadd.f32 %v8211, %v8775
        %v8864 = vadd.f32 %v8212, %v8778
        %v8865 = vadd.f32 %v8213, %v8783
        %v8866 = vadd.f32 %v8214, %v8786
        %v8867 = vadd.f32 %v8215, %v8791
        %v8868 = vadd.f32 %v8216, %v8794
        %v8869 = vadd.f32 %v8217, %v8799
        %v8870 = vadd.f32 %v8218, %v8802
        %v8871 = vadd.f32 %v8219, %v8807
        %v8872 = vadd.f32 %v8220, %v8810
        %v8873 = vadd.f32 %v8221, %v8815
        %v8874 = vadd.f32 %v8222, %v8818
        %v8875 = vadd.f32 %v8223, %v8823
        %v8876 = vadd.f32 %v8224, %v8826
        %v8877 = vadd.f32 %v8225, %v8831
        %v8878 = vadd.f32 %v8226, %v8834
        %v8879 = vld [vmem:[#allocation2 + $0x18] sm:$0xf]
        %v8880 = vld [vmem:[#allocation2 + $0x1c] sm:$0xf]
        %v8881 = vld [vmem:[#allocation2 + $0x20] sm:$0xf]
        %v8882 = vld [vmem:[#allocation2 + $0x24] sm:$0xf]
        %v8883 = vld [vmem:[#allocation2 + $0x28] sm:$0xf]
        %v8884 = vld [vmem:[#allocation2 + $0x2c] sm:$0xf]
        %v8885 = vld [vmem:[#allocation2 + $0x30] sm:$0xf]
        %v8886 = vld [vmem:[#allocation2 + $0x34] sm:$0xf]
        %v8887 = vld [vmem:[#allocation2 + $0x38] sm:$0xf]
        %v8888 = vld [vmem:[#allocation2 + $0x3c] sm:$0xf]
        %v8889 = vld [vmem:[#allocation2 + $0x40] sm:$0xf]
        %v8890 = vld [vmem:[#allocation2 + $0x44] sm:$0xf]
        %v8891 = vld [vmem:[#allocation2 + $0x48] sm:$0xf]
        %v8892 = vld [vmem:[#allocation2 + $0x4c] sm:$0xf]
        %v8893 = vld [vmem:[#allocation2 + $0x50] sm:$0xf]
        %v8894 = vld [vmem:[#allocation2 + $0x54] sm:$0xf]
        %v8895 = vld [vmem:[#allocation2 + $0x58] sm:$0xf]
        %v8896 = vld [vmem:[#allocation2 + $0x5c] sm:$0xf]
        %v8897 = vld [vmem:[#allocation2 + $0x60] sm:$0xf]
        %v8898 = vld [vmem:[#allocation2 + $0x64] sm:$0xf]
        %v8899 = vld [vmem:[#allocation2 + $0x68] sm:$0xf]
        %v8900 = vld [vmem:[#allocation2 + $0x6c] sm:$0xf]
        %v8901 = vld [vmem:[#allocation2 + $0x70] sm:$0xf]
        %v8902 = vld [vmem:[#allocation2 + $0x74] sm:$0xf]
        %v8903 = vld [vmem:[#allocation2 + $0x78] sm:$0xf]
        %v8904 = vld [vmem:[#allocation2 + $0x7c] sm:$0xf]
        %v8905 = vld [vmem:[#allocation2 + $0x80] sm:$0xf]
        %v8906 = vld [vmem:[#allocation2 + $0x84] sm:$0xf]
        %v8907 = vld [vmem:[#allocation2 + $0x88] sm:$0xf]
        %v8908 = vld [vmem:[#allocation2 + $0x8c] sm:$0xf]
        %v8909 = vld [vmem:[#allocation2 + $0x90] sm:$0xf]
        %v8910 = vld [vmem:[#allocation2 + $0x94] sm:$0xf]
        %v8911 = vld [vmem:[#allocation2 + $0x98] sm:$0xf]
        %v8912 = vld [vmem:[#allocation2 + $0x9c] sm:$0xf]
        %v8913 = vld [vmem:[#allocation2 + $0xa0] sm:$0xf]
        %v8914 = vld [vmem:[#allocation2 + $0xa4] sm:$0xf]
        %v8915 = vld [vmem:[#allocation2 + $0xa8] sm:$0xf]
        %v8916 = vld [vmem:[#allocation2 + $0xac] sm:$0xf]
        %v8917 = vld [vmem:[#allocation2 + $0xb0] sm:$0xf]
        %v8918 = vld [vmem:[#allocation2 + $0xb4] sm:$0xf]
        %v8919 = vld [vmem:[#allocation2 + $0xb8] sm:$0xf]
        %v8920 = vld [vmem:[#allocation2 + $0xbc] sm:$0xf]
        %v8921 = vld [vmem:[#allocation2 + $0xc0] sm:$0x1]
        %s8922 = scalar_lea.vmem %s4, 384
        %v8923 = vld [vmem:[%s8922] sm:$0xf]
        %v8924 = vld [vmem:[%s8922 + $0x4] sm:$0xf]
        %v8925 = vld [vmem:[%s8922 + $0x8] sm:$0xf]
        %v8926 = vld [vmem:[%s8922 + $0xc] sm:$0xf]
        %v8927 = vld [vmem:[%s8922 + $0x10] sm:$0xf]
        %v8928 = vld [vmem:[%s8922 + $0x14] sm:$0xf]
        %v8929 = vld [vmem:[%s8922 + $0x18] sm:$0xf]
        %v8930 = vld [vmem:[%s8922 + $0x1c] sm:$0xf]
        %v8931 = vld [vmem:[%s8922 + $0x20] sm:$0xf]
        %v8932 = vld [vmem:[%s8922 + $0x24] sm:$0xf]
        %v8933 = vld [vmem:[%s8922 + $0x28] sm:$0xf]
        %v8934 = vld [vmem:[%s8922 + $0x2c] sm:$0xf]
        %v8935 = vld [vmem:[%s8922 + $0x30] sm:$0xf]
        %v8936 = vld [vmem:[%s8922 + $0x34] sm:$0xf]
        %v8937 = vld [vmem:[%s8922 + $0x38] sm:$0xf]
        %v8938 = vld [vmem:[%s8922 + $0x3c] sm:$0xf]
        %v8982 = vunpack.c.l.b16 %v8879
        %v8983 = vunpack.c.l.b16 %v8880
        %v8984 = vunpack.c.l.b16 %v8881
        %v8985 = vunpack.c.l.b16 %v8882
        %v8986 = vunpack.c.l.b16 %v8883
        %v8987 = vunpack.c.l.b16 %v8884
        %v8988 = vunpack.c.l.b16 %v8885
        %v8989 = vunpack.c.l.b16 %v8886
        %v8990 = vunpack.c.l.b16 %v8887
        %v8991 = vunpack.c.l.b16 %v8888
        %v8992 = vunpack.c.l.b16 %v8889
        %v8993 = vunpack.c.l.b16 %v8890
        %v8994 = vunpack.c.l.b16 %v8891
        %v8995 = vunpack.c.l.b16 %v8892
        %v8996 = vunpack.c.l.b16 %v8893
        %v8997 = vunpack.c.l.b16 %v8894
        %v8998 = vunpack.c.l.b16 %v8895
        %v8999 = vunpack.c.l.b16 %v8896
        %v9000 = vunpack.c.l.b16 %v8897
        %v9001 = vunpack.c.l.b16 %v8898
        %v9002 = vunpack.c.l.b16 %v8899
        %v9003 = vunpack.c.l.b16 %v8900
        %v9004 = vunpack.c.l.b16 %v8901
        %v9005 = vunpack.c.l.b16 %v8902
        %v9006 = vunpack.c.l.b16 %v8903
        %v9007 = vunpack.c.l.b16 %v8904
        %v9008 = vunpack.c.l.b16 %v8905
        %v9009 = vunpack.c.l.b16 %v8906
        %v9010 = vunpack.c.l.b16 %v8907
        %v9011 = vunpack.c.l.b16 %v8908
        %v9012 = vunpack.c.l.b16 %v8909
        %v9013 = vunpack.c.l.b16 %v8910
        %v9014 = vunpack.c.l.b16 %v8911
        %v9015 = vunpack.c.l.b16 %v8912
        %v9016 = vunpack.c.l.b16 %v8913
        %v9017 = vunpack.c.l.b16 %v8914
        %v9018 = vunpack.c.l.b16 %v8915
        %v9019 = vunpack.c.l.b16 %v8916
        %v9020 = vunpack.c.l.b16 %v8917
        %v9021 = vunpack.c.l.b16 %v8918
        %v9022 = vunpack.c.l.b16 %v8919
        %v9023 = vunpack.c.l.b16 %v8920
        %v9024 = vunpack.c.l.b16 %v8921
        %v9025 = vpack.c.b16 %v8983, %v8982
        %v9026 = vpack.c.b16 %v8985, %v8984
        %v9027 = vpack.c.b16 %v8987, %v8986
        %v9028 = vpack.c.b16 %v8989, %v8988
        %v9029 = vpack.c.b16 %v8991, %v8990
        %v9030 = vpack.c.b16 %v8993, %v8992
        %v9031 = vpack.c.b16 %v8995, %v8994
        %v9032 = vpack.c.b16 %v8997, %v8996
        %v9033 = vpack.c.b16 %v8999, %v8998
        %v9034 = vpack.c.b16 %v9001, %v9000
        %v9035 = vpack.c.b16 %v9003, %v9002
        %v9036 = vpack.c.b16 %v9005, %v9004
        %v9037 = vpack.c.b16 %v9007, %v9006
        %v9038 = vpack.c.b16 %v9009, %v9008
        %v9039 = vpack.c.b16 %v9011, %v9010
        %v9040 = vpack.c.b16 %v9013, %v9012
        %v9041 = vpack.c.b16 %v9015, %v9014
        %v9042 = vpack.c.b16 %v9017, %v9016
        %v9043 = vpack.c.b16 %v9019, %v9018
        %v9044 = vpack.c.b16 %v9021, %v9020
        %v9045 = vpack.c.b16 %v9023, %v9022
        %v9046 = vpack.c.b16 %v9024, %v9024
        %v9048 = vshrl.u32 %v9025, 16
        %v9050 = vshll.u32 %v9025, 16
        %v9052 = vrot.slane %v9050, 1
        %v9053 = vor.u32 %v9048, %v9052
        %v9055 = vshll.u32 %v9026, 16
        %v9057 = vrot.slane %v9055, 1
        %v9058 = vsel %vm3039, %v9053, %v9057
        %v9059 = vshrl.u32 %v9026, 16
        %v9061 = vor.u32 %v9059, %v9057
        %v9063 = vshll.u32 %v9027, 16
        %v9065 = vrot.slane %v9063, 1
        %v9066 = vsel %vm3039, %v9061, %v9065
        %v9067 = vshrl.u32 %v9027, 16
        %v9069 = vor.u32 %v9067, %v9065
        %v9071 = vshll.u32 %v9028, 16
        %v9073 = vrot.slane %v9071, 1
        %v9074 = vsel %vm3039, %v9069, %v9073
        %v9075 = vshrl.u32 %v9028, 16
        %v9077 = vor.u32 %v9075, %v9073
        %v9079 = vshll.u32 %v9029, 16
        %v9081 = vrot.slane %v9079, 1
        %v9082 = vsel %vm3039, %v9077, %v9081
        %v9083 = vshrl.u32 %v9029, 16
        %v9085 = vor.u32 %v9083, %v9081
        %v9087 = vshll.u32 %v9030, 16
        %v9089 = vrot.slane %v9087, 1
        %v9090 = vsel %vm3039, %v9085, %v9089
        %v9091 = vshrl.u32 %v9030, 16
        %v9093 = vor.u32 %v9091, %v9089
        %v9095 = vshll.u32 %v9031, 16
        %v9097 = vrot.slane %v9095, 1
        %v9098 = vsel %vm3039, %v9093, %v9097
        %v9099 = vshrl.u32 %v9031, 16
        %v9101 = vor.u32 %v9099, %v9097
        %v9103 = vshll.u32 %v9032, 16
        %v9105 = vrot.slane %v9103, 1
        %v9106 = vsel %vm3039, %v9101, %v9105
        %v9107 = vshrl.u32 %v9032, 16
        %v9109 = vor.u32 %v9107, %v9105
        %v9111 = vshll.u32 %v9033, 16
        %v9113 = vrot.slane %v9111, 1
        %v9114 = vsel %vm3039, %v9109, %v9113
        %v9115 = vshrl.u32 %v9033, 16
        %v9117 = vor.u32 %v9115, %v9113
        %v9119 = vshll.u32 %v9034, 16
        %v9121 = vrot.slane %v9119, 1
        %v9122 = vsel %vm3039, %v9117, %v9121
        %v9123 = vshrl.u32 %v9034, 16
        %v9125 = vor.u32 %v9123, %v9121
        %v9127 = vshll.u32 %v9035, 16
        %v9129 = vrot.slane %v9127, 1
        %v9130 = vsel %vm3039, %v9125, %v9129
        %v9131 = vshrl.u32 %v9035, 16
        %v9133 = vor.u32 %v9131, %v9129
        %v9135 = vshll.u32 %v9036, 16
        %v9137 = vrot.slane %v9135, 1
        %v9138 = vsel %vm3039, %v9133, %v9137
        %v9139 = vshrl.u32 %v9036, 16
        %v9141 = vor.u32 %v9139, %v9137
        %v9143 = vshll.u32 %v9037, 16
        %v9145 = vrot.slane %v9143, 1
        %v9146 = vsel %vm3039, %v9141, %v9145
        %v9147 = vshrl.u32 %v9037, 16
        %v9149 = vor.u32 %v9147, %v9145
        %v9151 = vshll.u32 %v9038, 16
        %v9153 = vrot.slane %v9151, 1
        %v9154 = vsel %vm3039, %v9149, %v9153
        %v9155 = vshrl.u32 %v9038, 16
        %v9157 = vor.u32 %v9155, %v9153
        %v9159 = vshll.u32 %v9039, 16
        %v9161 = vrot.slane %v9159, 1
        %v9162 = vsel %vm3039, %v9157, %v9161
        %v9163 = vshrl.u32 %v9039, 16
        %v9165 = vor.u32 %v9163, %v9161
        %v9167 = vshll.u32 %v9040, 16
        %v9169 = vrot.slane %v9167, 1
        %v9170 = vsel %vm3039, %v9165, %v9169
        %v9171 = vshrl.u32 %v9040, 16
        %v9173 = vor.u32 %v9171, %v9169
        %v9175 = vshll.u32 %v9041, 16
        %v9177 = vrot.slane %v9175, 1
        %v9178 = vsel %vm3039, %v9173, %v9177
        %v9179 = vshrl.u32 %v9041, 16
        %v9181 = vor.u32 %v9179, %v9177
        %v9183 = vshll.u32 %v9042, 16
        %v9185 = vrot.slane %v9183, 1
        %v9186 = vsel %vm3039, %v9181, %v9185
        %v9187 = vshrl.u32 %v9042, 16
        %v9189 = vor.u32 %v9187, %v9185
        %v9191 = vshll.u32 %v9043, 16
        %v9193 = vrot.slane %v9191, 1
        %v9194 = vsel %vm3039, %v9189, %v9193
        %v9195 = vshrl.u32 %v9043, 16
        %v9197 = vor.u32 %v9195, %v9193
        %v9199 = vshll.u32 %v9044, 16
        %v9201 = vrot.slane %v9199, 1
        %v9202 = vsel %vm3039, %v9197, %v9201
        %v9203 = vshrl.u32 %v9044, 16
        %v9205 = vor.u32 %v9203, %v9201
        %v9207 = vshll.u32 %v9045, 16
        %v9209 = vrot.slane %v9207, 1
        %v9210 = vsel %vm3039, %v9205, %v9209
        %v9211 = vshrl.u32 %v9045, 16
        %v9213 = vor.u32 %v9211, %v9209
        %v9215 = vshll.u32 %v9046, 16
        %v9217 = vrot.slane %v9215, 1
        %v9218 = vsel %vm3039, %v9213, %v9217
        %v9256 = vunpack.c.l.b16 %v8923
        %v9257 = vunpack.c.l.b16 %v8924
        %v9258 = vunpack.c.l.b16 %v8925
        %v9259 = vunpack.c.l.b16 %v8926
        %v9260 = vunpack.c.l.b16 %v8927
        %v9261 = vunpack.c.l.b16 %v8928
        %v9262 = vunpack.c.l.b16 %v8929
        %v9263 = vunpack.c.l.b16 %v8930
        %v9264 = vunpack.c.l.b16 %v8931
        %v9265 = vunpack.c.l.b16 %v8932
        %v9266 = vunpack.c.l.b16 %v8933
        %v9267 = vunpack.c.l.b16 %v8934
        %v9268 = vunpack.c.l.b16 %v8935
        %v9269 = vunpack.c.l.b16 %v8936
        %v9270 = vunpack.c.l.b16 %v8937
        %v9271 = vunpack.c.l.b16 %v8938
        %v9272 = vpack.c.b16 %v9257, %v9256
        %v9273 = vpack.c.b16 %v9259, %v9258
        %v9274 = vpack.c.b16 %v9261, %v9260
        %v9275 = vpack.c.b16 %v9263, %v9262
        %v9276 = vpack.c.b16 %v9265, %v9264
        %v9277 = vpack.c.b16 %v9267, %v9266
        %v9278 = vpack.c.b16 %v9269, %v9268
        %v9279 = vpack.c.b16 %v9271, %v9270
        %9288 = vmatprep.subr.bf16.mxu0 0
        %9289 = vmatpush1.bf16.msra.mxu0 %v9279
        %9290 = vmatprep.subr.bf16.mxu0 0
        %9291 = vmatpush1.bf16.msra.mxu0 %v9278
        %9292 = vmatprep.subr.bf16.mxu0 0
        %9293 = vmatpush1.bf16.msra.mxu0 %v9277
        %9294 = vmatprep.subr.bf16.mxu0 0
        %9295 = vmatpush1.bf16.msra.mxu0 %v9276
        %9296 = vmatprep.subr.bf16.mxu0 0
        %9297 = vmatpush1.bf16.msra.mxu0 %v9275
        %9298 = vmatprep.subr.bf16.mxu0 0
        %9299 = vmatpush1.bf16.msra.mxu0 %v9274
        %9300 = vmatprep.subr.bf16.mxu0 0
        %9301 = vmatpush1.bf16.msra.mxu0 %v9273
        %9302 = vmatprep.subr.bf16.mxu0 0
        %9303 = vmatpush1.bf16.msra.mxu0 %v9272
        %9304 = vmatprep.subr.bf16.mxu0 0
        %9305 = vmatpush2.bf16.msra.mxu0 0
        %9306 = vmatprep.subr.bf16.mxu0 0
        %9307 = vmatpush2.bf16.msra.mxu0 0
        %9308 = vmatprep.subr.bf16.mxu0 0
        %9309 = vmatpush2.bf16.msra.mxu0 0
        %9310 = vmatprep.subr.bf16.mxu0 0
        %9311 = vmatpush2.bf16.msra.mxu0 0
        %9312 = vmatprep.subr.bf16.mxu0 0
        %9313 = vmatpush2.bf16.msra.mxu0 0
        %9314 = vmatprep.subr.bf16.mxu0 0
        %9315 = vmatpush2.bf16.msra.mxu0 0
        %9316 = vmatprep.subr.bf16.mxu0 0
        %9317 = vmatpush2.bf16.msra.mxu0 0
        %9318 = vmatprep.subr.bf16.mxu0 0
        %9319 = vmatpush2.bf16.msra.mxu0 0
        %9320 = vmatprep.mubr.bf16.mxu0 0
        %9321 = vmatmul.mubr.bf16.gmra.mxu0 %v9058
        %v9322 = vpop.f32.mrf.mxu0
        %v9323 = vadd.f32 0.0, %v9322
        %v9324 = vpop.f32.mrf.mxu0
        %v9325 = vpop.f32.mrf.mxu0
        %v9326 = vadd.f32 0.0, %v9325
        %v9327 = vpop.f32.mrf.mxu0
        %9328 = vmatprep.mubr.bf16.mxu0 0
        %9329 = vmatmul.mubr.bf16.gmra.mxu0 %v9066
        %v9330 = vpop.f32.mrf.mxu0
        %v9331 = vadd.f32 0.0, %v9330
        %v9332 = vpop.f32.mrf.mxu0
        %v9333 = vpop.f32.mrf.mxu0
        %v9334 = vadd.f32 0.0, %v9333
        %v9335 = vpop.f32.mrf.mxu0
        %9336 = vmatprep.mubr.bf16.mxu0 0
        %9337 = vmatmul.mubr.bf16.gmra.mxu0 %v9074
        %v9338 = vpop.f32.mrf.mxu0
        %v9339 = vadd.f32 0.0, %v9338
        %v9340 = vpop.f32.mrf.mxu0
        %v9341 = vpop.f32.mrf.mxu0
        %v9342 = vadd.f32 0.0, %v9341
        %v9343 = vpop.f32.mrf.mxu0
        %9344 = vmatprep.mubr.bf16.mxu0 0
        %9345 = vmatmul.mubr.bf16.gmra.mxu0 %v9082
        %v9346 = vpop.f32.mrf.mxu0
        %v9347 = vadd.f32 0.0, %v9346
        %v9348 = vpop.f32.mrf.mxu0
        %v9349 = vpop.f32.mrf.mxu0
        %v9350 = vadd.f32 0.0, %v9349
        %v9351 = vpop.f32.mrf.mxu0
        %9352 = vmatprep.mubr.bf16.mxu0 0
        %9353 = vmatmul.mubr.bf16.gmra.mxu0 %v9090
        %v9354 = vpop.f32.mrf.mxu0
        %v9355 = vadd.f32 0.0, %v9354
        %v9356 = vpop.f32.mrf.mxu0
        %v9357 = vpop.f32.mrf.mxu0
        %v9358 = vadd.f32 0.0, %v9357
        %v9359 = vpop.f32.mrf.mxu0
        %9360 = vmatprep.mubr.bf16.mxu0 0
        %9361 = vmatmul.mubr.bf16.gmra.mxu0 %v9098
        %v9362 = vpop.f32.mrf.mxu0
        %v9363 = vadd.f32 0.0, %v9362
        %v9364 = vpop.f32.mrf.mxu0
        %v9365 = vpop.f32.mrf.mxu0
        %v9366 = vadd.f32 0.0, %v9365
        %v9367 = vpop.f32.mrf.mxu0
        %9368 = vmatprep.mubr.bf16.mxu0 0
        %9369 = vmatmul.mubr.bf16.gmra.mxu0 %v9106
        %v9370 = vpop.f32.mrf.mxu0
        %v9371 = vadd.f32 0.0, %v9370
        %v9372 = vpop.f32.mrf.mxu0
        %v9373 = vpop.f32.mrf.mxu0
        %v9374 = vadd.f32 0.0, %v9373
        %v9375 = vpop.f32.mrf.mxu0
        %9376 = vmatprep.mubr.bf16.mxu0 0
        %9377 = vmatmul.mubr.bf16.gmra.mxu0 %v9114
        %v9378 = vpop.f32.mrf.mxu0
        %v9379 = vadd.f32 0.0, %v9378
        %v9380 = vpop.f32.mrf.mxu0
        %v9381 = vpop.f32.mrf.mxu0
        %v9382 = vadd.f32 0.0, %v9381
        %v9383 = vpop.f32.mrf.mxu0
        %9384 = vmatprep.mubr.bf16.mxu0 0
        %9385 = vmatmul.mubr.bf16.gmra.mxu0 %v9122
        %v9386 = vpop.f32.mrf.mxu0
        %v9387 = vadd.f32 0.0, %v9386
        %v9388 = vpop.f32.mrf.mxu0
        %v9389 = vpop.f32.mrf.mxu0
        %v9390 = vadd.f32 0.0, %v9389
        %v9391 = vpop.f32.mrf.mxu0
        %9392 = vmatprep.mubr.bf16.mxu0 0
        %9393 = vmatmul.mubr.bf16.gmra.mxu0 %v9130
        %v9394 = vpop.f32.mrf.mxu0
        %v9395 = vadd.f32 0.0, %v9394
        %v9396 = vpop.f32.mrf.mxu0
        %v9397 = vpop.f32.mrf.mxu0
        %v9398 = vadd.f32 0.0, %v9397
        %v9399 = vpop.f32.mrf.mxu0
        %9400 = vmatprep.mubr.bf16.mxu0 0
        %9401 = vmatmul.mubr.bf16.gmra.mxu0 %v9138
        %v9402 = vpop.f32.mrf.mxu0
        %v9403 = vadd.f32 0.0, %v9402
        %v9404 = vpop.f32.mrf.mxu0
        %v9405 = vpop.f32.mrf.mxu0
        %v9406 = vadd.f32 0.0, %v9405
        %v9407 = vpop.f32.mrf.mxu0
        %9408 = vmatprep.mubr.bf16.mxu0 0
        %9409 = vmatmul.mubr.bf16.gmra.mxu0 %v9146
        %v9410 = vpop.f32.mrf.mxu0
        %v9411 = vadd.f32 0.0, %v9410
        %v9412 = vpop.f32.mrf.mxu0
        %v9413 = vpop.f32.mrf.mxu0
        %v9414 = vadd.f32 0.0, %v9413
        %v9415 = vpop.f32.mrf.mxu0
        %9416 = vmatprep.mubr.bf16.mxu0 0
        %9417 = vmatmul.mubr.bf16.gmra.mxu0 %v9154
        %v9418 = vpop.f32.mrf.mxu0
        %v9419 = vadd.f32 0.0, %v9418
        %v9420 = vpop.f32.mrf.mxu0
        %v9421 = vpop.f32.mrf.mxu0
        %v9422 = vadd.f32 0.0, %v9421
        %v9423 = vpop.f32.mrf.mxu0
        %9424 = vmatprep.mubr.bf16.mxu0 0
        %9425 = vmatmul.mubr.bf16.gmra.mxu0 %v9162
        %v9426 = vpop.f32.mrf.mxu0
        %v9427 = vadd.f32 0.0, %v9426
        %v9428 = vpop.f32.mrf.mxu0
        %v9429 = vpop.f32.mrf.mxu0
        %v9430 = vadd.f32 0.0, %v9429
        %v9431 = vpop.f32.mrf.mxu0
        %9432 = vmatprep.mubr.bf16.mxu0 0
        %9433 = vmatmul.mubr.bf16.gmra.mxu0 %v9170
        %v9434 = vpop.f32.mrf.mxu0
        %v9435 = vadd.f32 0.0, %v9434
        %v9436 = vpop.f32.mrf.mxu0
        %v9437 = vpop.f32.mrf.mxu0
        %v9438 = vadd.f32 0.0, %v9437
        %v9439 = vpop.f32.mrf.mxu0
        %9440 = vmatprep.mubr.bf16.mxu0 0
        %9441 = vmatmul.mubr.bf16.gmra.mxu0 %v9178
        %v9442 = vpop.f32.mrf.mxu0
        %v9443 = vadd.f32 0.0, %v9442
        %v9444 = vpop.f32.mrf.mxu0
        %v9445 = vpop.f32.mrf.mxu0
        %v9446 = vadd.f32 0.0, %v9445
        %v9447 = vpop.f32.mrf.mxu0
        %9448 = vmatprep.mubr.bf16.mxu0 0
        %9449 = vmatmul.mubr.bf16.gmra.mxu0 %v9186
        %v9450 = vpop.f32.mrf.mxu0
        %v9451 = vadd.f32 0.0, %v9450
        %v9452 = vpop.f32.mrf.mxu0
        %v9453 = vpop.f32.mrf.mxu0
        %v9454 = vadd.f32 0.0, %v9453
        %v9455 = vpop.f32.mrf.mxu0
        %9456 = vmatprep.mubr.bf16.mxu0 0
        %9457 = vmatmul.mubr.bf16.gmra.mxu0 %v9194
        %v9458 = vpop.f32.mrf.mxu0
        %v9459 = vadd.f32 0.0, %v9458
        %v9460 = vpop.f32.mrf.mxu0
        %v9461 = vpop.f32.mrf.mxu0
        %v9462 = vadd.f32 0.0, %v9461
        %v9463 = vpop.f32.mrf.mxu0
        %9464 = vmatprep.mubr.bf16.mxu0 0
        %9465 = vmatmul.mubr.bf16.gmra.mxu0 %v9202
        %v9466 = vpop.f32.mrf.mxu0
        %v9467 = vadd.f32 0.0, %v9466
        %v9468 = vpop.f32.mrf.mxu0
        %v9469 = vpop.f32.mrf.mxu0
        %v9470 = vadd.f32 0.0, %v9469
        %v9471 = vpop.f32.mrf.mxu0
        %9472 = vmatprep.mubr.bf16.mxu0 0
        %9473 = vmatmul.mubr.bf16.gmra.mxu0 %v9210
        %v9474 = vpop.f32.mrf.mxu0
        %v9475 = vadd.f32 0.0, %v9474
        %v9476 = vpop.f32.mrf.mxu0
        %v9477 = vpop.f32.mrf.mxu0
        %v9478 = vadd.f32 0.0, %v9477
        %v9479 = vpop.f32.mrf.mxu0
        %9480 = vmatprep.mubr.bf16.mxu0 0
        %9481 = vmatmul.mubr.bf16.gmra.mxu0 %v9218
        %v9482 = vpop.f32.mrf.mxu0
        %v9483 = vadd.f32 0.0, %v9482
        %v9484 = vpop.f32.mrf.mxu0
        %v9485 = vpop.f32.mrf.mxu0
        %v9486 = vadd.f32 0.0, %v9485
        %v9487 = vpop.f32.mrf.mxu0
        %9488 = vdwg.mxu0
        %v9489 = vadd.f32 %v8837, %v9323
        %v9490 = vadd.f32 %v8838, %v9326
        %v9491 = vadd.f32 %v8839, %v9331
        %v9492 = vadd.f32 %v8840, %v9334
        %v9493 = vadd.f32 %v8841, %v9339
        %v9494 = vadd.f32 %v8842, %v9342
        %v9495 = vadd.f32 %v8843, %v9347
        %v9496 = vadd.f32 %v8844, %v9350
        %v9497 = vadd.f32 %v8845, %v9355
        %v9498 = vadd.f32 %v8846, %v9358
        %v9499 = vadd.f32 %v8847, %v9363
        %v9500 = vadd.f32 %v8848, %v9366
        %v9501 = vadd.f32 %v8849, %v9371
        %v9502 = vadd.f32 %v8850, %v9374
        %v9503 = vadd.f32 %v8851, %v9379
        %v9504 = vadd.f32 %v8852, %v9382
        %v9505 = vadd.f32 %v8853, %v9387
        %v9506 = vadd.f32 %v8854, %v9390
        %v9507 = vadd.f32 %v8855, %v9395
        %v9508 = vadd.f32 %v8856, %v9398
        %v9509 = vadd.f32 %v8857, %v9403
        %v9510 = vadd.f32 %v8858, %v9406
        %v9511 = vadd.f32 %v8859, %v9411
        %v9512 = vadd.f32 %v8860, %v9414
        %v9513 = vadd.f32 %v8861, %v9419
        %v9514 = vadd.f32 %v8862, %v9422
        %v9515 = vadd.f32 %v8863, %v9427
        %v9516 = vadd.f32 %v8864, %v9430
        %v9517 = vadd.f32 %v8865, %v9435
        %v9518 = vadd.f32 %v8866, %v9438
        %v9519 = vadd.f32 %v8867, %v9443
        %v9520 = vadd.f32 %v8868, %v9446
        %v9521 = vadd.f32 %v8869, %v9451
        %v9522 = vadd.f32 %v8870, %v9454
        %v9523 = vadd.f32 %v8871, %v9459
        %v9524 = vadd.f32 %v8872, %v9462
        %v9525 = vadd.f32 %v8873, %v9467
        %v9526 = vadd.f32 %v8874, %v9470
        %v9527 = vadd.f32 %v8875, %v9475
        %v9528 = vadd.f32 %v8876, %v9478
        %v9529 = vadd.f32 %v8877, %v9483
        %v9530 = vadd.f32 %v8878, %v9486
        %v9531 = vld [vmem:[#allocation2 + $0x18] sm:$0xe]
        %s9532 = scalar_lea.vmem %s4, 448
        %v9533 = vld [vmem:[%s9532] sm:$0xf]
        %v9534 = vld [vmem:[%s9532 + $0x4] sm:$0xf]
        %v9535 = vld [vmem:[%s9532 + $0x8] sm:$0xf]
        %v9536 = vld [vmem:[%s9532 + $0xc] sm:$0xf]
        %v9537 = vld [vmem:[%s9532 + $0x10] sm:$0xf]
        %v9538 = vld [vmem:[%s9532 + $0x14] sm:$0xf]
        %v9539 = vld [vmem:[%s9532 + $0x18] sm:$0xf]
        %v9540 = vld [vmem:[%s9532 + $0x1c] sm:$0xf]
        %v9541 = vld [vmem:[%s9532 + $0x20] sm:$0xf]
        %v9542 = vld [vmem:[%s9532 + $0x24] sm:$0xf]
        %v9543 = vld [vmem:[%s9532 + $0x28] sm:$0xf]
        %v9544 = vld [vmem:[%s9532 + $0x2c] sm:$0xf]
        %v9545 = vld [vmem:[%s9532 + $0x30] sm:$0xf]
        %v9546 = vld [vmem:[%s9532 + $0x34] sm:$0xf]
        %v9547 = vld [vmem:[%s9532 + $0x38] sm:$0xf]
        %v9548 = vld [vmem:[%s9532 + $0x3c] sm:$0xf]
        %v9550 = vunpack.c.l.b16 %v9531
        %v9551 = vpack.c.b16 %v8983, %v9550
        %v9552 = vrot.slane %v9551, 1
        %v9553 = vrot.slane %v9026, 1
        %v9554 = vsel %vm4161, %v9552, %v9553
        %v9555 = vrot.slane %v9027, 1
        %v9556 = vsel %vm4161, %v9553, %v9555
        %v9557 = vrot.slane %v9028, 1
        %v9558 = vsel %vm4161, %v9555, %v9557
        %v9559 = vrot.slane %v9029, 1
        %v9560 = vsel %vm4161, %v9557, %v9559
        %v9561 = vrot.slane %v9030, 1
        %v9562 = vsel %vm4161, %v9559, %v9561
        %v9563 = vrot.slane %v9031, 1
        %v9564 = vsel %vm4161, %v9561, %v9563
        %v9565 = vrot.slane %v9032, 1
        %v9566 = vsel %vm4161, %v9563, %v9565
        %v9567 = vrot.slane %v9033, 1
        %v9568 = vsel %vm4161, %v9565, %v9567
        %v9569 = vrot.slane %v9034, 1
        %v9570 = vsel %vm4161, %v9567, %v9569
        %v9571 = vrot.slane %v9035, 1
        %v9572 = vsel %vm4161, %v9569, %v9571
        %v9573 = vrot.slane %v9036, 1
        %v9574 = vsel %vm4161, %v9571, %v9573
        %v9575 = vrot.slane %v9037, 1
        %v9576 = vsel %vm4161, %v9573, %v9575
        %v9577 = vrot.slane %v9038, 1
        %v9578 = vsel %vm4161, %v9575, %v9577
        %v9579 = vrot.slane %v9039, 1
        %v9580 = vsel %vm4161, %v9577, %v9579
        %v9581 = vrot.slane %v9040, 1
        %v9582 = vsel %vm4161, %v9579, %v9581
        %v9583 = vrot.slane %v9041, 1
        %v9584 = vsel %vm4161, %v9581, %v9583
        %v9585 = vrot.slane %v9042, 1
        %v9586 = vsel %vm4161, %v9583, %v9585
        %v9587 = vrot.slane %v9043, 1
        %v9588 = vsel %vm4161, %v9585, %v9587
        %v9589 = vrot.slane %v9044, 1
        %v9590 = vsel %vm4161, %v9587, %v9589
        %v9591 = vrot.slane %v9045, 1
        %v9592 = vsel %vm4161, %v9589, %v9591
        %v9593 = vrot.slane %v9046, 1
        %v9594 = vsel %vm4161, %v9591, %v9593
        %v9632 = vunpack.c.l.b16 %v9533
        %v9633 = vunpack.c.l.b16 %v9534
        %v9634 = vunpack.c.l.b16 %v9535
        %v9635 = vunpack.c.l.b16 %v9536
        %v9636 = vunpack.c.l.b16 %v9537
        %v9637 = vunpack.c.l.b16 %v9538
        %v9638 = vunpack.c.l.b16 %v9539
        %v9639 = vunpack.c.l.b16 %v9540
        %v9640 = vunpack.c.l.b16 %v9541
        %v9641 = vunpack.c.l.b16 %v9542
        %v9642 = vunpack.c.l.b16 %v9543
        %v9643 = vunpack.c.l.b16 %v9544
        %v9644 = vunpack.c.l.b16 %v9545
        %v9645 = vunpack.c.l.b16 %v9546
        %v9646 = vunpack.c.l.b16 %v9547
        %v9647 = vunpack.c.l.b16 %v9548
        %v9648 = vpack.c.b16 %v9633, %v9632
        %v9649 = vpack.c.b16 %v9635, %v9634
        %v9650 = vpack.c.b16 %v9637, %v9636
        %v9651 = vpack.c.b16 %v9639, %v9638
        %v9652 = vpack.c.b16 %v9641, %v9640
        %v9653 = vpack.c.b16 %v9643, %v9642
        %v9654 = vpack.c.b16 %v9645, %v9644
        %v9655 = vpack.c.b16 %v9647, %v9646
        %9664 = vmatprep.subr.bf16.mxu0 0
        %9665 = vmatpush1.bf16.msra.mxu0 %v9655
        %9666 = vmatprep.subr.bf16.mxu0 0
        %9667 = vmatpush1.bf16.msra.mxu0 %v9654
        %9668 = vmatprep.subr.bf16.mxu0 0
        %9669 = vmatpush1.bf16.msra.mxu0 %v9653
        %9670 = vmatprep.subr.bf16.mxu0 0
        %9671 = vmatpush1.bf16.msra.mxu0 %v9652
        %9672 = vmatprep.subr.bf16.mxu0 0
        %9673 = vmatpush1.bf16.msra.mxu0 %v9651
        %9674 = vmatprep.subr.bf16.mxu0 0
        %9675 = vmatpush1.bf16.msra.mxu0 %v9650
        %9676 = vmatprep.subr.bf16.mxu0 0
        %9677 = vmatpush1.bf16.msra.mxu0 %v9649
        %9678 = vmatprep.subr.bf16.mxu0 0
        %9679 = vmatpush1.bf16.msra.mxu0 %v9648
        %9680 = vmatprep.subr.bf16.mxu0 0
        %9681 = vmatpush2.bf16.msra.mxu0 0
        %9682 = vmatprep.subr.bf16.mxu0 0
        %9683 = vmatpush2.bf16.msra.mxu0 0
        %9684 = vmatprep.subr.bf16.mxu0 0
        %9685 = vmatpush2.bf16.msra.mxu0 0
        %9686 = vmatprep.subr.bf16.mxu0 0
        %9687 = vmatpush2.bf16.msra.mxu0 0
        %9688 = vmatprep.subr.bf16.mxu0 0
        %9689 = vmatpush2.bf16.msra.mxu0 0
        %9690 = vmatprep.subr.bf16.mxu0 0
        %9691 = vmatpush2.bf16.msra.mxu0 0
        %9692 = vmatprep.subr.bf16.mxu0 0
        %9693 = vmatpush2.bf16.msra.mxu0 0
        %9694 = vmatprep.subr.bf16.mxu0 0
        %9695 = vmatpush2.bf16.msra.mxu0 0
        %9696 = vmatprep.mubr.bf16.mxu0 0
        %9697 = vmatmul.mubr.bf16.gmra.mxu0 %v9554
        %v9698 = vpop.f32.mrf.mxu0
        %v9699 = vadd.f32 0.0, %v9698
        %v9700 = vpop.f32.mrf.mxu0
        %v9701 = vpop.f32.mrf.mxu0
        %v9702 = vadd.f32 0.0, %v9701
        %v9703 = vpop.f32.mrf.mxu0
        %9704 = vmatprep.mubr.bf16.mxu0 0
        %9705 = vmatmul.mubr.bf16.gmra.mxu0 %v9556
        %v9706 = vpop.f32.mrf.mxu0
        %v9707 = vadd.f32 0.0, %v9706
        %v9708 = vpop.f32.mrf.mxu0
        %v9709 = vpop.f32.mrf.mxu0
        %v9710 = vadd.f32 0.0, %v9709
        %v9711 = vpop.f32.mrf.mxu0
        %9712 = vmatprep.mubr.bf16.mxu0 0
        %9713 = vmatmul.mubr.bf16.gmra.mxu0 %v9558
        %v9714 = vpop.f32.mrf.mxu0
        %v9715 = vadd.f32 0.0, %v9714
        %v9716 = vpop.f32.mrf.mxu0
        %v9717 = vpop.f32.mrf.mxu0
        %v9718 = vadd.f32 0.0, %v9717
        %v9719 = vpop.f32.mrf.mxu0
        %9720 = vmatprep.mubr.bf16.mxu0 0
        %9721 = vmatmul.mubr.bf16.gmra.mxu0 %v9560
        %v9722 = vpop.f32.mrf.mxu0
        %v9723 = vadd.f32 0.0, %v9722
        %v9724 = vpop.f32.mrf.mxu0
        %v9725 = vpop.f32.mrf.mxu0
        %v9726 = vadd.f32 0.0, %v9725
        %v9727 = vpop.f32.mrf.mxu0
        %9728 = vmatprep.mubr.bf16.mxu0 0
        %9729 = vmatmul.mubr.bf16.gmra.mxu0 %v9562
        %v9730 = vpop.f32.mrf.mxu0
        %v9731 = vadd.f32 0.0, %v9730
        %v9732 = vpop.f32.mrf.mxu0
        %v9733 = vpop.f32.mrf.mxu0
        %v9734 = vadd.f32 0.0, %v9733
        %v9735 = vpop.f32.mrf.mxu0
        %9736 = vmatprep.mubr.bf16.mxu0 0
        %9737 = vmatmul.mubr.bf16.gmra.mxu0 %v9564
        %v9738 = vpop.f32.mrf.mxu0
        %v9739 = vadd.f32 0.0, %v9738
        %v9740 = vpop.f32.mrf.mxu0
        %v9741 = vpop.f32.mrf.mxu0
        %v9742 = vadd.f32 0.0, %v9741
        %v9743 = vpop.f32.mrf.mxu0
        %9744 = vmatprep.mubr.bf16.mxu0 0
        %9745 = vmatmul.mubr.bf16.gmra.mxu0 %v9566
        %v9746 = vpop.f32.mrf.mxu0
        %v9747 = vadd.f32 0.0, %v9746
        %v9748 = vpop.f32.mrf.mxu0
        %v9749 = vpop.f32.mrf.mxu0
        %v9750 = vadd.f32 0.0, %v9749
        %v9751 = vpop.f32.mrf.mxu0
        %9752 = vmatprep.mubr.bf16.mxu0 0
        %9753 = vmatmul.mubr.bf16.gmra.mxu0 %v9568
        %v9754 = vpop.f32.mrf.mxu0
        %v9755 = vadd.f32 0.0, %v9754
        %v9756 = vpop.f32.mrf.mxu0
        %v9757 = vpop.f32.mrf.mxu0
        %v9758 = vadd.f32 0.0, %v9757
        %v9759 = vpop.f32.mrf.mxu0
        %9760 = vmatprep.mubr.bf16.mxu0 0
        %9761 = vmatmul.mubr.bf16.gmra.mxu0 %v9570
        %v9762 = vpop.f32.mrf.mxu0
        %v9763 = vadd.f32 0.0, %v9762
        %v9764 = vpop.f32.mrf.mxu0
        %v9765 = vpop.f32.mrf.mxu0
        %v9766 = vadd.f32 0.0, %v9765
        %v9767 = vpop.f32.mrf.mxu0
        %9768 = vmatprep.mubr.bf16.mxu0 0
        %9769 = vmatmul.mubr.bf16.gmra.mxu0 %v9572
        %v9770 = vpop.f32.mrf.mxu0
        %v9771 = vadd.f32 0.0, %v9770
        %v9772 = vpop.f32.mrf.mxu0
        %v9773 = vpop.f32.mrf.mxu0
        %v9774 = vadd.f32 0.0, %v9773
        %v9775 = vpop.f32.mrf.mxu0
        %9776 = vmatprep.mubr.bf16.mxu0 0
        %9777 = vmatmul.mubr.bf16.gmra.mxu0 %v9574
        %v9778 = vpop.f32.mrf.mxu0
        %v9779 = vadd.f32 0.0, %v9778
        %v9780 = vpop.f32.mrf.mxu0
        %v9781 = vpop.f32.mrf.mxu0
        %v9782 = vadd.f32 0.0, %v9781
        %v9783 = vpop.f32.mrf.mxu0
        %9784 = vmatprep.mubr.bf16.mxu0 0
        %9785 = vmatmul.mubr.bf16.gmra.mxu0 %v9576
        %v9786 = vpop.f32.mrf.mxu0
        %v9787 = vadd.f32 0.0, %v9786
        %v9788 = vpop.f32.mrf.mxu0
        %v9789 = vpop.f32.mrf.mxu0
        %v9790 = vadd.f32 0.0, %v9789
        %v9791 = vpop.f32.mrf.mxu0
        %9792 = vmatprep.mubr.bf16.mxu0 0
        %9793 = vmatmul.mubr.bf16.gmra.mxu0 %v9578
        %v9794 = vpop.f32.mrf.mxu0
        %v9795 = vadd.f32 0.0, %v9794
        %v9796 = vpop.f32.mrf.mxu0
        %v9797 = vpop.f32.mrf.mxu0
        %v9798 = vadd.f32 0.0, %v9797
        %v9799 = vpop.f32.mrf.mxu0
        %9800 = vmatprep.mubr.bf16.mxu0 0
        %9801 = vmatmul.mubr.bf16.gmra.mxu0 %v9580
        %v9802 = vpop.f32.mrf.mxu0
        %v9803 = vadd.f32 0.0, %v9802
        %v9804 = vpop.f32.mrf.mxu0
        %v9805 = vpop.f32.mrf.mxu0
        %v9806 = vadd.f32 0.0, %v9805
        %v9807 = vpop.f32.mrf.mxu0
        %9808 = vmatprep.mubr.bf16.mxu0 0
        %9809 = vmatmul.mubr.bf16.gmra.mxu0 %v9582
        %v9810 = vpop.f32.mrf.mxu0
        %v9811 = vadd.f32 0.0, %v9810
        %v9812 = vpop.f32.mrf.mxu0
        %v9813 = vpop.f32.mrf.mxu0
        %v9814 = vadd.f32 0.0, %v9813
        %v9815 = vpop.f32.mrf.mxu0
        %9816 = vmatprep.mubr.bf16.mxu0 0
        %9817 = vmatmul.mubr.bf16.gmra.mxu0 %v9584
        %v9818 = vpop.f32.mrf.mxu0
        %v9819 = vadd.f32 0.0, %v9818
        %v9820 = vpop.f32.mrf.mxu0
        %v9821 = vpop.f32.mrf.mxu0
        %v9822 = vadd.f32 0.0, %v9821
        %v9823 = vpop.f32.mrf.mxu0
        %9824 = vmatprep.mubr.bf16.mxu0 0
        %9825 = vmatmul.mubr.bf16.gmra.mxu0 %v9586
        %v9826 = vpop.f32.mrf.mxu0
        %v9827 = vadd.f32 0.0, %v9826
        %v9828 = vpop.f32.mrf.mxu0
        %v9829 = vpop.f32.mrf.mxu0
        %v9830 = vadd.f32 0.0, %v9829
        %v9831 = vpop.f32.mrf.mxu0
        %9832 = vmatprep.mubr.bf16.mxu0 0
        %9833 = vmatmul.mubr.bf16.gmra.mxu0 %v9588
        %v9834 = vpop.f32.mrf.mxu0
        %v9835 = vadd.f32 0.0, %v9834
        %v9836 = vpop.f32.mrf.mxu0
        %v9837 = vpop.f32.mrf.mxu0
        %v9838 = vadd.f32 0.0, %v9837
        %v9839 = vpop.f32.mrf.mxu0
        %9840 = vmatprep.mubr.bf16.mxu0 0
        %9841 = vmatmul.mubr.bf16.gmra.mxu0 %v9590
        %v9842 = vpop.f32.mrf.mxu0
        %v9843 = vadd.f32 0.0, %v9842
        %v9844 = vpop.f32.mrf.mxu0
        %v9845 = vpop.f32.mrf.mxu0
        %v9846 = vadd.f32 0.0, %v9845
        %v9847 = vpop.f32.mrf.mxu0
        %9848 = vmatprep.mubr.bf16.mxu0 0
        %9849 = vmatmul.mubr.bf16.gmra.mxu0 %v9592
        %v9850 = vpop.f32.mrf.mxu0
        %v9851 = vadd.f32 0.0, %v9850
        %v9852 = vpop.f32.mrf.mxu0
        %v9853 = vpop.f32.mrf.mxu0
        %v9854 = vadd.f32 0.0, %v9853
        %v9855 = vpop.f32.mrf.mxu0
        %9856 = vmatprep.mubr.bf16.mxu0 0
        %9857 = vmatmul.mubr.bf16.gmra.mxu0 %v9594
        %v9858 = vpop.f32.mrf.mxu0
        %v9859 = vadd.f32 0.0, %v9858
        %v9860 = vpop.f32.mrf.mxu0
        %v9861 = vpop.f32.mrf.mxu0
        %v9862 = vadd.f32 0.0, %v9861
        %v9863 = vpop.f32.mrf.mxu0
        %9864 = vdwg.mxu0
        %v9865 = vadd.f32 %v9489, %v9699
        %v9866 = vadd.f32 %v9490, %v9702
        %v9867 = vadd.f32 %v9491, %v9707
        %v9868 = vadd.f32 %v9492, %v9710
        %v9869 = vadd.f32 %v9493, %v9715
        %v9870 = vadd.f32 %v9494, %v9718
        %v9871 = vadd.f32 %v9495, %v9723
        %v9872 = vadd.f32 %v9496, %v9726
        %v9873 = vadd.f32 %v9497, %v9731
        %v9874 = vadd.f32 %v9498, %v9734
        %v9875 = vadd.f32 %v9499, %v9739
        %v9876 = vadd.f32 %v9500, %v9742
        %v9877 = vadd.f32 %v9501, %v9747
        %v9878 = vadd.f32 %v9502, %v9750
        %v9879 = vadd.f32 %v9503, %v9755
        %v9880 = vadd.f32 %v9504, %v9758
        %v9881 = vadd.f32 %v9505, %v9763
        %v9882 = vadd.f32 %v9506, %v9766
        %v9883 = vadd.f32 %v9507, %v9771
        %v9884 = vadd.f32 %v9508, %v9774
        %v9885 = vadd.f32 %v9509, %v9779
        %v9886 = vadd.f32 %v9510, %v9782
        %v9887 = vadd.f32 %v9511, %v9787
        %v9888 = vadd.f32 %v9512, %v9790
        %v9889 = vadd.f32 %v9513, %v9795
        %v9890 = vadd.f32 %v9514, %v9798
        %v9891 = vadd.f32 %v9515, %v9803
        %v9892 = vadd.f32 %v9516, %v9806
        %v9893 = vadd.f32 %v9517, %v9811
        %v9894 = vadd.f32 %v9518, %v9814
        %v9895 = vadd.f32 %v9519, %v9819
        %v9896 = vadd.f32 %v9520, %v9822
        %v9897 = vadd.f32 %v9521, %v9827
        %v9898 = vadd.f32 %v9522, %v9830
        %v9899 = vadd.f32 %v9523, %v9835
        %v9900 = vadd.f32 %v9524, %v9838
        %v9901 = vadd.f32 %v9525, %v9843
        %v9902 = vadd.f32 %v9526, %v9846
        %v9903 = vadd.f32 %v9527, %v9851
        %v9904 = vadd.f32 %v9528, %v9854
        %v9905 = vadd.f32 %v9529, %v9859
        %v9906 = vadd.f32 %v9530, %v9862
        %v9907 = vld [vmem:[#allocation2 + $0xc0] sm:$0x3]
        %s9908 = scalar_lea.vmem %s4, 512
        %v9909 = vld [vmem:[%s9908] sm:$0xf]
        %v9910 = vld [vmem:[%s9908 + $0x4] sm:$0xf]
        %v9911 = vld [vmem:[%s9908 + $0x8] sm:$0xf]
        %v9912 = vld [vmem:[%s9908 + $0xc] sm:$0xf]
        %v9913 = vld [vmem:[%s9908 + $0x10] sm:$0xf]
        %v9914 = vld [vmem:[%s9908 + $0x14] sm:$0xf]
        %v9915 = vld [vmem:[%s9908 + $0x18] sm:$0xf]
        %v9916 = vld [vmem:[%s9908 + $0x1c] sm:$0xf]
        %v9917 = vld [vmem:[%s9908 + $0x20] sm:$0xf]
        %v9918 = vld [vmem:[%s9908 + $0x24] sm:$0xf]
        %v9919 = vld [vmem:[%s9908 + $0x28] sm:$0xf]
        %v9920 = vld [vmem:[%s9908 + $0x2c] sm:$0xf]
        %v9921 = vld [vmem:[%s9908 + $0x30] sm:$0xf]
        %v9922 = vld [vmem:[%s9908 + $0x34] sm:$0xf]
        %v9923 = vld [vmem:[%s9908 + $0x38] sm:$0xf]
        %v9924 = vld [vmem:[%s9908 + $0x3c] sm:$0xf]
        %v9926 = vunpack.c.l.b16 %v9907
        %v9927 = vpack.c.b16 %v9926, %v9926
        %v9929 = vshrl.u32 %v9551, 16
        %v9931 = vrot.slane %v9929, 1
        %v9932 = vshll.u32 %v9551, 16
        %v9934 = vrot.slane %v9932, 2
        %v9935 = vor.u32 %v9931, %v9934
        %v9936 = vrot.slane %v9059, 1
        %v9937 = vrot.slane %v9055, 2
        %v9938 = vor.u32 %v9936, %v9937
        %v9939 = vsel %vm4520, %v9935, %v9938
        %v9940 = vrot.slane %v9067, 1
        %v9941 = vrot.slane %v9063, 2
        %v9942 = vor.u32 %v9940, %v9941
        %v9943 = vsel %vm4520, %v9938, %v9942
        %v9944 = vrot.slane %v9075, 1
        %v9945 = vrot.slane %v9071, 2
        %v9946 = vor.u32 %v9944, %v9945
        %v9947 = vsel %vm4520, %v9942, %v9946
        %v9948 = vrot.slane %v9083, 1
        %v9949 = vrot.slane %v9079, 2
        %v9950 = vor.u32 %v9948, %v9949
        %v9951 = vsel %vm4520, %v9946, %v9950
        %v9952 = vrot.slane %v9091, 1
        %v9953 = vrot.slane %v9087, 2
        %v9954 = vor.u32 %v9952, %v9953
        %v9955 = vsel %vm4520, %v9950, %v9954
        %v9956 = vrot.slane %v9099, 1
        %v9957 = vrot.slane %v9095, 2
        %v9958 = vor.u32 %v9956, %v9957
        %v9959 = vsel %vm4520, %v9954, %v9958
        %v9960 = vrot.slane %v9107, 1
        %v9961 = vrot.slane %v9103, 2
        %v9962 = vor.u32 %v9960, %v9961
        %v9963 = vsel %vm4520, %v9958, %v9962
        %v9964 = vrot.slane %v9115, 1
        %v9965 = vrot.slane %v9111, 2
        %v9966 = vor.u32 %v9964, %v9965
        %v9967 = vsel %vm4520, %v9962, %v9966
        %v9968 = vrot.slane %v9123, 1
        %v9969 = vrot.slane %v9119, 2
        %v9970 = vor.u32 %v9968, %v9969
        %v9971 = vsel %vm4520, %v9966, %v9970
        %v9972 = vrot.slane %v9131, 1
        %v9973 = vrot.slane %v9127, 2
        %v9974 = vor.u32 %v9972, %v9973
        %v9975 = vsel %vm4520, %v9970, %v9974
        %v9976 = vrot.slane %v9139, 1
        %v9977 = vrot.slane %v9135, 2
        %v9978 = vor.u32 %v9976, %v9977
        %v9979 = vsel %vm4520, %v9974, %v9978
        %v9980 = vrot.slane %v9147, 1
        %v9981 = vrot.slane %v9143, 2
        %v9982 = vor.u32 %v9980, %v9981
        %v9983 = vsel %vm4520, %v9978, %v9982
        %v9984 = vrot.slane %v9155, 1
        %v9985 = vrot.slane %v9151, 2
        %v9986 = vor.u32 %v9984, %v9985
        %v9987 = vsel %vm4520, %v9982, %v9986
        %v9988 = vrot.slane %v9163, 1
        %v9989 = vrot.slane %v9159, 2
        %v9990 = vor.u32 %v9988, %v9989
        %v9991 = vsel %vm4520, %v9986, %v9990
        %v9992 = vrot.slane %v9171, 1
        %v9993 = vrot.slane %v9167, 2
        %v9994 = vor.u32 %v9992, %v9993
        %v9995 = vsel %vm4520, %v9990, %v9994
        %v9996 = vrot.slane %v9179, 1
        %v9997 = vrot.slane %v9175, 2
        %v9998 = vor.u32 %v9996, %v9997
        %v9999 = vsel %vm4520, %v9994, %v9998
        %v10000 = vrot.slane %v9187, 1
        %v10001 = vrot.slane %v9183, 2
        %v10002 = vor.u32 %v10000, %v10001
        %v10003 = vsel %vm4520, %v9998, %v10002
        %v10004 = vrot.slane %v9195, 1
        %v10005 = vrot.slane %v9191, 2
        %v10006 = vor.u32 %v10004, %v10005
        %v10007 = vsel %vm4520, %v10002, %v10006
        %v10008 = vrot.slane %v9203, 1
        %v10009 = vrot.slane %v9199, 2
        %v10010 = vor.u32 %v10008, %v10009
        %v10011 = vsel %vm4520, %v10006, %v10010
        %v10012 = vrot.slane %v9211, 1
        %v10013 = vrot.slane %v9207, 2
        %v10014 = vor.u32 %v10012, %v10013
        %v10015 = vsel %vm4520, %v10010, %v10014
        %v10017 = vshrl.u32 %v9927, 16
        %v10019 = vrot.slane %v10017, 1
        %v10020 = vshll.u32 %v9927, 16
        %v10022 = vrot.slane %v10020, 2
        %v10023 = vor.u32 %v10019, %v10022
        %v10024 = vsel %vm4520, %v10014, %v10023
        %v10062 = vunpack.c.l.b16 %v9909
        %v10063 = vunpack.c.l.b16 %v9910
        %v10064 = vunpack.c.l.b16 %v9911
        %v10065 = vunpack.c.l.b16 %v9912
        %v10066 = vunpack.c.l.b16 %v9913
        %v10067 = vunpack.c.l.b16 %v9914
        %v10068 = vunpack.c.l.b16 %v9915
        %v10069 = vunpack.c.l.b16 %v9916
        %v10070 = vunpack.c.l.b16 %v9917
        %v10071 = vunpack.c.l.b16 %v9918
        %v10072 = vunpack.c.l.b16 %v9919
        %v10073 = vunpack.c.l.b16 %v9920
        %v10074 = vunpack.c.l.b16 %v9921
        %v10075 = vunpack.c.l.b16 %v9922
        %v10076 = vunpack.c.l.b16 %v9923
        %v10077 = vunpack.c.l.b16 %v9924
        %v10078 = vpack.c.b16 %v10063, %v10062
        %v10079 = vpack.c.b16 %v10065, %v10064
        %v10080 = vpack.c.b16 %v10067, %v10066
        %v10081 = vpack.c.b16 %v10069, %v10068
        %v10082 = vpack.c.b16 %v10071, %v10070
        %v10083 = vpack.c.b16 %v10073, %v10072
        %v10084 = vpack.c.b16 %v10075, %v10074
        %v10085 = vpack.c.b16 %v10077, %v10076
        %10094 = vmatprep.subr.bf16.mxu0 0
        %10095 = vmatpush1.bf16.msra.mxu0 %v10085
        %10096 = vmatprep.subr.bf16.mxu0 0
        %10097 = vmatpush1.bf16.msra.mxu0 %v10084
        %10098 = vmatprep.subr.bf16.mxu0 0
        %10099 = vmatpush1.bf16.msra.mxu0 %v10083
        %10100 = vmatprep.subr.bf16.mxu0 0
        %10101 = vmatpush1.bf16.msra.mxu0 %v10082
        %10102 = vmatprep.subr.bf16.mxu0 0
        %10103 = vmatpush1.bf16.msra.mxu0 %v10081
        %10104 = vmatprep.subr.bf16.mxu0 0
        %10105 = vmatpush1.bf16.msra.mxu0 %v10080
        %10106 = vmatprep.subr.bf16.mxu0 0
        %10107 = vmatpush1.bf16.msra.mxu0 %v10079
        %10108 = vmatprep.subr.bf16.mxu0 0
        %10109 = vmatpush1.bf16.msra.mxu0 %v10078
        %10110 = vmatprep.subr.bf16.mxu0 0
        %10111 = vmatpush2.bf16.msra.mxu0 0
        %10112 = vmatprep.subr.bf16.mxu0 0
        %10113 = vmatpush2.bf16.msra.mxu0 0
        %10114 = vmatprep.subr.bf16.mxu0 0
        %10115 = vmatpush2.bf16.msra.mxu0 0
        %10116 = vmatprep.subr.bf16.mxu0 0
        %10117 = vmatpush2.bf16.msra.mxu0 0
        %10118 = vmatprep.subr.bf16.mxu0 0
        %10119 = vmatpush2.bf16.msra.mxu0 0
        %10120 = vmatprep.subr.bf16.mxu0 0
        %10121 = vmatpush2.bf16.msra.mxu0 0
        %10122 = vmatprep.subr.bf16.mxu0 0
        %10123 = vmatpush2.bf16.msra.mxu0 0
        %10124 = vmatprep.subr.bf16.mxu0 0
        %10125 = vmatpush2.bf16.msra.mxu0 0
        %10126 = vmatprep.mubr.bf16.mxu0 0
        %10127 = vmatmul.mubr.bf16.gmra.mxu0 %v9939
        %v10128 = vpop.f32.mrf.mxu0
        %v10129 = vadd.f32 0.0, %v10128
        %v10130 = vpop.f32.mrf.mxu0
        %v10131 = vpop.f32.mrf.mxu0
        %v10132 = vadd.f32 0.0, %v10131
        %v10133 = vpop.f32.mrf.mxu0
        %10134 = vmatprep.mubr.bf16.mxu0 0
        %10135 = vmatmul.mubr.bf16.gmra.mxu0 %v9943
        %v10136 = vpop.f32.mrf.mxu0
        %v10137 = vadd.f32 0.0, %v10136
        %v10138 = vpop.f32.mrf.mxu0
        %v10139 = vpop.f32.mrf.mxu0
        %v10140 = vadd.f32 0.0, %v10139
        %v10141 = vpop.f32.mrf.mxu0
        %10142 = vmatprep.mubr.bf16.mxu0 0
        %10143 = vmatmul.mubr.bf16.gmra.mxu0 %v9947
        %v10144 = vpop.f32.mrf.mxu0
        %v10145 = vadd.f32 0.0, %v10144
        %v10146 = vpop.f32.mrf.mxu0
        %v10147 = vpop.f32.mrf.mxu0
        %v10148 = vadd.f32 0.0, %v10147
        %v10149 = vpop.f32.mrf.mxu0
        %10150 = vmatprep.mubr.bf16.mxu0 0
        %10151 = vmatmul.mubr.bf16.gmra.mxu0 %v9951
        %v10152 = vpop.f32.mrf.mxu0
        %v10153 = vadd.f32 0.0, %v10152
        %v10154 = vpop.f32.mrf.mxu0
        %v10155 = vpop.f32.mrf.mxu0
        %v10156 = vadd.f32 0.0, %v10155
        %v10157 = vpop.f32.mrf.mxu0
        %10158 = vmatprep.mubr.bf16.mxu0 0
        %10159 = vmatmul.mubr.bf16.gmra.mxu0 %v9955
        %v10160 = vpop.f32.mrf.mxu0
        %v10161 = vadd.f32 0.0, %v10160
        %v10162 = vpop.f32.mrf.mxu0
        %v10163 = vpop.f32.mrf.mxu0
        %v10164 = vadd.f32 0.0, %v10163
        %v10165 = vpop.f32.mrf.mxu0
        %10166 = vmatprep.mubr.bf16.mxu0 0
        %10167 = vmatmul.mubr.bf16.gmra.mxu0 %v9959
        %v10168 = vpop.f32.mrf.mxu0
        %v10169 = vadd.f32 0.0, %v10168
        %v10170 = vpop.f32.mrf.mxu0
        %v10171 = vpop.f32.mrf.mxu0
        %v10172 = vadd.f32 0.0, %v10171
        %v10173 = vpop.f32.mrf.mxu0
        %10174 = vmatprep.mubr.bf16.mxu0 0
        %10175 = vmatmul.mubr.bf16.gmra.mxu0 %v9963
        %v10176 = vpop.f32.mrf.mxu0
        %v10177 = vadd.f32 0.0, %v10176
        %v10178 = vpop.f32.mrf.mxu0
        %v10179 = vpop.f32.mrf.mxu0
        %v10180 = vadd.f32 0.0, %v10179
        %v10181 = vpop.f32.mrf.mxu0
        %10182 = vmatprep.mubr.bf16.mxu0 0
        %10183 = vmatmul.mubr.bf16.gmra.mxu0 %v9967
        %v10184 = vpop.f32.mrf.mxu0
        %v10185 = vadd.f32 0.0, %v10184
        %v10186 = vpop.f32.mrf.mxu0
        %v10187 = vpop.f32.mrf.mxu0
        %v10188 = vadd.f32 0.0, %v10187
        %v10189 = vpop.f32.mrf.mxu0
        %10190 = vmatprep.mubr.bf16.mxu0 0
        %10191 = vmatmul.mubr.bf16.gmra.mxu0 %v9971
        %v10192 = vpop.f32.mrf.mxu0
        %v10193 = vadd.f32 0.0, %v10192
        %v10194 = vpop.f32.mrf.mxu0
        %v10195 = vpop.f32.mrf.mxu0
        %v10196 = vadd.f32 0.0, %v10195
        %v10197 = vpop.f32.mrf.mxu0
        %10198 = vmatprep.mubr.bf16.mxu0 0
        %10199 = vmatmul.mubr.bf16.gmra.mxu0 %v9975
        %v10200 = vpop.f32.mrf.mxu0
        %v10201 = vadd.f32 0.0, %v10200
        %v10202 = vpop.f32.mrf.mxu0
        %v10203 = vpop.f32.mrf.mxu0
        %v10204 = vadd.f32 0.0, %v10203
        %v10205 = vpop.f32.mrf.mxu0
        %10206 = vmatprep.mubr.bf16.mxu0 0
        %10207 = vmatmul.mubr.bf16.gmra.mxu0 %v9979
        %v10208 = vpop.f32.mrf.mxu0
        %v10209 = vadd.f32 0.0, %v10208
        %v10210 = vpop.f32.mrf.mxu0
        %v10211 = vpop.f32.mrf.mxu0
        %v10212 = vadd.f32 0.0, %v10211
        %v10213 = vpop.f32.mrf.mxu0
        %10214 = vmatprep.mubr.bf16.mxu0 0
        %10215 = vmatmul.mubr.bf16.gmra.mxu0 %v9983
        %v10216 = vpop.f32.mrf.mxu0
        %v10217 = vadd.f32 0.0, %v10216
        %v10218 = vpop.f32.mrf.mxu0
        %v10219 = vpop.f32.mrf.mxu0
        %v10220 = vadd.f32 0.0, %v10219
        %v10221 = vpop.f32.mrf.mxu0
        %10222 = vmatprep.mubr.bf16.mxu0 0
        %10223 = vmatmul.mubr.bf16.gmra.mxu0 %v9987
        %v10224 = vpop.f32.mrf.mxu0
        %v10225 = vadd.f32 0.0, %v10224
        %v10226 = vpop.f32.mrf.mxu0
        %v10227 = vpop.f32.mrf.mxu0
        %v10228 = vadd.f32 0.0, %v10227
        %v10229 = vpop.f32.mrf.mxu0
        %10230 = vmatprep.mubr.bf16.mxu0 0
        %10231 = vmatmul.mubr.bf16.gmra.mxu0 %v9991
        %v10232 = vpop.f32.mrf.mxu0
        %v10233 = vadd.f32 0.0, %v10232
        %v10234 = vpop.f32.mrf.mxu0
        %v10235 = vpop.f32.mrf.mxu0
        %v10236 = vadd.f32 0.0, %v10235
        %v10237 = vpop.f32.mrf.mxu0
        %10238 = vmatprep.mubr.bf16.mxu0 0
        %10239 = vmatmul.mubr.bf16.gmra.mxu0 %v9995
        %v10240 = vpop.f32.mrf.mxu0
        %v10241 = vadd.f32 0.0, %v10240
        %v10242 = vpop.f32.mrf.mxu0
        %v10243 = vpop.f32.mrf.mxu0
        %v10244 = vadd.f32 0.0, %v10243
        %v10245 = vpop.f32.mrf.mxu0
        %10246 = vmatprep.mubr.bf16.mxu0 0
        %10247 = vmatmul.mubr.bf16.gmra.mxu0 %v9999
        %v10248 = vpop.f32.mrf.mxu0
        %v10249 = vadd.f32 0.0, %v10248
        %v10250 = vpop.f32.mrf.mxu0
        %v10251 = vpop.f32.mrf.mxu0
        %v10252 = vadd.f32 0.0, %v10251
        %v10253 = vpop.f32.mrf.mxu0
        %10254 = vmatprep.mubr.bf16.mxu0 0
        %10255 = vmatmul.mubr.bf16.gmra.mxu0 %v10003
        %v10256 = vpop.f32.mrf.mxu0
        %v10257 = vadd.f32 0.0, %v10256
        %v10258 = vpop.f32.mrf.mxu0
        %v10259 = vpop.f32.mrf.mxu0
        %v10260 = vadd.f32 0.0, %v10259
        %v10261 = vpop.f32.mrf.mxu0
        %10262 = vmatprep.mubr.bf16.mxu0 0
        %10263 = vmatmul.mubr.bf16.gmra.mxu0 %v10007
        %v10264 = vpop.f32.mrf.mxu0
        %v10265 = vadd.f32 0.0, %v10264
        %v10266 = vpop.f32.mrf.mxu0
        %v10267 = vpop.f32.mrf.mxu0
        %v10268 = vadd.f32 0.0, %v10267
        %v10269 = vpop.f32.mrf.mxu0
        %10270 = vmatprep.mubr.bf16.mxu0 0
        %10271 = vmatmul.mubr.bf16.gmra.mxu0 %v10011
        %v10272 = vpop.f32.mrf.mxu0
        %v10273 = vadd.f32 0.0, %v10272
        %v10274 = vpop.f32.mrf.mxu0
        %v10275 = vpop.f32.mrf.mxu0
        %v10276 = vadd.f32 0.0, %v10275
        %v10277 = vpop.f32.mrf.mxu0
        %10278 = vmatprep.mubr.bf16.mxu0 0
        %10279 = vmatmul.mubr.bf16.gmra.mxu0 %v10015
        %v10280 = vpop.f32.mrf.mxu0
        %v10281 = vadd.f32 0.0, %v10280
        %v10282 = vpop.f32.mrf.mxu0
        %v10283 = vpop.f32.mrf.mxu0
        %v10284 = vadd.f32 0.0, %v10283
        %v10285 = vpop.f32.mrf.mxu0
        %10286 = vmatprep.mubr.bf16.mxu0 0
        %10287 = vmatmul.mubr.bf16.gmra.mxu0 %v10024
        %v10288 = vpop.f32.mrf.mxu0
        %v10289 = vadd.f32 0.0, %v10288
        %v10290 = vpop.f32.mrf.mxu0
        %v10291 = vpop.f32.mrf.mxu0
        %v10292 = vadd.f32 0.0, %v10291
        %v10293 = vpop.f32.mrf.mxu0
        %10294 = vdwg.mxu0
        %v10295 = vadd.f32 %v9865, %v10129
        %v10296 = vadd.f32 %v9866, %v10132
        %v10297 = vadd.f32 %v9867, %v10137
        %v10298 = vadd.f32 %v9868, %v10140
        %v10299 = vadd.f32 %v9869, %v10145
        %v10300 = vadd.f32 %v9870, %v10148
        %v10301 = vadd.f32 %v9871, %v10153
        %v10302 = vadd.f32 %v9872, %v10156
        %v10303 = vadd.f32 %v9873, %v10161
        %v10304 = vadd.f32 %v9874, %v10164
        %v10305 = vadd.f32 %v9875, %v10169
        %v10306 = vadd.f32 %v9876, %v10172
        %v10307 = vadd.f32 %v9877, %v10177
        %v10308 = vadd.f32 %v9878, %v10180
        %v10309 = vadd.f32 %v9879, %v10185
        %v10310 = vadd.f32 %v9880, %v10188
        %v10311 = vadd.f32 %v9881, %v10193
        %v10312 = vadd.f32 %v9882, %v10196
        %v10313 = vadd.f32 %v9883, %v10201
        %v10314 = vadd.f32 %v9884, %v10204
        %v10315 = vadd.f32 %v9885, %v10209
        %v10316 = vadd.f32 %v9886, %v10212
        %v10317 = vadd.f32 %v9887, %v10217
        %v10318 = vadd.f32 %v9888, %v10220
        %v10319 = vadd.f32 %v9889, %v10225
        %v10320 = vadd.f32 %v9890, %v10228
        %v10321 = vadd.f32 %v9891, %v10233
        %v10322 = vadd.f32 %v9892, %v10236
        %v10323 = vadd.f32 %v9893, %v10241
        %v10324 = vadd.f32 %v9894, %v10244
        %v10325 = vadd.f32 %v9895, %v10249
        %v10326 = vadd.f32 %v9896, %v10252
        %v10327 = vadd.f32 %v9897, %v10257
        %v10328 = vadd.f32 %v9898, %v10260
        %v10329 = vadd.f32 %v9899, %v10265
        %v10330 = vadd.f32 %v9900, %v10268
        %v10331 = vadd.f32 %v9901, %v10273
        %v10332 = vadd.f32 %v9902, %v10276
        %v10333 = vadd.f32 %v9903, %v10281
        %v10334 = vadd.f32 %v9904, %v10284
        %v10335 = vadd.f32 %v9905, %v10289
        %v10336 = vadd.f32 %v9906, %v10292
        %v10337 = vld [vmem:[%s5 + $0x2] sm:$0x1]
        %v10338 = vlaneseq
        %v10339 = vshrl.u32 %v10338, 7
        %v10340 = vsub.s32 0, %v10339
        %v10341 = vrot.slane %v10337, %v10340
        %v10342 = vadd.f32 %v10295, %v10341
        %v10343 = vadd.f32 %v10296, %v10341
        %v10344 = vadd.f32 %v10297, %v10341
        %v10345 = vadd.f32 %v10298, %v10341
        %v10346 = vadd.f32 %v10299, %v10341
        %v10347 = vadd.f32 %v10300, %v10341
        %v10348 = vadd.f32 %v10301, %v10341
        %v10349 = vadd.f32 %v10302, %v10341
        %v10350 = vadd.f32 %v10303, %v10341
        %v10351 = vadd.f32 %v10304, %v10341
        %v10352 = vadd.f32 %v10305, %v10341
        %v10353 = vadd.f32 %v10306, %v10341
        %v10354 = vadd.f32 %v10307, %v10341
        %v10355 = vadd.f32 %v10308, %v10341
        %v10356 = vadd.f32 %v10309, %v10341
        %v10357 = vadd.f32 %v10310, %v10341
        %v10358 = vadd.f32 %v10311, %v10341
        %v10359 = vadd.f32 %v10312, %v10341
        %v10360 = vadd.f32 %v10313, %v10341
        %v10361 = vadd.f32 %v10314, %v10341
        %v10362 = vadd.f32 %v10315, %v10341
        %v10363 = vadd.f32 %v10316, %v10341
        %v10364 = vadd.f32 %v10317, %v10341
        %v10365 = vadd.f32 %v10318, %v10341
        %v10366 = vadd.f32 %v10319, %v10341
        %v10367 = vadd.f32 %v10320, %v10341
        %v10368 = vadd.f32 %v10321, %v10341
        %v10369 = vadd.f32 %v10322, %v10341
        %v10370 = vadd.f32 %v10323, %v10341
        %v10371 = vadd.f32 %v10324, %v10341
        %v10372 = vadd.f32 %v10325, %v10341
        %v10373 = vadd.f32 %v10326, %v10341
        %v10374 = vadd.f32 %v10327, %v10341
        %v10375 = vadd.f32 %v10328, %v10341
        %v10376 = vadd.f32 %v10329, %v10341
        %v10377 = vadd.f32 %v10330, %v10341
        %v10378 = vadd.f32 %v10331, %v10341
        %v10379 = vadd.f32 %v10332, %v10341
        %v10380 = vadd.f32 %v10333, %v10341
        %v10381 = vadd.f32 %v10334, %v10341
        %v10382 = vadd.f32 %v10335, %v10341
        %v10383 = vadd.f32 %v10336, %v10341
        %vm10384 = vcmp.gt.f32.partialorder %v10342, 0.0
        %vm10385 = vcmp.gt.f32.partialorder %v10343, 0.0
        %vm10386 = vcmp.gt.f32.partialorder %v10344, 0.0
        %vm10387 = vcmp.gt.f32.partialorder %v10345, 0.0
        %vm10388 = vcmp.gt.f32.partialorder %v10346, 0.0
        %vm10389 = vcmp.gt.f32.partialorder %v10347, 0.0
        %vm10390 = vcmp.gt.f32.partialorder %v10348, 0.0
        %vm10391 = vcmp.gt.f32.partialorder %v10349, 0.0
        %vm10392 = vcmp.gt.f32.partialorder %v10350, 0.0
        %vm10393 = vcmp.gt.f32.partialorder %v10351, 0.0
        %vm10394 = vcmp.gt.f32.partialorder %v10352, 0.0
        %vm10395 = vcmp.gt.f32.partialorder %v10353, 0.0
        %vm10396 = vcmp.gt.f32.partialorder %v10354, 0.0
        %vm10397 = vcmp.gt.f32.partialorder %v10355, 0.0
        %vm10398 = vcmp.gt.f32.partialorder %v10356, 0.0
        %vm10399 = vcmp.gt.f32.partialorder %v10357, 0.0
        %vm10400 = vcmp.gt.f32.partialorder %v10358, 0.0
        %vm10401 = vcmp.gt.f32.partialorder %v10359, 0.0
        %vm10402 = vcmp.gt.f32.partialorder %v10360, 0.0
        %vm10403 = vcmp.gt.f32.partialorder %v10361, 0.0
        %vm10404 = vcmp.gt.f32.partialorder %v10362, 0.0
        %vm10405 = vcmp.gt.f32.partialorder %v10363, 0.0
        %vm10406 = vcmp.gt.f32.partialorder %v10364, 0.0
        %vm10407 = vcmp.gt.f32.partialorder %v10365, 0.0
        %vm10408 = vcmp.gt.f32.partialorder %v10366, 0.0
        %vm10409 = vcmp.gt.f32.partialorder %v10367, 0.0
        %vm10410 = vcmp.gt.f32.partialorder %v10368, 0.0
        %vm10411 = vcmp.gt.f32.partialorder %v10369, 0.0
        %vm10412 = vcmp.gt.f32.partialorder %v10370, 0.0
        %vm10413 = vcmp.gt.f32.partialorder %v10371, 0.0
        %vm10414 = vcmp.gt.f32.partialorder %v10372, 0.0
        %vm10415 = vcmp.gt.f32.partialorder %v10373, 0.0
        %vm10416 = vcmp.gt.f32.partialorder %v10374, 0.0
        %vm10417 = vcmp.gt.f32.partialorder %v10375, 0.0
        %vm10418 = vcmp.gt.f32.partialorder %v10376, 0.0
        %vm10419 = vcmp.gt.f32.partialorder %v10377, 0.0
        %vm10420 = vcmp.gt.f32.partialorder %v10378, 0.0
        %vm10421 = vcmp.gt.f32.partialorder %v10379, 0.0
        %vm10422 = vcmp.gt.f32.partialorder %v10380, 0.0
        %vm10423 = vcmp.gt.f32.partialorder %v10381, 0.0
        %vm10424 = vcmp.gt.f32.partialorder %v10382, 0.0
        %vm10425 = vcmp.gt.f32.partialorder %v10383, 0.0
        %v10426 = vstv %s293
        %v10427 = vmul.f32 %v10426, %v10342
        %v10428 = vmul.f32 %v10426, %v10343
        %v10429 = vmul.f32 %v10426, %v10344
        %v10430 = vmul.f32 %v10426, %v10345
        %v10431 = vmul.f32 %v10426, %v10346
        %v10432 = vmul.f32 %v10426, %v10347
        %v10433 = vmul.f32 %v10426, %v10348
        %v10434 = vmul.f32 %v10426, %v10349
        %v10435 = vmul.f32 %v10426, %v10350
        %v10436 = vmul.f32 %v10426, %v10351
        %v10437 = vmul.f32 %v10426, %v10352
        %v10438 = vmul.f32 %v10426, %v10353
        %v10439 = vmul.f32 %v10426, %v10354
        %v10440 = vmul.f32 %v10426, %v10355
        %v10441 = vmul.f32 %v10426, %v10356
        %v10442 = vmul.f32 %v10426, %v10357
        %v10443 = vmul.f32 %v10426, %v10358
        %v10444 = vmul.f32 %v10426, %v10359
        %v10445 = vmul.f32 %v10426, %v10360
        %v10446 = vmul.f32 %v10426, %v10361
        %v10447 = vmul.f32 %v10426, %v10362
        %v10448 = vmul.f32 %v10426, %v10363
        %v10449 = vmul.f32 %v10426, %v10364
        %v10450 = vmul.f32 %v10426, %v10365
        %v10451 = vmul.f32 %v10426, %v10366
        %v10452 = vmul.f32 %v10426, %v10367
        %v10453 = vmul.f32 %v10426, %v10368
        %v10454 = vmul.f32 %v10426, %v10369
        %v10455 = vmul.f32 %v10426, %v10370
        %v10456 = vmul.f32 %v10426, %v10371
        %v10457 = vmul.f32 %v10426, %v10372
        %v10458 = vmul.f32 %v10426, %v10373
        %v10459 = vmul.f32 %v10426, %v10374
        %v10460 = vmul.f32 %v10426, %v10375
        %v10461 = vmul.f32 %v10426, %v10376
        %v10462 = vmul.f32 %v10426, %v10377
        %v10463 = vmul.f32 %v10426, %v10378
        %v10464 = vmul.f32 %v10426, %v10379
        %v10465 = vmul.f32 %v10426, %v10380
        %v10466 = vmul.f32 %v10426, %v10381
        %v10467 = vmul.f32 %v10426, %v10382
        %v10468 = vmul.f32 %v10426, %v10383
        %v10469 = vsel %vm10384, %v10342, %v10427
        %v10470 = vsel %vm10385, %v10343, %v10428
        %v10471 = vsel %vm10386, %v10344, %v10429
        %v10472 = vsel %vm10387, %v10345, %v10430
        %v10473 = vsel %vm10388, %v10346, %v10431
        %v10474 = vsel %vm10389, %v10347, %v10432
        %v10475 = vsel %vm10390, %v10348, %v10433
        %v10476 = vsel %vm10391, %v10349, %v10434
        %v10477 = vsel %vm10392, %v10350, %v10435
        %v10478 = vsel %vm10393, %v10351, %v10436
        %v10479 = vsel %vm10394, %v10352, %v10437
        %v10480 = vsel %vm10395, %v10353, %v10438
        %v10481 = vsel %vm10396, %v10354, %v10439
        %v10482 = vsel %vm10397, %v10355, %v10440
        %v10483 = vsel %vm10398, %v10356, %v10441
        %v10484 = vsel %vm10399, %v10357, %v10442
        %v10485 = vsel %vm10400, %v10358, %v10443
        %v10486 = vsel %vm10401, %v10359, %v10444
        %v10487 = vsel %vm10402, %v10360, %v10445
        %v10488 = vsel %vm10403, %v10361, %v10446
        %v10489 = vsel %vm10404, %v10362, %v10447
        %v10490 = vsel %vm10405, %v10363, %v10448
        %v10491 = vsel %vm10406, %v10364, %v10449
        %v10492 = vsel %vm10407, %v10365, %v10450
        %v10493 = vsel %vm10408, %v10366, %v10451
        %v10494 = vsel %vm10409, %v10367, %v10452
        %v10495 = vsel %vm10410, %v10368, %v10453
        %v10496 = vsel %vm10411, %v10369, %v10454
        %v10497 = vsel %vm10412, %v10370, %v10455
        %v10498 = vsel %vm10413, %v10371, %v10456
        %v10499 = vsel %vm10414, %v10372, %v10457
        %v10500 = vsel %vm10415, %v10373, %v10458
        %v10501 = vsel %vm10416, %v10374, %v10459
        %v10502 = vsel %vm10417, %v10375, %v10460
        %v10503 = vsel %vm10418, %v10376, %v10461
        %v10504 = vsel %vm10419, %v10377, %v10462
        %v10505 = vsel %vm10420, %v10378, %v10463
        %v10506 = vsel %vm10421, %v10379, %v10464
        %v10507 = vsel %vm10422, %v10380, %v10465
        %v10508 = vsel %vm10423, %v10381, %v10466
        %v10509 = vsel %vm10424, %v10382, %v10467
        %v10510 = vsel %vm10425, %v10383, %v10468
        %v10511 = vunpack.c.l.bf16 %v5781
        %v10512 = vunpack.c.h.bf16 %v5781
        %v10513 = vunpack.c.l.bf16 %v5782
        %v10514 = vunpack.c.h.bf16 %v5782
        %v10515 = vunpack.c.l.bf16 %v5783
        %v10516 = vunpack.c.h.bf16 %v5783
        %v10517 = vunpack.c.l.bf16 %v5784
        %v10518 = vunpack.c.h.bf16 %v5784
        %v10519 = vunpack.c.l.bf16 %v5785
        %v10520 = vunpack.c.h.bf16 %v5785
        %v10521 = vunpack.c.l.bf16 %v5786
        %v10522 = vunpack.c.h.bf16 %v5786
        %v10523 = vunpack.c.l.bf16 %v5787
        %v10524 = vunpack.c.h.bf16 %v5787
        %v10525 = vunpack.c.l.bf16 %v5788
        %v10526 = vunpack.c.h.bf16 %v5788
        %v10527 = vunpack.c.l.bf16 %v5789
        %v10528 = vunpack.c.h.bf16 %v5789
        %v10529 = vunpack.c.l.bf16 %v5790
        %v10530 = vunpack.c.h.bf16 %v5790
        %v10531 = vunpack.c.l.bf16 %v5791
        %v10532 = vunpack.c.h.bf16 %v5791
        %v10533 = vunpack.c.l.bf16 %v5792
        %v10534 = vunpack.c.h.bf16 %v5792
        %v10535 = vunpack.c.l.bf16 %v5793
        %v10536 = vunpack.c.h.bf16 %v5793
        %v10537 = vunpack.c.l.bf16 %v5794
        %v10538 = vunpack.c.h.bf16 %v5794
        %v10539 = vunpack.c.l.bf16 %v5795
        %v10540 = vunpack.c.h.bf16 %v5795
        %v10541 = vunpack.c.l.bf16 %v5796
        %v10542 = vunpack.c.h.bf16 %v5796
        %v10543 = vunpack.c.l.bf16 %v5797
        %v10544 = vunpack.c.h.bf16 %v5797
        %v10545 = vunpack.c.l.bf16 %v5798
        %v10546 = vunpack.c.h.bf16 %v5798
        %v10547 = vunpack.c.l.bf16 %v5799
        %v10548 = vunpack.c.h.bf16 %v5799
        %v10549 = vunpack.c.l.bf16 %v5800
        %v10550 = vunpack.c.h.bf16 %v5800
        %v10551 = vunpack.c.l.bf16 %v5801
        %v10552 = vunpack.c.h.bf16 %v5801
        %v10553 = vadd.f32 %v10469, %v10511
        %v10554 = vadd.f32 %v10470, %v10512
        %v10555 = vadd.f32 %v10471, %v10513
        %v10556 = vadd.f32 %v10472, %v10514
        %v10557 = vadd.f32 %v10473, %v10515
        %v10558 = vadd.f32 %v10474, %v10516
        %v10559 = vadd.f32 %v10475, %v10517
        %v10560 = vadd.f32 %v10476, %v10518
        %v10561 = vadd.f32 %v10477, %v10519
        %v10562 = vadd.f32 %v10478, %v10520
        %v10563 = vadd.f32 %v10479, %v10521
        %v10564 = vadd.f32 %v10480, %v10522
        %v10565 = vadd.f32 %v10481, %v10523
        %v10566 = vadd.f32 %v10482, %v10524
        %v10567 = vadd.f32 %v10483, %v10525
        %v10568 = vadd.f32 %v10484, %v10526
        %v10569 = vadd.f32 %v10485, %v10527
        %v10570 = vadd.f32 %v10486, %v10528
        %v10571 = vadd.f32 %v10487, %v10529
        %v10572 = vadd.f32 %v10488, %v10530
        %v10573 = vadd.f32 %v10489, %v10531
        %v10574 = vadd.f32 %v10490, %v10532
        %v10575 = vadd.f32 %v10491, %v10533
        %v10576 = vadd.f32 %v10492, %v10534
        %v10577 = vadd.f32 %v10493, %v10535
        %v10578 = vadd.f32 %v10494, %v10536
        %v10579 = vadd.f32 %v10495, %v10537
        %v10580 = vadd.f32 %v10496, %v10538
        %v10581 = vadd.f32 %v10497, %v10539
        %v10582 = vadd.f32 %v10498, %v10540
        %v10583 = vadd.f32 %v10499, %v10541
        %v10584 = vadd.f32 %v10500, %v10542
        %v10585 = vadd.f32 %v10501, %v10543
        %v10586 = vadd.f32 %v10502, %v10544
        %v10587 = vadd.f32 %v10503, %v10545
        %v10588 = vadd.f32 %v10504, %v10546
        %v10589 = vadd.f32 %v10505, %v10547
        %v10590 = vadd.f32 %v10506, %v10548
        %v10591 = vadd.f32 %v10507, %v10549
        %v10592 = vadd.f32 %v10508, %v10550
        %v10593 = vadd.f32 %v10509, %v10551
        %v10594 = vadd.f32 %v10510, %v10552
        %v10595 = vmul.f32 %v339, %v10553
        %v10596 = vmul.f32 %v344, %v10554
        %v10597 = vmul.f32 %v349, %v10555
        %v10598 = vmul.f32 %v354, %v10556
        %v10599 = vmul.f32 %v359, %v10557
        %v10600 = vmul.f32 %v364, %v10558
        %v10601 = vmul.f32 %v369, %v10559
        %v10602 = vmul.f32 %v374, %v10560
        %v10603 = vmul.f32 %v379, %v10561
        %v10604 = vmul.f32 %v384, %v10562
        %v10605 = vmul.f32 %v389, %v10563
        %v10606 = vmul.f32 %v394, %v10564
        %v10607 = vmul.f32 %v399, %v10565
        %v10608 = vmul.f32 %v404, %v10566
        %v10609 = vmul.f32 %v409, %v10567
        %v10610 = vmul.f32 %v414, %v10568
        %v10611 = vmul.f32 %v419, %v10569
        %v10612 = vmul.f32 %v424, %v10570
        %v10613 = vmul.f32 %v429, %v10571
        %v10614 = vmul.f32 %v434, %v10572
        %v10615 = vmul.f32 %v439, %v10573
        %v10616 = vmul.f32 %v444, %v10574
        %v10617 = vmul.f32 %v449, %v10575
        %v10618 = vmul.f32 %v454, %v10576
        %v10619 = vmul.f32 %v459, %v10577
        %v10620 = vmul.f32 %v464, %v10578
        %v10621 = vmul.f32 %v469, %v10579
        %v10622 = vmul.f32 %v474, %v10580
        %v10623 = vmul.f32 %v479, %v10581
        %v10624 = vmul.f32 %v484, %v10582
        %v10625 = vmul.f32 %v489, %v10583
        %v10626 = vmul.f32 %v494, %v10584
        %v10627 = vmul.f32 %v499, %v10585
        %v10628 = vmul.f32 %v504, %v10586
        %v10629 = vmul.f32 %v509, %v10587
        %v10630 = vmul.f32 %v514, %v10588
        %v10631 = vmul.f32 %v519, %v10589
        %v10632 = vmul.f32 %v524, %v10590
        %v10633 = vmul.f32 %v529, %v10591
        %v10634 = vmul.f32 %v534, %v10592
        %v10635 = vmul.f32 %v539, %v10593
        %v10636 = vmul.f32 %v544, %v10594
        %v10637 = vpack.c.bf16 %v10596, %v10595
        %v10638 = vpack.c.bf16 %v10598, %v10597
        %v10639 = vpack.c.bf16 %v10600, %v10599
        %v10640 = vpack.c.bf16 %v10602, %v10601
        %v10641 = vpack.c.bf16 %v10604, %v10603
        %v10642 = vpack.c.bf16 %v10606, %v10605
        %v10643 = vpack.c.bf16 %v10608, %v10607
        %v10644 = vpack.c.bf16 %v10610, %v10609
        %v10645 = vpack.c.bf16 %v10612, %v10611
        %v10646 = vpack.c.bf16 %v10614, %v10613
        %v10647 = vpack.c.bf16 %v10616, %v10615
        %v10648 = vpack.c.bf16 %v10618, %v10617
        %v10649 = vpack.c.bf16 %v10620, %v10619
        %v10650 = vpack.c.bf16 %v10622, %v10621
        %v10651 = vpack.c.bf16 %v10624, %v10623
        %v10652 = vpack.c.bf16 %v10626, %v10625
        %v10653 = vpack.c.bf16 %v10628, %v10627
        %v10654 = vpack.c.bf16 %v10630, %v10629
        %v10655 = vpack.c.bf16 %v10632, %v10631
        %v10656 = vpack.c.bf16 %v10634, %v10633
        %v10657 = vpack.c.bf16 %v10636, %v10635
        %v10679 = vunpack.c.l.b16 %v10637
        %v10680 = vunpack.c.h.b16 %v10637
        %v10681 = vunpack.c.l.b16 %v10638
        %v10682 = vunpack.c.h.b16 %v10638
        %v10683 = vunpack.c.l.b16 %v10639
        %v10684 = vunpack.c.h.b16 %v10639
        %v10685 = vunpack.c.l.b16 %v10640
        %v10686 = vunpack.c.h.b16 %v10640
        %v10687 = vunpack.c.l.b16 %v10641
        %v10688 = vunpack.c.h.b16 %v10641
        %v10689 = vunpack.c.l.b16 %v10642
        %v10690 = vunpack.c.h.b16 %v10642
        %v10691 = vunpack.c.l.b16 %v10643
        %v10692 = vunpack.c.h.b16 %v10643
        %v10693 = vunpack.c.l.b16 %v10644
        %v10694 = vunpack.c.h.b16 %v10644
        %v10695 = vunpack.c.l.b16 %v10645
        %v10696 = vunpack.c.h.b16 %v10645
        %v10697 = vunpack.c.l.b16 %v10646
        %v10698 = vunpack.c.h.b16 %v10646
        %v10699 = vunpack.c.l.b16 %v10647
        %v10700 = vunpack.c.h.b16 %v10647
        %v10701 = vunpack.c.l.b16 %v10648
        %v10702 = vunpack.c.h.b16 %v10648
        %v10703 = vunpack.c.l.b16 %v10649
        %v10704 = vunpack.c.h.b16 %v10649
        %v10705 = vunpack.c.l.b16 %v10650
        %v10706 = vunpack.c.h.b16 %v10650
        %v10707 = vunpack.c.l.b16 %v10651
        %v10708 = vunpack.c.h.b16 %v10651
        %v10709 = vunpack.c.l.b16 %v10652
        %v10710 = vunpack.c.h.b16 %v10652
        %v10711 = vunpack.c.l.b16 %v10653
        %v10712 = vunpack.c.h.b16 %v10653
        %v10713 = vunpack.c.l.b16 %v10654
        %v10714 = vunpack.c.h.b16 %v10654
        %v10715 = vunpack.c.l.b16 %v10655
        %v10716 = vunpack.c.h.b16 %v10655
        %v10717 = vunpack.c.l.b16 %v10656
        %v10718 = vunpack.c.h.b16 %v10656
        %v10719 = vunpack.c.l.b16 %v10657
        %v10720 = vunpack.c.h.b16 %v10657
        %v10721 = vpack.c.b16 %v10679, %v10679
        %v10722 = vpack.c.b16 %v10680, %v10680
        %v10723 = vpack.c.b16 %v10681, %v10681
        %v10724 = vpack.c.b16 %v10682, %v10682
        %v10725 = vpack.c.b16 %v10683, %v10683
        %v10726 = vpack.c.b16 %v10684, %v10684
        %v10727 = vpack.c.b16 %v10685, %v10685
        %v10728 = vpack.c.b16 %v10686, %v10686
        %v10729 = vpack.c.b16 %v10687, %v10687
        %v10730 = vpack.c.b16 %v10688, %v10688
        %v10731 = vpack.c.b16 %v10689, %v10689
        %v10732 = vpack.c.b16 %v10690, %v10690
        %v10733 = vpack.c.b16 %v10691, %v10691
        %v10734 = vpack.c.b16 %v10692, %v10692
        %v10735 = vpack.c.b16 %v10693, %v10693
        %v10736 = vpack.c.b16 %v10694, %v10694
        %v10737 = vpack.c.b16 %v10695, %v10695
        %v10738 = vpack.c.b16 %v10696, %v10696
        %v10739 = vpack.c.b16 %v10697, %v10697
        %v10740 = vpack.c.b16 %v10698, %v10698
        %v10741 = vpack.c.b16 %v10699, %v10699
        %v10742 = vpack.c.b16 %v10700, %v10700
        %v10743 = vpack.c.b16 %v10701, %v10701
        %v10744 = vpack.c.b16 %v10702, %v10702
        %v10745 = vpack.c.b16 %v10703, %v10703
        %v10746 = vpack.c.b16 %v10704, %v10704
        %v10747 = vpack.c.b16 %v10705, %v10705
        %v10748 = vpack.c.b16 %v10706, %v10706
        %v10749 = vpack.c.b16 %v10707, %v10707
        %v10750 = vpack.c.b16 %v10708, %v10708
        %v10751 = vpack.c.b16 %v10709, %v10709
        %v10752 = vpack.c.b16 %v10710, %v10710
        %v10753 = vpack.c.b16 %v10711, %v10711
        %v10754 = vpack.c.b16 %v10712, %v10712
        %v10755 = vpack.c.b16 %v10713, %v10713
        %v10756 = vpack.c.b16 %v10714, %v10714
        %v10757 = vpack.c.b16 %v10715, %v10715
        %v10758 = vpack.c.b16 %v10716, %v10716
        %v10759 = vpack.c.b16 %v10717, %v10717
        %v10760 = vpack.c.b16 %v10718, %v10718
        %v10761 = vpack.c.b16 %v10719, %v10719
        %v10762 = vpack.c.b16 %v10720, %v10720
        %10805 = vst [vmem:[%s285] sm:$0xf] %v10721
        %10806 = vst [vmem:[%s285 + $0x4] sm:$0xf] %v10722
        %10807 = vst [vmem:[%s285 + $0x8] sm:$0xf] %v10723
        %10808 = vst [vmem:[%s285 + $0xc] sm:$0xf] %v10724
        %10809 = vst [vmem:[%s285 + $0x10] sm:$0xf] %v10725
        %10810 = vst [vmem:[%s285 + $0x14] sm:$0xf] %v10726
        %10811 = vst [vmem:[%s285 + $0x18] sm:$0xf] %v10727
        %10812 = vst [vmem:[%s285 + $0x1c] sm:$0xf] %v10728
        %10813 = vst [vmem:[%s285 + $0x20] sm:$0xf] %v10729
        %10814 = vst [vmem:[%s285 + $0x24] sm:$0xf] %v10730
        %10815 = vst [vmem:[%s285 + $0x28] sm:$0xf] %v10731
        %10816 = vst [vmem:[%s285 + $0x2c] sm:$0xf] %v10732
        %10817 = vst [vmem:[%s285 + $0x30] sm:$0xf] %v10733
        %10818 = vst [vmem:[%s285 + $0x34] sm:$0xf] %v10734
        %10819 = vst [vmem:[%s285 + $0x38] sm:$0xf] %v10735
        %10820 = vst [vmem:[%s285 + $0x3c] sm:$0xf] %v10736
        %10821 = vst [vmem:[%s285 + $0x40] sm:$0xf] %v10737
        %10822 = vst [vmem:[%s285 + $0x44] sm:$0xf] %v10738
        %10823 = vst [vmem:[%s285 + $0x48] sm:$0xf] %v10739
        %10824 = vst [vmem:[%s285 + $0x4c] sm:$0xf] %v10740
        %10825 = vst [vmem:[%s285 + $0x50] sm:$0xf] %v10741
        %10826 = vst [vmem:[%s285 + $0x54] sm:$0xf] %v10742
        %10827 = vst [vmem:[%s285 + $0x58] sm:$0xf] %v10743
        %10828 = vst [vmem:[%s285 + $0x5c] sm:$0xf] %v10744
        %10829 = vst [vmem:[%s285 + $0x60] sm:$0xf] %v10745
        %10830 = vst [vmem:[%s285 + $0x64] sm:$0xf] %v10746
        %10831 = vst [vmem:[%s285 + $0x68] sm:$0xf] %v10747
        %10832 = vst [vmem:[%s285 + $0x6c] sm:$0xf] %v10748
        %10833 = vst [vmem:[%s285 + $0x70] sm:$0xf] %v10749
        %10834 = vst [vmem:[%s285 + $0x74] sm:$0xf] %v10750
        %10835 = vst [vmem:[%s285 + $0x78] sm:$0xf] %v10751
        %10836 = vst [vmem:[%s285 + $0x7c] sm:$0xf] %v10752
        %10837 = vst [vmem:[%s285 + $0x80] sm:$0xf] %v10753
        %10838 = vst [vmem:[%s285 + $0x84] sm:$0xf] %v10754
        %10839 = vst [vmem:[%s285 + $0x88] sm:$0xf] %v10755
        %10840 = vst [vmem:[%s285 + $0x8c] sm:$0xf] %v10756
        %10841 = vst [vmem:[%s285 + $0x90] sm:$0xf] %v10757
        %10842 = vst [vmem:[%s285 + $0x94] sm:$0xf] %v10758
        %10843 = vst [vmem:[%s285 + $0x98] sm:$0xf] %v10759
        %10844 = vst [vmem:[%s285 + $0x9c] sm:$0xf] %v10760
        %10845 = vst [vmem:[%s285 + $0xa0] sm:$0xf] %v10761
        %10846 = vst [vmem:[%s285 + $0xa4] sm:$0xf] %v10762
        %s10847 = sand.u32 %s182, 1
        %s10848 = scalar_lea.sflag [#allocation4], %s10847
        %s10849 = sand.u32 %s182, 1
        %s10850 = smul.addr %s10849, 168
        %s10851 = scalar_lea.vmem [#allocation6], %s10850
        // Predicated region
        $region53: #{tpu_custom_call.1} parent=47 // pred_check
          %p10852 = pneg %p192
        $region54: #{tpu_custom_call.1} parent=47 // pred_check_branch
          %10854 = sbr.rel (%p10852) target = $region56
        $region55: #{tpu_custom_call.1} parent=47 // pred_region
          %s10856 = ssub.s32 2688, 2688
          %10857 = vsyncadd %s10848, %s10856
          %s10858 = smul.addr %s22, 42
          %s10859 = smul.addr %s10858, 64
          %s10860 = scalar_lea.hbm %s7, %s10859
          %s10861 = sshll.u32 %s10851, 4
          %s10862 = int_to_ptr.vmem [resolvable:$true] %s10861
          %10867 = dma.vmem_to_hbm [thread:$0]  %s10862, 2688, %s10860, %s10848, 64, 64, 4
        $region56: #{tpu_custom_call.1} parent=47 // pred_fallthru
          _
      $region48: #{tpu_custom_call.1} parent=5 // pred_fallthru
        _
      %p10868 = scmp.le.s32.totalorder 2, %s17
      // Predicated region
      $region57: #{tpu_custom_call.1} parent=5 // pred_check
        %p10869 = pneg %p10868
      $region58: #{tpu_custom_call.1} parent=5 // pred_check_branch
        %10871 = sbr.rel (%p10869) target = $region60
      $region59: #{tpu_custom_call.1} parent=5 // pred_region
        %s10872 = ssub.s32 %s17, 2
        // Predicated region
        $region61: #{tpu_custom_call.1} parent=59 // pred_check
          %p10873 = pneg %p198
        $region62: #{tpu_custom_call.1} parent=59 // pred_check_branch
          %10875 = sbr.rel (%p10873) target = $region64
        $region63: #{tpu_custom_call.1} parent=59 // pred_region
          %s10876 = sand.u32 %s183, 1
          %s10877 = scalar_lea.sflag [#allocation4], %s10876
          %s10878 = sand.u32 %s183, 1
          %s10879 = smul.addr %s10878, 168
          %s10880 = scalar_lea.vmem [#allocation6], %s10879
          %10881 = dma.done %s10877, 2688
        $region64: #{tpu_custom_call.1} parent=59 // pred_fallthru
          _
      $region60: #{tpu_custom_call.1} parent=5 // pred_fallthru
        _
    $region6: #{tpu_custom_call.1} parent=1 // loop_footer
      %s21 = sadd.s32 1, %s17
    $region7: #{tpu_custom_call.1} parent=1 // loop_footer_branch
      %16 = sbr.rel target = $region3
    $region8: #{tpu_custom_call.1} parent=1 // loop_exit
      _
    %10882 = vsyncpa [#allocation4], 1
    %s10883 = scalar_lea.sflag [#allocation4], 1
    %10884 = vsyncpa %s10883, 1
    %10885 = vsyncpa [#allocation5], 1
    %s10886 = scalar_lea.sflag [#allocation5], 1
    %10887 = vsyncpa %s10886, 1

</llo_original>
